<compile_context>
chip_gen: v5e
topology: v5e:2x2
jax: 0.10.0
libtpu: 0.0.40
codegen_flags: <defaults>
</compile_context>

<pallas_src>
import functools

import jax
import jax.numpy as jnp
from jax.experimental import pallas as pl
from jax.experimental.pallas import tpu as pltpu


CHANNELS = (1, 20, 30, 40, 50, 50, 60)   # conv channel progression from the module
KSIZE = 4                                # kernel_size=4 everywhere
C_PAD = 128                              # channels zero-padded to a full lane width
HALO_L = 1                               # minimum zero positions before each element
HALO_R = 2                               # minimum zero positions after each element


def _shift_up(h, shift_rows):
    """Circular sublane shift: result[r] = h[(r - shift_rows) % rows].

    shift_rows is a static multiple of tile_b (>= 8), so both pieces are vreg-aligned
    sublane slices — equivalent to pltpu.roll but avoids packed-bf16 roll lowering and
    keeps the XLU idle (pure vreg placement).
    """
    if shift_rows == 0:
        return h
    return jnp.concatenate([h[-shift_rows:], h[:-shift_rows]], axis=0)


# -----------------------------------------------------------------------------
# Fused kernel: 6 x (Conv1d k=4 'same' + bias + ReLU) + Flatten + BayesianLinear
# -----------------------------------------------------------------------------
def _encoder_kernel(x_ref, wc_ref, bc_ref, wl_ref, bl_ref, o_ref, *,
                    n_layers, tile_b, S, seq, fold_taps):
    """x_ref  : (rows, 128) bf16   position-major slab, rows = S*tile_b,
                                   row = position*tile_b + element; halo positions zero
       wc_ref : (n_layers, 4*128, 128) bf16   per-layer weights, row = tap*128 + C_in
       bc_ref : (n_layers, 1, 128) f32
       wl_ref : (seq, 128, O_PAD) bf16        head weight per valid position
       bl_ref : (1, O_PAD) f32
       o_ref  : (tile_b, O_PAD) f32
    """
    rows = tile_b * S
    h = x_ref[...]                                               # bf16

    # Halo mask (valid rows = data positions), built once from an in-kernel iota.
    r = jax.lax.broadcasted_iota(jnp.int32, (rows, 1), 0)
    valid = jnp.logical_and(r >= HALO_L * tile_b, r < (HALO_L + seq) * tile_b)

    for layer in range(n_layers):
        # Tap k of a 'same'-padded (left=1, right=2) conv reads x[pos - 1 + k]; the
        # circular wrap only lands on halo positions, which are re-zeroed every layer.
        taps = [_shift_up(h, ((1 - k) * tile_b) % rows) for k in range(KSIZE)]
        if fold_taps:
            # v6e/v7x: one K=512 contraction per layer (MXU is 256-deep in K).
            hk = jnp.concatenate(taps, axis=1)                   # (rows, 512) bf16
            acc = jnp.dot(hk, wc_ref[layer], preferred_element_type=jnp.float32)
        else:
            # v5e: 128x128 MXU — K=128 already fills the array, keep 4 dots.
            w_layer = wc_ref[layer]                              # (512, 128)
            acc = jnp.zeros((rows, C_PAD), jnp.float32)
            for k in range(KSIZE):
                acc = acc + jnp.dot(taps[k], w_layer[k * C_PAD:(k + 1) * C_PAD, :],
                                    preferred_element_type=jnp.float32)
        acc = jnp.maximum(acc + bc_ref[layer], 0.0)              # bias + ReLU (Dropout=id)
        if layer + 1 < n_layers:                                 # last layer: head weights
            acc = jnp.where(valid, acc, 0.0)                     # are zero on halo rows
        h = acc.astype(jnp.bfloat16)                             # single cast per layer

    # Fused Flatten + BayesianLinear: contiguous (tile_b,128) slice per valid position.
    o_pad = o_ref.shape[1]
    head = jnp.zeros((tile_b, o_pad), jnp.float32)
    for j in range(seq):
        s = HALO_L + j
        hs = h[s * tile_b:(s + 1) * tile_b, :]
        head = head + jnp.dot(hs, wl_ref[j], preferred_element_type=jnp.float32)
    o_ref[...] = head + bl_ref[...]


# -----------------------------------------------------------------------------
# Parameter layout glue — hoisted out of the per-forward hot path (run once).
# -----------------------------------------------------------------------------
def pack_params(conv_params, lin_params):
    n_layers = len(conv_params)
    wc = jnp.zeros((n_layers, KSIZE, C_PAD, C_PAD), jnp.float32)
    bc = jnp.zeros((n_layers, 1, C_PAD), jnp.float32)
    for i, (w, b) in enumerate(conv_params):                     # w: (Cout, Cin, 4)
        c_out, c_in, _ = w.shape
        assert c_in <= C_PAD and c_out <= C_PAD
        wc = wc.at[i, :, :c_in, :c_out].set(jnp.transpose(w, (2, 1, 0)))
        bc = bc.at[i, 0, :c_out].set(b)
    wc = wc.reshape(n_layers, KSIZE * C_PAD, C_PAD).astype(jnp.bfloat16)

    w_lin, b_lin = lin_params
    out_dim = b_lin.shape[0]
    c_last = conv_params[-1][0].shape[0]
    seq = w_lin.shape[1] // c_last
    o_pad = max(128, pl.cdiv(out_dim, 128) * 128)
    # PyTorch flattens (B, C, L) as c*L + l; permute to (position, channel, out).
    w3 = jnp.transpose(w_lin.reshape(out_dim, c_last, seq), (2, 1, 0))
    wl = jnp.zeros((seq, C_PAD, o_pad), jnp.float32)
    wl = wl.at[:, :c_last, :out_dim].set(w3).astype(jnp.bfloat16)
    bl = jnp.zeros((1, o_pad), jnp.float32).at[0, :out_dim].set(b_lin)
    return {"wc": wc, "bc": bc, "wl": wl, "bl": bl}


# -----------------------------------------------------------------------------
# Forward wrapper
# -----------------------------------------------------------------------------
@functools.partial(jax.jit, static_argnames=("seq", "out_dim"))
def bayesian_conv_encoder_forward(x, wc, bc, wl, bl, *, seq, out_dim):
    """x: [batch, seq] f32.  Returns [batch, out_dim] f32 (out_dim = 2*latent_dim)."""
    batch = x.shape[0]
    assert x.shape[1] == seq
    n_layers = wc.shape[0]
    o_pad = bl.shape[1]
    S = seq + HALO_L + HALO_R

    # One grid step per TensorCore: 1 on single-TC chips, 2 "parallel" on v7x megacore.
    try:
        kind = jax.devices()[0].device_kind.lower()
    except Exception:
        kind = ""
    n_steps = 2 if ("v7" in kind and batch >= 2) else 1
    fold_taps = "v5" not in kind                     # v5e: keep the 4-dot K=128 form

    # Pad batch so each step's tile is a multiple of 8 rows (padded rows are zeros and
    # are sliced away at the end) — no hard asserts on arbitrary batch sizes.
    tile_b = ((pl.cdiv(batch, n_steps) + 7) // 8) * 8
    bp = tile_b * n_steps
    xp = x if bp == batch else jnp.concatenate(
        [x, jnp.zeros((bp - batch, seq), x.dtype)], axis=0)

    rows = tile_b * S
    # Position-major bf16 slab: row = step*rows + position*tile_b + element, lane = channel.
    xf = jnp.zeros((n_steps, S, tile_b, C_PAD), jnp.bfloat16)
    xv = jnp.transpose(xp.reshape(n_steps, tile_b, seq), (0, 2, 1)).astype(jnp.bfloat16)
    xf = xf.at[:, HALO_L:HALO_L + seq, :, 0].set(xv)             # single input channel
    xf = xf.reshape(n_steps * rows, C_PAD)

    kernel = functools.partial(_encoder_kernel, n_layers=n_layers, tile_b=tile_b,
                               S=S, seq=seq, fold_taps=fold_taps)
    out = pl.pallas_call(
        kernel,
        out_shape=jax.ShapeDtypeStruct((bp, o_pad), jnp.float32),
        grid=(n_steps,),
        in_specs=[
            pl.BlockSpec((rows, C_PAD), lambda i: (i, 0)),
            pl.BlockSpec((n_layers, KSIZE * C_PAD, C_PAD), lambda i: (0, 0, 0)),
            pl.BlockSpec((n_layers, 1, C_PAD), lambda i: (0, 0, 0)),
            pl.BlockSpec((seq, C_PAD, o_pad), lambda i: (0, 0, 0)),
            pl.BlockSpec((1, o_pad), lambda i: (0, 0)),
        ],
        out_specs=pl.BlockSpec((tile_b, o_pad), lambda i: (i, 0)),
        compiler_params=pltpu.CompilerParams(dimension_semantics=("parallel",)),
        cost_estimate=pl.CostEstimate(
            flops=int(2 * bp * S * KSIZE * C_PAD * C_PAD * n_layers
                      + 2 * bp * seq * C_PAD * o_pad),
            transcendentals=0,
            bytes_accessed=int(xf.size * 2 + wc.size * 2 + bc.size * 4
                               + wl.size * 2 + bl.size * 4 + bp * o_pad * 4)),
    )(xf, wc, bc, wl, bl)

    return out[:batch, :out_dim]                     # drop lane / batch padding outside


# -----------------------------------------------------------------------------
# Parameter setup: deterministic Bayesian weight sampling (reparameterization)
# -----------------------------------------------------------------------------
def _sample(key, shape):
    k_mu, k_eps = jax.random.split(key)
    mu = jax.random.uniform(k_mu, shape, jnp.float32, -0.2, 0.2)
    sigma = jax.nn.softplus(jnp.full(shape, -5.0, jnp.float32))
    return mu + sigma * jax.random.normal(k_eps, shape, jnp.float32)


def sample_bayesian_conv(key, c_in, c_out, ksize=KSIZE):
    kw, kb = jax.random.split(key)
    return _sample(kw, (c_out, c_in, ksize)), _sample(kb, (c_out,))


def sample_bayesian_linear(key, in_f, out_f):
    kw, kb = jax.random.split(key)
    return _sample(kw, (out_f, in_f)), _sample(kb, (out_f,))


def make_params(key, input_dim, latent_dim):
    n_conv = len(CHANNELS) - 1
    keys = jax.random.split(key, n_conv + 1)
    conv_params = [sample_bayesian_conv(keys[i], CHANNELS[i], CHANNELS[i + 1])
                   for i in range(n_conv)]
    lin_params = sample_bayesian_linear(keys[-1], input_dim * CHANNELS[-1], 2 * latent_dim)
    return conv_params, lin_params


# -----------------------------------------------------------------------------
# Pure-JAX reference (PyTorch semantics)
# -----------------------------------------------------------------------------
def reference_forward(x, conv_params, lin_params):
    h = x[:, None, :].astype(jnp.float32)                        # unsqueeze(1) -> (B,1,L)
    for w, b in conv_params:                                     # Conv1d 'same' (1,2)
        y = jax.lax.conv_general_dilated(
            h, w, window_strides=(1,), padding=[(1, 2)],
            dimension_numbers=("NCH", "OIH", "NCH"))
        h = jnp.maximum(y + b[None, :, None], 0.0)               # Dropout(eval)=id, ReLU
    flat = h.reshape(h.shape[0], -1)                             # Flatten -> (B, 60*L)
    w_lin, b_lin = lin_params
    return flat @ w_lin.T + b_lin[None, :]                       # BayesianLinear


if __name__ == "__main__":
    input_dim = 16       # 1-D signal length (kept by 'same' padding through the convs)
    latent_dim = 16      # encoder output width = 2 * latent_dim = 32
    batch = 32

    key = jax.random.PRNGKey(0)
    k_x, k_p = jax.random.split(key)
    x = jax.random.normal(k_x, (batch, input_dim), jnp.float32)
    conv_params, lin_params = make_params(k_p, input_dim, latent_dim)

    packed = pack_params(conv_params, lin_params)    # layout glue: runs once, not per call
    out = bayesian_conv_encoder_forward(
        x, packed["wc"], packed["bc"], packed["wl"], packed["bl"],
        seq=input_dim, out_dim=2 * latent_dim)
    out = jax.block_until_ready(out)

    ref = reference_forward(x, conv_params, lin_params)
    assert out.shape == (batch, 2 * latent_dim)
    # bf16 matmul operands with f32 accumulation -> loosened tolerance vs f32 reference.
    assert jnp.allclose(out, ref, atol=5e-2, rtol=5e-2), \
        float(jnp.max(jnp.abs(out - ref)))

    print("KERNEL_OK")
</pallas_src>

<mosaic_0001>
module attributes {stable_mosaic.version = 11 : i64} {
  func.func @_encoder_kernel(%arg0: i32, %arg1: memref<608x128xbf16, #tpu.memory_space<vmem>>, %arg2: memref<6x512x128xbf16, #tpu.memory_space<vmem>>, %arg3: memref<6x1x128xf32, #tpu.memory_space<vmem>>, %arg4: memref<16x128x128xbf16, #tpu.memory_space<vmem>>, %arg5: memref<1x128xf32, #tpu.memory_space<vmem>>, %arg6: memref<32x128xf32, #tpu.memory_space<vmem>>) attributes {dimension_semantics = [#tpu.dimension_semantics<parallel>], iteration_bounds = array<i64: 1>, scalar_prefetch = 0 : i64, scratch_operands = 0 : i64, tpu.core_type = #tpu.core_type<tc>, window_params = [{transform_indices = @transform_0, window_bounds = array<i64: 608, 128>}, {pipeline_mode = #tpu.pipeline_mode<synchronous>, transform_indices = @transform_1, window_bounds = array<i64: 6, 512, 128>}, {pipeline_mode = #tpu.pipeline_mode<synchronous>, transform_indices = @transform_2, window_bounds = array<i64: 6, 1, 128>}, {pipeline_mode = #tpu.pipeline_mode<synchronous>, transform_indices = @transform_3, window_bounds = array<i64: 16, 128, 128>}, {pipeline_mode = #tpu.pipeline_mode<synchronous>, transform_indices = @transform_4, window_bounds = array<i64: 1, 128>}, {transform_indices = @transform_5, window_bounds = array<i64: 32, 128>}]} {
    %c0 = arith.constant 0 : index
    %c0_0 = arith.constant 0 : index
    %0 = vector.load %arg1[%c0, %c0_0] : memref<608x128xbf16, #tpu.memory_space<vmem>>, vector<608x128xbf16>
    %1 = tpu.iota {dimensions = array<i32: 0>} : vector<608x1xi32>
    %c32_i32 = arith.constant 32 : i32
    %2 = vector.broadcast %c32_i32 : i32 to vector<608x1xi32>
    %3 = arith.cmpi sge, %1, %2 : vector<608x1xi32>
    %c544_i32 = arith.constant 544 : i32
    %4 = vector.broadcast %c544_i32 : i32 to vector<608x1xi32>
    %5 = arith.cmpi slt, %1, %4 : vector<608x1xi32>
    %6 = arith.andi %3, %5 : vector<608x1xi1>
    %7 = vector.extract_strided_slice %0 {offsets = [576, 0], sizes = [32, 128], strides = [1, 1]} : vector<608x128xbf16> to vector<32x128xbf16>
    %8 = vector.extract_strided_slice %0 {offsets = [0, 0], sizes = [576, 128], strides = [1, 1]} : vector<608x128xbf16> to vector<576x128xbf16>
    %9 = tpu.concatenate %7, %8 in 0 : vector<32x128xbf16>, vector<576x128xbf16> -> vector<608x128xbf16>
    %10 = vector.extract_strided_slice %0 {offsets = [32, 0], sizes = [576, 128], strides = [1, 1]} : vector<608x128xbf16> to vector<576x128xbf16>
    %11 = vector.extract_strided_slice %0 {offsets = [0, 0], sizes = [32, 128], strides = [1, 1]} : vector<608x128xbf16> to vector<32x128xbf16>
    %12 = tpu.concatenate %10, %11 in 0 : vector<576x128xbf16>, vector<32x128xbf16> -> vector<608x128xbf16>
    %13 = vector.extract_strided_slice %0 {offsets = [64, 0], sizes = [544, 128], strides = [1, 1]} : vector<608x128xbf16> to vector<544x128xbf16>
    %14 = vector.extract_strided_slice %0 {offsets = [0, 0], sizes = [64, 128], strides = [1, 1]} : vector<608x128xbf16> to vector<64x128xbf16>
    %15 = tpu.concatenate %13, %14 in 0 : vector<544x128xbf16>, vector<64x128xbf16> -> vector<608x128xbf16>
    %16 = tpu.concatenate %9, %0, %12, %15 in 1 : vector<608x128xbf16>, vector<608x128xbf16>, vector<608x128xbf16>, vector<608x128xbf16> -> vector<608x512xbf16>
    %c0_1 = arith.constant 0 : index
    %c0_2 = arith.constant 0 : index
    %c0_3 = arith.constant 0 : index
    %17 = vector.load %arg2[%c0_1, %c0_2, %c0_3] : memref<6x512x128xbf16, #tpu.memory_space<vmem>>, vector<1x512x128xbf16>
    %18 = vector.shape_cast %17 : vector<1x512x128xbf16> to vector<512x128xbf16>
    %cst = arith.constant dense<0.000000e+00> : vector<608x128xf32>
    %19 = tpu.matmul %16, %18, %cst {dimension_numbers = #tpu.dot_dimension_numbers<[1], [0], [0], [1], [0, 0, 1, 1], [], []>} : vector<608x512xbf16>, vector<512x128xbf16>, vector<608x128xf32> -> vector<608x128xf32>
    %c0_4 = arith.constant 0 : index
    %c0_5 = arith.constant 0 : index
    %c0_6 = arith.constant 0 : index
    %20 = vector.load %arg3[%c0_4, %c0_5, %c0_6] : memref<6x1x128xf32, #tpu.memory_space<vmem>>, vector<1x1x128xf32>
    %21 = vector.shape_cast %20 : vector<1x1x128xf32> to vector<1x128xf32>
    %22 = vector.broadcast %21 : vector<1x128xf32> to vector<608x128xf32>
    %23 = arith.addf %19, %22 : vector<608x128xf32>
    %cst_7 = arith.constant 0.000000e+00 : f32
    %24 = vector.broadcast %cst_7 : f32 to vector<608x128xf32>
    %25 = arith.maximumf %23, %24 : vector<608x128xf32>
    %cst_8 = arith.constant 0.000000e+00 : f32
    %26 = vector.shape_cast %6 : vector<608x1xi1> to vector<608x1xi1>
    %27 = vector.broadcast %26 : vector<608x1xi1> to vector<608x128xi1>
    %28 = vector.broadcast %cst_8 : f32 to vector<608x128xf32>
    %29 = arith.select %27, %25, %28 : vector<608x128xi1>, vector<608x128xf32>
    %30 = arith.truncf %29 : vector<608x128xf32> to vector<608x128xbf16>
    %31 = vector.extract_strided_slice %30 {offsets = [576, 0], sizes = [32, 128], strides = [1, 1]} : vector<608x128xbf16> to vector<32x128xbf16>
    %32 = vector.extract_strided_slice %30 {offsets = [0, 0], sizes = [576, 128], strides = [1, 1]} : vector<608x128xbf16> to vector<576x128xbf16>
    %33 = tpu.concatenate %31, %32 in 0 : vector<32x128xbf16>, vector<576x128xbf16> -> vector<608x128xbf16>
    %34 = vector.extract_strided_slice %30 {offsets = [32, 0], sizes = [576, 128], strides = [1, 1]} : vector<608x128xbf16> to vector<576x128xbf16>
    %35 = vector.extract_strided_slice %30 {offsets = [0, 0], sizes = [32, 128], strides = [1, 1]} : vector<608x128xbf16> to vector<32x128xbf16>
    %36 = tpu.concatenate %34, %35 in 0 : vector<576x128xbf16>, vector<32x128xbf16> -> vector<608x128xbf16>
    %37 = vector.extract_strided_slice %30 {offsets = [64, 0], sizes = [544, 128], strides = [1, 1]} : vector<608x128xbf16> to vector<544x128xbf16>
    %38 = vector.extract_strided_slice %30 {offsets = [0, 0], sizes = [64, 128], strides = [1, 1]} : vector<608x128xbf16> to vector<64x128xbf16>
    %39 = tpu.concatenate %37, %38 in 0 : vector<544x128xbf16>, vector<64x128xbf16> -> vector<608x128xbf16>
    %40 = tpu.concatenate %33, %30, %36, %39 in 1 : vector<608x128xbf16>, vector<608x128xbf16>, vector<608x128xbf16>, vector<608x128xbf16> -> vector<608x512xbf16>
    %c1 = arith.constant 1 : index
    %c0_9 = arith.constant 0 : index
    %c0_10 = arith.constant 0 : index
    %41 = vector.load %arg2[%c1, %c0_9, %c0_10] : memref<6x512x128xbf16, #tpu.memory_space<vmem>>, vector<1x512x128xbf16>
    %42 = vector.shape_cast %41 : vector<1x512x128xbf16> to vector<512x128xbf16>
    %cst_11 = arith.constant dense<0.000000e+00> : vector<608x128xf32>
    %43 = tpu.matmul %40, %42, %cst_11 {dimension_numbers = #tpu.dot_dimension_numbers<[1], [0], [0], [1], [0, 0, 1, 1], [], []>} : vector<608x512xbf16>, vector<512x128xbf16>, vector<608x128xf32> -> vector<608x128xf32>
    %c1_12 = arith.constant 1 : index
    %c0_13 = arith.constant 0 : index
    %c0_14 = arith.constant 0 : index
    %44 = vector.load %arg3[%c1_12, %c0_13, %c0_14] : memref<6x1x128xf32, #tpu.memory_space<vmem>>, vector<1x1x128xf32>
    %45 = vector.shape_cast %44 : vector<1x1x128xf32> to vector<1x128xf32>
    %46 = vector.broadcast %45 : vector<1x128xf32> to vector<608x128xf32>
    %47 = arith.addf %43, %46 : vector<608x128xf32>
    %cst_15 = arith.constant 0.000000e+00 : f32
    %48 = vector.broadcast %cst_15 : f32 to vector<608x128xf32>
    %49 = arith.maximumf %47, %48 : vector<608x128xf32>
    %cst_16 = arith.constant 0.000000e+00 : f32
    %50 = vector.shape_cast %6 : vector<608x1xi1> to vector<608x1xi1>
    %51 = vector.broadcast %50 : vector<608x1xi1> to vector<608x128xi1>
    %52 = vector.broadcast %cst_16 : f32 to vector<608x128xf32>
    %53 = arith.select %51, %49, %52 : vector<608x128xi1>, vector<608x128xf32>
    %54 = arith.truncf %53 : vector<608x128xf32> to vector<608x128xbf16>
    %55 = vector.extract_strided_slice %54 {offsets = [576, 0], sizes = [32, 128], strides = [1, 1]} : vector<608x128xbf16> to vector<32x128xbf16>
    %56 = vector.extract_strided_slice %54 {offsets = [0, 0], sizes = [576, 128], strides = [1, 1]} : vector<608x128xbf16> to vector<576x128xbf16>
    %57 = tpu.concatenate %55, %56 in 0 : vector<32x128xbf16>, vector<576x128xbf16> -> vector<608x128xbf16>
    %58 = vector.extract_strided_slice %54 {offsets = [32, 0], sizes = [576, 128], strides = [1, 1]} : vector<608x128xbf16> to vector<576x128xbf16>
    %59 = vector.extract_strided_slice %54 {offsets = [0, 0], sizes = [32, 128], strides = [1, 1]} : vector<608x128xbf16> to vector<32x128xbf16>
    %60 = tpu.concatenate %58, %59 in 0 : vector<576x128xbf16>, vector<32x128xbf16> -> vector<608x128xbf16>
    %61 = vector.extract_strided_slice %54 {offsets = [64, 0], sizes = [544, 128], strides = [1, 1]} : vector<608x128xbf16> to vector<544x128xbf16>
    %62 = vector.extract_strided_slice %54 {offsets = [0, 0], sizes = [64, 128], strides = [1, 1]} : vector<608x128xbf16> to vector<64x128xbf16>
    %63 = tpu.concatenate %61, %62 in 0 : vector<544x128xbf16>, vector<64x128xbf16> -> vector<608x128xbf16>
    %64 = tpu.concatenate %57, %54, %60, %63 in 1 : vector<608x128xbf16>, vector<608x128xbf16>, vector<608x128xbf16>, vector<608x128xbf16> -> vector<608x512xbf16>
    %c2 = arith.constant 2 : index
    %c0_17 = arith.constant 0 : index
    %c0_18 = arith.constant 0 : index
    %65 = vector.load %arg2[%c2, %c0_17, %c0_18] : memref<6x512x128xbf16, #tpu.memory_space<vmem>>, vector<1x512x128xbf16>
    %66 = vector.shape_cast %65 : vector<1x512x128xbf16> to vector<512x128xbf16>
    %cst_19 = arith.constant dense<0.000000e+00> : vector<608x128xf32>
    %67 = tpu.matmul %64, %66, %cst_19 {dimension_numbers = #tpu.dot_dimension_numbers<[1], [0], [0], [1], [0, 0, 1, 1], [], []>} : vector<608x512xbf16>, vector<512x128xbf16>, vector<608x128xf32> -> vector<608x128xf32>
    %c2_20 = arith.constant 2 : index
    %c0_21 = arith.constant 0 : index
    %c0_22 = arith.constant 0 : index
    %68 = vector.load %arg3[%c2_20, %c0_21, %c0_22] : memref<6x1x128xf32, #tpu.memory_space<vmem>>, vector<1x1x128xf32>
    %69 = vector.shape_cast %68 : vector<1x1x128xf32> to vector<1x128xf32>
    %70 = vector.broadcast %69 : vector<1x128xf32> to vector<608x128xf32>
    %71 = arith.addf %67, %70 : vector<608x128xf32>
    %cst_23 = arith.constant 0.000000e+00 : f32
    %72 = vector.broadcast %cst_23 : f32 to vector<608x128xf32>
    %73 = arith.maximumf %71, %72 : vector<608x128xf32>
    %cst_24 = arith.constant 0.000000e+00 : f32
    %74 = vector.shape_cast %6 : vector<608x1xi1> to vector<608x1xi1>
    %75 = vector.broadcast %74 : vector<608x1xi1> to vector<608x128xi1>
    %76 = vector.broadcast %cst_24 : f32 to vector<608x128xf32>
    %77 = arith.select %75, %73, %76 : vector<608x128xi1>, vector<608x128xf32>
    %78 = arith.truncf %77 : vector<608x128xf32> to vector<608x128xbf16>
    %79 = vector.extract_strided_slice %78 {offsets = [576, 0], sizes = [32, 128], strides = [1, 1]} : vector<608x128xbf16> to vector<32x128xbf16>
    %80 = vector.extract_strided_slice %78 {offsets = [0, 0], sizes = [576, 128], strides = [1, 1]} : vector<608x128xbf16> to vector<576x128xbf16>
    %81 = tpu.concatenate %79, %80 in 0 : vector<32x128xbf16>, vector<576x128xbf16> -> vector<608x128xbf16>
    %82 = vector.extract_strided_slice %78 {offsets = [32, 0], sizes = [576, 128], strides = [1, 1]} : vector<608x128xbf16> to vector<576x128xbf16>
    %83 = vector.extract_strided_slice %78 {offsets = [0, 0], sizes = [32, 128], strides = [1, 1]} : vector<608x128xbf16> to vector<32x128xbf16>
    %84 = tpu.concatenate %82, %83 in 0 : vector<576x128xbf16>, vector<32x128xbf16> -> vector<608x128xbf16>
    %85 = vector.extract_strided_slice %78 {offsets = [64, 0], sizes = [544, 128], strides = [1, 1]} : vector<608x128xbf16> to vector<544x128xbf16>
    %86 = vector.extract_strided_slice %78 {offsets = [0, 0], sizes = [64, 128], strides = [1, 1]} : vector<608x128xbf16> to vector<64x128xbf16>
    %87 = tpu.concatenate %85, %86 in 0 : vector<544x128xbf16>, vector<64x128xbf16> -> vector<608x128xbf16>
    %88 = tpu.concatenate %81, %78, %84, %87 in 1 : vector<608x128xbf16>, vector<608x128xbf16>, vector<608x128xbf16>, vector<608x128xbf16> -> vector<608x512xbf16>
    %c3 = arith.constant 3 : index
    %c0_25 = arith.constant 0 : index
    %c0_26 = arith.constant 0 : index
    %89 = vector.load %arg2[%c3, %c0_25, %c0_26] : memref<6x512x128xbf16, #tpu.memory_space<vmem>>, vector<1x512x128xbf16>
    %90 = vector.shape_cast %89 : vector<1x512x128xbf16> to vector<512x128xbf16>
    %cst_27 = arith.constant dense<0.000000e+00> : vector<608x128xf32>
    %91 = tpu.matmul %88, %90, %cst_27 {dimension_numbers = #tpu.dot_dimension_numbers<[1], [0], [0], [1], [0, 0, 1, 1], [], []>} : vector<608x512xbf16>, vector<512x128xbf16>, vector<608x128xf32> -> vector<608x128xf32>
    %c3_28 = arith.constant 3 : index
    %c0_29 = arith.constant 0 : index
    %c0_30 = arith.constant 0 : index
    %92 = vector.load %arg3[%c3_28, %c0_29, %c0_30] : memref<6x1x128xf32, #tpu.memory_space<vmem>>, vector<1x1x128xf32>
    %93 = vector.shape_cast %92 : vector<1x1x128xf32> to vector<1x128xf32>
    %94 = vector.broadcast %93 : vector<1x128xf32> to vector<608x128xf32>
    %95 = arith.addf %91, %94 : vector<608x128xf32>
    %cst_31 = arith.constant 0.000000e+00 : f32
    %96 = vector.broadcast %cst_31 : f32 to vector<608x128xf32>
    %97 = arith.maximumf %95, %96 : vector<608x128xf32>
    %cst_32 = arith.constant 0.000000e+00 : f32
    %98 = vector.shape_cast %6 : vector<608x1xi1> to vector<608x1xi1>
    %99 = vector.broadcast %98 : vector<608x1xi1> to vector<608x128xi1>
    %100 = vector.broadcast %cst_32 : f32 to vector<608x128xf32>
    %101 = arith.select %99, %97, %100 : vector<608x128xi1>, vector<608x128xf32>
    %102 = arith.truncf %101 : vector<608x128xf32> to vector<608x128xbf16>
    %103 = vector.extract_strided_slice %102 {offsets = [576, 0], sizes = [32, 128], strides = [1, 1]} : vector<608x128xbf16> to vector<32x128xbf16>
    %104 = vector.extract_strided_slice %102 {offsets = [0, 0], sizes = [576, 128], strides = [1, 1]} : vector<608x128xbf16> to vector<576x128xbf16>
    %105 = tpu.concatenate %103, %104 in 0 : vector<32x128xbf16>, vector<576x128xbf16> -> vector<608x128xbf16>
    %106 = vector.extract_strided_slice %102 {offsets = [32, 0], sizes = [576, 128], strides = [1, 1]} : vector<608x128xbf16> to vector<576x128xbf16>
    %107 = vector.extract_strided_slice %102 {offsets = [0, 0], sizes = [32, 128], strides = [1, 1]} : vector<608x128xbf16> to vector<32x128xbf16>
    %108 = tpu.concatenate %106, %107 in 0 : vector<576x128xbf16>, vector<32x128xbf16> -> vector<608x128xbf16>
    %109 = vector.extract_strided_slice %102 {offsets = [64, 0], sizes = [544, 128], strides = [1, 1]} : vector<608x128xbf16> to vector<544x128xbf16>
    %110 = vector.extract_strided_slice %102 {offsets = [0, 0], sizes = [64, 128], strides = [1, 1]} : vector<608x128xbf16> to vector<64x128xbf16>
    %111 = tpu.concatenate %109, %110 in 0 : vector<544x128xbf16>, vector<64x128xbf16> -> vector<608x128xbf16>
    %112 = tpu.concatenate %105, %102, %108, %111 in 1 : vector<608x128xbf16>, vector<608x128xbf16>, vector<608x128xbf16>, vector<608x128xbf16> -> vector<608x512xbf16>
    %c4 = arith.constant 4 : index
    %c0_33 = arith.constant 0 : index
    %c0_34 = arith.constant 0 : index
    %113 = vector.load %arg2[%c4, %c0_33, %c0_34] : memref<6x512x128xbf16, #tpu.memory_space<vmem>>, vector<1x512x128xbf16>
    %114 = vector.shape_cast %113 : vector<1x512x128xbf16> to vector<512x128xbf16>
    %cst_35 = arith.constant dense<0.000000e+00> : vector<608x128xf32>
    %115 = tpu.matmul %112, %114, %cst_35 {dimension_numbers = #tpu.dot_dimension_numbers<[1], [0], [0], [1], [0, 0, 1, 1], [], []>} : vector<608x512xbf16>, vector<512x128xbf16>, vector<608x128xf32> -> vector<608x128xf32>
    %c4_36 = arith.constant 4 : index
    %c0_37 = arith.constant 0 : index
    %c0_38 = arith.constant 0 : index
    %116 = vector.load %arg3[%c4_36, %c0_37, %c0_38] : memref<6x1x128xf32, #tpu.memory_space<vmem>>, vector<1x1x128xf32>
    %117 = vector.shape_cast %116 : vector<1x1x128xf32> to vector<1x128xf32>
    %118 = vector.broadcast %117 : vector<1x128xf32> to vector<608x128xf32>
    %119 = arith.addf %115, %118 : vector<608x128xf32>
    %cst_39 = arith.constant 0.000000e+00 : f32
    %120 = vector.broadcast %cst_39 : f32 to vector<608x128xf32>
    %121 = arith.maximumf %119, %120 : vector<608x128xf32>
    %cst_40 = arith.constant 0.000000e+00 : f32
    %122 = vector.shape_cast %6 : vector<608x1xi1> to vector<608x1xi1>
    %123 = vector.broadcast %122 : vector<608x1xi1> to vector<608x128xi1>
    %124 = vector.broadcast %cst_40 : f32 to vector<608x128xf32>
    %125 = arith.select %123, %121, %124 : vector<608x128xi1>, vector<608x128xf32>
    %126 = arith.truncf %125 : vector<608x128xf32> to vector<608x128xbf16>
    %127 = vector.extract_strided_slice %126 {offsets = [576, 0], sizes = [32, 128], strides = [1, 1]} : vector<608x128xbf16> to vector<32x128xbf16>
    %128 = vector.extract_strided_slice %126 {offsets = [0, 0], sizes = [576, 128], strides = [1, 1]} : vector<608x128xbf16> to vector<576x128xbf16>
    %129 = tpu.concatenate %127, %128 in 0 : vector<32x128xbf16>, vector<576x128xbf16> -> vector<608x128xbf16>
    %130 = vector.extract_strided_slice %126 {offsets = [32, 0], sizes = [576, 128], strides = [1, 1]} : vector<608x128xbf16> to vector<576x128xbf16>
    %131 = vector.extract_strided_slice %126 {offsets = [0, 0], sizes = [32, 128], strides = [1, 1]} : vector<608x128xbf16> to vector<32x128xbf16>
    %132 = tpu.concatenate %130, %131 in 0 : vector<576x128xbf16>, vector<32x128xbf16> -> vector<608x128xbf16>
    %133 = vector.extract_strided_slice %126 {offsets = [64, 0], sizes = [544, 128], strides = [1, 1]} : vector<608x128xbf16> to vector<544x128xbf16>
    %134 = vector.extract_strided_slice %126 {offsets = [0, 0], sizes = [64, 128], strides = [1, 1]} : vector<608x128xbf16> to vector<64x128xbf16>
    %135 = tpu.concatenate %133, %134 in 0 : vector<544x128xbf16>, vector<64x128xbf16> -> vector<608x128xbf16>
    %136 = tpu.concatenate %129, %126, %132, %135 in 1 : vector<608x128xbf16>, vector<608x128xbf16>, vector<608x128xbf16>, vector<608x128xbf16> -> vector<608x512xbf16>
    %c5 = arith.constant 5 : index
    %c0_41 = arith.constant 0 : index
    %c0_42 = arith.constant 0 : index
    %137 = vector.load %arg2[%c5, %c0_41, %c0_42] : memref<6x512x128xbf16, #tpu.memory_space<vmem>>, vector<1x512x128xbf16>
    %138 = vector.shape_cast %137 : vector<1x512x128xbf16> to vector<512x128xbf16>
    %cst_43 = arith.constant dense<0.000000e+00> : vector<608x128xf32>
    %139 = tpu.matmul %136, %138, %cst_43 {dimension_numbers = #tpu.dot_dimension_numbers<[1], [0], [0], [1], [0, 0, 1, 1], [], []>} : vector<608x512xbf16>, vector<512x128xbf16>, vector<608x128xf32> -> vector<608x128xf32>
    %c5_44 = arith.constant 5 : index
    %c0_45 = arith.constant 0 : index
    %c0_46 = arith.constant 0 : index
    %140 = vector.load %arg3[%c5_44, %c0_45, %c0_46] : memref<6x1x128xf32, #tpu.memory_space<vmem>>, vector<1x1x128xf32>
    %141 = vector.shape_cast %140 : vector<1x1x128xf32> to vector<1x128xf32>
    %142 = vector.broadcast %141 : vector<1x128xf32> to vector<608x128xf32>
    %143 = arith.addf %139, %142 : vector<608x128xf32>
    %cst_47 = arith.constant 0.000000e+00 : f32
    %144 = vector.broadcast %cst_47 : f32 to vector<608x128xf32>
    %145 = arith.maximumf %143, %144 : vector<608x128xf32>
    %146 = arith.truncf %145 : vector<608x128xf32> to vector<608x128xbf16>
    %cst_48 = arith.constant 0.000000e+00 : f32
    %147 = vector.broadcast %cst_48 : f32 to vector<32x128xf32>
    %148 = vector.extract_strided_slice %146 {offsets = [32, 0], sizes = [32, 128], strides = [1, 1]} : vector<608x128xbf16> to vector<32x128xbf16>
    %c0_49 = arith.constant 0 : index
    %c0_50 = arith.constant 0 : index
    %c0_51 = arith.constant 0 : index
    %149 = vector.load %arg4[%c0_49, %c0_50, %c0_51] : memref<16x128x128xbf16, #tpu.memory_space<vmem>>, vector<1x128x128xbf16>
    %150 = vector.shape_cast %149 : vector<1x128x128xbf16> to vector<128x128xbf16>
    %cst_52 = arith.constant dense<0.000000e+00> : vector<32x128xf32>
    %151 = tpu.matmul %148, %150, %cst_52 {dimension_numbers = #tpu.dot_dimension_numbers<[1], [0], [0], [1], [0, 0, 1, 1], [], []>} : vector<32x128xbf16>, vector<128x128xbf16>, vector<32x128xf32> -> vector<32x128xf32>
    %152 = arith.addf %147, %151 : vector<32x128xf32>
    %153 = vector.extract_strided_slice %146 {offsets = [64, 0], sizes = [32, 128], strides = [1, 1]} : vector<608x128xbf16> to vector<32x128xbf16>
    %c1_53 = arith.constant 1 : index
    %c0_54 = arith.constant 0 : index
    %c0_55 = arith.constant 0 : index
    %154 = vector.load %arg4[%c1_53, %c0_54, %c0_55] : memref<16x128x128xbf16, #tpu.memory_space<vmem>>, vector<1x128x128xbf16>
    %155 = vector.shape_cast %154 : vector<1x128x128xbf16> to vector<128x128xbf16>
    %cst_56 = arith.constant dense<0.000000e+00> : vector<32x128xf32>
    %156 = tpu.matmul %153, %155, %cst_56 {dimension_numbers = #tpu.dot_dimension_numbers<[1], [0], [0], [1], [0, 0, 1, 1], [], []>} : vector<32x128xbf16>, vector<128x128xbf16>, vector<32x128xf32> -> vector<32x128xf32>
    %157 = arith.addf %152, %156 : vector<32x128xf32>
    %158 = vector.extract_strided_slice %146 {offsets = [96, 0], sizes = [32, 128], strides = [1, 1]} : vector<608x128xbf16> to vector<32x128xbf16>
    %c2_57 = arith.constant 2 : index
    %c0_58 = arith.constant 0 : index
    %c0_59 = arith.constant 0 : index
    %159 = vector.load %arg4[%c2_57, %c0_58, %c0_59] : memref<16x128x128xbf16, #tpu.memory_space<vmem>>, vector<1x128x128xbf16>
    %160 = vector.shape_cast %159 : vector<1x128x128xbf16> to vector<128x128xbf16>
    %cst_60 = arith.constant dense<0.000000e+00> : vector<32x128xf32>
    %161 = tpu.matmul %158, %160, %cst_60 {dimension_numbers = #tpu.dot_dimension_numbers<[1], [0], [0], [1], [0, 0, 1, 1], [], []>} : vector<32x128xbf16>, vector<128x128xbf16>, vector<32x128xf32> -> vector<32x128xf32>
    %162 = arith.addf %157, %161 : vector<32x128xf32>
    %163 = vector.extract_strided_slice %146 {offsets = [128, 0], sizes = [32, 128], strides = [1, 1]} : vector<608x128xbf16> to vector<32x128xbf16>
    %c3_61 = arith.constant 3 : index
    %c0_62 = arith.constant 0 : index
    %c0_63 = arith.constant 0 : index
    %164 = vector.load %arg4[%c3_61, %c0_62, %c0_63] : memref<16x128x128xbf16, #tpu.memory_space<vmem>>, vector<1x128x128xbf16>
    %165 = vector.shape_cast %164 : vector<1x128x128xbf16> to vector<128x128xbf16>
    %cst_64 = arith.constant dense<0.000000e+00> : vector<32x128xf32>
    %166 = tpu.matmul %163, %165, %cst_64 {dimension_numbers = #tpu.dot_dimension_numbers<[1], [0], [0], [1], [0, 0, 1, 1], [], []>} : vector<32x128xbf16>, vector<128x128xbf16>, vector<32x128xf32> -> vector<32x128xf32>
    %167 = arith.addf %162, %166 : vector<32x128xf32>
    %168 = vector.extract_strided_slice %146 {offsets = [160, 0], sizes = [32, 128], strides = [1, 1]} : vector<608x128xbf16> to vector<32x128xbf16>
    %c4_65 = arith.constant 4 : index
    %c0_66 = arith.constant 0 : index
    %c0_67 = arith.constant 0 : index
    %169 = vector.load %arg4[%c4_65, %c0_66, %c0_67] : memref<16x128x128xbf16, #tpu.memory_space<vmem>>, vector<1x128x128xbf16>
    %170 = vector.shape_cast %169 : vector<1x128x128xbf16> to vector<128x128xbf16>
    %cst_68 = arith.constant dense<0.000000e+00> : vector<32x128xf32>
    %171 = tpu.matmul %168, %170, %cst_68 {dimension_numbers = #tpu.dot_dimension_numbers<[1], [0], [0], [1], [0, 0, 1, 1], [], []>} : vector<32x128xbf16>, vector<128x128xbf16>, vector<32x128xf32> -> vector<32x128xf32>
    %172 = arith.addf %167, %171 : vector<32x128xf32>
    %173 = vector.extract_strided_slice %146 {offsets = [192, 0], sizes = [32, 128], strides = [1, 1]} : vector<608x128xbf16> to vector<32x128xbf16>
    %c5_69 = arith.constant 5 : index
    %c0_70 = arith.constant 0 : index
    %c0_71 = arith.constant 0 : index
    %174 = vector.load %arg4[%c5_69, %c0_70, %c0_71] : memref<16x128x128xbf16, #tpu.memory_space<vmem>>, vector<1x128x128xbf16>
    %175 = vector.shape_cast %174 : vector<1x128x128xbf16> to vector<128x128xbf16>
    %cst_72 = arith.constant dense<0.000000e+00> : vector<32x128xf32>
    %176 = tpu.matmul %173, %175, %cst_72 {dimension_numbers = #tpu.dot_dimension_numbers<[1], [0], [0], [1], [0, 0, 1, 1], [], []>} : vector<32x128xbf16>, vector<128x128xbf16>, vector<32x128xf32> -> vector<32x128xf32>
    %177 = arith.addf %172, %176 : vector<32x128xf32>
    %178 = vector.extract_strided_slice %146 {offsets = [224, 0], sizes = [32, 128], strides = [1, 1]} : vector<608x128xbf16> to vector<32x128xbf16>
    %c6 = arith.constant 6 : index
    %c0_73 = arith.constant 0 : index
    %c0_74 = arith.constant 0 : index
    %179 = vector.load %arg4[%c6, %c0_73, %c0_74] : memref<16x128x128xbf16, #tpu.memory_space<vmem>>, vector<1x128x128xbf16>
    %180 = vector.shape_cast %179 : vector<1x128x128xbf16> to vector<128x128xbf16>
    %cst_75 = arith.constant dense<0.000000e+00> : vector<32x128xf32>
    %181 = tpu.matmul %178, %180, %cst_75 {dimension_numbers = #tpu.dot_dimension_numbers<[1], [0], [0], [1], [0, 0, 1, 1], [], []>} : vector<32x128xbf16>, vector<128x128xbf16>, vector<32x128xf32> -> vector<32x128xf32>
    %182 = arith.addf %177, %181 : vector<32x128xf32>
    %183 = vector.extract_strided_slice %146 {offsets = [256, 0], sizes = [32, 128], strides = [1, 1]} : vector<608x128xbf16> to vector<32x128xbf16>
    %c7 = arith.constant 7 : index
    %c0_76 = arith.constant 0 : index
    %c0_77 = arith.constant 0 : index
    %184 = vector.load %arg4[%c7, %c0_76, %c0_77] : memref<16x128x128xbf16, #tpu.memory_space<vmem>>, vector<1x128x128xbf16>
    %185 = vector.shape_cast %184 : vector<1x128x128xbf16> to vector<128x128xbf16>
    %cst_78 = arith.constant dense<0.000000e+00> : vector<32x128xf32>
    %186 = tpu.matmul %183, %185, %cst_78 {dimension_numbers = #tpu.dot_dimension_numbers<[1], [0], [0], [1], [0, 0, 1, 1], [], []>} : vector<32x128xbf16>, vector<128x128xbf16>, vector<32x128xf32> -> vector<32x128xf32>
    %187 = arith.addf %182, %186 : vector<32x128xf32>
    %188 = vector.extract_strided_slice %146 {offsets = [288, 0], sizes = [32, 128], strides = [1, 1]} : vector<608x128xbf16> to vector<32x128xbf16>
    %c8 = arith.constant 8 : index
    %c0_79 = arith.constant 0 : index
    %c0_80 = arith.constant 0 : index
    %189 = vector.load %arg4[%c8, %c0_79, %c0_80] : memref<16x128x128xbf16, #tpu.memory_space<vmem>>, vector<1x128x128xbf16>
    %190 = vector.shape_cast %189 : vector<1x128x128xbf16> to vector<128x128xbf16>
    %cst_81 = arith.constant dense<0.000000e+00> : vector<32x128xf32>
    %191 = tpu.matmul %188, %190, %cst_81 {dimension_numbers = #tpu.dot_dimension_numbers<[1], [0], [0], [1], [0, 0, 1, 1], [], []>} : vector<32x128xbf16>, vector<128x128xbf16>, vector<32x128xf32> -> vector<32x128xf32>
    %192 = arith.addf %187, %191 : vector<32x128xf32>
    %193 = vector.extract_strided_slice %146 {offsets = [320, 0], sizes = [32, 128], strides = [1, 1]} : vector<608x128xbf16> to vector<32x128xbf16>
    %c9 = arith.constant 9 : index
    %c0_82 = arith.constant 0 : index
    %c0_83 = arith.constant 0 : index
    %194 = vector.load %arg4[%c9, %c0_82, %c0_83] : memref<16x128x128xbf16, #tpu.memory_space<vmem>>, vector<1x128x128xbf16>
    %195 = vector.shape_cast %194 : vector<1x128x128xbf16> to vector<128x128xbf16>
    %cst_84 = arith.constant dense<0.000000e+00> : vector<32x128xf32>
    %196 = tpu.matmul %193, %195, %cst_84 {dimension_numbers = #tpu.dot_dimension_numbers<[1], [0], [0], [1], [0, 0, 1, 1], [], []>} : vector<32x128xbf16>, vector<128x128xbf16>, vector<32x128xf32> -> vector<32x128xf32>
    %197 = arith.addf %192, %196 : vector<32x128xf32>
    %198 = vector.extract_strided_slice %146 {offsets = [352, 0], sizes = [32, 128], strides = [1, 1]} : vector<608x128xbf16> to vector<32x128xbf16>
    %c10 = arith.constant 10 : index
    %c0_85 = arith.constant 0 : index
    %c0_86 = arith.constant 0 : index
    %199 = vector.load %arg4[%c10, %c0_85, %c0_86] : memref<16x128x128xbf16, #tpu.memory_space<vmem>>, vector<1x128x128xbf16>
    %200 = vector.shape_cast %199 : vector<1x128x128xbf16> to vector<128x128xbf16>
    %cst_87 = arith.constant dense<0.000000e+00> : vector<32x128xf32>
    %201 = tpu.matmul %198, %200, %cst_87 {dimension_numbers = #tpu.dot_dimension_numbers<[1], [0], [0], [1], [0, 0, 1, 1], [], []>} : vector<32x128xbf16>, vector<128x128xbf16>, vector<32x128xf32> -> vector<32x128xf32>
    %202 = arith.addf %197, %201 : vector<32x128xf32>
    %203 = vector.extract_strided_slice %146 {offsets = [384, 0], sizes = [32, 128], strides = [1, 1]} : vector<608x128xbf16> to vector<32x128xbf16>
    %c11 = arith.constant 11 : index
    %c0_88 = arith.constant 0 : index
    %c0_89 = arith.constant 0 : index
    %204 = vector.load %arg4[%c11, %c0_88, %c0_89] : memref<16x128x128xbf16, #tpu.memory_space<vmem>>, vector<1x128x128xbf16>
    %205 = vector.shape_cast %204 : vector<1x128x128xbf16> to vector<128x128xbf16>
    %cst_90 = arith.constant dense<0.000000e+00> : vector<32x128xf32>
    %206 = tpu.matmul %203, %205, %cst_90 {dimension_numbers = #tpu.dot_dimension_numbers<[1], [0], [0], [1], [0, 0, 1, 1], [], []>} : vector<32x128xbf16>, vector<128x128xbf16>, vector<32x128xf32> -> vector<32x128xf32>
    %207 = arith.addf %202, %206 : vector<32x128xf32>
    %208 = vector.extract_strided_slice %146 {offsets = [416, 0], sizes = [32, 128], strides = [1, 1]} : vector<608x128xbf16> to vector<32x128xbf16>
    %c12 = arith.constant 12 : index
    %c0_91 = arith.constant 0 : index
    %c0_92 = arith.constant 0 : index
    %209 = vector.load %arg4[%c12, %c0_91, %c0_92] : memref<16x128x128xbf16, #tpu.memory_space<vmem>>, vector<1x128x128xbf16>
    %210 = vector.shape_cast %209 : vector<1x128x128xbf16> to vector<128x128xbf16>
    %cst_93 = arith.constant dense<0.000000e+00> : vector<32x128xf32>
    %211 = tpu.matmul %208, %210, %cst_93 {dimension_numbers = #tpu.dot_dimension_numbers<[1], [0], [0], [1], [0, 0, 1, 1], [], []>} : vector<32x128xbf16>, vector<128x128xbf16>, vector<32x128xf32> -> vector<32x128xf32>
    %212 = arith.addf %207, %211 : vector<32x128xf32>
    %213 = vector.extract_strided_slice %146 {offsets = [448, 0], sizes = [32, 128], strides = [1, 1]} : vector<608x128xbf16> to vector<32x128xbf16>
    %c13 = arith.constant 13 : index
    %c0_94 = arith.constant 0 : index
    %c0_95 = arith.constant 0 : index
    %214 = vector.load %arg4[%c13, %c0_94, %c0_95] : memref<16x128x128xbf16, #tpu.memory_space<vmem>>, vector<1x128x128xbf16>
    %215 = vector.shape_cast %214 : vector<1x128x128xbf16> to vector<128x128xbf16>
    %cst_96 = arith.constant dense<0.000000e+00> : vector<32x128xf32>
    %216 = tpu.matmul %213, %215, %cst_96 {dimension_numbers = #tpu.dot_dimension_numbers<[1], [0], [0], [1], [0, 0, 1, 1], [], []>} : vector<32x128xbf16>, vector<128x128xbf16>, vector<32x128xf32> -> vector<32x128xf32>
    %217 = arith.addf %212, %216 : vector<32x128xf32>
    %218 = vector.extract_strided_slice %146 {offsets = [480, 0], sizes = [32, 128], strides = [1, 1]} : vector<608x128xbf16> to vector<32x128xbf16>
    %c14 = arith.constant 14 : index
    %c0_97 = arith.constant 0 : index
    %c0_98 = arith.constant 0 : index
    %219 = vector.load %arg4[%c14, %c0_97, %c0_98] : memref<16x128x128xbf16, #tpu.memory_space<vmem>>, vector<1x128x128xbf16>
    %220 = vector.shape_cast %219 : vector<1x128x128xbf16> to vector<128x128xbf16>
    %cst_99 = arith.constant dense<0.000000e+00> : vector<32x128xf32>
    %221 = tpu.matmul %218, %220, %cst_99 {dimension_numbers = #tpu.dot_dimension_numbers<[1], [0], [0], [1], [0, 0, 1, 1], [], []>} : vector<32x128xbf16>, vector<128x128xbf16>, vector<32x128xf32> -> vector<32x128xf32>
    %222 = arith.addf %217, %221 : vector<32x128xf32>
    %223 = vector.extract_strided_slice %146 {offsets = [512, 0], sizes = [32, 128], strides = [1, 1]} : vector<608x128xbf16> to vector<32x128xbf16>
    %c15 = arith.constant 15 : index
    %c0_100 = arith.constant 0 : index
    %c0_101 = arith.constant 0 : index
    %224 = vector.load %arg4[%c15, %c0_100, %c0_101] : memref<16x128x128xbf16, #tpu.memory_space<vmem>>, vector<1x128x128xbf16>
    %225 = vector.shape_cast %224 : vector<1x128x128xbf16> to vector<128x128xbf16>
    %cst_102 = arith.constant dense<0.000000e+00> : vector<32x128xf32>
    %226 = tpu.matmul %223, %225, %cst_102 {dimension_numbers = #tpu.dot_dimension_numbers<[1], [0], [0], [1], [0, 0, 1, 1], [], []>} : vector<32x128xbf16>, vector<128x128xbf16>, vector<32x128xf32> -> vector<32x128xf32>
    %227 = arith.addf %222, %226 : vector<32x128xf32>
    %c0_103 = arith.constant 0 : index
    %c0_104 = arith.constant 0 : index
    %228 = vector.load %arg5[%c0_103, %c0_104] : memref<1x128xf32, #tpu.memory_space<vmem>>, vector<1x128xf32>
    %229 = vector.broadcast %228 : vector<1x128xf32> to vector<32x128xf32>
    %230 = arith.addf %227, %229 : vector<32x128xf32>
    %c0_105 = arith.constant 0 : index
    %c0_106 = arith.constant 0 : index
    %231 = vector.load %arg6[%c0_105, %c0_106] : memref<32x128xf32, #tpu.memory_space<vmem>>, vector<32x128xf32>
    tpu.vector_store %arg6[%c0_105, %c0_106], %230 {strides = array<i32>} : memref<32x128xf32, #tpu.memory_space<vmem>>, vector<32x128xf32>,
    return
  }
  func.func @transform_0(%arg0: i32) -> (i32, i32) {
    %c0_i32 = arith.constant 0 : i32
    %c0_i32_0 = arith.constant 0 : i32
    return %arg0, %c0_i32 : i32, i32
  }
  func.func @transform_1(%arg0: i32) -> (i32, i32, i32) {
    %c0_i32 = arith.constant 0 : i32
    %c0_i32_0 = arith.constant 0 : i32
    %c0_i32_1 = arith.constant 0 : i32
    %c0_i32_2 = arith.constant 0 : i32
    return %c0_i32, %c0_i32_0, %c0_i32_1 : i32, i32, i32
  }
  func.func @transform_2(%arg0: i32) -> (i32, i32, i32) {
    %c0_i32 = arith.constant 0 : i32
    %c0_i32_0 = arith.constant 0 : i32
    %c0_i32_1 = arith.constant 0 : i32
    %c0_i32_2 = arith.constant 0 : i32
    return %c0_i32, %c0_i32_0, %c0_i32_1 : i32, i32, i32
  }
  func.func @transform_3(%arg0: i32) -> (i32, i32, i32) {
    %c0_i32 = arith.constant 0 : i32
    %c0_i32_0 = arith.constant 0 : i32
    %c0_i32_1 = arith.constant 0 : i32
    %c0_i32_2 = arith.constant 0 : i32
    return %c0_i32, %c0_i32_0, %c0_i32_1 : i32, i32, i32
  }
  func.func @transform_4(%arg0: i32) -> (i32, i32) {
    %c0_i32 = arith.constant 0 : i32
    %c0_i32_0 = arith.constant 0 : i32
    %c0_i32_1 = arith.constant 0 : i32
    return %c0_i32, %c0_i32_0 : i32, i32
  }
  func.func @transform_5(%arg0: i32) -> (i32, i32) {
    %c0_i32 = arith.constant 0 : i32
    %c0_i32_0 = arith.constant 0 : i32
    return %arg0, %c0_i32 : i32, i32
  }
}

</mosaic_0001>

<llo_original>
// kernel: bayesian_conv_encoder_forward.1
$region0: #{bayesian_conv_encoder_forward.1}
  #allocation0 [shape = 'u32[]', space=smem, size = 0x4, offset = 0x4, fixed_abs, tag = 'smem constant byte address 0x4 - core index']
  #allocation1 [shape = 'u32[72,128]{1,0:T(1,128)}', space=vmem, size = 0x9000, scoped, tag = 'internal scratch']
  %s0 = inlined_call_operand.vmem [shape: bf16[608,128], index: 0, kind: input, shape index: {}]
  %s1 = inlined_call_operand.hbm [shape: bf16[6,512,128], index: 1, kind: input, shape index: {}]
  %s2 = inlined_call_operand.vmem [shape: f32[6,1,128], index: 2, kind: input, shape index: {}]
  %s3 = inlined_call_operand.hbm [shape: bf16[16,128,128], index: 3, kind: input, shape index: {}]
  %s4 = inlined_call_operand.vmem [shape: f32[1,128], index: 4, kind: input, shape index: {}]
  %s5 = inlined_call_operand.hbm [shape: f32[32,128], index: 5, kind: output, shape index: {}]
  %s6 = sld [smem:[#allocation0]]
  $region38: #{bayesian_conv_encoder_forward.1} parent=0
    _
  %s8 = ssub.s32 1, %s6
  %s9 = scalar_select 0, %s8, %s6
  $region1: #{bayesian_conv_encoder_forward.1} parent=0
    #allocation2 [shape = 'u8[786432]{0}', space=vmem, size = 0xc0000, scoped, tag = 'input window, operand 1, single buffered']
    #allocation3 [shape = 's32[1]{0}', space=sflag, size = 0x4, scoped, tag = 'scoped memory for bayesian_conv_encoder_forward.1']
    #allocation4 [shape = 's32[1]{0}', space=sflag, size = 0x4, scoped, tag = 'scoped memory for bayesian_conv_encoder_forward.1']
    #allocation5 [shape = 'u8[524288]{0}', space=vmem, size = 0x80000, scoped, tag = 'input window, operand 3, single buffered']
    #allocation6 [shape = 's32[1]{0}', space=sflag, size = 0x4, scoped, tag = 'scoped memory for bayesian_conv_encoder_forward.1']
    #allocation7 [shape = 'u8[16384]{0}', space=vmem, size = 0x4000, scoped, tag = 'output window, operand 0, single buffered']
    %10 = vsyncpa [#allocation3], 0
    %11 = vsyncpa [#allocation6], 0
    %12 = vsyncpa [#allocation4], 0
    // Predicated region
    $region2: #{bayesian_conv_encoder_forward.1} parent=1 // pred_check
      _
    $region3: #{bayesian_conv_encoder_forward.1} parent=1 // pred_check_branch
      %14 = sbr.rel (0) target = $region5
    $region4: #{bayesian_conv_encoder_forward.1} parent=1 // pred_region
      _
    $region5: #{bayesian_conv_encoder_forward.1} parent=1 // pred_fallthru
      _
    // Predicated region
    $region6: #{bayesian_conv_encoder_forward.1} parent=1 // pred_check
      _
    $region7: #{bayesian_conv_encoder_forward.1} parent=1 // pred_check_branch
      %16 = sbr.rel (0) target = $region9
    $region8: #{bayesian_conv_encoder_forward.1} parent=1 // pred_region
      %18 = vsyncadd [#allocation3], 0
      %s19 = sshll.u32 %s1, 4
      %s20 = int_to_ptr.hbm [resolvable:$true] %s19
      %s21 = sshll.u32 [#allocation2], 4
      %s22 = int_to_ptr.vmem [resolvable:$true] %s21
      %27 = dma.hbm_to_vmem [thread:$0]  %s20, 24576, %s22, [#allocation3], 64, 64, 4
    $region9: #{bayesian_conv_encoder_forward.1} parent=1 // pred_fallthru
      _
    // Predicated region
    $region10: #{bayesian_conv_encoder_forward.1} parent=1 // pred_check
      _
    $region11: #{bayesian_conv_encoder_forward.1} parent=1 // pred_check_branch
      %29 = sbr.rel (0) target = $region13
    $region12: #{bayesian_conv_encoder_forward.1} parent=1 // pred_region
      _
    $region13: #{bayesian_conv_encoder_forward.1} parent=1 // pred_fallthru
      _
    // Predicated region
    $region14: #{bayesian_conv_encoder_forward.1} parent=1 // pred_check
      _
    $region15: #{bayesian_conv_encoder_forward.1} parent=1 // pred_check_branch
      %31 = sbr.rel (0) target = $region17
    $region16: #{bayesian_conv_encoder_forward.1} parent=1 // pred_region
      %33 = vsyncadd [#allocation6], 0
      %s34 = sshll.u32 %s3, 4
      %s35 = int_to_ptr.hbm [resolvable:$true] %s34
      %s36 = sshll.u32 [#allocation5], 4
      %s37 = int_to_ptr.vmem [resolvable:$true] %s36
      %42 = dma.hbm_to_vmem [thread:$0]  %s35, 16384, %s37, [#allocation6], 64, 64, 4
    $region17: #{bayesian_conv_encoder_forward.1} parent=1 // pred_fallthru
      _
    // Predicated region
    $region18: #{bayesian_conv_encoder_forward.1} parent=1 // pred_check
      _
    $region19: #{bayesian_conv_encoder_forward.1} parent=1 // pred_check_branch
      %44 = sbr.rel (0) target = $region21
    $region20: #{bayesian_conv_encoder_forward.1} parent=1 // pred_region
      _
    $region21: #{bayesian_conv_encoder_forward.1} parent=1 // pred_fallthru
      _
    // Predicated region
    $region22: #{bayesian_conv_encoder_forward.1} parent=1 // pred_check
      _
    $region23: #{bayesian_conv_encoder_forward.1} parent=1 // pred_check_branch
      %46 = sbr.rel (0) target = $region25
    $region24: #{bayesian_conv_encoder_forward.1} parent=1 // pred_region
      %48 = dma.done [#allocation3], 24576
    $region25: #{bayesian_conv_encoder_forward.1} parent=1 // pred_fallthru
      _
    // Predicated region
    $region26: #{bayesian_conv_encoder_forward.1} parent=1 // pred_check
      _
    $region27: #{bayesian_conv_encoder_forward.1} parent=1 // pred_check_branch
      %50 = sbr.rel (0) target = $region29
    $region28: #{bayesian_conv_encoder_forward.1} parent=1 // pred_region
      %52 = dma.done [#allocation6], 16384
    $region29: #{bayesian_conv_encoder_forward.1} parent=1 // pred_fallthru
      _
    %v53 = vld [vmem:[%s0] sm:$0xf]
    %v54 = vld [vmem:[%s0 + $0x4] sm:$0xf]
    %v55 = vld [vmem:[%s0 + $0x8] sm:$0xf]
    %v56 = vld [vmem:[%s0 + $0xc] sm:$0xf]
    %v57 = vld [vmem:[%s0 + $0x10] sm:$0xf]
    %v58 = vld [vmem:[%s0 + $0x14] sm:$0xf]
    %v59 = vld [vmem:[%s0 + $0x18] sm:$0xf]
    %v60 = vld [vmem:[%s0 + $0x1c] sm:$0xf]
    %v61 = vld [vmem:[%s0 + $0x20] sm:$0xf]
    %v62 = vld [vmem:[%s0 + $0x24] sm:$0xf]
    %v63 = vld [vmem:[%s0 + $0x28] sm:$0xf]
    %v64 = vld [vmem:[%s0 + $0x2c] sm:$0xf]
    %v65 = vld [vmem:[%s0 + $0x30] sm:$0xf]
    %v66 = vld [vmem:[%s0 + $0x34] sm:$0xf]
    %v67 = vld [vmem:[%s0 + $0x38] sm:$0xf]
    %v68 = vld [vmem:[%s0 + $0x3c] sm:$0xf]
    %v69 = vld [vmem:[%s0 + $0x40] sm:$0xf]
    %v70 = vld [vmem:[%s0 + $0x44] sm:$0xf]
    %v71 = vld [vmem:[%s0 + $0x48] sm:$0xf]
    %v72 = vld [vmem:[%s0 + $0x4c] sm:$0xf]
    %v73 = vld [vmem:[%s0 + $0x50] sm:$0xf]
    %v74 = vld [vmem:[%s0 + $0x54] sm:$0xf]
    %v75 = vld [vmem:[%s0 + $0x58] sm:$0xf]
    %v76 = vld [vmem:[%s0 + $0x5c] sm:$0xf]
    %v77 = vld [vmem:[%s0 + $0x60] sm:$0xf]
    %v78 = vld [vmem:[%s0 + $0x64] sm:$0xf]
    %v79 = vld [vmem:[%s0 + $0x68] sm:$0xf]
    %v80 = vld [vmem:[%s0 + $0x6c] sm:$0xf]
    %v81 = vld [vmem:[%s0 + $0x70] sm:$0xf]
    %v82 = vld [vmem:[%s0 + $0x74] sm:$0xf]
    %v83 = vld [vmem:[%s0 + $0x78] sm:$0xf]
    %v84 = vld [vmem:[%s0 + $0x7c] sm:$0xf]
    %v85 = vld [vmem:[%s0 + $0x80] sm:$0xf]
    %v86 = vld [vmem:[%s0 + $0x84] sm:$0xf]
    %v87 = vld [vmem:[%s0 + $0x88] sm:$0xf]
    %v88 = vld [vmem:[%s0 + $0x8c] sm:$0xf]
    %v89 = vld [vmem:[%s0 + $0x90] sm:$0xf]
    %v90 = vld [vmem:[%s0 + $0x94] sm:$0xf]
    %v91 = vld [vmem:[%s0 + $0x98] sm:$0xf]
    %v92 = vld [vmem:[%s0 + $0x9c] sm:$0xf]
    %v93 = vld [vmem:[%s0 + $0xa0] sm:$0xf]
    %v94 = vld [vmem:[%s0 + $0xa4] sm:$0xf]
    %v95 = vld [vmem:[%s0 + $0xa8] sm:$0xf]
    %v96 = vld [vmem:[%s0 + $0xac] sm:$0xf]
    %v97 = vld [vmem:[%s0 + $0xb0] sm:$0xf]
    %v98 = vld [vmem:[%s0 + $0xb4] sm:$0xf]
    %v99 = vld [vmem:[%s0 + $0xb8] sm:$0xf]
    %v100 = vld [vmem:[%s0 + $0xbc] sm:$0xf]
    %v101 = vld [vmem:[%s0 + $0xc0] sm:$0xf]
    %v102 = vld [vmem:[%s0 + $0xc4] sm:$0xf]
    %v103 = vld [vmem:[%s0 + $0xc8] sm:$0xf]
    %v104 = vld [vmem:[%s0 + $0xcc] sm:$0xf]
    %v105 = vld [vmem:[%s0 + $0xd0] sm:$0xf]
    %v106 = vld [vmem:[%s0 + $0xd4] sm:$0xf]
    %v107 = vld [vmem:[%s0 + $0xd8] sm:$0xf]
    %v108 = vld [vmem:[%s0 + $0xdc] sm:$0xf]
    %v109 = vld [vmem:[%s0 + $0xe0] sm:$0xf]
    %v110 = vld [vmem:[%s0 + $0xe4] sm:$0xf]
    %v111 = vld [vmem:[%s0 + $0xe8] sm:$0xf]
    %v112 = vld [vmem:[%s0 + $0xec] sm:$0xf]
    %v113 = vld [vmem:[%s0 + $0xf0] sm:$0xf]
    %v114 = vld [vmem:[%s0 + $0xf4] sm:$0xf]
    %v115 = vld [vmem:[%s0 + $0xf8] sm:$0xf]
    %v116 = vld [vmem:[%s0 + $0xfc] sm:$0xf]
    %v117 = vld [vmem:[%s0 + $0x100] sm:$0xf]
    %v118 = vld [vmem:[%s0 + $0x104] sm:$0xf]
    %v119 = vld [vmem:[%s0 + $0x108] sm:$0xf]
    %v120 = vld [vmem:[%s0 + $0x10c] sm:$0xf]
    %v121 = vld [vmem:[%s0 + $0x110] sm:$0xf]
    %v122 = vld [vmem:[%s0 + $0x114] sm:$0xf]
    %v123 = vld [vmem:[%s0 + $0x118] sm:$0xf]
    %v124 = vld [vmem:[%s0 + $0x11c] sm:$0xf]
    %v125 = vld [vmem:[%s0 + $0x120] sm:$0xf]
    %v126 = vld [vmem:[%s0 + $0x124] sm:$0xf]
    %v127 = vld [vmem:[%s0 + $0x128] sm:$0xf]
    %v128 = vld [vmem:[%s0 + $0x12c] sm:$0xf]
    %v129 = vlaneseq
    %v130 = vshrl.u32 %v129, 7
    %v131 = vadd.s32 %v130, 8
    %v132 = vadd.s32 %v130, 16
    %v133 = vadd.s32 %v130, 24
    %v134 = vadd.s32 %v130, 32
    %v135 = vadd.s32 %v130, 40
    %v136 = vadd.s32 %v130, 48
    %v137 = vadd.s32 %v130, 56
    %v138 = vadd.s32 %v130, 64
    %v139 = vadd.s32 %v130, 72
    %v140 = vadd.s32 %v130, 80
    %v141 = vadd.s32 %v130, 88
    %v142 = vadd.s32 %v130, 96
    %v143 = vadd.s32 %v130, 104
    %v144 = vadd.s32 %v130, 112
    %v145 = vadd.s32 %v130, 120
    %v146 = vadd.s32 %v130, 128
    %v147 = vadd.s32 %v130, 136
    %v148 = vadd.s32 %v130, 144
    %v149 = vadd.s32 %v130, 152
    %v150 = vadd.s32 %v130, 160
    %v151 = vadd.s32 %v130, 168
    %v152 = vadd.s32 %v130, 176
    %v153 = vadd.s32 %v130, 184
    %v154 = vadd.s32 %v130, 192
    %v155 = vadd.s32 %v130, 200
    %v156 = vadd.s32 %v130, 208
    %v157 = vadd.s32 %v130, 216
    %v158 = vadd.s32 %v130, 224
    %v159 = vadd.s32 %v130, 232
    %v160 = vadd.s32 %v130, 240
    %v161 = vadd.s32 %v130, 248
    %v162 = vadd.s32 %v130, 256
    %v163 = vadd.s32 %v130, 264
    %v164 = vadd.s32 %v130, 272
    %v165 = vadd.s32 %v130, 280
    %v166 = vadd.s32 %v130, 288
    %v167 = vadd.s32 %v130, 296
    %v168 = vadd.s32 %v130, 304
    %v169 = vadd.s32 %v130, 312
    %v170 = vadd.s32 %v130, 320
    %v171 = vadd.s32 %v130, 328
    %v172 = vadd.s32 %v130, 336
    %v173 = vadd.s32 %v130, 344
    %v174 = vadd.s32 %v130, 352
    %v175 = vadd.s32 %v130, 360
    %v176 = vadd.s32 %v130, 368
    %v177 = vadd.s32 %v130, 376
    %v178 = vadd.s32 %v130, 384
    %v179 = vadd.s32 %v130, 392
    %v180 = vadd.s32 %v130, 400
    %v181 = vadd.s32 %v130, 408
    %v182 = vadd.s32 %v130, 416
    %v183 = vadd.s32 %v130, 424
    %v184 = vadd.s32 %v130, 432
    %v185 = vadd.s32 %v130, 440
    %v186 = vadd.s32 %v130, 448
    %v187 = vadd.s32 %v130, 456
    %v188 = vadd.s32 %v130, 464
    %v189 = vadd.s32 %v130, 472
    %v190 = vadd.s32 %v130, 480
    %v191 = vadd.s32 %v130, 488
    %v192 = vadd.s32 %v130, 496
    %v193 = vadd.s32 %v130, 504
    %v194 = vadd.s32 %v130, 512
    %v195 = vadd.s32 %v130, 520
    %v196 = vadd.s32 %v130, 528
    %v197 = vadd.s32 %v130, 536
    %v198 = vadd.s32 %v130, 544
    %v199 = vadd.s32 %v130, 552
    %v200 = vadd.s32 %v130, 560
    %v201 = vadd.s32 %v130, 568
    %v202 = vadd.s32 %v130, 576
    %v203 = vadd.s32 %v130, 584
    %v204 = vadd.s32 %v130, 592
    %v205 = vadd.s32 %v130, 600
    %vm206 = vcmp.ge.s32.totalorder %v130, 32
    %vm207 = vcmp.ge.s32.totalorder %v131, 32
    %vm208 = vcmp.ge.s32.totalorder %v132, 32
    %vm209 = vcmp.ge.s32.totalorder %v133, 32
    %vm210 = vcmp.ge.s32.totalorder %v134, 32
    %vm211 = vcmp.ge.s32.totalorder %v135, 32
    %vm212 = vcmp.ge.s32.totalorder %v136, 32
    %vm213 = vcmp.ge.s32.totalorder %v137, 32
    %vm214 = vcmp.ge.s32.totalorder %v138, 32
    %vm215 = vcmp.ge.s32.totalorder %v139, 32
    %vm216 = vcmp.ge.s32.totalorder %v140, 32
    %vm217 = vcmp.ge.s32.totalorder %v141, 32
    %vm218 = vcmp.ge.s32.totalorder %v142, 32
    %vm219 = vcmp.ge.s32.totalorder %v143, 32
    %vm220 = vcmp.ge.s32.totalorder %v144, 32
    %vm221 = vcmp.ge.s32.totalorder %v145, 32
    %vm222 = vcmp.ge.s32.totalorder %v146, 32
    %vm223 = vcmp.ge.s32.totalorder %v147, 32
    %vm224 = vcmp.ge.s32.totalorder %v148, 32
    %vm225 = vcmp.ge.s32.totalorder %v149, 32
    %vm226 = vcmp.ge.s32.totalorder %v150, 32
    %vm227 = vcmp.ge.s32.totalorder %v151, 32
    %vm228 = vcmp.ge.s32.totalorder %v152, 32
    %vm229 = vcmp.ge.s32.totalorder %v153, 32
    %vm230 = vcmp.ge.s32.totalorder %v154, 32
    %vm231 = vcmp.ge.s32.totalorder %v155, 32
    %vm232 = vcmp.ge.s32.totalorder %v156, 32
    %vm233 = vcmp.ge.s32.totalorder %v157, 32
    %vm234 = vcmp.ge.s32.totalorder %v158, 32
    %vm235 = vcmp.ge.s32.totalorder %v159, 32
    %vm236 = vcmp.ge.s32.totalorder %v160, 32
    %vm237 = vcmp.ge.s32.totalorder %v161, 32
    %vm238 = vcmp.ge.s32.totalorder %v162, 32
    %vm239 = vcmp.ge.s32.totalorder %v163, 32
    %vm240 = vcmp.ge.s32.totalorder %v164, 32
    %vm241 = vcmp.ge.s32.totalorder %v165, 32
    %vm242 = vcmp.ge.s32.totalorder %v166, 32
    %vm243 = vcmp.ge.s32.totalorder %v167, 32
    %vm244 = vcmp.ge.s32.totalorder %v168, 32
    %vm245 = vcmp.ge.s32.totalorder %v169, 32
    %vm246 = vcmp.ge.s32.totalorder %v170, 32
    %vm247 = vcmp.ge.s32.totalorder %v171, 32
    %vm248 = vcmp.ge.s32.totalorder %v172, 32
    %vm249 = vcmp.ge.s32.totalorder %v173, 32
    %vm250 = vcmp.ge.s32.totalorder %v174, 32
    %vm251 = vcmp.ge.s32.totalorder %v175, 32
    %vm252 = vcmp.ge.s32.totalorder %v176, 32
    %vm253 = vcmp.ge.s32.totalorder %v177, 32
    %vm254 = vcmp.ge.s32.totalorder %v178, 32
    %vm255 = vcmp.ge.s32.totalorder %v179, 32
    %vm256 = vcmp.ge.s32.totalorder %v180, 32
    %vm257 = vcmp.ge.s32.totalorder %v181, 32
    %vm258 = vcmp.ge.s32.totalorder %v182, 32
    %vm259 = vcmp.ge.s32.totalorder %v183, 32
    %vm260 = vcmp.ge.s32.totalorder %v184, 32
    %vm261 = vcmp.ge.s32.totalorder %v185, 32
    %vm262 = vcmp.ge.s32.totalorder %v186, 32
    %vm263 = vcmp.ge.s32.totalorder %v187, 32
    %vm264 = vcmp.ge.s32.totalorder %v188, 32
    %vm265 = vcmp.ge.s32.totalorder %v189, 32
    %vm266 = vcmp.ge.s32.totalorder %v190, 32
    %vm267 = vcmp.ge.s32.totalorder %v191, 32
    %vm268 = vcmp.ge.s32.totalorder %v192, 32
    %vm269 = vcmp.ge.s32.totalorder %v193, 32
    %vm270 = vcmp.ge.s32.totalorder %v194, 32
    %vm271 = vcmp.ge.s32.totalorder %v195, 32
    %vm272 = vcmp.ge.s32.totalorder %v196, 32
    %vm273 = vcmp.ge.s32.totalorder %v197, 32
    %vm274 = vcmp.ge.s32.totalorder %v198, 32
    %vm275 = vcmp.ge.s32.totalorder %v199, 32
    %vm276 = vcmp.ge.s32.totalorder %v200, 32
    %vm277 = vcmp.ge.s32.totalorder %v201, 32
    %vm278 = vcmp.ge.s32.totalorder %v202, 32
    %vm279 = vcmp.ge.s32.totalorder %v203, 32
    %vm280 = vcmp.ge.s32.totalorder %v204, 32
    %vm281 = vcmp.ge.s32.totalorder %v205, 32
    %vm282 = vcmp.lt.s32.totalorder %v130, 544
    %vm283 = vcmp.lt.s32.totalorder %v131, 544
    %vm284 = vcmp.lt.s32.totalorder %v132, 544
    %vm285 = vcmp.lt.s32.totalorder %v133, 544
    %vm286 = vcmp.lt.s32.totalorder %v134, 544
    %vm287 = vcmp.lt.s32.totalorder %v135, 544
    %vm288 = vcmp.lt.s32.totalorder %v136, 544
    %vm289 = vcmp.lt.s32.totalorder %v137, 544
    %vm290 = vcmp.lt.s32.totalorder %v138, 544
    %vm291 = vcmp.lt.s32.totalorder %v139, 544
    %vm292 = vcmp.lt.s32.totalorder %v140, 544
    %vm293 = vcmp.lt.s32.totalorder %v141, 544
    %vm294 = vcmp.lt.s32.totalorder %v142, 544
    %vm295 = vcmp.lt.s32.totalorder %v143, 544
    %vm296 = vcmp.lt.s32.totalorder %v144, 544
    %vm297 = vcmp.lt.s32.totalorder %v145, 544
    %vm298 = vcmp.lt.s32.totalorder %v146, 544
    %vm299 = vcmp.lt.s32.totalorder %v147, 544
    %vm300 = vcmp.lt.s32.totalorder %v148, 544
    %vm301 = vcmp.lt.s32.totalorder %v149, 544
    %vm302 = vcmp.lt.s32.totalorder %v150, 544
    %vm303 = vcmp.lt.s32.totalorder %v151, 544
    %vm304 = vcmp.lt.s32.totalorder %v152, 544
    %vm305 = vcmp.lt.s32.totalorder %v153, 544
    %vm306 = vcmp.lt.s32.totalorder %v154, 544
    %vm307 = vcmp.lt.s32.totalorder %v155, 544
    %vm308 = vcmp.lt.s32.totalorder %v156, 544
    %vm309 = vcmp.lt.s32.totalorder %v157, 544
    %vm310 = vcmp.lt.s32.totalorder %v158, 544
    %vm311 = vcmp.lt.s32.totalorder %v159, 544
    %vm312 = vcmp.lt.s32.totalorder %v160, 544
    %vm313 = vcmp.lt.s32.totalorder %v161, 544
    %vm314 = vcmp.lt.s32.totalorder %v162, 544
    %vm315 = vcmp.lt.s32.totalorder %v163, 544
    %vm316 = vcmp.lt.s32.totalorder %v164, 544
    %vm317 = vcmp.lt.s32.totalorder %v165, 544
    %vm318 = vcmp.lt.s32.totalorder %v166, 544
    %vm319 = vcmp.lt.s32.totalorder %v167, 544
    %vm320 = vcmp.lt.s32.totalorder %v168, 544
    %vm321 = vcmp.lt.s32.totalorder %v169, 544
    %vm322 = vcmp.lt.s32.totalorder %v170, 544
    %vm323 = vcmp.lt.s32.totalorder %v171, 544
    %vm324 = vcmp.lt.s32.totalorder %v172, 544
    %vm325 = vcmp.lt.s32.totalorder %v173, 544
    %vm326 = vcmp.lt.s32.totalorder %v174, 544
    %vm327 = vcmp.lt.s32.totalorder %v175, 544
    %vm328 = vcmp.lt.s32.totalorder %v176, 544
    %vm329 = vcmp.lt.s32.totalorder %v177, 544
    %vm330 = vcmp.lt.s32.totalorder %v178, 544
    %vm331 = vcmp.lt.s32.totalorder %v179, 544
    %vm332 = vcmp.lt.s32.totalorder %v180, 544
    %vm333 = vcmp.lt.s32.totalorder %v181, 544
    %vm334 = vcmp.lt.s32.totalorder %v182, 544
    %vm335 = vcmp.lt.s32.totalorder %v183, 544
    %vm336 = vcmp.lt.s32.totalorder %v184, 544
    %vm337 = vcmp.lt.s32.totalorder %v185, 544
    %vm338 = vcmp.lt.s32.totalorder %v186, 544
    %vm339 = vcmp.lt.s32.totalorder %v187, 544
    %vm340 = vcmp.lt.s32.totalorder %v188, 544
    %vm341 = vcmp.lt.s32.totalorder %v189, 544
    %vm342 = vcmp.lt.s32.totalorder %v190, 544
    %vm343 = vcmp.lt.s32.totalorder %v191, 544
    %vm344 = vcmp.lt.s32.totalorder %v192, 544
    %vm345 = vcmp.lt.s32.totalorder %v193, 544
    %vm346 = vcmp.lt.s32.totalorder %v194, 544
    %vm347 = vcmp.lt.s32.totalorder %v195, 544
    %vm348 = vcmp.lt.s32.totalorder %v196, 544
    %vm349 = vcmp.lt.s32.totalorder %v197, 544
    %vm350 = vcmp.lt.s32.totalorder %v198, 544
    %vm351 = vcmp.lt.s32.totalorder %v199, 544
    %vm352 = vcmp.lt.s32.totalorder %v200, 544
    %vm353 = vcmp.lt.s32.totalorder %v201, 544
    %vm354 = vcmp.lt.s32.totalorder %v202, 544
    %vm355 = vcmp.lt.s32.totalorder %v203, 544
    %vm356 = vcmp.lt.s32.totalorder %v204, 544
    %vm357 = vcmp.lt.s32.totalorder %v205, 544
    %vm358 = vmand %vm206, %vm282
    %vm359 = vmand %vm207, %vm283
    %vm360 = vmand %vm208, %vm284
    %vm361 = vmand %vm209, %vm285
    %vm362 = vmand %vm210, %vm286
    %vm363 = vmand %vm211, %vm287
    %vm364 = vmand %vm212, %vm288
    %vm365 = vmand %vm213, %vm289
    %vm366 = vmand %vm214, %vm290
    %vm367 = vmand %vm215, %vm291
    %vm368 = vmand %vm216, %vm292
    %vm369 = vmand %vm217, %vm293
    %vm370 = vmand %vm218, %vm294
    %vm371 = vmand %vm219, %vm295
    %vm372 = vmand %vm220, %vm296
    %vm373 = vmand %vm221, %vm297
    %vm374 = vmand %vm222, %vm298
    %vm375 = vmand %vm223, %vm299
    %vm376 = vmand %vm224, %vm300
    %vm377 = vmand %vm225, %vm301
    %vm378 = vmand %vm226, %vm302
    %vm379 = vmand %vm227, %vm303
    %vm380 = vmand %vm228, %vm304
    %vm381 = vmand %vm229, %vm305
    %vm382 = vmand %vm230, %vm306
    %vm383 = vmand %vm231, %vm307
    %vm384 = vmand %vm232, %vm308
    %vm385 = vmand %vm233, %vm309
    %vm386 = vmand %vm234, %vm310
    %vm387 = vmand %vm235, %vm311
    %vm388 = vmand %vm236, %vm312
    %vm389 = vmand %vm237, %vm313
    %vm390 = vmand %vm238, %vm314
    %vm391 = vmand %vm239, %vm315
    %vm392 = vmand %vm240, %vm316
    %vm393 = vmand %vm241, %vm317
    %vm394 = vmand %vm242, %vm318
    %vm395 = vmand %vm243, %vm319
    %vm396 = vmand %vm244, %vm320
    %vm397 = vmand %vm245, %vm321
    %vm398 = vmand %vm246, %vm322
    %vm399 = vmand %vm247, %vm323
    %vm400 = vmand %vm248, %vm324
    %vm401 = vmand %vm249, %vm325
    %vm402 = vmand %vm250, %vm326
    %vm403 = vmand %vm251, %vm327
    %vm404 = vmand %vm252, %vm328
    %vm405 = vmand %vm253, %vm329
    %vm406 = vmand %vm254, %vm330
    %vm407 = vmand %vm255, %vm331
    %vm408 = vmand %vm256, %vm332
    %vm409 = vmand %vm257, %vm333
    %vm410 = vmand %vm258, %vm334
    %vm411 = vmand %vm259, %vm335
    %vm412 = vmand %vm260, %vm336
    %vm413 = vmand %vm261, %vm337
    %vm414 = vmand %vm262, %vm338
    %vm415 = vmand %vm263, %vm339
    %vm416 = vmand %vm264, %vm340
    %vm417 = vmand %vm265, %vm341
    %vm418 = vmand %vm266, %vm342
    %vm419 = vmand %vm267, %vm343
    %vm420 = vmand %vm268, %vm344
    %vm421 = vmand %vm269, %vm345
    %vm422 = vmand %vm270, %vm346
    %vm423 = vmand %vm271, %vm347
    %vm424 = vmand %vm272, %vm348
    %vm425 = vmand %vm273, %vm349
    %vm426 = vmand %vm274, %vm350
    %vm427 = vmand %vm275, %vm351
    %vm428 = vmand %vm276, %vm352
    %vm429 = vmand %vm277, %vm353
    %vm430 = vmand %vm278, %vm354
    %vm431 = vmand %vm279, %vm355
    %vm432 = vmand %vm280, %vm356
    %vm433 = vmand %vm281, %vm357
    %v438 = vunpack.c.l.b16 %v125
    %v439 = vunpack.c.l.b16 %v126
    %v440 = vunpack.c.l.b16 %v127
    %v441 = vunpack.c.l.b16 %v128
    %v442 = vpack.c.b16 %v439, %v438
    %v443 = vpack.c.b16 %v441, %v440
    %v518 = vunpack.c.l.b16 %v53
    %v519 = vunpack.c.l.b16 %v54
    %v520 = vunpack.c.l.b16 %v55
    %v521 = vunpack.c.l.b16 %v56
    %v522 = vunpack.c.l.b16 %v57
    %v523 = vunpack.c.l.b16 %v58
    %v524 = vunpack.c.l.b16 %v59
    %v525 = vunpack.c.l.b16 %v60
    %v526 = vunpack.c.l.b16 %v61
    %v527 = vunpack.c.l.b16 %v62
    %v528 = vunpack.c.l.b16 %v63
    %v529 = vunpack.c.l.b16 %v64
    %v530 = vunpack.c.l.b16 %v65
    %v531 = vunpack.c.l.b16 %v66
    %v532 = vunpack.c.l.b16 %v67
    %v533 = vunpack.c.l.b16 %v68
    %v534 = vunpack.c.l.b16 %v69
    %v535 = vunpack.c.l.b16 %v70
    %v536 = vunpack.c.l.b16 %v71
    %v537 = vunpack.c.l.b16 %v72
    %v538 = vunpack.c.l.b16 %v73
    %v539 = vunpack.c.l.b16 %v74
    %v540 = vunpack.c.l.b16 %v75
    %v541 = vunpack.c.l.b16 %v76
    %v542 = vunpack.c.l.b16 %v77
    %v543 = vunpack.c.l.b16 %v78
    %v544 = vunpack.c.l.b16 %v79
    %v545 = vunpack.c.l.b16 %v80
    %v546 = vunpack.c.l.b16 %v81
    %v547 = vunpack.c.l.b16 %v82
    %v548 = vunpack.c.l.b16 %v83
    %v549 = vunpack.c.l.b16 %v84
    %v550 = vunpack.c.l.b16 %v85
    %v551 = vunpack.c.l.b16 %v86
    %v552 = vunpack.c.l.b16 %v87
    %v553 = vunpack.c.l.b16 %v88
    %v554 = vunpack.c.l.b16 %v89
    %v555 = vunpack.c.l.b16 %v90
    %v556 = vunpack.c.l.b16 %v91
    %v557 = vunpack.c.l.b16 %v92
    %v558 = vunpack.c.l.b16 %v93
    %v559 = vunpack.c.l.b16 %v94
    %v560 = vunpack.c.l.b16 %v95
    %v561 = vunpack.c.l.b16 %v96
    %v562 = vunpack.c.l.b16 %v97
    %v563 = vunpack.c.l.b16 %v98
    %v564 = vunpack.c.l.b16 %v99
    %v565 = vunpack.c.l.b16 %v100
    %v566 = vunpack.c.l.b16 %v101
    %v567 = vunpack.c.l.b16 %v102
    %v568 = vunpack.c.l.b16 %v103
    %v569 = vunpack.c.l.b16 %v104
    %v570 = vunpack.c.l.b16 %v105
    %v571 = vunpack.c.l.b16 %v106
    %v572 = vunpack.c.l.b16 %v107
    %v573 = vunpack.c.l.b16 %v108
    %v574 = vunpack.c.l.b16 %v109
    %v575 = vunpack.c.l.b16 %v110
    %v576 = vunpack.c.l.b16 %v111
    %v577 = vunpack.c.l.b16 %v112
    %v578 = vunpack.c.l.b16 %v113
    %v579 = vunpack.c.l.b16 %v114
    %v580 = vunpack.c.l.b16 %v115
    %v581 = vunpack.c.l.b16 %v116
    %v582 = vunpack.c.l.b16 %v117
    %v583 = vunpack.c.l.b16 %v118
    %v584 = vunpack.c.l.b16 %v119
    %v585 = vunpack.c.l.b16 %v120
    %v586 = vunpack.c.l.b16 %v121
    %v587 = vunpack.c.l.b16 %v122
    %v588 = vunpack.c.l.b16 %v123
    %v589 = vunpack.c.l.b16 %v124
    %v590 = vpack.c.b16 %v519, %v518
    %v591 = vpack.c.b16 %v521, %v520
    %v592 = vpack.c.b16 %v523, %v522
    %v593 = vpack.c.b16 %v525, %v524
    %v594 = vpack.c.b16 %v527, %v526
    %v595 = vpack.c.b16 %v529, %v528
    %v596 = vpack.c.b16 %v531, %v530
    %v597 = vpack.c.b16 %v533, %v532
    %v598 = vpack.c.b16 %v535, %v534
    %v599 = vpack.c.b16 %v537, %v536
    %v600 = vpack.c.b16 %v539, %v538
    %v601 = vpack.c.b16 %v541, %v540
    %v602 = vpack.c.b16 %v543, %v542
    %v603 = vpack.c.b16 %v545, %v544
    %v604 = vpack.c.b16 %v547, %v546
    %v605 = vpack.c.b16 %v549, %v548
    %v606 = vpack.c.b16 %v551, %v550
    %v607 = vpack.c.b16 %v553, %v552
    %v608 = vpack.c.b16 %v555, %v554
    %v609 = vpack.c.b16 %v557, %v556
    %v610 = vpack.c.b16 %v559, %v558
    %v611 = vpack.c.b16 %v561, %v560
    %v612 = vpack.c.b16 %v563, %v562
    %v613 = vpack.c.b16 %v565, %v564
    %v614 = vpack.c.b16 %v567, %v566
    %v615 = vpack.c.b16 %v569, %v568
    %v616 = vpack.c.b16 %v571, %v570
    %v617 = vpack.c.b16 %v573, %v572
    %v618 = vpack.c.b16 %v575, %v574
    %v619 = vpack.c.b16 %v577, %v576
    %v620 = vpack.c.b16 %v579, %v578
    %v621 = vpack.c.b16 %v581, %v580
    %v622 = vpack.c.b16 %v583, %v582
    %v623 = vpack.c.b16 %v585, %v584
    %v624 = vpack.c.b16 %v587, %v586
    %v625 = vpack.c.b16 %v589, %v588
    %v662 = vld [vmem:[#allocation2] sm:$0xf]
    %v663 = vld [vmem:[#allocation2 + $0x4] sm:$0xf]
    %v664 = vld [vmem:[#allocation2 + $0x8] sm:$0xf]
    %v665 = vld [vmem:[#allocation2 + $0xc] sm:$0xf]
    %v666 = vld [vmem:[#allocation2 + $0x10] sm:$0xf]
    %v667 = vld [vmem:[#allocation2 + $0x14] sm:$0xf]
    %v668 = vld [vmem:[#allocation2 + $0x18] sm:$0xf]
    %v669 = vld [vmem:[#allocation2 + $0x1c] sm:$0xf]
    %v670 = vld [vmem:[#allocation2 + $0x20] sm:$0xf]
    %v671 = vld [vmem:[#allocation2 + $0x24] sm:$0xf]
    %v672 = vld [vmem:[#allocation2 + $0x28] sm:$0xf]
    %v673 = vld [vmem:[#allocation2 + $0x2c] sm:$0xf]
    %v674 = vld [vmem:[#allocation2 + $0x30] sm:$0xf]
    %v675 = vld [vmem:[#allocation2 + $0x34] sm:$0xf]
    %v676 = vld [vmem:[#allocation2 + $0x38] sm:$0xf]
    %v677 = vld [vmem:[#allocation2 + $0x3c] sm:$0xf]
    %v678 = vld [vmem:[#allocation2 + $0x40] sm:$0xf]
    %v679 = vld [vmem:[#allocation2 + $0x44] sm:$0xf]
    %v680 = vld [vmem:[#allocation2 + $0x48] sm:$0xf]
    %v681 = vld [vmem:[#allocation2 + $0x4c] sm:$0xf]
    %v682 = vld [vmem:[#allocation2 + $0x50] sm:$0xf]
    %v683 = vld [vmem:[#allocation2 + $0x54] sm:$0xf]
    %v684 = vld [vmem:[#allocation2 + $0x58] sm:$0xf]
    %v685 = vld [vmem:[#allocation2 + $0x5c] sm:$0xf]
    %v686 = vld [vmem:[#allocation2 + $0x60] sm:$0xf]
    %v687 = vld [vmem:[#allocation2 + $0x64] sm:$0xf]
    %v688 = vld [vmem:[#allocation2 + $0x68] sm:$0xf]
    %v689 = vld [vmem:[#allocation2 + $0x6c] sm:$0xf]
    %v690 = vld [vmem:[#allocation2 + $0x70] sm:$0xf]
    %v691 = vld [vmem:[#allocation2 + $0x74] sm:$0xf]
    %v692 = vld [vmem:[#allocation2 + $0x78] sm:$0xf]
    %v693 = vld [vmem:[#allocation2 + $0x7c] sm:$0xf]
    %v694 = vld [vmem:[#allocation2 + $0x80] sm:$0xf]
    %v695 = vld [vmem:[#allocation2 + $0x84] sm:$0xf]
    %v696 = vld [vmem:[#allocation2 + $0x88] sm:$0xf]
    %v697 = vld [vmem:[#allocation2 + $0x8c] sm:$0xf]
    %v698 = vld [vmem:[#allocation2 + $0x90] sm:$0xf]
    %v699 = vld [vmem:[#allocation2 + $0x94] sm:$0xf]
    %v700 = vld [vmem:[#allocation2 + $0x98] sm:$0xf]
    %v701 = vld [vmem:[#allocation2 + $0x9c] sm:$0xf]
    %v702 = vld [vmem:[#allocation2 + $0xa0] sm:$0xf]
    %v703 = vld [vmem:[#allocation2 + $0xa4] sm:$0xf]
    %v704 = vld [vmem:[#allocation2 + $0xa8] sm:$0xf]
    %v705 = vld [vmem:[#allocation2 + $0xac] sm:$0xf]
    %v706 = vld [vmem:[#allocation2 + $0xb0] sm:$0xf]
    %v707 = vld [vmem:[#allocation2 + $0xb4] sm:$0xf]
    %v708 = vld [vmem:[#allocation2 + $0xb8] sm:$0xf]
    %v709 = vld [vmem:[#allocation2 + $0xbc] sm:$0xf]
    %v710 = vld [vmem:[#allocation2 + $0xc0] sm:$0xf]
    %v711 = vld [vmem:[#allocation2 + $0xc4] sm:$0xf]
    %v712 = vld [vmem:[#allocation2 + $0xc8] sm:$0xf]
    %v713 = vld [vmem:[#allocation2 + $0xcc] sm:$0xf]
    %v714 = vld [vmem:[#allocation2 + $0xd0] sm:$0xf]
    %v715 = vld [vmem:[#allocation2 + $0xd4] sm:$0xf]
    %v716 = vld [vmem:[#allocation2 + $0xd8] sm:$0xf]
    %v717 = vld [vmem:[#allocation2 + $0xdc] sm:$0xf]
    %v718 = vld [vmem:[#allocation2 + $0xe0] sm:$0xf]
    %v719 = vld [vmem:[#allocation2 + $0xe4] sm:$0xf]
    %v720 = vld [vmem:[#allocation2 + $0xe8] sm:$0xf]
    %v721 = vld [vmem:[#allocation2 + $0xec] sm:$0xf]
    %v722 = vld [vmem:[#allocation2 + $0xf0] sm:$0xf]
    %v723 = vld [vmem:[#allocation2 + $0xf4] sm:$0xf]
    %v724 = vld [vmem:[#allocation2 + $0xf8] sm:$0xf]
    %v725 = vld [vmem:[#allocation2 + $0xfc] sm:$0xf]
    %v726 = vld [vmem:[%s2] sm:$0x1]
    %v728 = vperm.slane %v726, 0
    %v794 = vunpack.c.l.b16 %v662
    %v795 = vunpack.c.l.b16 %v663
    %v796 = vunpack.c.l.b16 %v664
    %v797 = vunpack.c.l.b16 %v665
    %v798 = vunpack.c.l.b16 %v666
    %v799 = vunpack.c.l.b16 %v667
    %v800 = vunpack.c.l.b16 %v668
    %v801 = vunpack.c.l.b16 %v669
    %v802 = vunpack.c.l.b16 %v670
    %v803 = vunpack.c.l.b16 %v671
    %v804 = vunpack.c.l.b16 %v672
    %v805 = vunpack.c.l.b16 %v673
    %v806 = vunpack.c.l.b16 %v674
    %v807 = vunpack.c.l.b16 %v675
    %v808 = vunpack.c.l.b16 %v676
    %v809 = vunpack.c.l.b16 %v677
    %v810 = vunpack.c.l.b16 %v678
    %v811 = vunpack.c.l.b16 %v679
    %v812 = vunpack.c.l.b16 %v680
    %v813 = vunpack.c.l.b16 %v681
    %v814 = vunpack.c.l.b16 %v682
    %v815 = vunpack.c.l.b16 %v683
    %v816 = vunpack.c.l.b16 %v684
    %v817 = vunpack.c.l.b16 %v685
    %v818 = vunpack.c.l.b16 %v686
    %v819 = vunpack.c.l.b16 %v687
    %v820 = vunpack.c.l.b16 %v688
    %v821 = vunpack.c.l.b16 %v689
    %v822 = vunpack.c.l.b16 %v690
    %v823 = vunpack.c.l.b16 %v691
    %v824 = vunpack.c.l.b16 %v692
    %v825 = vunpack.c.l.b16 %v693
    %v826 = vunpack.c.l.b16 %v694
    %v827 = vunpack.c.l.b16 %v695
    %v828 = vunpack.c.l.b16 %v696
    %v829 = vunpack.c.l.b16 %v697
    %v830 = vunpack.c.l.b16 %v698
    %v831 = vunpack.c.l.b16 %v699
    %v832 = vunpack.c.l.b16 %v700
    %v833 = vunpack.c.l.b16 %v701
    %v834 = vunpack.c.l.b16 %v702
    %v835 = vunpack.c.l.b16 %v703
    %v836 = vunpack.c.l.b16 %v704
    %v837 = vunpack.c.l.b16 %v705
    %v838 = vunpack.c.l.b16 %v706
    %v839 = vunpack.c.l.b16 %v707
    %v840 = vunpack.c.l.b16 %v708
    %v841 = vunpack.c.l.b16 %v709
    %v842 = vunpack.c.l.b16 %v710
    %v843 = vunpack.c.l.b16 %v711
    %v844 = vunpack.c.l.b16 %v712
    %v845 = vunpack.c.l.b16 %v713
    %v846 = vunpack.c.l.b16 %v714
    %v847 = vunpack.c.l.b16 %v715
    %v848 = vunpack.c.l.b16 %v716
    %v849 = vunpack.c.l.b16 %v717
    %v850 = vunpack.c.l.b16 %v718
    %v851 = vunpack.c.l.b16 %v719
    %v852 = vunpack.c.l.b16 %v720
    %v853 = vunpack.c.l.b16 %v721
    %v854 = vunpack.c.l.b16 %v722
    %v855 = vunpack.c.l.b16 %v723
    %v856 = vunpack.c.l.b16 %v724
    %v857 = vunpack.c.l.b16 %v725
    %v858 = vpack.c.b16 %v795, %v794
    %v859 = vpack.c.b16 %v797, %v796
    %v860 = vpack.c.b16 %v799, %v798
    %v861 = vpack.c.b16 %v801, %v800
    %v862 = vpack.c.b16 %v803, %v802
    %v863 = vpack.c.b16 %v805, %v804
    %v864 = vpack.c.b16 %v807, %v806
    %v865 = vpack.c.b16 %v809, %v808
    %v866 = vpack.c.b16 %v811, %v810
    %v867 = vpack.c.b16 %v813, %v812
    %v868 = vpack.c.b16 %v815, %v814
    %v869 = vpack.c.b16 %v817, %v816
    %v870 = vpack.c.b16 %v819, %v818
    %v871 = vpack.c.b16 %v821, %v820
    %v872 = vpack.c.b16 %v823, %v822
    %v873 = vpack.c.b16 %v825, %v824
    %v874 = vpack.c.b16 %v827, %v826
    %v875 = vpack.c.b16 %v829, %v828
    %v876 = vpack.c.b16 %v831, %v830
    %v877 = vpack.c.b16 %v833, %v832
    %v878 = vpack.c.b16 %v835, %v834
    %v879 = vpack.c.b16 %v837, %v836
    %v880 = vpack.c.b16 %v839, %v838
    %v881 = vpack.c.b16 %v841, %v840
    %v882 = vpack.c.b16 %v843, %v842
    %v883 = vpack.c.b16 %v845, %v844
    %v884 = vpack.c.b16 %v847, %v846
    %v885 = vpack.c.b16 %v849, %v848
    %v886 = vpack.c.b16 %v851, %v850
    %v887 = vpack.c.b16 %v853, %v852
    %v888 = vpack.c.b16 %v855, %v854
    %v889 = vpack.c.b16 %v857, %v856
    %922 = vmatpush.bf16.msra.mxu0 %v865
    %923 = vmatpush.bf16.msra.mxu0 %v864
    %924 = vmatpush.bf16.msra.mxu0 %v863
    %925 = vmatpush.bf16.msra.mxu0 %v862
    %926 = vmatpush.bf16.msra.mxu0 %v861
    %927 = vmatpush.bf16.msra.mxu0 %v860
    %928 = vmatpush.bf16.msra.mxu0 %v859
    %929 = vmatpush.bf16.msra.mxu0 %v858
    %930 = vmatmul.bf16.gmra.mxu0 %v442
    %v931 = vpop.f32.mrf.mxu0
    %v932 = vadd.f32 %v728, %v931
    %v933 = vpop.f32.mrf.mxu0
    %v934 = vadd.f32 %v728, %v933
    %935 = vmatmul.bf16.gmra.mxu0 %v443
    %v936 = vpop.f32.mrf.mxu0
    %v937 = vadd.f32 %v728, %v936
    %v938 = vpop.f32.mrf.mxu0
    %v939 = vadd.f32 %v728, %v938
    %940 = vmatmul.bf16.gmra.mxu0 %v590
    %v941 = vpop.f32.mrf.mxu0
    %v942 = vadd.f32 %v728, %v941
    %v943 = vpop.f32.mrf.mxu0
    %v944 = vadd.f32 %v728, %v943
    %945 = vmatmul.bf16.gmra.mxu0 %v591
    %v946 = vpop.f32.mrf.mxu0
    %v947 = vadd.f32 %v728, %v946
    %v948 = vpop.f32.mrf.mxu0
    %v949 = vadd.f32 %v728, %v948
    %950 = vmatmul.bf16.gmra.mxu0 %v592
    %v951 = vpop.f32.mrf.mxu0
    %v952 = vadd.f32 %v728, %v951
    %v953 = vpop.f32.mrf.mxu0
    %v954 = vadd.f32 %v728, %v953
    %955 = vmatmul.bf16.gmra.mxu0 %v593
    %v956 = vpop.f32.mrf.mxu0
    %v957 = vadd.f32 %v728, %v956
    %v958 = vpop.f32.mrf.mxu0
    %v959 = vadd.f32 %v728, %v958
    %960 = vmatmul.bf16.gmra.mxu0 %v594
    %v961 = vpop.f32.mrf.mxu0
    %v962 = vadd.f32 %v728, %v961
    %v963 = vpop.f32.mrf.mxu0
    %v964 = vadd.f32 %v728, %v963
    %965 = vmatmul.bf16.gmra.mxu0 %v595
    %v966 = vpop.f32.mrf.mxu0
    %v967 = vadd.f32 %v728, %v966
    %v968 = vpop.f32.mrf.mxu0
    %v969 = vadd.f32 %v728, %v968
    %970 = vmatmul.bf16.gmra.mxu0 %v596
    %v971 = vpop.f32.mrf.mxu0
    %v972 = vadd.f32 %v728, %v971
    %v973 = vpop.f32.mrf.mxu0
    %v974 = vadd.f32 %v728, %v973
    %975 = vmatmul.bf16.gmra.mxu0 %v597
    %v976 = vpop.f32.mrf.mxu0
    %v977 = vadd.f32 %v728, %v976
    %v978 = vpop.f32.mrf.mxu0
    %v979 = vadd.f32 %v728, %v978
    %980 = vmatmul.bf16.gmra.mxu0 %v598
    %v981 = vpop.f32.mrf.mxu0
    %v982 = vadd.f32 %v728, %v981
    %v983 = vpop.f32.mrf.mxu0
    %v984 = vadd.f32 %v728, %v983
    %985 = vmatmul.bf16.gmra.mxu0 %v599
    %v986 = vpop.f32.mrf.mxu0
    %v987 = vadd.f32 %v728, %v986
    %v988 = vpop.f32.mrf.mxu0
    %v989 = vadd.f32 %v728, %v988
    %990 = vmatmul.bf16.gmra.mxu0 %v600
    %v991 = vpop.f32.mrf.mxu0
    %v992 = vadd.f32 %v728, %v991
    %v993 = vpop.f32.mrf.mxu0
    %v994 = vadd.f32 %v728, %v993
    %995 = vmatmul.bf16.gmra.mxu0 %v601
    %v996 = vpop.f32.mrf.mxu0
    %v997 = vadd.f32 %v728, %v996
    %v998 = vpop.f32.mrf.mxu0
    %v999 = vadd.f32 %v728, %v998
    %1000 = vmatmul.bf16.gmra.mxu0 %v602
    %v1001 = vpop.f32.mrf.mxu0
    %v1002 = vadd.f32 %v728, %v1001
    %v1003 = vpop.f32.mrf.mxu0
    %v1004 = vadd.f32 %v728, %v1003
    %1005 = vmatmul.bf16.gmra.mxu0 %v603
    %v1006 = vpop.f32.mrf.mxu0
    %v1007 = vadd.f32 %v728, %v1006
    %v1008 = vpop.f32.mrf.mxu0
    %v1009 = vadd.f32 %v728, %v1008
    %1010 = vmatmul.bf16.gmra.mxu0 %v604
    %v1011 = vpop.f32.mrf.mxu0
    %v1012 = vadd.f32 %v728, %v1011
    %v1013 = vpop.f32.mrf.mxu0
    %v1014 = vadd.f32 %v728, %v1013
    %1015 = vmatmul.bf16.gmra.mxu0 %v605
    %v1016 = vpop.f32.mrf.mxu0
    %v1017 = vadd.f32 %v728, %v1016
    %v1018 = vpop.f32.mrf.mxu0
    %v1019 = vadd.f32 %v728, %v1018
    %1020 = vmatmul.bf16.gmra.mxu0 %v606
    %v1021 = vpop.f32.mrf.mxu0
    %v1022 = vadd.f32 %v728, %v1021
    %v1023 = vpop.f32.mrf.mxu0
    %v1024 = vadd.f32 %v728, %v1023
    %1025 = vmatmul.bf16.gmra.mxu0 %v607
    %v1026 = vpop.f32.mrf.mxu0
    %v1027 = vadd.f32 %v728, %v1026
    %v1028 = vpop.f32.mrf.mxu0
    %v1029 = vadd.f32 %v728, %v1028
    %1030 = vmatmul.bf16.gmra.mxu0 %v608
    %v1031 = vpop.f32.mrf.mxu0
    %v1032 = vadd.f32 %v728, %v1031
    %v1033 = vpop.f32.mrf.mxu0
    %v1034 = vadd.f32 %v728, %v1033
    %1035 = vmatmul.bf16.gmra.mxu0 %v609
    %v1036 = vpop.f32.mrf.mxu0
    %v1037 = vadd.f32 %v728, %v1036
    %v1038 = vpop.f32.mrf.mxu0
    %v1039 = vadd.f32 %v728, %v1038
    %1040 = vmatmul.bf16.gmra.mxu0 %v610
    %v1041 = vpop.f32.mrf.mxu0
    %v1042 = vadd.f32 %v728, %v1041
    %v1043 = vpop.f32.mrf.mxu0
    %v1044 = vadd.f32 %v728, %v1043
    %1045 = vmatmul.bf16.gmra.mxu0 %v611
    %v1046 = vpop.f32.mrf.mxu0
    %v1047 = vadd.f32 %v728, %v1046
    %v1048 = vpop.f32.mrf.mxu0
    %v1049 = vadd.f32 %v728, %v1048
    %1050 = vmatmul.bf16.gmra.mxu0 %v612
    %v1051 = vpop.f32.mrf.mxu0
    %v1052 = vadd.f32 %v728, %v1051
    %v1053 = vpop.f32.mrf.mxu0
    %v1054 = vadd.f32 %v728, %v1053
    %1055 = vmatmul.bf16.gmra.mxu0 %v613
    %v1056 = vpop.f32.mrf.mxu0
    %v1057 = vadd.f32 %v728, %v1056
    %v1058 = vpop.f32.mrf.mxu0
    %v1059 = vadd.f32 %v728, %v1058
    %1060 = vmatmul.bf16.gmra.mxu0 %v614
    %v1061 = vpop.f32.mrf.mxu0
    %v1062 = vadd.f32 %v728, %v1061
    %v1063 = vpop.f32.mrf.mxu0
    %v1064 = vadd.f32 %v728, %v1063
    %1065 = vmatmul.bf16.gmra.mxu0 %v615
    %v1066 = vpop.f32.mrf.mxu0
    %v1067 = vadd.f32 %v728, %v1066
    %v1068 = vpop.f32.mrf.mxu0
    %v1069 = vadd.f32 %v728, %v1068
    %1070 = vmatmul.bf16.gmra.mxu0 %v616
    %v1071 = vpop.f32.mrf.mxu0
    %v1072 = vadd.f32 %v728, %v1071
    %v1073 = vpop.f32.mrf.mxu0
    %v1074 = vadd.f32 %v728, %v1073
    %1075 = vmatmul.bf16.gmra.mxu0 %v617
    %v1076 = vpop.f32.mrf.mxu0
    %v1077 = vadd.f32 %v728, %v1076
    %v1078 = vpop.f32.mrf.mxu0
    %v1079 = vadd.f32 %v728, %v1078
    %1080 = vmatmul.bf16.gmra.mxu0 %v618
    %v1081 = vpop.f32.mrf.mxu0
    %v1082 = vadd.f32 %v728, %v1081
    %v1083 = vpop.f32.mrf.mxu0
    %v1084 = vadd.f32 %v728, %v1083
    %1085 = vmatmul.bf16.gmra.mxu0 %v619
    %v1086 = vpop.f32.mrf.mxu0
    %v1087 = vadd.f32 %v728, %v1086
    %v1088 = vpop.f32.mrf.mxu0
    %v1089 = vadd.f32 %v728, %v1088
    %1090 = vmatmul.bf16.gmra.mxu0 %v620
    %v1091 = vpop.f32.mrf.mxu0
    %v1092 = vadd.f32 %v728, %v1091
    %v1093 = vpop.f32.mrf.mxu0
    %v1094 = vadd.f32 %v728, %v1093
    %1095 = vmatmul.bf16.gmra.mxu0 %v621
    %v1096 = vpop.f32.mrf.mxu0
    %v1097 = vadd.f32 %v728, %v1096
    %v1098 = vpop.f32.mrf.mxu0
    %v1099 = vadd.f32 %v728, %v1098
    %1100 = vmatmul.bf16.gmra.mxu0 %v622
    %v1101 = vpop.f32.mrf.mxu0
    %v1102 = vadd.f32 %v728, %v1101
    %v1103 = vpop.f32.mrf.mxu0
    %v1104 = vadd.f32 %v728, %v1103
    %1105 = vmatmul.bf16.gmra.mxu0 %v623
    %v1106 = vpop.f32.mrf.mxu0
    %v1107 = vadd.f32 %v728, %v1106
    %v1108 = vpop.f32.mrf.mxu0
    %v1109 = vadd.f32 %v728, %v1108
    %1110 = vmatmul.bf16.gmra.mxu0 %v624
    %v1111 = vpop.f32.mrf.mxu0
    %v1112 = vadd.f32 %v728, %v1111
    %v1113 = vpop.f32.mrf.mxu0
    %v1114 = vadd.f32 %v728, %v1113
    %1115 = vmatmul.bf16.gmra.mxu0 %v625
    %v1116 = vpop.f32.mrf.mxu0
    %v1117 = vadd.f32 %v728, %v1116
    %v1118 = vpop.f32.mrf.mxu0
    %v1119 = vadd.f32 %v728, %v1118
    %1120 = vdwg.mxu0
    %1121 = vmatpush.bf16.msra.mxu0 %v873
    %1122 = vmatpush.bf16.msra.mxu0 %v872
    %1123 = vmatpush.bf16.msra.mxu0 %v871
    %1124 = vmatpush.bf16.msra.mxu0 %v870
    %1125 = vmatpush.bf16.msra.mxu0 %v869
    %1126 = vmatpush.bf16.msra.mxu0 %v868
    %1127 = vmatpush.bf16.msra.mxu0 %v867
    %1128 = vmatpush.bf16.msra.mxu0 %v866
    %1129 = vmatmul.bf16.gmra.mxu0 %v590
    %v1130 = vpop.f32.mrf.mxu0
    %v1131 = vadd.f32 %v932, %v1130
    %v1132 = vpop.f32.mrf.mxu0
    %v1133 = vadd.f32 %v934, %v1132
    %1134 = vmatmul.bf16.gmra.mxu0 %v591
    %v1135 = vpop.f32.mrf.mxu0
    %v1136 = vadd.f32 %v937, %v1135
    %v1137 = vpop.f32.mrf.mxu0
    %v1138 = vadd.f32 %v939, %v1137
    %1139 = vmatmul.bf16.gmra.mxu0 %v592
    %v1140 = vpop.f32.mrf.mxu0
    %v1141 = vadd.f32 %v942, %v1140
    %v1142 = vpop.f32.mrf.mxu0
    %v1143 = vadd.f32 %v944, %v1142
    %1144 = vmatmul.bf16.gmra.mxu0 %v593
    %v1145 = vpop.f32.mrf.mxu0
    %v1146 = vadd.f32 %v947, %v1145
    %v1147 = vpop.f32.mrf.mxu0
    %v1148 = vadd.f32 %v949, %v1147
    %1149 = vmatmul.bf16.gmra.mxu0 %v594
    %v1150 = vpop.f32.mrf.mxu0
    %v1151 = vadd.f32 %v952, %v1150
    %v1152 = vpop.f32.mrf.mxu0
    %v1153 = vadd.f32 %v954, %v1152
    %1154 = vmatmul.bf16.gmra.mxu0 %v595
    %v1155 = vpop.f32.mrf.mxu0
    %v1156 = vadd.f32 %v957, %v1155
    %v1157 = vpop.f32.mrf.mxu0
    %v1158 = vadd.f32 %v959, %v1157
    %1159 = vmatmul.bf16.gmra.mxu0 %v596
    %v1160 = vpop.f32.mrf.mxu0
    %v1161 = vadd.f32 %v962, %v1160
    %v1162 = vpop.f32.mrf.mxu0
    %v1163 = vadd.f32 %v964, %v1162
    %1164 = vmatmul.bf16.gmra.mxu0 %v597
    %v1165 = vpop.f32.mrf.mxu0
    %v1166 = vadd.f32 %v967, %v1165
    %v1167 = vpop.f32.mrf.mxu0
    %v1168 = vadd.f32 %v969, %v1167
    %1169 = vmatmul.bf16.gmra.mxu0 %v598
    %v1170 = vpop.f32.mrf.mxu0
    %v1171 = vadd.f32 %v972, %v1170
    %v1172 = vpop.f32.mrf.mxu0
    %v1173 = vadd.f32 %v974, %v1172
    %1174 = vmatmul.bf16.gmra.mxu0 %v599
    %v1175 = vpop.f32.mrf.mxu0
    %v1176 = vadd.f32 %v977, %v1175
    %v1177 = vpop.f32.mrf.mxu0
    %v1178 = vadd.f32 %v979, %v1177
    %1179 = vmatmul.bf16.gmra.mxu0 %v600
    %v1180 = vpop.f32.mrf.mxu0
    %v1181 = vadd.f32 %v982, %v1180
    %v1182 = vpop.f32.mrf.mxu0
    %v1183 = vadd.f32 %v984, %v1182
    %1184 = vmatmul.bf16.gmra.mxu0 %v601
    %v1185 = vpop.f32.mrf.mxu0
    %v1186 = vadd.f32 %v987, %v1185
    %v1187 = vpop.f32.mrf.mxu0
    %v1188 = vadd.f32 %v989, %v1187
    %1189 = vmatmul.bf16.gmra.mxu0 %v602
    %v1190 = vpop.f32.mrf.mxu0
    %v1191 = vadd.f32 %v992, %v1190
    %v1192 = vpop.f32.mrf.mxu0
    %v1193 = vadd.f32 %v994, %v1192
    %1194 = vmatmul.bf16.gmra.mxu0 %v603
    %v1195 = vpop.f32.mrf.mxu0
    %v1196 = vadd.f32 %v997, %v1195
    %v1197 = vpop.f32.mrf.mxu0
    %v1198 = vadd.f32 %v999, %v1197
    %1199 = vmatmul.bf16.gmra.mxu0 %v604
    %v1200 = vpop.f32.mrf.mxu0
    %v1201 = vadd.f32 %v1002, %v1200
    %v1202 = vpop.f32.mrf.mxu0
    %v1203 = vadd.f32 %v1004, %v1202
    %1204 = vmatmul.bf16.gmra.mxu0 %v605
    %v1205 = vpop.f32.mrf.mxu0
    %v1206 = vadd.f32 %v1007, %v1205
    %v1207 = vpop.f32.mrf.mxu0
    %v1208 = vadd.f32 %v1009, %v1207
    %1209 = vmatmul.bf16.gmra.mxu0 %v606
    %v1210 = vpop.f32.mrf.mxu0
    %v1211 = vadd.f32 %v1012, %v1210
    %v1212 = vpop.f32.mrf.mxu0
    %v1213 = vadd.f32 %v1014, %v1212
    %1214 = vmatmul.bf16.gmra.mxu0 %v607
    %v1215 = vpop.f32.mrf.mxu0
    %v1216 = vadd.f32 %v1017, %v1215
    %v1217 = vpop.f32.mrf.mxu0
    %v1218 = vadd.f32 %v1019, %v1217
    %1219 = vmatmul.bf16.gmra.mxu0 %v608
    %v1220 = vpop.f32.mrf.mxu0
    %v1221 = vadd.f32 %v1022, %v1220
    %v1222 = vpop.f32.mrf.mxu0
    %v1223 = vadd.f32 %v1024, %v1222
    %1224 = vmatmul.bf16.gmra.mxu0 %v609
    %v1225 = vpop.f32.mrf.mxu0
    %v1226 = vadd.f32 %v1027, %v1225
    %v1227 = vpop.f32.mrf.mxu0
    %v1228 = vadd.f32 %v1029, %v1227
    %1229 = vmatmul.bf16.gmra.mxu0 %v610
    %v1230 = vpop.f32.mrf.mxu0
    %v1231 = vadd.f32 %v1032, %v1230
    %v1232 = vpop.f32.mrf.mxu0
    %v1233 = vadd.f32 %v1034, %v1232
    %1234 = vmatmul.bf16.gmra.mxu0 %v611
    %v1235 = vpop.f32.mrf.mxu0
    %v1236 = vadd.f32 %v1037, %v1235
    %v1237 = vpop.f32.mrf.mxu0
    %v1238 = vadd.f32 %v1039, %v1237
    %1239 = vmatmul.bf16.gmra.mxu0 %v612
    %v1240 = vpop.f32.mrf.mxu0
    %v1241 = vadd.f32 %v1042, %v1240
    %v1242 = vpop.f32.mrf.mxu0
    %v1243 = vadd.f32 %v1044, %v1242
    %1244 = vmatmul.bf16.gmra.mxu0 %v613
    %v1245 = vpop.f32.mrf.mxu0
    %v1246 = vadd.f32 %v1047, %v1245
    %v1247 = vpop.f32.mrf.mxu0
    %v1248 = vadd.f32 %v1049, %v1247
    %1249 = vmatmul.bf16.gmra.mxu0 %v614
    %v1250 = vpop.f32.mrf.mxu0
    %v1251 = vadd.f32 %v1052, %v1250
    %v1252 = vpop.f32.mrf.mxu0
    %v1253 = vadd.f32 %v1054, %v1252
    %1254 = vmatmul.bf16.gmra.mxu0 %v615
    %v1255 = vpop.f32.mrf.mxu0
    %v1256 = vadd.f32 %v1057, %v1255
    %v1257 = vpop.f32.mrf.mxu0
    %v1258 = vadd.f32 %v1059, %v1257
    %1259 = vmatmul.bf16.gmra.mxu0 %v616
    %v1260 = vpop.f32.mrf.mxu0
    %v1261 = vadd.f32 %v1062, %v1260
    %v1262 = vpop.f32.mrf.mxu0
    %v1263 = vadd.f32 %v1064, %v1262
    %1264 = vmatmul.bf16.gmra.mxu0 %v617
    %v1265 = vpop.f32.mrf.mxu0
    %v1266 = vadd.f32 %v1067, %v1265
    %v1267 = vpop.f32.mrf.mxu0
    %v1268 = vadd.f32 %v1069, %v1267
    %1269 = vmatmul.bf16.gmra.mxu0 %v618
    %v1270 = vpop.f32.mrf.mxu0
    %v1271 = vadd.f32 %v1072, %v1270
    %v1272 = vpop.f32.mrf.mxu0
    %v1273 = vadd.f32 %v1074, %v1272
    %1274 = vmatmul.bf16.gmra.mxu0 %v619
    %v1275 = vpop.f32.mrf.mxu0
    %v1276 = vadd.f32 %v1077, %v1275
    %v1277 = vpop.f32.mrf.mxu0
    %v1278 = vadd.f32 %v1079, %v1277
    %1279 = vmatmul.bf16.gmra.mxu0 %v620
    %v1280 = vpop.f32.mrf.mxu0
    %v1281 = vadd.f32 %v1082, %v1280
    %v1282 = vpop.f32.mrf.mxu0
    %v1283 = vadd.f32 %v1084, %v1282
    %1284 = vmatmul.bf16.gmra.mxu0 %v621
    %v1285 = vpop.f32.mrf.mxu0
    %v1286 = vadd.f32 %v1087, %v1285
    %v1287 = vpop.f32.mrf.mxu0
    %v1288 = vadd.f32 %v1089, %v1287
    %1289 = vmatmul.bf16.gmra.mxu0 %v622
    %v1290 = vpop.f32.mrf.mxu0
    %v1291 = vadd.f32 %v1092, %v1290
    %v1292 = vpop.f32.mrf.mxu0
    %v1293 = vadd.f32 %v1094, %v1292
    %1294 = vmatmul.bf16.gmra.mxu0 %v623
    %v1295 = vpop.f32.mrf.mxu0
    %v1296 = vadd.f32 %v1097, %v1295
    %v1297 = vpop.f32.mrf.mxu0
    %v1298 = vadd.f32 %v1099, %v1297
    %1299 = vmatmul.bf16.gmra.mxu0 %v624
    %v1300 = vpop.f32.mrf.mxu0
    %v1301 = vadd.f32 %v1102, %v1300
    %v1302 = vpop.f32.mrf.mxu0
    %v1303 = vadd.f32 %v1104, %v1302
    %1304 = vmatmul.bf16.gmra.mxu0 %v625
    %v1305 = vpop.f32.mrf.mxu0
    %v1306 = vadd.f32 %v1107, %v1305
    %v1307 = vpop.f32.mrf.mxu0
    %v1308 = vadd.f32 %v1109, %v1307
    %1309 = vmatmul.bf16.gmra.mxu0 %v442
    %v1310 = vpop.f32.mrf.mxu0
    %v1311 = vadd.f32 %v1112, %v1310
    %v1312 = vpop.f32.mrf.mxu0
    %v1313 = vadd.f32 %v1114, %v1312
    %1314 = vmatmul.bf16.gmra.mxu0 %v443
    %v1315 = vpop.f32.mrf.mxu0
    %v1316 = vadd.f32 %v1117, %v1315
    %v1317 = vpop.f32.mrf.mxu0
    %v1318 = vadd.f32 %v1119, %v1317
    %1319 = vdwg.mxu0
    %1320 = vmatpush.bf16.msra.mxu0 %v881
    %1321 = vmatpush.bf16.msra.mxu0 %v880
    %1322 = vmatpush.bf16.msra.mxu0 %v879
    %1323 = vmatpush.bf16.msra.mxu0 %v878
    %1324 = vmatpush.bf16.msra.mxu0 %v877
    %1325 = vmatpush.bf16.msra.mxu0 %v876
    %1326 = vmatpush.bf16.msra.mxu0 %v875
    %1327 = vmatpush.bf16.msra.mxu0 %v874
    %1328 = vmatmul.bf16.gmra.mxu0 %v592
    %v1329 = vpop.f32.mrf.mxu0
    %v1330 = vadd.f32 %v1131, %v1329
    %v1331 = vpop.f32.mrf.mxu0
    %v1332 = vadd.f32 %v1133, %v1331
    %1333 = vmatmul.bf16.gmra.mxu0 %v593
    %v1334 = vpop.f32.mrf.mxu0
    %v1335 = vadd.f32 %v1136, %v1334
    %v1336 = vpop.f32.mrf.mxu0
    %v1337 = vadd.f32 %v1138, %v1336
    %1338 = vmatmul.bf16.gmra.mxu0 %v594
    %v1339 = vpop.f32.mrf.mxu0
    %v1340 = vadd.f32 %v1141, %v1339
    %v1341 = vpop.f32.mrf.mxu0
    %v1342 = vadd.f32 %v1143, %v1341
    %1343 = vmatmul.bf16.gmra.mxu0 %v595
    %v1344 = vpop.f32.mrf.mxu0
    %v1345 = vadd.f32 %v1146, %v1344
    %v1346 = vpop.f32.mrf.mxu0
    %v1347 = vadd.f32 %v1148, %v1346
    %1348 = vmatmul.bf16.gmra.mxu0 %v596
    %v1349 = vpop.f32.mrf.mxu0
    %v1350 = vadd.f32 %v1151, %v1349
    %v1351 = vpop.f32.mrf.mxu0
    %v1352 = vadd.f32 %v1153, %v1351
    %1353 = vmatmul.bf16.gmra.mxu0 %v597
    %v1354 = vpop.f32.mrf.mxu0
    %v1355 = vadd.f32 %v1156, %v1354
    %v1356 = vpop.f32.mrf.mxu0
    %v1357 = vadd.f32 %v1158, %v1356
    %1358 = vmatmul.bf16.gmra.mxu0 %v598
    %v1359 = vpop.f32.mrf.mxu0
    %v1360 = vadd.f32 %v1161, %v1359
    %v1361 = vpop.f32.mrf.mxu0
    %v1362 = vadd.f32 %v1163, %v1361
    %1363 = vmatmul.bf16.gmra.mxu0 %v599
    %v1364 = vpop.f32.mrf.mxu0
    %v1365 = vadd.f32 %v1166, %v1364
    %v1366 = vpop.f32.mrf.mxu0
    %v1367 = vadd.f32 %v1168, %v1366
    %1368 = vmatmul.bf16.gmra.mxu0 %v600
    %v1369 = vpop.f32.mrf.mxu0
    %v1370 = vadd.f32 %v1171, %v1369
    %v1371 = vpop.f32.mrf.mxu0
    %v1372 = vadd.f32 %v1173, %v1371
    %1373 = vmatmul.bf16.gmra.mxu0 %v601
    %v1374 = vpop.f32.mrf.mxu0
    %v1375 = vadd.f32 %v1176, %v1374
    %v1376 = vpop.f32.mrf.mxu0
    %v1377 = vadd.f32 %v1178, %v1376
    %1378 = vmatmul.bf16.gmra.mxu0 %v602
    %v1379 = vpop.f32.mrf.mxu0
    %v1380 = vadd.f32 %v1181, %v1379
    %v1381 = vpop.f32.mrf.mxu0
    %v1382 = vadd.f32 %v1183, %v1381
    %1383 = vmatmul.bf16.gmra.mxu0 %v603
    %v1384 = vpop.f32.mrf.mxu0
    %v1385 = vadd.f32 %v1186, %v1384
    %v1386 = vpop.f32.mrf.mxu0
    %v1387 = vadd.f32 %v1188, %v1386
    %1388 = vmatmul.bf16.gmra.mxu0 %v604
    %v1389 = vpop.f32.mrf.mxu0
    %v1390 = vadd.f32 %v1191, %v1389
    %v1391 = vpop.f32.mrf.mxu0
    %v1392 = vadd.f32 %v1193, %v1391
    %1393 = vmatmul.bf16.gmra.mxu0 %v605
    %v1394 = vpop.f32.mrf.mxu0
    %v1395 = vadd.f32 %v1196, %v1394
    %v1396 = vpop.f32.mrf.mxu0
    %v1397 = vadd.f32 %v1198, %v1396
    %1398 = vmatmul.bf16.gmra.mxu0 %v606
    %v1399 = vpop.f32.mrf.mxu0
    %v1400 = vadd.f32 %v1201, %v1399
    %v1401 = vpop.f32.mrf.mxu0
    %v1402 = vadd.f32 %v1203, %v1401
    %1403 = vmatmul.bf16.gmra.mxu0 %v607
    %v1404 = vpop.f32.mrf.mxu0
    %v1405 = vadd.f32 %v1206, %v1404
    %v1406 = vpop.f32.mrf.mxu0
    %v1407 = vadd.f32 %v1208, %v1406
    %1408 = vmatmul.bf16.gmra.mxu0 %v608
    %v1409 = vpop.f32.mrf.mxu0
    %v1410 = vadd.f32 %v1211, %v1409
    %v1411 = vpop.f32.mrf.mxu0
    %v1412 = vadd.f32 %v1213, %v1411
    %1413 = vmatmul.bf16.gmra.mxu0 %v609
    %v1414 = vpop.f32.mrf.mxu0
    %v1415 = vadd.f32 %v1216, %v1414
    %v1416 = vpop.f32.mrf.mxu0
    %v1417 = vadd.f32 %v1218, %v1416
    %1418 = vmatmul.bf16.gmra.mxu0 %v610
    %v1419 = vpop.f32.mrf.mxu0
    %v1420 = vadd.f32 %v1221, %v1419
    %v1421 = vpop.f32.mrf.mxu0
    %v1422 = vadd.f32 %v1223, %v1421
    %1423 = vmatmul.bf16.gmra.mxu0 %v611
    %v1424 = vpop.f32.mrf.mxu0
    %v1425 = vadd.f32 %v1226, %v1424
    %v1426 = vpop.f32.mrf.mxu0
    %v1427 = vadd.f32 %v1228, %v1426
    %1428 = vmatmul.bf16.gmra.mxu0 %v612
    %v1429 = vpop.f32.mrf.mxu0
    %v1430 = vadd.f32 %v1231, %v1429
    %v1431 = vpop.f32.mrf.mxu0
    %v1432 = vadd.f32 %v1233, %v1431
    %1433 = vmatmul.bf16.gmra.mxu0 %v613
    %v1434 = vpop.f32.mrf.mxu0
    %v1435 = vadd.f32 %v1236, %v1434
    %v1436 = vpop.f32.mrf.mxu0
    %v1437 = vadd.f32 %v1238, %v1436
    %1438 = vmatmul.bf16.gmra.mxu0 %v614
    %v1439 = vpop.f32.mrf.mxu0
    %v1440 = vadd.f32 %v1241, %v1439
    %v1441 = vpop.f32.mrf.mxu0
    %v1442 = vadd.f32 %v1243, %v1441
    %1443 = vmatmul.bf16.gmra.mxu0 %v615
    %v1444 = vpop.f32.mrf.mxu0
    %v1445 = vadd.f32 %v1246, %v1444
    %v1446 = vpop.f32.mrf.mxu0
    %v1447 = vadd.f32 %v1248, %v1446
    %1448 = vmatmul.bf16.gmra.mxu0 %v616
    %v1449 = vpop.f32.mrf.mxu0
    %v1450 = vadd.f32 %v1251, %v1449
    %v1451 = vpop.f32.mrf.mxu0
    %v1452 = vadd.f32 %v1253, %v1451
    %1453 = vmatmul.bf16.gmra.mxu0 %v617
    %v1454 = vpop.f32.mrf.mxu0
    %v1455 = vadd.f32 %v1256, %v1454
    %v1456 = vpop.f32.mrf.mxu0
    %v1457 = vadd.f32 %v1258, %v1456
    %1458 = vmatmul.bf16.gmra.mxu0 %v618
    %v1459 = vpop.f32.mrf.mxu0
    %v1460 = vadd.f32 %v1261, %v1459
    %v1461 = vpop.f32.mrf.mxu0
    %v1462 = vadd.f32 %v1263, %v1461
    %1463 = vmatmul.bf16.gmra.mxu0 %v619
    %v1464 = vpop.f32.mrf.mxu0
    %v1465 = vadd.f32 %v1266, %v1464
    %v1466 = vpop.f32.mrf.mxu0
    %v1467 = vadd.f32 %v1268, %v1466
    %1468 = vmatmul.bf16.gmra.mxu0 %v620
    %v1469 = vpop.f32.mrf.mxu0
    %v1470 = vadd.f32 %v1271, %v1469
    %v1471 = vpop.f32.mrf.mxu0
    %v1472 = vadd.f32 %v1273, %v1471
    %1473 = vmatmul.bf16.gmra.mxu0 %v621
    %v1474 = vpop.f32.mrf.mxu0
    %v1475 = vadd.f32 %v1276, %v1474
    %v1476 = vpop.f32.mrf.mxu0
    %v1477 = vadd.f32 %v1278, %v1476
    %1478 = vmatmul.bf16.gmra.mxu0 %v622
    %v1479 = vpop.f32.mrf.mxu0
    %v1480 = vadd.f32 %v1281, %v1479
    %v1481 = vpop.f32.mrf.mxu0
    %v1482 = vadd.f32 %v1283, %v1481
    %1483 = vmatmul.bf16.gmra.mxu0 %v623
    %v1484 = vpop.f32.mrf.mxu0
    %v1485 = vadd.f32 %v1286, %v1484
    %v1486 = vpop.f32.mrf.mxu0
    %v1487 = vadd.f32 %v1288, %v1486
    %1488 = vmatmul.bf16.gmra.mxu0 %v624
    %v1489 = vpop.f32.mrf.mxu0
    %v1490 = vadd.f32 %v1291, %v1489
    %v1491 = vpop.f32.mrf.mxu0
    %v1492 = vadd.f32 %v1293, %v1491
    %1493 = vmatmul.bf16.gmra.mxu0 %v625
    %v1494 = vpop.f32.mrf.mxu0
    %v1495 = vadd.f32 %v1296, %v1494
    %v1496 = vpop.f32.mrf.mxu0
    %v1497 = vadd.f32 %v1298, %v1496
    %1498 = vmatmul.bf16.gmra.mxu0 %v442
    %v1499 = vpop.f32.mrf.mxu0
    %v1500 = vadd.f32 %v1301, %v1499
    %v1501 = vpop.f32.mrf.mxu0
    %v1502 = vadd.f32 %v1303, %v1501
    %1503 = vmatmul.bf16.gmra.mxu0 %v443
    %v1504 = vpop.f32.mrf.mxu0
    %v1505 = vadd.f32 %v1306, %v1504
    %v1506 = vpop.f32.mrf.mxu0
    %v1507 = vadd.f32 %v1308, %v1506
    %1508 = vmatmul.bf16.gmra.mxu0 %v590
    %v1509 = vpop.f32.mrf.mxu0
    %v1510 = vadd.f32 %v1311, %v1509
    %v1511 = vpop.f32.mrf.mxu0
    %v1512 = vadd.f32 %v1313, %v1511
    %1513 = vmatmul.bf16.gmra.mxu0 %v591
    %v1514 = vpop.f32.mrf.mxu0
    %v1515 = vadd.f32 %v1316, %v1514
    %v1516 = vpop.f32.mrf.mxu0
    %v1517 = vadd.f32 %v1318, %v1516
    %1518 = vdwg.mxu0
    %1519 = vmatpush.bf16.msra.mxu0 %v889
    %1520 = vmatpush.bf16.msra.mxu0 %v888
    %1521 = vmatpush.bf16.msra.mxu0 %v887
    %1522 = vmatpush.bf16.msra.mxu0 %v886
    %1523 = vmatpush.bf16.msra.mxu0 %v885
    %1524 = vmatpush.bf16.msra.mxu0 %v884
    %1525 = vmatpush.bf16.msra.mxu0 %v883
    %1526 = vmatpush.bf16.msra.mxu0 %v882
    %1527 = vmatmul.bf16.gmra.mxu0 %v594
    %v1528 = vpop.f32.mrf.mxu0
    %v1529 = vadd.f32 %v1330, %v1528
    %v1530 = vpop.f32.mrf.mxu0
    %v1531 = vadd.f32 %v1332, %v1530
    %1532 = vmatmul.bf16.gmra.mxu0 %v595
    %v1533 = vpop.f32.mrf.mxu0
    %v1534 = vadd.f32 %v1335, %v1533
    %v1535 = vpop.f32.mrf.mxu0
    %v1536 = vadd.f32 %v1337, %v1535
    %1537 = vmatmul.bf16.gmra.mxu0 %v596
    %v1538 = vpop.f32.mrf.mxu0
    %v1539 = vadd.f32 %v1340, %v1538
    %v1540 = vpop.f32.mrf.mxu0
    %v1541 = vadd.f32 %v1342, %v1540
    %1542 = vmatmul.bf16.gmra.mxu0 %v597
    %v1543 = vpop.f32.mrf.mxu0
    %v1544 = vadd.f32 %v1345, %v1543
    %v1545 = vpop.f32.mrf.mxu0
    %v1546 = vadd.f32 %v1347, %v1545
    %1547 = vmatmul.bf16.gmra.mxu0 %v598
    %v1548 = vpop.f32.mrf.mxu0
    %v1549 = vadd.f32 %v1350, %v1548
    %v1550 = vpop.f32.mrf.mxu0
    %v1551 = vadd.f32 %v1352, %v1550
    %1552 = vmatmul.bf16.gmra.mxu0 %v599
    %v1553 = vpop.f32.mrf.mxu0
    %v1554 = vadd.f32 %v1355, %v1553
    %v1555 = vpop.f32.mrf.mxu0
    %v1556 = vadd.f32 %v1357, %v1555
    %1557 = vmatmul.bf16.gmra.mxu0 %v600
    %v1558 = vpop.f32.mrf.mxu0
    %v1559 = vadd.f32 %v1360, %v1558
    %v1560 = vpop.f32.mrf.mxu0
    %v1561 = vadd.f32 %v1362, %v1560
    %1562 = vmatmul.bf16.gmra.mxu0 %v601
    %v1563 = vpop.f32.mrf.mxu0
    %v1564 = vadd.f32 %v1365, %v1563
    %v1565 = vpop.f32.mrf.mxu0
    %v1566 = vadd.f32 %v1367, %v1565
    %1567 = vmatmul.bf16.gmra.mxu0 %v602
    %v1568 = vpop.f32.mrf.mxu0
    %v1569 = vadd.f32 %v1370, %v1568
    %v1570 = vpop.f32.mrf.mxu0
    %v1571 = vadd.f32 %v1372, %v1570
    %1572 = vmatmul.bf16.gmra.mxu0 %v603
    %v1573 = vpop.f32.mrf.mxu0
    %v1574 = vadd.f32 %v1375, %v1573
    %v1575 = vpop.f32.mrf.mxu0
    %v1576 = vadd.f32 %v1377, %v1575
    %1577 = vmatmul.bf16.gmra.mxu0 %v604
    %v1578 = vpop.f32.mrf.mxu0
    %v1579 = vadd.f32 %v1380, %v1578
    %v1580 = vpop.f32.mrf.mxu0
    %v1581 = vadd.f32 %v1382, %v1580
    %1582 = vmatmul.bf16.gmra.mxu0 %v605
    %v1583 = vpop.f32.mrf.mxu0
    %v1584 = vadd.f32 %v1385, %v1583
    %v1585 = vpop.f32.mrf.mxu0
    %v1586 = vadd.f32 %v1387, %v1585
    %1587 = vmatmul.bf16.gmra.mxu0 %v606
    %v1588 = vpop.f32.mrf.mxu0
    %v1589 = vadd.f32 %v1390, %v1588
    %v1590 = vpop.f32.mrf.mxu0
    %v1591 = vadd.f32 %v1392, %v1590
    %1592 = vmatmul.bf16.gmra.mxu0 %v607
    %v1593 = vpop.f32.mrf.mxu0
    %v1594 = vadd.f32 %v1395, %v1593
    %v1595 = vpop.f32.mrf.mxu0
    %v1596 = vadd.f32 %v1397, %v1595
    %1597 = vmatmul.bf16.gmra.mxu0 %v608
    %v1598 = vpop.f32.mrf.mxu0
    %v1599 = vadd.f32 %v1400, %v1598
    %v1600 = vpop.f32.mrf.mxu0
    %v1601 = vadd.f32 %v1402, %v1600
    %1602 = vmatmul.bf16.gmra.mxu0 %v609
    %v1603 = vpop.f32.mrf.mxu0
    %v1604 = vadd.f32 %v1405, %v1603
    %v1605 = vpop.f32.mrf.mxu0
    %v1606 = vadd.f32 %v1407, %v1605
    %1607 = vmatmul.bf16.gmra.mxu0 %v610
    %v1608 = vpop.f32.mrf.mxu0
    %v1609 = vadd.f32 %v1410, %v1608
    %v1610 = vpop.f32.mrf.mxu0
    %v1611 = vadd.f32 %v1412, %v1610
    %1612 = vmatmul.bf16.gmra.mxu0 %v611
    %v1613 = vpop.f32.mrf.mxu0
    %v1614 = vadd.f32 %v1415, %v1613
    %v1615 = vpop.f32.mrf.mxu0
    %v1616 = vadd.f32 %v1417, %v1615
    %1617 = vmatmul.bf16.gmra.mxu0 %v612
    %v1618 = vpop.f32.mrf.mxu0
    %v1619 = vadd.f32 %v1420, %v1618
    %v1620 = vpop.f32.mrf.mxu0
    %v1621 = vadd.f32 %v1422, %v1620
    %1622 = vmatmul.bf16.gmra.mxu0 %v613
    %v1623 = vpop.f32.mrf.mxu0
    %v1624 = vadd.f32 %v1425, %v1623
    %v1625 = vpop.f32.mrf.mxu0
    %v1626 = vadd.f32 %v1427, %v1625
    %1627 = vmatmul.bf16.gmra.mxu0 %v614
    %v1628 = vpop.f32.mrf.mxu0
    %v1629 = vadd.f32 %v1430, %v1628
    %v1630 = vpop.f32.mrf.mxu0
    %v1631 = vadd.f32 %v1432, %v1630
    %1632 = vmatmul.bf16.gmra.mxu0 %v615
    %v1633 = vpop.f32.mrf.mxu0
    %v1634 = vadd.f32 %v1435, %v1633
    %v1635 = vpop.f32.mrf.mxu0
    %v1636 = vadd.f32 %v1437, %v1635
    %1637 = vmatmul.bf16.gmra.mxu0 %v616
    %v1638 = vpop.f32.mrf.mxu0
    %v1639 = vadd.f32 %v1440, %v1638
    %v1640 = vpop.f32.mrf.mxu0
    %v1641 = vadd.f32 %v1442, %v1640
    %1642 = vmatmul.bf16.gmra.mxu0 %v617
    %v1643 = vpop.f32.mrf.mxu0
    %v1644 = vadd.f32 %v1445, %v1643
    %v1645 = vpop.f32.mrf.mxu0
    %v1646 = vadd.f32 %v1447, %v1645
    %1647 = vmatmul.bf16.gmra.mxu0 %v618
    %v1648 = vpop.f32.mrf.mxu0
    %v1649 = vadd.f32 %v1450, %v1648
    %v1650 = vpop.f32.mrf.mxu0
    %v1651 = vadd.f32 %v1452, %v1650
    %1652 = vmatmul.bf16.gmra.mxu0 %v619
    %v1653 = vpop.f32.mrf.mxu0
    %v1654 = vadd.f32 %v1455, %v1653
    %v1655 = vpop.f32.mrf.mxu0
    %v1656 = vadd.f32 %v1457, %v1655
    %1657 = vmatmul.bf16.gmra.mxu0 %v620
    %v1658 = vpop.f32.mrf.mxu0
    %v1659 = vadd.f32 %v1460, %v1658
    %v1660 = vpop.f32.mrf.mxu0
    %v1661 = vadd.f32 %v1462, %v1660
    %1662 = vmatmul.bf16.gmra.mxu0 %v621
    %v1663 = vpop.f32.mrf.mxu0
    %v1664 = vadd.f32 %v1465, %v1663
    %v1665 = vpop.f32.mrf.mxu0
    %v1666 = vadd.f32 %v1467, %v1665
    %1667 = vmatmul.bf16.gmra.mxu0 %v622
    %v1668 = vpop.f32.mrf.mxu0
    %v1669 = vadd.f32 %v1470, %v1668
    %v1670 = vpop.f32.mrf.mxu0
    %v1671 = vadd.f32 %v1472, %v1670
    %1672 = vmatmul.bf16.gmra.mxu0 %v623
    %v1673 = vpop.f32.mrf.mxu0
    %v1674 = vadd.f32 %v1475, %v1673
    %v1675 = vpop.f32.mrf.mxu0
    %v1676 = vadd.f32 %v1477, %v1675
    %1677 = vmatmul.bf16.gmra.mxu0 %v624
    %v1678 = vpop.f32.mrf.mxu0
    %v1679 = vadd.f32 %v1480, %v1678
    %v1680 = vpop.f32.mrf.mxu0
    %v1681 = vadd.f32 %v1482, %v1680
    %1682 = vmatmul.bf16.gmra.mxu0 %v625
    %v1683 = vpop.f32.mrf.mxu0
    %v1684 = vadd.f32 %v1485, %v1683
    %v1685 = vpop.f32.mrf.mxu0
    %v1686 = vadd.f32 %v1487, %v1685
    %1687 = vmatmul.bf16.gmra.mxu0 %v442
    %v1688 = vpop.f32.mrf.mxu0
    %v1689 = vadd.f32 %v1490, %v1688
    %v1690 = vpop.f32.mrf.mxu0
    %v1691 = vadd.f32 %v1492, %v1690
    %1692 = vmatmul.bf16.gmra.mxu0 %v443
    %v1693 = vpop.f32.mrf.mxu0
    %v1694 = vadd.f32 %v1495, %v1693
    %v1695 = vpop.f32.mrf.mxu0
    %v1696 = vadd.f32 %v1497, %v1695
    %1697 = vmatmul.bf16.gmra.mxu0 %v590
    %v1698 = vpop.f32.mrf.mxu0
    %v1699 = vadd.f32 %v1500, %v1698
    %v1700 = vpop.f32.mrf.mxu0
    %v1701 = vadd.f32 %v1502, %v1700
    %1702 = vmatmul.bf16.gmra.mxu0 %v591
    %v1703 = vpop.f32.mrf.mxu0
    %v1704 = vadd.f32 %v1505, %v1703
    %v1705 = vpop.f32.mrf.mxu0
    %v1706 = vadd.f32 %v1507, %v1705
    %1707 = vmatmul.bf16.gmra.mxu0 %v592
    %v1708 = vpop.f32.mrf.mxu0
    %v1709 = vadd.f32 %v1510, %v1708
    %v1710 = vpop.f32.mrf.mxu0
    %v1711 = vadd.f32 %v1512, %v1710
    %1712 = vmatmul.bf16.gmra.mxu0 %v593
    %v1713 = vpop.f32.mrf.mxu0
    %v1714 = vadd.f32 %v1515, %v1713
    %v1715 = vpop.f32.mrf.mxu0
    %v1716 = vadd.f32 %v1517, %v1715
    %1717 = vdwg.mxu0
    %v1718 = vmax.f32 %v1529, 0.0
    %v1719 = vmax.f32 %v1531, 0.0
    %v1720 = vmax.f32 %v1534, 0.0
    %v1721 = vmax.f32 %v1536, 0.0
    %v1722 = vmax.f32 %v1539, 0.0
    %v1723 = vmax.f32 %v1541, 0.0
    %v1724 = vmax.f32 %v1544, 0.0
    %v1725 = vmax.f32 %v1546, 0.0
    %v1726 = vmax.f32 %v1549, 0.0
    %v1727 = vmax.f32 %v1551, 0.0
    %v1728 = vmax.f32 %v1554, 0.0
    %v1729 = vmax.f32 %v1556, 0.0
    %v1730 = vmax.f32 %v1559, 0.0
    %v1731 = vmax.f32 %v1561, 0.0
    %v1732 = vmax.f32 %v1564, 0.0
    %v1733 = vmax.f32 %v1566, 0.0
    %v1734 = vmax.f32 %v1569, 0.0
    %v1735 = vmax.f32 %v1571, 0.0
    %v1736 = vmax.f32 %v1574, 0.0
    %v1737 = vmax.f32 %v1576, 0.0
    %v1738 = vmax.f32 %v1579, 0.0
    %v1739 = vmax.f32 %v1581, 0.0
    %v1740 = vmax.f32 %v1584, 0.0
    %v1741 = vmax.f32 %v1586, 0.0
    %v1742 = vmax.f32 %v1589, 0.0
    %v1743 = vmax.f32 %v1591, 0.0
    %v1744 = vmax.f32 %v1594, 0.0
    %v1745 = vmax.f32 %v1596, 0.0
    %v1746 = vmax.f32 %v1599, 0.0
    %v1747 = vmax.f32 %v1601, 0.0
    %v1748 = vmax.f32 %v1604, 0.0
    %v1749 = vmax.f32 %v1606, 0.0
    %v1750 = vmax.f32 %v1609, 0.0
    %v1751 = vmax.f32 %v1611, 0.0
    %v1752 = vmax.f32 %v1614, 0.0
    %v1753 = vmax.f32 %v1616, 0.0
    %v1754 = vmax.f32 %v1619, 0.0
    %v1755 = vmax.f32 %v1621, 0.0
    %v1756 = vmax.f32 %v1624, 0.0
    %v1757 = vmax.f32 %v1626, 0.0
    %v1758 = vmax.f32 %v1629, 0.0
    %v1759 = vmax.f32 %v1631, 0.0
    %v1760 = vmax.f32 %v1634, 0.0
    %v1761 = vmax.f32 %v1636, 0.0
    %v1762 = vmax.f32 %v1639, 0.0
    %v1763 = vmax.f32 %v1641, 0.0
    %v1764 = vmax.f32 %v1644, 0.0
    %v1765 = vmax.f32 %v1646, 0.0
    %v1766 = vmax.f32 %v1649, 0.0
    %v1767 = vmax.f32 %v1651, 0.0
    %v1768 = vmax.f32 %v1654, 0.0
    %v1769 = vmax.f32 %v1656, 0.0
    %v1770 = vmax.f32 %v1659, 0.0
    %v1771 = vmax.f32 %v1661, 0.0
    %v1772 = vmax.f32 %v1664, 0.0
    %v1773 = vmax.f32 %v1666, 0.0
    %v1774 = vmax.f32 %v1669, 0.0
    %v1775 = vmax.f32 %v1671, 0.0
    %v1776 = vmax.f32 %v1674, 0.0
    %v1777 = vmax.f32 %v1676, 0.0
    %v1778 = vmax.f32 %v1679, 0.0
    %v1779 = vmax.f32 %v1681, 0.0
    %v1780 = vmax.f32 %v1684, 0.0
    %v1781 = vmax.f32 %v1686, 0.0
    %v1782 = vmax.f32 %v1689, 0.0
    %v1783 = vmax.f32 %v1691, 0.0
    %v1784 = vmax.f32 %v1694, 0.0
    %v1785 = vmax.f32 %v1696, 0.0
    %v1786 = vmax.f32 %v1699, 0.0
    %v1787 = vmax.f32 %v1701, 0.0
    %v1788 = vmax.f32 %v1704, 0.0
    %v1789 = vmax.f32 %v1706, 0.0
    %v1790 = vmax.f32 %v1709, 0.0
    %v1791 = vmax.f32 %v1711, 0.0
    %v1792 = vmax.f32 %v1714, 0.0
    %v1793 = vmax.f32 %v1716, 0.0
    %v1794 = vsel %vm358, 1, 0
    %v1795 = vsel %vm359, 1, 0
    %v1796 = vsel %vm360, 1, 0
    %v1797 = vsel %vm361, 1, 0
    %v1798 = vsel %vm362, 1, 0
    %v1799 = vsel %vm363, 1, 0
    %v1800 = vsel %vm364, 1, 0
    %v1801 = vsel %vm365, 1, 0
    %v1802 = vsel %vm366, 1, 0
    %v1803 = vsel %vm367, 1, 0
    %v1804 = vsel %vm368, 1, 0
    %v1805 = vsel %vm369, 1, 0
    %v1806 = vsel %vm370, 1, 0
    %v1807 = vsel %vm371, 1, 0
    %v1808 = vsel %vm372, 1, 0
    %v1809 = vsel %vm373, 1, 0
    %v1810 = vsel %vm374, 1, 0
    %v1811 = vsel %vm375, 1, 0
    %v1812 = vsel %vm376, 1, 0
    %v1813 = vsel %vm377, 1, 0
    %v1814 = vsel %vm378, 1, 0
    %v1815 = vsel %vm379, 1, 0
    %v1816 = vsel %vm380, 1, 0
    %v1817 = vsel %vm381, 1, 0
    %v1818 = vsel %vm382, 1, 0
    %v1819 = vsel %vm383, 1, 0
    %v1820 = vsel %vm384, 1, 0
    %v1821 = vsel %vm385, 1, 0
    %v1822 = vsel %vm386, 1, 0
    %v1823 = vsel %vm387, 1, 0
    %v1824 = vsel %vm388, 1, 0
    %v1825 = vsel %vm389, 1, 0
    %v1826 = vsel %vm390, 1, 0
    %v1827 = vsel %vm391, 1, 0
    %v1828 = vsel %vm392, 1, 0
    %v1829 = vsel %vm393, 1, 0
    %v1830 = vsel %vm394, 1, 0
    %v1831 = vsel %vm395, 1, 0
    %v1832 = vsel %vm396, 1, 0
    %v1833 = vsel %vm397, 1, 0
    %v1834 = vsel %vm398, 1, 0
    %v1835 = vsel %vm399, 1, 0
    %v1836 = vsel %vm400, 1, 0
    %v1837 = vsel %vm401, 1, 0
    %v1838 = vsel %vm402, 1, 0
    %v1839 = vsel %vm403, 1, 0
    %v1840 = vsel %vm404, 1, 0
    %v1841 = vsel %vm405, 1, 0
    %v1842 = vsel %vm406, 1, 0
    %v1843 = vsel %vm407, 1, 0
    %v1844 = vsel %vm408, 1, 0
    %v1845 = vsel %vm409, 1, 0
    %v1846 = vsel %vm410, 1, 0
    %v1847 = vsel %vm411, 1, 0
    %v1848 = vsel %vm412, 1, 0
    %v1849 = vsel %vm413, 1, 0
    %v1850 = vsel %vm414, 1, 0
    %v1851 = vsel %vm415, 1, 0
    %v1852 = vsel %vm416, 1, 0
    %v1853 = vsel %vm417, 1, 0
    %v1854 = vsel %vm418, 1, 0
    %v1855 = vsel %vm419, 1, 0
    %v1856 = vsel %vm420, 1, 0
    %v1857 = vsel %vm421, 1, 0
    %v1858 = vsel %vm422, 1, 0
    %v1859 = vsel %vm423, 1, 0
    %v1860 = vsel %vm424, 1, 0
    %v1861 = vsel %vm425, 1, 0
    %v1862 = vsel %vm426, 1, 0
    %v1863 = vsel %vm427, 1, 0
    %v1864 = vsel %vm428, 1, 0
    %v1865 = vsel %vm429, 1, 0
    %v1866 = vsel %vm430, 1, 0
    %v1867 = vsel %vm431, 1, 0
    %v1868 = vsel %vm432, 1, 0
    %v1869 = vsel %vm433, 1, 0
    %vm1870 = vcmp.eq.s32.totalorder %v1794, 1
    %vm1871 = vcmp.eq.s32.totalorder %v1795, 1
    %vm1872 = vcmp.eq.s32.totalorder %v1796, 1
    %vm1873 = vcmp.eq.s32.totalorder %v1797, 1
    %vm1874 = vcmp.eq.s32.totalorder %v1798, 1
    %vm1875 = vcmp.eq.s32.totalorder %v1799, 1
    %vm1876 = vcmp.eq.s32.totalorder %v1800, 1
    %vm1877 = vcmp.eq.s32.totalorder %v1801, 1
    %vm1878 = vcmp.eq.s32.totalorder %v1802, 1
    %vm1879 = vcmp.eq.s32.totalorder %v1803, 1
    %vm1880 = vcmp.eq.s32.totalorder %v1804, 1
    %vm1881 = vcmp.eq.s32.totalorder %v1805, 1
    %vm1882 = vcmp.eq.s32.totalorder %v1806, 1
    %vm1883 = vcmp.eq.s32.totalorder %v1807, 1
    %vm1884 = vcmp.eq.s32.totalorder %v1808, 1
    %vm1885 = vcmp.eq.s32.totalorder %v1809, 1
    %vm1886 = vcmp.eq.s32.totalorder %v1810, 1
    %vm1887 = vcmp.eq.s32.totalorder %v1811, 1
    %vm1888 = vcmp.eq.s32.totalorder %v1812, 1
    %vm1889 = vcmp.eq.s32.totalorder %v1813, 1
    %vm1890 = vcmp.eq.s32.totalorder %v1814, 1
    %vm1891 = vcmp.eq.s32.totalorder %v1815, 1
    %vm1892 = vcmp.eq.s32.totalorder %v1816, 1
    %vm1893 = vcmp.eq.s32.totalorder %v1817, 1
    %vm1894 = vcmp.eq.s32.totalorder %v1818, 1
    %vm1895 = vcmp.eq.s32.totalorder %v1819, 1
    %vm1896 = vcmp.eq.s32.totalorder %v1820, 1
    %vm1897 = vcmp.eq.s32.totalorder %v1821, 1
    %vm1898 = vcmp.eq.s32.totalorder %v1822, 1
    %vm1899 = vcmp.eq.s32.totalorder %v1823, 1
    %vm1900 = vcmp.eq.s32.totalorder %v1824, 1
    %vm1901 = vcmp.eq.s32.totalorder %v1825, 1
    %vm1902 = vcmp.eq.s32.totalorder %v1826, 1
    %vm1903 = vcmp.eq.s32.totalorder %v1827, 1
    %vm1904 = vcmp.eq.s32.totalorder %v1828, 1
    %vm1905 = vcmp.eq.s32.totalorder %v1829, 1
    %vm1906 = vcmp.eq.s32.totalorder %v1830, 1
    %vm1907 = vcmp.eq.s32.totalorder %v1831, 1
    %vm1908 = vcmp.eq.s32.totalorder %v1832, 1
    %vm1909 = vcmp.eq.s32.totalorder %v1833, 1
    %vm1910 = vcmp.eq.s32.totalorder %v1834, 1
    %vm1911 = vcmp.eq.s32.totalorder %v1835, 1
    %vm1912 = vcmp.eq.s32.totalorder %v1836, 1
    %vm1913 = vcmp.eq.s32.totalorder %v1837, 1
    %vm1914 = vcmp.eq.s32.totalorder %v1838, 1
    %vm1915 = vcmp.eq.s32.totalorder %v1839, 1
    %vm1916 = vcmp.eq.s32.totalorder %v1840, 1
    %vm1917 = vcmp.eq.s32.totalorder %v1841, 1
    %vm1918 = vcmp.eq.s32.totalorder %v1842, 1
    %vm1919 = vcmp.eq.s32.totalorder %v1843, 1
    %vm1920 = vcmp.eq.s32.totalorder %v1844, 1
    %vm1921 = vcmp.eq.s32.totalorder %v1845, 1
    %vm1922 = vcmp.eq.s32.totalorder %v1846, 1
    %vm1923 = vcmp.eq.s32.totalorder %v1847, 1
    %vm1924 = vcmp.eq.s32.totalorder %v1848, 1
    %vm1925 = vcmp.eq.s32.totalorder %v1849, 1
    %vm1926 = vcmp.eq.s32.totalorder %v1850, 1
    %vm1927 = vcmp.eq.s32.totalorder %v1851, 1
    %vm1928 = vcmp.eq.s32.totalorder %v1852, 1
    %vm1929 = vcmp.eq.s32.totalorder %v1853, 1
    %vm1930 = vcmp.eq.s32.totalorder %v1854, 1
    %vm1931 = vcmp.eq.s32.totalorder %v1855, 1
    %vm1932 = vcmp.eq.s32.totalorder %v1856, 1
    %vm1933 = vcmp.eq.s32.totalorder %v1857, 1
    %vm1934 = vcmp.eq.s32.totalorder %v1858, 1
    %vm1935 = vcmp.eq.s32.totalorder %v1859, 1
    %vm1936 = vcmp.eq.s32.totalorder %v1860, 1
    %vm1937 = vcmp.eq.s32.totalorder %v1861, 1
    %vm1938 = vcmp.eq.s32.totalorder %v1862, 1
    %vm1939 = vcmp.eq.s32.totalorder %v1863, 1
    %vm1940 = vcmp.eq.s32.totalorder %v1864, 1
    %vm1941 = vcmp.eq.s32.totalorder %v1865, 1
    %vm1942 = vcmp.eq.s32.totalorder %v1866, 1
    %vm1943 = vcmp.eq.s32.totalorder %v1867, 1
    %vm1944 = vcmp.eq.s32.totalorder %v1868, 1
    %vm1945 = vcmp.eq.s32.totalorder %v1869, 1
    %v1946 = vsel %vm1870, %v1718, 0.0
    %v1947 = vsel %vm1871, %v1719, 0.0
    %v1948 = vsel %vm1872, %v1720, 0.0
    %v1949 = vsel %vm1873, %v1721, 0.0
    %v1950 = vsel %vm1874, %v1722, 0.0
    %v1951 = vsel %vm1875, %v1723, 0.0
    %v1952 = vsel %vm1876, %v1724, 0.0
    %v1953 = vsel %vm1877, %v1725, 0.0
    %v1954 = vsel %vm1878, %v1726, 0.0
    %v1955 = vsel %vm1879, %v1727, 0.0
    %v1956 = vsel %vm1880, %v1728, 0.0
    %v1957 = vsel %vm1881, %v1729, 0.0
    %v1958 = vsel %vm1882, %v1730, 0.0
    %v1959 = vsel %vm1883, %v1731, 0.0
    %v1960 = vsel %vm1884, %v1732, 0.0
    %v1961 = vsel %vm1885, %v1733, 0.0
    %v1962 = vsel %vm1886, %v1734, 0.0
    %v1963 = vsel %vm1887, %v1735, 0.0
    %v1964 = vsel %vm1888, %v1736, 0.0
    %v1965 = vsel %vm1889, %v1737, 0.0
    %v1966 = vsel %vm1890, %v1738, 0.0
    %v1967 = vsel %vm1891, %v1739, 0.0
    %v1968 = vsel %vm1892, %v1740, 0.0
    %v1969 = vsel %vm1893, %v1741, 0.0
    %v1970 = vsel %vm1894, %v1742, 0.0
    %v1971 = vsel %vm1895, %v1743, 0.0
    %v1972 = vsel %vm1896, %v1744, 0.0
    %v1973 = vsel %vm1897, %v1745, 0.0
    %v1974 = vsel %vm1898, %v1746, 0.0
    %v1975 = vsel %vm1899, %v1747, 0.0
    %v1976 = vsel %vm1900, %v1748, 0.0
    %v1977 = vsel %vm1901, %v1749, 0.0
    %v1978 = vsel %vm1902, %v1750, 0.0
    %v1979 = vsel %vm1903, %v1751, 0.0
    %v1980 = vsel %vm1904, %v1752, 0.0
    %v1981 = vsel %vm1905, %v1753, 0.0
    %v1982 = vsel %vm1906, %v1754, 0.0
    %v1983 = vsel %vm1907, %v1755, 0.0
    %v1984 = vsel %vm1908, %v1756, 0.0
    %v1985 = vsel %vm1909, %v1757, 0.0
    %v1986 = vsel %vm1910, %v1758, 0.0
    %v1987 = vsel %vm1911, %v1759, 0.0
    %v1988 = vsel %vm1912, %v1760, 0.0
    %v1989 = vsel %vm1913, %v1761, 0.0
    %v1990 = vsel %vm1914, %v1762, 0.0
    %v1991 = vsel %vm1915, %v1763, 0.0
    %v1992 = vsel %vm1916, %v1764, 0.0
    %v1993 = vsel %vm1917, %v1765, 0.0
    %v1994 = vsel %vm1918, %v1766, 0.0
    %v1995 = vsel %vm1919, %v1767, 0.0
    %v1996 = vsel %vm1920, %v1768, 0.0
    %v1997 = vsel %vm1921, %v1769, 0.0
    %v1998 = vsel %vm1922, %v1770, 0.0
    %v1999 = vsel %vm1923, %v1771, 0.0
    %v2000 = vsel %vm1924, %v1772, 0.0
    %v2001 = vsel %vm1925, %v1773, 0.0
    %v2002 = vsel %vm1926, %v1774, 0.0
    %v2003 = vsel %vm1927, %v1775, 0.0
    %v2004 = vsel %vm1928, %v1776, 0.0
    %v2005 = vsel %vm1929, %v1777, 0.0
    %v2006 = vsel %vm1930, %v1778, 0.0
    %v2007 = vsel %vm1931, %v1779, 0.0
    %v2008 = vsel %vm1932, %v1780, 0.0
    %v2009 = vsel %vm1933, %v1781, 0.0
    %v2010 = vsel %vm1934, %v1782, 0.0
    %v2011 = vsel %vm1935, %v1783, 0.0
    %v2012 = vsel %vm1936, %v1784, 0.0
    %v2013 = vsel %vm1937, %v1785, 0.0
    %v2014 = vsel %vm1938, %v1786, 0.0
    %v2015 = vsel %vm1939, %v1787, 0.0
    %v2016 = vsel %vm1940, %v1788, 0.0
    %v2017 = vsel %vm1941, %v1789, 0.0
    %v2018 = vsel %vm1942, %v1790, 0.0
    %v2019 = vsel %vm1943, %v1791, 0.0
    %v2020 = vsel %vm1944, %v1792, 0.0
    %v2021 = vsel %vm1945, %v1793, 0.0
    %v2022 = vpack.c.bf16 %v1946, %v1946
    %v2023 = vpack.c.bf16 %v1947, %v1947
    %v2024 = vpack.c.bf16 %v1948, %v1948
    %v2025 = vpack.c.bf16 %v1949, %v1949
    %v2026 = vpack.c.bf16 %v1950, %v1950
    %v2027 = vpack.c.bf16 %v1951, %v1951
    %v2028 = vpack.c.bf16 %v1952, %v1952
    %v2029 = vpack.c.bf16 %v1953, %v1953
    %v2030 = vpack.c.bf16 %v1954, %v1954
    %v2031 = vpack.c.bf16 %v1955, %v1955
    %v2032 = vpack.c.bf16 %v1956, %v1956
    %v2033 = vpack.c.bf16 %v1957, %v1957
    %v2034 = vpack.c.bf16 %v1958, %v1958
    %v2035 = vpack.c.bf16 %v1959, %v1959
    %v2036 = vpack.c.bf16 %v1960, %v1960
    %v2037 = vpack.c.bf16 %v1961, %v1961
    %v2038 = vpack.c.bf16 %v1962, %v1962
    %v2039 = vpack.c.bf16 %v1963, %v1963
    %v2040 = vpack.c.bf16 %v1964, %v1964
    %v2041 = vpack.c.bf16 %v1965, %v1965
    %v2042 = vpack.c.bf16 %v1966, %v1966
    %v2043 = vpack.c.bf16 %v1967, %v1967
    %v2044 = vpack.c.bf16 %v1968, %v1968
    %v2045 = vpack.c.bf16 %v1969, %v1969
    %v2046 = vpack.c.bf16 %v1970, %v1970
    %v2047 = vpack.c.bf16 %v1971, %v1971
    %v2048 = vpack.c.bf16 %v1972, %v1972
    %v2049 = vpack.c.bf16 %v1973, %v1973
    %v2050 = vpack.c.bf16 %v1974, %v1974
    %v2051 = vpack.c.bf16 %v1975, %v1975
    %v2052 = vpack.c.bf16 %v1976, %v1976
    %v2053 = vpack.c.bf16 %v1977, %v1977
    %v2054 = vpack.c.bf16 %v1978, %v1978
    %v2055 = vpack.c.bf16 %v1979, %v1979
    %v2056 = vpack.c.bf16 %v1980, %v1980
    %v2057 = vpack.c.bf16 %v1981, %v1981
    %v2058 = vpack.c.bf16 %v1982, %v1982
    %v2059 = vpack.c.bf16 %v1983, %v1983
    %v2060 = vpack.c.bf16 %v1984, %v1984
    %v2061 = vpack.c.bf16 %v1985, %v1985
    %v2062 = vpack.c.bf16 %v1986, %v1986
    %v2063 = vpack.c.bf16 %v1987, %v1987
    %v2064 = vpack.c.bf16 %v1988, %v1988
    %v2065 = vpack.c.bf16 %v1989, %v1989
    %v2066 = vpack.c.bf16 %v1990, %v1990
    %v2067 = vpack.c.bf16 %v1991, %v1991
    %v2068 = vpack.c.bf16 %v1992, %v1992
    %v2069 = vpack.c.bf16 %v1993, %v1993
    %v2070 = vpack.c.bf16 %v1994, %v1994
    %v2071 = vpack.c.bf16 %v1995, %v1995
    %v2072 = vpack.c.bf16 %v1996, %v1996
    %v2073 = vpack.c.bf16 %v1997, %v1997
    %v2074 = vpack.c.bf16 %v1998, %v1998
    %v2075 = vpack.c.bf16 %v1999, %v1999
    %v2076 = vpack.c.bf16 %v2000, %v2000
    %v2077 = vpack.c.bf16 %v2001, %v2001
    %v2078 = vpack.c.bf16 %v2002, %v2002
    %v2079 = vpack.c.bf16 %v2003, %v2003
    %v2080 = vpack.c.bf16 %v2004, %v2004
    %v2081 = vpack.c.bf16 %v2005, %v2005
    %v2082 = vpack.c.bf16 %v2006, %v2006
    %v2083 = vpack.c.bf16 %v2007, %v2007
    %v2084 = vpack.c.bf16 %v2008, %v2008
    %v2085 = vpack.c.bf16 %v2009, %v2009
    %v2086 = vpack.c.bf16 %v2010, %v2010
    %v2087 = vpack.c.bf16 %v2011, %v2011
    %v2088 = vpack.c.bf16 %v2012, %v2012
    %v2089 = vpack.c.bf16 %v2013, %v2013
    %v2090 = vpack.c.bf16 %v2014, %v2014
    %v2091 = vpack.c.bf16 %v2015, %v2015
    %v2092 = vpack.c.bf16 %v2016, %v2016
    %v2093 = vpack.c.bf16 %v2017, %v2017
    %v2094 = vpack.c.bf16 %v2018, %v2018
    %v2095 = vpack.c.bf16 %v2019, %v2019
    %v2096 = vpack.c.bf16 %v2020, %v2020
    %v2097 = vpack.c.bf16 %v2021, %v2021
    %v2102 = vunpack.c.l.b16 %v2094
    %v2103 = vunpack.c.l.b16 %v2095
    %v2104 = vunpack.c.l.b16 %v2096
    %v2105 = vunpack.c.l.b16 %v2097
    %v2106 = vpack.c.b16 %v2103, %v2102
    %v2107 = vpack.c.b16 %v2105, %v2104
    %v2182 = vunpack.c.l.b16 %v2022
    %v2183 = vunpack.c.l.b16 %v2023
    %v2184 = vunpack.c.l.b16 %v2024
    %v2185 = vunpack.c.l.b16 %v2025
    %v2186 = vunpack.c.l.b16 %v2026
    %v2187 = vunpack.c.l.b16 %v2027
    %v2188 = vunpack.c.l.b16 %v2028
    %v2189 = vunpack.c.l.b16 %v2029
    %v2190 = vunpack.c.l.b16 %v2030
    %v2191 = vunpack.c.l.b16 %v2031
    %v2192 = vunpack.c.l.b16 %v2032
    %v2193 = vunpack.c.l.b16 %v2033
    %v2194 = vunpack.c.l.b16 %v2034
    %v2195 = vunpack.c.l.b16 %v2035
    %v2196 = vunpack.c.l.b16 %v2036
    %v2197 = vunpack.c.l.b16 %v2037
    %v2198 = vunpack.c.l.b16 %v2038
    %v2199 = vunpack.c.l.b16 %v2039
    %v2200 = vunpack.c.l.b16 %v2040
    %v2201 = vunpack.c.l.b16 %v2041
    %v2202 = vunpack.c.l.b16 %v2042
    %v2203 = vunpack.c.l.b16 %v2043
    %v2204 = vunpack.c.l.b16 %v2044
    %v2205 = vunpack.c.l.b16 %v2045
    %v2206 = vunpack.c.l.b16 %v2046
    %v2207 = vunpack.c.l.b16 %v2047
    %v2208 = vunpack.c.l.b16 %v2048
    %v2209 = vunpack.c.l.b16 %v2049
    %v2210 = vunpack.c.l.b16 %v2050
    %v2211 = vunpack.c.l.b16 %v2051
    %v2212 = vunpack.c.l.b16 %v2052
    %v2213 = vunpack.c.l.b16 %v2053
    %v2214 = vunpack.c.l.b16 %v2054
    %v2215 = vunpack.c.l.b16 %v2055
    %v2216 = vunpack.c.l.b16 %v2056
    %v2217 = vunpack.c.l.b16 %v2057
    %v2218 = vunpack.c.l.b16 %v2058
    %v2219 = vunpack.c.l.b16 %v2059
    %v2220 = vunpack.c.l.b16 %v2060
    %v2221 = vunpack.c.l.b16 %v2061
    %v2222 = vunpack.c.l.b16 %v2062
    %v2223 = vunpack.c.l.b16 %v2063
    %v2224 = vunpack.c.l.b16 %v2064
    %v2225 = vunpack.c.l.b16 %v2065
    %v2226 = vunpack.c.l.b16 %v2066
    %v2227 = vunpack.c.l.b16 %v2067
    %v2228 = vunpack.c.l.b16 %v2068
    %v2229 = vunpack.c.l.b16 %v2069
    %v2230 = vunpack.c.l.b16 %v2070
    %v2231 = vunpack.c.l.b16 %v2071
    %v2232 = vunpack.c.l.b16 %v2072
    %v2233 = vunpack.c.l.b16 %v2073
    %v2234 = vunpack.c.l.b16 %v2074
    %v2235 = vunpack.c.l.b16 %v2075
    %v2236 = vunpack.c.l.b16 %v2076
    %v2237 = vunpack.c.l.b16 %v2077
    %v2238 = vunpack.c.l.b16 %v2078
    %v2239 = vunpack.c.l.b16 %v2079
    %v2240 = vunpack.c.l.b16 %v2080
    %v2241 = vunpack.c.l.b16 %v2081
    %v2242 = vunpack.c.l.b16 %v2082
    %v2243 = vunpack.c.l.b16 %v2083
    %v2244 = vunpack.c.l.b16 %v2084
    %v2245 = vunpack.c.l.b16 %v2085
    %v2246 = vunpack.c.l.b16 %v2086
    %v2247 = vunpack.c.l.b16 %v2087
    %v2248 = vunpack.c.l.b16 %v2088
    %v2249 = vunpack.c.l.b16 %v2089
    %v2250 = vunpack.c.l.b16 %v2090
    %v2251 = vunpack.c.l.b16 %v2091
    %v2252 = vunpack.c.l.b16 %v2092
    %v2253 = vunpack.c.l.b16 %v2093
    %v2254 = vpack.c.b16 %v2183, %v2182
    %v2255 = vpack.c.b16 %v2185, %v2184
    %v2256 = vpack.c.b16 %v2187, %v2186
    %v2257 = vpack.c.b16 %v2189, %v2188
    %v2258 = vpack.c.b16 %v2191, %v2190
    %v2259 = vpack.c.b16 %v2193, %v2192
    %v2260 = vpack.c.b16 %v2195, %v2194
    %v2261 = vpack.c.b16 %v2197, %v2196
    %v2262 = vpack.c.b16 %v2199, %v2198
    %v2263 = vpack.c.b16 %v2201, %v2200
    %v2264 = vpack.c.b16 %v2203, %v2202
    %v2265 = vpack.c.b16 %v2205, %v2204
    %v2266 = vpack.c.b16 %v2207, %v2206
    %v2267 = vpack.c.b16 %v2209, %v2208
    %v2268 = vpack.c.b16 %v2211, %v2210
    %v2269 = vpack.c.b16 %v2213, %v2212
    %v2270 = vpack.c.b16 %v2215, %v2214
    %v2271 = vpack.c.b16 %v2217, %v2216
    %v2272 = vpack.c.b16 %v2219, %v2218
    %v2273 = vpack.c.b16 %v2221, %v2220
    %v2274 = vpack.c.b16 %v2223, %v2222
    %v2275 = vpack.c.b16 %v2225, %v2224
    %v2276 = vpack.c.b16 %v2227, %v2226
    %v2277 = vpack.c.b16 %v2229, %v2228
    %v2278 = vpack.c.b16 %v2231, %v2230
    %v2279 = vpack.c.b16 %v2233, %v2232
    %v2280 = vpack.c.b16 %v2235, %v2234
    %v2281 = vpack.c.b16 %v2237, %v2236
    %v2282 = vpack.c.b16 %v2239, %v2238
    %v2283 = vpack.c.b16 %v2241, %v2240
    %v2284 = vpack.c.b16 %v2243, %v2242
    %v2285 = vpack.c.b16 %v2245, %v2244
    %v2286 = vpack.c.b16 %v2247, %v2246
    %v2287 = vpack.c.b16 %v2249, %v2248
    %v2288 = vpack.c.b16 %v2251, %v2250
    %v2289 = vpack.c.b16 %v2253, %v2252
    %s2326 = scalar_lea.vmem [#allocation2], 256
    %v2327 = vld [vmem:[%s2326] sm:$0xf]
    %v2328 = vld [vmem:[%s2326 + $0x4] sm:$0xf]
    %v2329 = vld [vmem:[%s2326 + $0x8] sm:$0xf]
    %v2330 = vld [vmem:[%s2326 + $0xc] sm:$0xf]
    %v2331 = vld [vmem:[%s2326 + $0x10] sm:$0xf]
    %v2332 = vld [vmem:[%s2326 + $0x14] sm:$0xf]
    %v2333 = vld [vmem:[%s2326 + $0x18] sm:$0xf]
    %v2334 = vld [vmem:[%s2326 + $0x1c] sm:$0xf]
    %v2335 = vld [vmem:[%s2326 + $0x20] sm:$0xf]
    %v2336 = vld [vmem:[%s2326 + $0x24] sm:$0xf]
    %v2337 = vld [vmem:[%s2326 + $0x28] sm:$0xf]
    %v2338 = vld [vmem:[%s2326 + $0x2c] sm:$0xf]
    %v2339 = vld [vmem:[%s2326 + $0x30] sm:$0xf]
    %v2340 = vld [vmem:[%s2326 + $0x34] sm:$0xf]
    %v2341 = vld [vmem:[%s2326 + $0x38] sm:$0xf]
    %v2342 = vld [vmem:[%s2326 + $0x3c] sm:$0xf]
    %v2343 = vld [vmem:[%s2326 + $0x40] sm:$0xf]
    %v2344 = vld [vmem:[%s2326 + $0x44] sm:$0xf]
    %v2345 = vld [vmem:[%s2326 + $0x48] sm:$0xf]
    %v2346 = vld [vmem:[%s2326 + $0x4c] sm:$0xf]
    %v2347 = vld [vmem:[%s2326 + $0x50] sm:$0xf]
    %v2348 = vld [vmem:[%s2326 + $0x54] sm:$0xf]
    %v2349 = vld [vmem:[%s2326 + $0x58] sm:$0xf]
    %v2350 = vld [vmem:[%s2326 + $0x5c] sm:$0xf]
    %v2351 = vld [vmem:[%s2326 + $0x60] sm:$0xf]
    %v2352 = vld [vmem:[%s2326 + $0x64] sm:$0xf]
    %v2353 = vld [vmem:[%s2326 + $0x68] sm:$0xf]
    %v2354 = vld [vmem:[%s2326 + $0x6c] sm:$0xf]
    %v2355 = vld [vmem:[%s2326 + $0x70] sm:$0xf]
    %v2356 = vld [vmem:[%s2326 + $0x74] sm:$0xf]
    %v2357 = vld [vmem:[%s2326 + $0x78] sm:$0xf]
    %v2358 = vld [vmem:[%s2326 + $0x7c] sm:$0xf]
    %v2359 = vld [vmem:[%s2326 + $0x80] sm:$0xf]
    %v2360 = vld [vmem:[%s2326 + $0x84] sm:$0xf]
    %v2361 = vld [vmem:[%s2326 + $0x88] sm:$0xf]
    %v2362 = vld [vmem:[%s2326 + $0x8c] sm:$0xf]
    %v2363 = vld [vmem:[%s2326 + $0x90] sm:$0xf]
    %v2364 = vld [vmem:[%s2326 + $0x94] sm:$0xf]
    %v2365 = vld [vmem:[%s2326 + $0x98] sm:$0xf]
    %v2366 = vld [vmem:[%s2326 + $0x9c] sm:$0xf]
    %v2367 = vld [vmem:[%s2326 + $0xa0] sm:$0xf]
    %v2368 = vld [vmem:[%s2326 + $0xa4] sm:$0xf]
    %v2369 = vld [vmem:[%s2326 + $0xa8] sm:$0xf]
    %v2370 = vld [vmem:[%s2326 + $0xac] sm:$0xf]
    %v2371 = vld [vmem:[%s2326 + $0xb0] sm:$0xf]
    %v2372 = vld [vmem:[%s2326 + $0xb4] sm:$0xf]
    %v2373 = vld [vmem:[%s2326 + $0xb8] sm:$0xf]
    %v2374 = vld [vmem:[%s2326 + $0xbc] sm:$0xf]
    %v2375 = vld [vmem:[%s2326 + $0xc0] sm:$0xf]
    %v2376 = vld [vmem:[%s2326 + $0xc4] sm:$0xf]
    %v2377 = vld [vmem:[%s2326 + $0xc8] sm:$0xf]
    %v2378 = vld [vmem:[%s2326 + $0xcc] sm:$0xf]
    %v2379 = vld [vmem:[%s2326 + $0xd0] sm:$0xf]
    %v2380 = vld [vmem:[%s2326 + $0xd4] sm:$0xf]
    %v2381 = vld [vmem:[%s2326 + $0xd8] sm:$0xf]
    %v2382 = vld [vmem:[%s2326 + $0xdc] sm:$0xf]
    %v2383 = vld [vmem:[%s2326 + $0xe0] sm:$0xf]
    %v2384 = vld [vmem:[%s2326 + $0xe4] sm:$0xf]
    %v2385 = vld [vmem:[%s2326 + $0xe8] sm:$0xf]
    %v2386 = vld [vmem:[%s2326 + $0xec] sm:$0xf]
    %v2387 = vld [vmem:[%s2326 + $0xf0] sm:$0xf]
    %v2388 = vld [vmem:[%s2326 + $0xf4] sm:$0xf]
    %v2389 = vld [vmem:[%s2326 + $0xf8] sm:$0xf]
    %v2390 = vld [vmem:[%s2326 + $0xfc] sm:$0xf]
    %s2391 = scalar_lea.vmem %s2, 1
    %v2392 = vld [vmem:[%s2391] sm:$0x1]
    %v2394 = vperm.slane %v2392, 0
    %v2460 = vunpack.c.l.b16 %v2327
    %v2461 = vunpack.c.l.b16 %v2328
    %v2462 = vunpack.c.l.b16 %v2329
    %v2463 = vunpack.c.l.b16 %v2330
    %v2464 = vunpack.c.l.b16 %v2331
    %v2465 = vunpack.c.l.b16 %v2332
    %v2466 = vunpack.c.l.b16 %v2333
    %v2467 = vunpack.c.l.b16 %v2334
    %v2468 = vunpack.c.l.b16 %v2335
    %v2469 = vunpack.c.l.b16 %v2336
    %v2470 = vunpack.c.l.b16 %v2337
    %v2471 = vunpack.c.l.b16 %v2338
    %v2472 = vunpack.c.l.b16 %v2339
    %v2473 = vunpack.c.l.b16 %v2340
    %v2474 = vunpack.c.l.b16 %v2341
    %v2475 = vunpack.c.l.b16 %v2342
    %v2476 = vunpack.c.l.b16 %v2343
    %v2477 = vunpack.c.l.b16 %v2344
    %v2478 = vunpack.c.l.b16 %v2345
    %v2479 = vunpack.c.l.b16 %v2346
    %v2480 = vunpack.c.l.b16 %v2347
    %v2481 = vunpack.c.l.b16 %v2348
    %v2482 = vunpack.c.l.b16 %v2349
    %v2483 = vunpack.c.l.b16 %v2350
    %v2484 = vunpack.c.l.b16 %v2351
    %v2485 = vunpack.c.l.b16 %v2352
    %v2486 = vunpack.c.l.b16 %v2353
    %v2487 = vunpack.c.l.b16 %v2354
    %v2488 = vunpack.c.l.b16 %v2355
    %v2489 = vunpack.c.l.b16 %v2356
    %v2490 = vunpack.c.l.b16 %v2357
    %v2491 = vunpack.c.l.b16 %v2358
    %v2492 = vunpack.c.l.b16 %v2359
    %v2493 = vunpack.c.l.b16 %v2360
    %v2494 = vunpack.c.l.b16 %v2361
    %v2495 = vunpack.c.l.b16 %v2362
    %v2496 = vunpack.c.l.b16 %v2363
    %v2497 = vunpack.c.l.b16 %v2364
    %v2498 = vunpack.c.l.b16 %v2365
    %v2499 = vunpack.c.l.b16 %v2366
    %v2500 = vunpack.c.l.b16 %v2367
    %v2501 = vunpack.c.l.b16 %v2368
    %v2502 = vunpack.c.l.b16 %v2369
    %v2503 = vunpack.c.l.b16 %v2370
    %v2504 = vunpack.c.l.b16 %v2371
    %v2505 = vunpack.c.l.b16 %v2372
    %v2506 = vunpack.c.l.b16 %v2373
    %v2507 = vunpack.c.l.b16 %v2374
    %v2508 = vunpack.c.l.b16 %v2375
    %v2509 = vunpack.c.l.b16 %v2376
    %v2510 = vunpack.c.l.b16 %v2377
    %v2511 = vunpack.c.l.b16 %v2378
    %v2512 = vunpack.c.l.b16 %v2379
    %v2513 = vunpack.c.l.b16 %v2380
    %v2514 = vunpack.c.l.b16 %v2381
    %v2515 = vunpack.c.l.b16 %v2382
    %v2516 = vunpack.c.l.b16 %v2383
    %v2517 = vunpack.c.l.b16 %v2384
    %v2518 = vunpack.c.l.b16 %v2385
    %v2519 = vunpack.c.l.b16 %v2386
    %v2520 = vunpack.c.l.b16 %v2387
    %v2521 = vunpack.c.l.b16 %v2388
    %v2522 = vunpack.c.l.b16 %v2389
    %v2523 = vunpack.c.l.b16 %v2390
    %v2524 = vpack.c.b16 %v2461, %v2460
    %v2525 = vpack.c.b16 %v2463, %v2462
    %v2526 = vpack.c.b16 %v2465, %v2464
    %v2527 = vpack.c.b16 %v2467, %v2466
    %v2528 = vpack.c.b16 %v2469, %v2468
    %v2529 = vpack.c.b16 %v2471, %v2470
    %v2530 = vpack.c.b16 %v2473, %v2472
    %v2531 = vpack.c.b16 %v2475, %v2474
    %v2532 = vpack.c.b16 %v2477, %v2476
    %v2533 = vpack.c.b16 %v2479, %v2478
    %v2534 = vpack.c.b16 %v2481, %v2480
    %v2535 = vpack.c.b16 %v2483, %v2482
    %v2536 = vpack.c.b16 %v2485, %v2484
    %v2537 = vpack.c.b16 %v2487, %v2486
    %v2538 = vpack.c.b16 %v2489, %v2488
    %v2539 = vpack.c.b16 %v2491, %v2490
    %v2540 = vpack.c.b16 %v2493, %v2492
    %v2541 = vpack.c.b16 %v2495, %v2494
    %v2542 = vpack.c.b16 %v2497, %v2496
    %v2543 = vpack.c.b16 %v2499, %v2498
    %v2544 = vpack.c.b16 %v2501, %v2500
    %v2545 = vpack.c.b16 %v2503, %v2502
    %v2546 = vpack.c.b16 %v2505, %v2504
    %v2547 = vpack.c.b16 %v2507, %v2506
    %v2548 = vpack.c.b16 %v2509, %v2508
    %v2549 = vpack.c.b16 %v2511, %v2510
    %v2550 = vpack.c.b16 %v2513, %v2512
    %v2551 = vpack.c.b16 %v2515, %v2514
    %v2552 = vpack.c.b16 %v2517, %v2516
    %v2553 = vpack.c.b16 %v2519, %v2518
    %v2554 = vpack.c.b16 %v2521, %v2520
    %v2555 = vpack.c.b16 %v2523, %v2522
    %2588 = vmatpush.bf16.msra.mxu0 %v2531
    %2589 = vmatpush.bf16.msra.mxu0 %v2530
    %2590 = vmatpush.bf16.msra.mxu0 %v2529
    %2591 = vmatpush.bf16.msra.mxu0 %v2528
    %2592 = vmatpush.bf16.msra.mxu0 %v2527
    %2593 = vmatpush.bf16.msra.mxu0 %v2526
    %2594 = vmatpush.bf16.msra.mxu0 %v2525
    %2595 = vmatpush.bf16.msra.mxu0 %v2524
    %2596 = vmatmul.bf16.gmra.mxu0 %v2106
    %v2597 = vpop.f32.mrf.mxu0
    %v2598 = vadd.f32 %v2394, %v2597
    %v2599 = vpop.f32.mrf.mxu0
    %v2600 = vadd.f32 %v2394, %v2599
    %2601 = vmatmul.bf16.gmra.mxu0 %v2107
    %v2602 = vpop.f32.mrf.mxu0
    %v2603 = vadd.f32 %v2394, %v2602
    %v2604 = vpop.f32.mrf.mxu0
    %v2605 = vadd.f32 %v2394, %v2604
    %2606 = vmatmul.bf16.gmra.mxu0 %v2254
    %v2607 = vpop.f32.mrf.mxu0
    %v2608 = vadd.f32 %v2394, %v2607
    %v2609 = vpop.f32.mrf.mxu0
    %v2610 = vadd.f32 %v2394, %v2609
    %2611 = vmatmul.bf16.gmra.mxu0 %v2255
    %v2612 = vpop.f32.mrf.mxu0
    %v2613 = vadd.f32 %v2394, %v2612
    %v2614 = vpop.f32.mrf.mxu0
    %v2615 = vadd.f32 %v2394, %v2614
    %2616 = vmatmul.bf16.gmra.mxu0 %v2256
    %v2617 = vpop.f32.mrf.mxu0
    %v2618 = vadd.f32 %v2394, %v2617
    %v2619 = vpop.f32.mrf.mxu0
    %v2620 = vadd.f32 %v2394, %v2619
    %2621 = vmatmul.bf16.gmra.mxu0 %v2257
    %v2622 = vpop.f32.mrf.mxu0
    %v2623 = vadd.f32 %v2394, %v2622
    %v2624 = vpop.f32.mrf.mxu0
    %v2625 = vadd.f32 %v2394, %v2624
    %2626 = vmatmul.bf16.gmra.mxu0 %v2258
    %v2627 = vpop.f32.mrf.mxu0
    %v2628 = vadd.f32 %v2394, %v2627
    %v2629 = vpop.f32.mrf.mxu0
    %v2630 = vadd.f32 %v2394, %v2629
    %2631 = vmatmul.bf16.gmra.mxu0 %v2259
    %v2632 = vpop.f32.mrf.mxu0
    %v2633 = vadd.f32 %v2394, %v2632
    %v2634 = vpop.f32.mrf.mxu0
    %v2635 = vadd.f32 %v2394, %v2634
    %2636 = vmatmul.bf16.gmra.mxu0 %v2260
    %v2637 = vpop.f32.mrf.mxu0
    %v2638 = vadd.f32 %v2394, %v2637
    %v2639 = vpop.f32.mrf.mxu0
    %v2640 = vadd.f32 %v2394, %v2639
    %2641 = vmatmul.bf16.gmra.mxu0 %v2261
    %v2642 = vpop.f32.mrf.mxu0
    %v2643 = vadd.f32 %v2394, %v2642
    %v2644 = vpop.f32.mrf.mxu0
    %v2645 = vadd.f32 %v2394, %v2644
    %2646 = vmatmul.bf16.gmra.mxu0 %v2262
    %v2647 = vpop.f32.mrf.mxu0
    %v2648 = vadd.f32 %v2394, %v2647
    %v2649 = vpop.f32.mrf.mxu0
    %v2650 = vadd.f32 %v2394, %v2649
    %2651 = vmatmul.bf16.gmra.mxu0 %v2263
    %v2652 = vpop.f32.mrf.mxu0
    %v2653 = vadd.f32 %v2394, %v2652
    %v2654 = vpop.f32.mrf.mxu0
    %v2655 = vadd.f32 %v2394, %v2654
    %2656 = vmatmul.bf16.gmra.mxu0 %v2264
    %v2657 = vpop.f32.mrf.mxu0
    %v2658 = vadd.f32 %v2394, %v2657
    %v2659 = vpop.f32.mrf.mxu0
    %v2660 = vadd.f32 %v2394, %v2659
    %2661 = vmatmul.bf16.gmra.mxu0 %v2265
    %v2662 = vpop.f32.mrf.mxu0
    %v2663 = vadd.f32 %v2394, %v2662
    %v2664 = vpop.f32.mrf.mxu0
    %v2665 = vadd.f32 %v2394, %v2664
    %2666 = vmatmul.bf16.gmra.mxu0 %v2266
    %v2667 = vpop.f32.mrf.mxu0
    %v2668 = vadd.f32 %v2394, %v2667
    %v2669 = vpop.f32.mrf.mxu0
    %v2670 = vadd.f32 %v2394, %v2669
    %2671 = vmatmul.bf16.gmra.mxu0 %v2267
    %v2672 = vpop.f32.mrf.mxu0
    %v2673 = vadd.f32 %v2394, %v2672
    %v2674 = vpop.f32.mrf.mxu0
    %v2675 = vadd.f32 %v2394, %v2674
    %2676 = vmatmul.bf16.gmra.mxu0 %v2268
    %v2677 = vpop.f32.mrf.mxu0
    %v2678 = vadd.f32 %v2394, %v2677
    %v2679 = vpop.f32.mrf.mxu0
    %v2680 = vadd.f32 %v2394, %v2679
    %2681 = vmatmul.bf16.gmra.mxu0 %v2269
    %v2682 = vpop.f32.mrf.mxu0
    %v2683 = vadd.f32 %v2394, %v2682
    %v2684 = vpop.f32.mrf.mxu0
    %v2685 = vadd.f32 %v2394, %v2684
    %2686 = vmatmul.bf16.gmra.mxu0 %v2270
    %v2687 = vpop.f32.mrf.mxu0
    %v2688 = vadd.f32 %v2394, %v2687
    %v2689 = vpop.f32.mrf.mxu0
    %v2690 = vadd.f32 %v2394, %v2689
    %2691 = vmatmul.bf16.gmra.mxu0 %v2271
    %v2692 = vpop.f32.mrf.mxu0
    %v2693 = vadd.f32 %v2394, %v2692
    %v2694 = vpop.f32.mrf.mxu0
    %v2695 = vadd.f32 %v2394, %v2694
    %2696 = vmatmul.bf16.gmra.mxu0 %v2272
    %v2697 = vpop.f32.mrf.mxu0
    %v2698 = vadd.f32 %v2394, %v2697
    %v2699 = vpop.f32.mrf.mxu0
    %v2700 = vadd.f32 %v2394, %v2699
    %2701 = vmatmul.bf16.gmra.mxu0 %v2273
    %v2702 = vpop.f32.mrf.mxu0
    %v2703 = vadd.f32 %v2394, %v2702
    %v2704 = vpop.f32.mrf.mxu0
    %v2705 = vadd.f32 %v2394, %v2704
    %2706 = vmatmul.bf16.gmra.mxu0 %v2274
    %v2707 = vpop.f32.mrf.mxu0
    %v2708 = vadd.f32 %v2394, %v2707
    %v2709 = vpop.f32.mrf.mxu0
    %v2710 = vadd.f32 %v2394, %v2709
    %2711 = vmatmul.bf16.gmra.mxu0 %v2275
    %v2712 = vpop.f32.mrf.mxu0
    %v2713 = vadd.f32 %v2394, %v2712
    %v2714 = vpop.f32.mrf.mxu0
    %v2715 = vadd.f32 %v2394, %v2714
    %2716 = vmatmul.bf16.gmra.mxu0 %v2276
    %v2717 = vpop.f32.mrf.mxu0
    %v2718 = vadd.f32 %v2394, %v2717
    %v2719 = vpop.f32.mrf.mxu0
    %v2720 = vadd.f32 %v2394, %v2719
    %2721 = vmatmul.bf16.gmra.mxu0 %v2277
    %v2722 = vpop.f32.mrf.mxu0
    %v2723 = vadd.f32 %v2394, %v2722
    %v2724 = vpop.f32.mrf.mxu0
    %v2725 = vadd.f32 %v2394, %v2724
    %2726 = vmatmul.bf16.gmra.mxu0 %v2278
    %v2727 = vpop.f32.mrf.mxu0
    %v2728 = vadd.f32 %v2394, %v2727
    %v2729 = vpop.f32.mrf.mxu0
    %v2730 = vadd.f32 %v2394, %v2729
    %2731 = vmatmul.bf16.gmra.mxu0 %v2279
    %v2732 = vpop.f32.mrf.mxu0
    %v2733 = vadd.f32 %v2394, %v2732
    %v2734 = vpop.f32.mrf.mxu0
    %v2735 = vadd.f32 %v2394, %v2734
    %2736 = vmatmul.bf16.gmra.mxu0 %v2280
    %v2737 = vpop.f32.mrf.mxu0
    %v2738 = vadd.f32 %v2394, %v2737
    %v2739 = vpop.f32.mrf.mxu0
    %v2740 = vadd.f32 %v2394, %v2739
    %2741 = vmatmul.bf16.gmra.mxu0 %v2281
    %v2742 = vpop.f32.mrf.mxu0
    %v2743 = vadd.f32 %v2394, %v2742
    %v2744 = vpop.f32.mrf.mxu0
    %v2745 = vadd.f32 %v2394, %v2744
    %2746 = vmatmul.bf16.gmra.mxu0 %v2282
    %v2747 = vpop.f32.mrf.mxu0
    %v2748 = vadd.f32 %v2394, %v2747
    %v2749 = vpop.f32.mrf.mxu0
    %v2750 = vadd.f32 %v2394, %v2749
    %2751 = vmatmul.bf16.gmra.mxu0 %v2283
    %v2752 = vpop.f32.mrf.mxu0
    %v2753 = vadd.f32 %v2394, %v2752
    %v2754 = vpop.f32.mrf.mxu0
    %v2755 = vadd.f32 %v2394, %v2754
    %2756 = vmatmul.bf16.gmra.mxu0 %v2284
    %v2757 = vpop.f32.mrf.mxu0
    %v2758 = vadd.f32 %v2394, %v2757
    %v2759 = vpop.f32.mrf.mxu0
    %v2760 = vadd.f32 %v2394, %v2759
    %2761 = vmatmul.bf16.gmra.mxu0 %v2285
    %v2762 = vpop.f32.mrf.mxu0
    %v2763 = vadd.f32 %v2394, %v2762
    %v2764 = vpop.f32.mrf.mxu0
    %v2765 = vadd.f32 %v2394, %v2764
    %2766 = vmatmul.bf16.gmra.mxu0 %v2286
    %v2767 = vpop.f32.mrf.mxu0
    %v2768 = vadd.f32 %v2394, %v2767
    %v2769 = vpop.f32.mrf.mxu0
    %v2770 = vadd.f32 %v2394, %v2769
    %2771 = vmatmul.bf16.gmra.mxu0 %v2287
    %v2772 = vpop.f32.mrf.mxu0
    %v2773 = vadd.f32 %v2394, %v2772
    %v2774 = vpop.f32.mrf.mxu0
    %v2775 = vadd.f32 %v2394, %v2774
    %2776 = vmatmul.bf16.gmra.mxu0 %v2288
    %v2777 = vpop.f32.mrf.mxu0
    %v2778 = vadd.f32 %v2394, %v2777
    %v2779 = vpop.f32.mrf.mxu0
    %v2780 = vadd.f32 %v2394, %v2779
    %2781 = vmatmul.bf16.gmra.mxu0 %v2289
    %v2782 = vpop.f32.mrf.mxu0
    %v2783 = vadd.f32 %v2394, %v2782
    %v2784 = vpop.f32.mrf.mxu0
    %v2785 = vadd.f32 %v2394, %v2784
    %2786 = vdwg.mxu0
    %2787 = vmatpush.bf16.msra.mxu0 %v2539
    %2788 = vmatpush.bf16.msra.mxu0 %v2538
    %2789 = vmatpush.bf16.msra.mxu0 %v2537
    %2790 = vmatpush.bf16.msra.mxu0 %v2536
    %2791 = vmatpush.bf16.msra.mxu0 %v2535
    %2792 = vmatpush.bf16.msra.mxu0 %v2534
    %2793 = vmatpush.bf16.msra.mxu0 %v2533
    %2794 = vmatpush.bf16.msra.mxu0 %v2532
    %2795 = vmatmul.bf16.gmra.mxu0 %v2254
    %v2796 = vpop.f32.mrf.mxu0
    %v2797 = vadd.f32 %v2598, %v2796
    %v2798 = vpop.f32.mrf.mxu0
    %v2799 = vadd.f32 %v2600, %v2798
    %2800 = vmatmul.bf16.gmra.mxu0 %v2255
    %v2801 = vpop.f32.mrf.mxu0
    %v2802 = vadd.f32 %v2603, %v2801
    %v2803 = vpop.f32.mrf.mxu0
    %v2804 = vadd.f32 %v2605, %v2803
    %2805 = vmatmul.bf16.gmra.mxu0 %v2256
    %v2806 = vpop.f32.mrf.mxu0
    %v2807 = vadd.f32 %v2608, %v2806
    %v2808 = vpop.f32.mrf.mxu0
    %v2809 = vadd.f32 %v2610, %v2808
    %2810 = vmatmul.bf16.gmra.mxu0 %v2257
    %v2811 = vpop.f32.mrf.mxu0
    %v2812 = vadd.f32 %v2613, %v2811
    %v2813 = vpop.f32.mrf.mxu0
    %v2814 = vadd.f32 %v2615, %v2813
    %2815 = vmatmul.bf16.gmra.mxu0 %v2258
    %v2816 = vpop.f32.mrf.mxu0
    %v2817 = vadd.f32 %v2618, %v2816
    %v2818 = vpop.f32.mrf.mxu0
    %v2819 = vadd.f32 %v2620, %v2818
    %2820 = vmatmul.bf16.gmra.mxu0 %v2259
    %v2821 = vpop.f32.mrf.mxu0
    %v2822 = vadd.f32 %v2623, %v2821
    %v2823 = vpop.f32.mrf.mxu0
    %v2824 = vadd.f32 %v2625, %v2823
    %2825 = vmatmul.bf16.gmra.mxu0 %v2260
    %v2826 = vpop.f32.mrf.mxu0
    %v2827 = vadd.f32 %v2628, %v2826
    %v2828 = vpop.f32.mrf.mxu0
    %v2829 = vadd.f32 %v2630, %v2828
    %2830 = vmatmul.bf16.gmra.mxu0 %v2261
    %v2831 = vpop.f32.mrf.mxu0
    %v2832 = vadd.f32 %v2633, %v2831
    %v2833 = vpop.f32.mrf.mxu0
    %v2834 = vadd.f32 %v2635, %v2833
    %2835 = vmatmul.bf16.gmra.mxu0 %v2262
    %v2836 = vpop.f32.mrf.mxu0
    %v2837 = vadd.f32 %v2638, %v2836
    %v2838 = vpop.f32.mrf.mxu0
    %v2839 = vadd.f32 %v2640, %v2838
    %2840 = vmatmul.bf16.gmra.mxu0 %v2263
    %v2841 = vpop.f32.mrf.mxu0
    %v2842 = vadd.f32 %v2643, %v2841
    %v2843 = vpop.f32.mrf.mxu0
    %v2844 = vadd.f32 %v2645, %v2843
    %2845 = vmatmul.bf16.gmra.mxu0 %v2264
    %v2846 = vpop.f32.mrf.mxu0
    %v2847 = vadd.f32 %v2648, %v2846
    %v2848 = vpop.f32.mrf.mxu0
    %v2849 = vadd.f32 %v2650, %v2848
    %2850 = vmatmul.bf16.gmra.mxu0 %v2265
    %v2851 = vpop.f32.mrf.mxu0
    %v2852 = vadd.f32 %v2653, %v2851
    %v2853 = vpop.f32.mrf.mxu0
    %v2854 = vadd.f32 %v2655, %v2853
    %2855 = vmatmul.bf16.gmra.mxu0 %v2266
    %v2856 = vpop.f32.mrf.mxu0
    %v2857 = vadd.f32 %v2658, %v2856
    %v2858 = vpop.f32.mrf.mxu0
    %v2859 = vadd.f32 %v2660, %v2858
    %2860 = vmatmul.bf16.gmra.mxu0 %v2267
    %v2861 = vpop.f32.mrf.mxu0
    %v2862 = vadd.f32 %v2663, %v2861
    %v2863 = vpop.f32.mrf.mxu0
    %v2864 = vadd.f32 %v2665, %v2863
    %2865 = vmatmul.bf16.gmra.mxu0 %v2268
    %v2866 = vpop.f32.mrf.mxu0
    %v2867 = vadd.f32 %v2668, %v2866
    %v2868 = vpop.f32.mrf.mxu0
    %v2869 = vadd.f32 %v2670, %v2868
    %2870 = vmatmul.bf16.gmra.mxu0 %v2269
    %v2871 = vpop.f32.mrf.mxu0
    %v2872 = vadd.f32 %v2673, %v2871
    %v2873 = vpop.f32.mrf.mxu0
    %v2874 = vadd.f32 %v2675, %v2873
    %2875 = vmatmul.bf16.gmra.mxu0 %v2270
    %v2876 = vpop.f32.mrf.mxu0
    %v2877 = vadd.f32 %v2678, %v2876
    %v2878 = vpop.f32.mrf.mxu0
    %v2879 = vadd.f32 %v2680, %v2878
    %2880 = vmatmul.bf16.gmra.mxu0 %v2271
    %v2881 = vpop.f32.mrf.mxu0
    %v2882 = vadd.f32 %v2683, %v2881
    %v2883 = vpop.f32.mrf.mxu0
    %v2884 = vadd.f32 %v2685, %v2883
    %2885 = vmatmul.bf16.gmra.mxu0 %v2272
    %v2886 = vpop.f32.mrf.mxu0
    %v2887 = vadd.f32 %v2688, %v2886
    %v2888 = vpop.f32.mrf.mxu0
    %v2889 = vadd.f32 %v2690, %v2888
    %2890 = vmatmul.bf16.gmra.mxu0 %v2273
    %v2891 = vpop.f32.mrf.mxu0
    %v2892 = vadd.f32 %v2693, %v2891
    %v2893 = vpop.f32.mrf.mxu0
    %v2894 = vadd.f32 %v2695, %v2893
    %2895 = vmatmul.bf16.gmra.mxu0 %v2274
    %v2896 = vpop.f32.mrf.mxu0
    %v2897 = vadd.f32 %v2698, %v2896
    %v2898 = vpop.f32.mrf.mxu0
    %v2899 = vadd.f32 %v2700, %v2898
    %2900 = vmatmul.bf16.gmra.mxu0 %v2275
    %v2901 = vpop.f32.mrf.mxu0
    %v2902 = vadd.f32 %v2703, %v2901
    %v2903 = vpop.f32.mrf.mxu0
    %v2904 = vadd.f32 %v2705, %v2903
    %2905 = vmatmul.bf16.gmra.mxu0 %v2276
    %v2906 = vpop.f32.mrf.mxu0
    %v2907 = vadd.f32 %v2708, %v2906
    %v2908 = vpop.f32.mrf.mxu0
    %v2909 = vadd.f32 %v2710, %v2908
    %2910 = vmatmul.bf16.gmra.mxu0 %v2277
    %v2911 = vpop.f32.mrf.mxu0
    %v2912 = vadd.f32 %v2713, %v2911
    %v2913 = vpop.f32.mrf.mxu0
    %v2914 = vadd.f32 %v2715, %v2913
    %2915 = vmatmul.bf16.gmra.mxu0 %v2278
    %v2916 = vpop.f32.mrf.mxu0
    %v2917 = vadd.f32 %v2718, %v2916
    %v2918 = vpop.f32.mrf.mxu0
    %v2919 = vadd.f32 %v2720, %v2918
    %2920 = vmatmul.bf16.gmra.mxu0 %v2279
    %v2921 = vpop.f32.mrf.mxu0
    %v2922 = vadd.f32 %v2723, %v2921
    %v2923 = vpop.f32.mrf.mxu0
    %v2924 = vadd.f32 %v2725, %v2923
    %2925 = vmatmul.bf16.gmra.mxu0 %v2280
    %v2926 = vpop.f32.mrf.mxu0
    %v2927 = vadd.f32 %v2728, %v2926
    %v2928 = vpop.f32.mrf.mxu0
    %v2929 = vadd.f32 %v2730, %v2928
    %2930 = vmatmul.bf16.gmra.mxu0 %v2281
    %v2931 = vpop.f32.mrf.mxu0
    %v2932 = vadd.f32 %v2733, %v2931
    %v2933 = vpop.f32.mrf.mxu0
    %v2934 = vadd.f32 %v2735, %v2933
    %2935 = vmatmul.bf16.gmra.mxu0 %v2282
    %v2936 = vpop.f32.mrf.mxu0
    %v2937 = vadd.f32 %v2738, %v2936
    %v2938 = vpop.f32.mrf.mxu0
    %v2939 = vadd.f32 %v2740, %v2938
    %2940 = vmatmul.bf16.gmra.mxu0 %v2283
    %v2941 = vpop.f32.mrf.mxu0
    %v2942 = vadd.f32 %v2743, %v2941
    %v2943 = vpop.f32.mrf.mxu0
    %v2944 = vadd.f32 %v2745, %v2943
    %2945 = vmatmul.bf16.gmra.mxu0 %v2284
    %v2946 = vpop.f32.mrf.mxu0
    %v2947 = vadd.f32 %v2748, %v2946
    %v2948 = vpop.f32.mrf.mxu0
    %v2949 = vadd.f32 %v2750, %v2948
    %2950 = vmatmul.bf16.gmra.mxu0 %v2285
    %v2951 = vpop.f32.mrf.mxu0
    %v2952 = vadd.f32 %v2753, %v2951
    %v2953 = vpop.f32.mrf.mxu0
    %v2954 = vadd.f32 %v2755, %v2953
    %2955 = vmatmul.bf16.gmra.mxu0 %v2286
    %v2956 = vpop.f32.mrf.mxu0
    %v2957 = vadd.f32 %v2758, %v2956
    %v2958 = vpop.f32.mrf.mxu0
    %v2959 = vadd.f32 %v2760, %v2958
    %2960 = vmatmul.bf16.gmra.mxu0 %v2287
    %v2961 = vpop.f32.mrf.mxu0
    %v2962 = vadd.f32 %v2763, %v2961
    %v2963 = vpop.f32.mrf.mxu0
    %v2964 = vadd.f32 %v2765, %v2963
    %2965 = vmatmul.bf16.gmra.mxu0 %v2288
    %v2966 = vpop.f32.mrf.mxu0
    %v2967 = vadd.f32 %v2768, %v2966
    %v2968 = vpop.f32.mrf.mxu0
    %v2969 = vadd.f32 %v2770, %v2968
    %2970 = vmatmul.bf16.gmra.mxu0 %v2289
    %v2971 = vpop.f32.mrf.mxu0
    %v2972 = vadd.f32 %v2773, %v2971
    %v2973 = vpop.f32.mrf.mxu0
    %v2974 = vadd.f32 %v2775, %v2973
    %2975 = vmatmul.bf16.gmra.mxu0 %v2106
    %v2976 = vpop.f32.mrf.mxu0
    %v2977 = vadd.f32 %v2778, %v2976
    %v2978 = vpop.f32.mrf.mxu0
    %v2979 = vadd.f32 %v2780, %v2978
    %2980 = vmatmul.bf16.gmra.mxu0 %v2107
    %v2981 = vpop.f32.mrf.mxu0
    %v2982 = vadd.f32 %v2783, %v2981
    %v2983 = vpop.f32.mrf.mxu0
    %v2984 = vadd.f32 %v2785, %v2983
    %2985 = vdwg.mxu0
    %2986 = vmatpush.bf16.msra.mxu0 %v2547
    %2987 = vmatpush.bf16.msra.mxu0 %v2546
    %2988 = vmatpush.bf16.msra.mxu0 %v2545
    %2989 = vmatpush.bf16.msra.mxu0 %v2544
    %2990 = vmatpush.bf16.msra.mxu0 %v2543
    %2991 = vmatpush.bf16.msra.mxu0 %v2542
    %2992 = vmatpush.bf16.msra.mxu0 %v2541
    %2993 = vmatpush.bf16.msra.mxu0 %v2540
    %2994 = vmatmul.bf16.gmra.mxu0 %v2256
    %v2995 = vpop.f32.mrf.mxu0
    %v2996 = vadd.f32 %v2797, %v2995
    %v2997 = vpop.f32.mrf.mxu0
    %v2998 = vadd.f32 %v2799, %v2997
    %2999 = vmatmul.bf16.gmra.mxu0 %v2257
    %v3000 = vpop.f32.mrf.mxu0
    %v3001 = vadd.f32 %v2802, %v3000
    %v3002 = vpop.f32.mrf.mxu0
    %v3003 = vadd.f32 %v2804, %v3002
    %3004 = vmatmul.bf16.gmra.mxu0 %v2258
    %v3005 = vpop.f32.mrf.mxu0
    %v3006 = vadd.f32 %v2807, %v3005
    %v3007 = vpop.f32.mrf.mxu0
    %v3008 = vadd.f32 %v2809, %v3007
    %3009 = vmatmul.bf16.gmra.mxu0 %v2259
    %v3010 = vpop.f32.mrf.mxu0
    %v3011 = vadd.f32 %v2812, %v3010
    %v3012 = vpop.f32.mrf.mxu0
    %v3013 = vadd.f32 %v2814, %v3012
    %3014 = vmatmul.bf16.gmra.mxu0 %v2260
    %v3015 = vpop.f32.mrf.mxu0
    %v3016 = vadd.f32 %v2817, %v3015
    %v3017 = vpop.f32.mrf.mxu0
    %v3018 = vadd.f32 %v2819, %v3017
    %3019 = vmatmul.bf16.gmra.mxu0 %v2261
    %v3020 = vpop.f32.mrf.mxu0
    %v3021 = vadd.f32 %v2822, %v3020
    %v3022 = vpop.f32.mrf.mxu0
    %v3023 = vadd.f32 %v2824, %v3022
    %3024 = vmatmul.bf16.gmra.mxu0 %v2262
    %v3025 = vpop.f32.mrf.mxu0
    %v3026 = vadd.f32 %v2827, %v3025
    %v3027 = vpop.f32.mrf.mxu0
    %v3028 = vadd.f32 %v2829, %v3027
    %3029 = vmatmul.bf16.gmra.mxu0 %v2263
    %v3030 = vpop.f32.mrf.mxu0
    %v3031 = vadd.f32 %v2832, %v3030
    %v3032 = vpop.f32.mrf.mxu0
    %v3033 = vadd.f32 %v2834, %v3032
    %3034 = vmatmul.bf16.gmra.mxu0 %v2264
    %v3035 = vpop.f32.mrf.mxu0
    %v3036 = vadd.f32 %v2837, %v3035
    %v3037 = vpop.f32.mrf.mxu0
    %v3038 = vadd.f32 %v2839, %v3037
    %3039 = vmatmul.bf16.gmra.mxu0 %v2265
    %v3040 = vpop.f32.mrf.mxu0
    %v3041 = vadd.f32 %v2842, %v3040
    %v3042 = vpop.f32.mrf.mxu0
    %v3043 = vadd.f32 %v2844, %v3042
    %3044 = vmatmul.bf16.gmra.mxu0 %v2266
    %v3045 = vpop.f32.mrf.mxu0
    %v3046 = vadd.f32 %v2847, %v3045
    %v3047 = vpop.f32.mrf.mxu0
    %v3048 = vadd.f32 %v2849, %v3047
    %3049 = vmatmul.bf16.gmra.mxu0 %v2267
    %v3050 = vpop.f32.mrf.mxu0
    %v3051 = vadd.f32 %v2852, %v3050
    %v3052 = vpop.f32.mrf.mxu0
    %v3053 = vadd.f32 %v2854, %v3052
    %3054 = vmatmul.bf16.gmra.mxu0 %v2268
    %v3055 = vpop.f32.mrf.mxu0
    %v3056 = vadd.f32 %v2857, %v3055
    %v3057 = vpop.f32.mrf.mxu0
    %v3058 = vadd.f32 %v2859, %v3057
    %3059 = vmatmul.bf16.gmra.mxu0 %v2269
    %v3060 = vpop.f32.mrf.mxu0
    %v3061 = vadd.f32 %v2862, %v3060
    %v3062 = vpop.f32.mrf.mxu0
    %v3063 = vadd.f32 %v2864, %v3062
    %3064 = vmatmul.bf16.gmra.mxu0 %v2270
    %v3065 = vpop.f32.mrf.mxu0
    %v3066 = vadd.f32 %v2867, %v3065
    %v3067 = vpop.f32.mrf.mxu0
    %v3068 = vadd.f32 %v2869, %v3067
    %3069 = vmatmul.bf16.gmra.mxu0 %v2271
    %v3070 = vpop.f32.mrf.mxu0
    %v3071 = vadd.f32 %v2872, %v3070
    %v3072 = vpop.f32.mrf.mxu0
    %v3073 = vadd.f32 %v2874, %v3072
    %3074 = vmatmul.bf16.gmra.mxu0 %v2272
    %v3075 = vpop.f32.mrf.mxu0
    %v3076 = vadd.f32 %v2877, %v3075
    %v3077 = vpop.f32.mrf.mxu0
    %v3078 = vadd.f32 %v2879, %v3077
    %3079 = vmatmul.bf16.gmra.mxu0 %v2273
    %v3080 = vpop.f32.mrf.mxu0
    %v3081 = vadd.f32 %v2882, %v3080
    %v3082 = vpop.f32.mrf.mxu0
    %v3083 = vadd.f32 %v2884, %v3082
    %3084 = vmatmul.bf16.gmra.mxu0 %v2274
    %v3085 = vpop.f32.mrf.mxu0
    %v3086 = vadd.f32 %v2887, %v3085
    %v3087 = vpop.f32.mrf.mxu0
    %v3088 = vadd.f32 %v2889, %v3087
    %3089 = vmatmul.bf16.gmra.mxu0 %v2275
    %v3090 = vpop.f32.mrf.mxu0
    %v3091 = vadd.f32 %v2892, %v3090
    %v3092 = vpop.f32.mrf.mxu0
    %v3093 = vadd.f32 %v2894, %v3092
    %3094 = vmatmul.bf16.gmra.mxu0 %v2276
    %v3095 = vpop.f32.mrf.mxu0
    %v3096 = vadd.f32 %v2897, %v3095
    %v3097 = vpop.f32.mrf.mxu0
    %v3098 = vadd.f32 %v2899, %v3097
    %3099 = vmatmul.bf16.gmra.mxu0 %v2277
    %v3100 = vpop.f32.mrf.mxu0
    %v3101 = vadd.f32 %v2902, %v3100
    %v3102 = vpop.f32.mrf.mxu0
    %v3103 = vadd.f32 %v2904, %v3102
    %3104 = vmatmul.bf16.gmra.mxu0 %v2278
    %v3105 = vpop.f32.mrf.mxu0
    %v3106 = vadd.f32 %v2907, %v3105
    %v3107 = vpop.f32.mrf.mxu0
    %v3108 = vadd.f32 %v2909, %v3107
    %3109 = vmatmul.bf16.gmra.mxu0 %v2279
    %v3110 = vpop.f32.mrf.mxu0
    %v3111 = vadd.f32 %v2912, %v3110
    %v3112 = vpop.f32.mrf.mxu0
    %v3113 = vadd.f32 %v2914, %v3112
    %3114 = vmatmul.bf16.gmra.mxu0 %v2280
    %v3115 = vpop.f32.mrf.mxu0
    %v3116 = vadd.f32 %v2917, %v3115
    %v3117 = vpop.f32.mrf.mxu0
    %v3118 = vadd.f32 %v2919, %v3117
    %3119 = vmatmul.bf16.gmra.mxu0 %v2281
    %v3120 = vpop.f32.mrf.mxu0
    %v3121 = vadd.f32 %v2922, %v3120
    %v3122 = vpop.f32.mrf.mxu0
    %v3123 = vadd.f32 %v2924, %v3122
    %3124 = vmatmul.bf16.gmra.mxu0 %v2282
    %v3125 = vpop.f32.mrf.mxu0
    %v3126 = vadd.f32 %v2927, %v3125
    %v3127 = vpop.f32.mrf.mxu0
    %v3128 = vadd.f32 %v2929, %v3127
    %3129 = vmatmul.bf16.gmra.mxu0 %v2283
    %v3130 = vpop.f32.mrf.mxu0
    %v3131 = vadd.f32 %v2932, %v3130
    %v3132 = vpop.f32.mrf.mxu0
    %v3133 = vadd.f32 %v2934, %v3132
    %3134 = vmatmul.bf16.gmra.mxu0 %v2284
    %v3135 = vpop.f32.mrf.mxu0
    %v3136 = vadd.f32 %v2937, %v3135
    %v3137 = vpop.f32.mrf.mxu0
    %v3138 = vadd.f32 %v2939, %v3137
    %3139 = vmatmul.bf16.gmra.mxu0 %v2285
    %v3140 = vpop.f32.mrf.mxu0
    %v3141 = vadd.f32 %v2942, %v3140
    %v3142 = vpop.f32.mrf.mxu0
    %v3143 = vadd.f32 %v2944, %v3142
    %3144 = vmatmul.bf16.gmra.mxu0 %v2286
    %v3145 = vpop.f32.mrf.mxu0
    %v3146 = vadd.f32 %v2947, %v3145
    %v3147 = vpop.f32.mrf.mxu0
    %v3148 = vadd.f32 %v2949, %v3147
    %3149 = vmatmul.bf16.gmra.mxu0 %v2287
    %v3150 = vpop.f32.mrf.mxu0
    %v3151 = vadd.f32 %v2952, %v3150
    %v3152 = vpop.f32.mrf.mxu0
    %v3153 = vadd.f32 %v2954, %v3152
    %3154 = vmatmul.bf16.gmra.mxu0 %v2288
    %v3155 = vpop.f32.mrf.mxu0
    %v3156 = vadd.f32 %v2957, %v3155
    %v3157 = vpop.f32.mrf.mxu0
    %v3158 = vadd.f32 %v2959, %v3157
    %3159 = vmatmul.bf16.gmra.mxu0 %v2289
    %v3160 = vpop.f32.mrf.mxu0
    %v3161 = vadd.f32 %v2962, %v3160
    %v3162 = vpop.f32.mrf.mxu0
    %v3163 = vadd.f32 %v2964, %v3162
    %3164 = vmatmul.bf16.gmra.mxu0 %v2106
    %v3165 = vpop.f32.mrf.mxu0
    %v3166 = vadd.f32 %v2967, %v3165
    %v3167 = vpop.f32.mrf.mxu0
    %v3168 = vadd.f32 %v2969, %v3167
    %3169 = vmatmul.bf16.gmra.mxu0 %v2107
    %v3170 = vpop.f32.mrf.mxu0
    %v3171 = vadd.f32 %v2972, %v3170
    %v3172 = vpop.f32.mrf.mxu0
    %v3173 = vadd.f32 %v2974, %v3172
    %3174 = vmatmul.bf16.gmra.mxu0 %v2254
    %v3175 = vpop.f32.mrf.mxu0
    %v3176 = vadd.f32 %v2977, %v3175
    %v3177 = vpop.f32.mrf.mxu0
    %v3178 = vadd.f32 %v2979, %v3177
    %3179 = vmatmul.bf16.gmra.mxu0 %v2255
    %v3180 = vpop.f32.mrf.mxu0
    %v3181 = vadd.f32 %v2982, %v3180
    %v3182 = vpop.f32.mrf.mxu0
    %v3183 = vadd.f32 %v2984, %v3182
    %3184 = vdwg.mxu0
    %3185 = vmatpush.bf16.msra.mxu0 %v2555
    %3186 = vmatpush.bf16.msra.mxu0 %v2554
    %3187 = vmatpush.bf16.msra.mxu0 %v2553
    %3188 = vmatpush.bf16.msra.mxu0 %v2552
    %3189 = vmatpush.bf16.msra.mxu0 %v2551
    %3190 = vmatpush.bf16.msra.mxu0 %v2550
    %3191 = vmatpush.bf16.msra.mxu0 %v2549
    %3192 = vmatpush.bf16.msra.mxu0 %v2548
    %3193 = vmatmul.bf16.gmra.mxu0 %v2258
    %v3194 = vpop.f32.mrf.mxu0
    %v3195 = vadd.f32 %v2996, %v3194
    %v3196 = vpop.f32.mrf.mxu0
    %v3197 = vadd.f32 %v2998, %v3196
    %3198 = vmatmul.bf16.gmra.mxu0 %v2259
    %v3199 = vpop.f32.mrf.mxu0
    %v3200 = vadd.f32 %v3001, %v3199
    %v3201 = vpop.f32.mrf.mxu0
    %v3202 = vadd.f32 %v3003, %v3201
    %3203 = vmatmul.bf16.gmra.mxu0 %v2260
    %v3204 = vpop.f32.mrf.mxu0
    %v3205 = vadd.f32 %v3006, %v3204
    %v3206 = vpop.f32.mrf.mxu0
    %v3207 = vadd.f32 %v3008, %v3206
    %3208 = vmatmul.bf16.gmra.mxu0 %v2261
    %v3209 = vpop.f32.mrf.mxu0
    %v3210 = vadd.f32 %v3011, %v3209
    %v3211 = vpop.f32.mrf.mxu0
    %v3212 = vadd.f32 %v3013, %v3211
    %3213 = vmatmul.bf16.gmra.mxu0 %v2262
    %v3214 = vpop.f32.mrf.mxu0
    %v3215 = vadd.f32 %v3016, %v3214
    %v3216 = vpop.f32.mrf.mxu0
    %v3217 = vadd.f32 %v3018, %v3216
    %3218 = vmatmul.bf16.gmra.mxu0 %v2263
    %v3219 = vpop.f32.mrf.mxu0
    %v3220 = vadd.f32 %v3021, %v3219
    %v3221 = vpop.f32.mrf.mxu0
    %v3222 = vadd.f32 %v3023, %v3221
    %3223 = vmatmul.bf16.gmra.mxu0 %v2264
    %v3224 = vpop.f32.mrf.mxu0
    %v3225 = vadd.f32 %v3026, %v3224
    %v3226 = vpop.f32.mrf.mxu0
    %v3227 = vadd.f32 %v3028, %v3226
    %3228 = vmatmul.bf16.gmra.mxu0 %v2265
    %v3229 = vpop.f32.mrf.mxu0
    %v3230 = vadd.f32 %v3031, %v3229
    %v3231 = vpop.f32.mrf.mxu0
    %v3232 = vadd.f32 %v3033, %v3231
    %3233 = vmatmul.bf16.gmra.mxu0 %v2266
    %v3234 = vpop.f32.mrf.mxu0
    %v3235 = vadd.f32 %v3036, %v3234
    %v3236 = vpop.f32.mrf.mxu0
    %v3237 = vadd.f32 %v3038, %v3236
    %3238 = vmatmul.bf16.gmra.mxu0 %v2267
    %v3239 = vpop.f32.mrf.mxu0
    %v3240 = vadd.f32 %v3041, %v3239
    %v3241 = vpop.f32.mrf.mxu0
    %v3242 = vadd.f32 %v3043, %v3241
    %3243 = vmatmul.bf16.gmra.mxu0 %v2268
    %v3244 = vpop.f32.mrf.mxu0
    %v3245 = vadd.f32 %v3046, %v3244
    %v3246 = vpop.f32.mrf.mxu0
    %v3247 = vadd.f32 %v3048, %v3246
    %3248 = vmatmul.bf16.gmra.mxu0 %v2269
    %v3249 = vpop.f32.mrf.mxu0
    %v3250 = vadd.f32 %v3051, %v3249
    %v3251 = vpop.f32.mrf.mxu0
    %v3252 = vadd.f32 %v3053, %v3251
    %3253 = vmatmul.bf16.gmra.mxu0 %v2270
    %v3254 = vpop.f32.mrf.mxu0
    %v3255 = vadd.f32 %v3056, %v3254
    %v3256 = vpop.f32.mrf.mxu0
    %v3257 = vadd.f32 %v3058, %v3256
    %3258 = vmatmul.bf16.gmra.mxu0 %v2271
    %v3259 = vpop.f32.mrf.mxu0
    %v3260 = vadd.f32 %v3061, %v3259
    %v3261 = vpop.f32.mrf.mxu0
    %v3262 = vadd.f32 %v3063, %v3261
    %3263 = vmatmul.bf16.gmra.mxu0 %v2272
    %v3264 = vpop.f32.mrf.mxu0
    %v3265 = vadd.f32 %v3066, %v3264
    %v3266 = vpop.f32.mrf.mxu0
    %v3267 = vadd.f32 %v3068, %v3266
    %3268 = vmatmul.bf16.gmra.mxu0 %v2273
    %v3269 = vpop.f32.mrf.mxu0
    %v3270 = vadd.f32 %v3071, %v3269
    %v3271 = vpop.f32.mrf.mxu0
    %v3272 = vadd.f32 %v3073, %v3271
    %3273 = vmatmul.bf16.gmra.mxu0 %v2274
    %v3274 = vpop.f32.mrf.mxu0
    %v3275 = vadd.f32 %v3076, %v3274
    %v3276 = vpop.f32.mrf.mxu0
    %v3277 = vadd.f32 %v3078, %v3276
    %3278 = vmatmul.bf16.gmra.mxu0 %v2275
    %v3279 = vpop.f32.mrf.mxu0
    %v3280 = vadd.f32 %v3081, %v3279
    %v3281 = vpop.f32.mrf.mxu0
    %v3282 = vadd.f32 %v3083, %v3281
    %3283 = vmatmul.bf16.gmra.mxu0 %v2276
    %v3284 = vpop.f32.mrf.mxu0
    %v3285 = vadd.f32 %v3086, %v3284
    %v3286 = vpop.f32.mrf.mxu0
    %v3287 = vadd.f32 %v3088, %v3286
    %3288 = vmatmul.bf16.gmra.mxu0 %v2277
    %v3289 = vpop.f32.mrf.mxu0
    %v3290 = vadd.f32 %v3091, %v3289
    %v3291 = vpop.f32.mrf.mxu0
    %v3292 = vadd.f32 %v3093, %v3291
    %3293 = vmatmul.bf16.gmra.mxu0 %v2278
    %v3294 = vpop.f32.mrf.mxu0
    %v3295 = vadd.f32 %v3096, %v3294
    %v3296 = vpop.f32.mrf.mxu0
    %v3297 = vadd.f32 %v3098, %v3296
    %3298 = vmatmul.bf16.gmra.mxu0 %v2279
    %v3299 = vpop.f32.mrf.mxu0
    %v3300 = vadd.f32 %v3101, %v3299
    %v3301 = vpop.f32.mrf.mxu0
    %v3302 = vadd.f32 %v3103, %v3301
    %3303 = vmatmul.bf16.gmra.mxu0 %v2280
    %v3304 = vpop.f32.mrf.mxu0
    %v3305 = vadd.f32 %v3106, %v3304
    %v3306 = vpop.f32.mrf.mxu0
    %v3307 = vadd.f32 %v3108, %v3306
    %3308 = vmatmul.bf16.gmra.mxu0 %v2281
    %v3309 = vpop.f32.mrf.mxu0
    %v3310 = vadd.f32 %v3111, %v3309
    %v3311 = vpop.f32.mrf.mxu0
    %v3312 = vadd.f32 %v3113, %v3311
    %3313 = vmatmul.bf16.gmra.mxu0 %v2282
    %v3314 = vpop.f32.mrf.mxu0
    %v3315 = vadd.f32 %v3116, %v3314
    %v3316 = vpop.f32.mrf.mxu0
    %v3317 = vadd.f32 %v3118, %v3316
    %3318 = vmatmul.bf16.gmra.mxu0 %v2283
    %v3319 = vpop.f32.mrf.mxu0
    %v3320 = vadd.f32 %v3121, %v3319
    %v3321 = vpop.f32.mrf.mxu0
    %v3322 = vadd.f32 %v3123, %v3321
    %3323 = vmatmul.bf16.gmra.mxu0 %v2284
    %v3324 = vpop.f32.mrf.mxu0
    %v3325 = vadd.f32 %v3126, %v3324
    %v3326 = vpop.f32.mrf.mxu0
    %v3327 = vadd.f32 %v3128, %v3326
    %3328 = vmatmul.bf16.gmra.mxu0 %v2285
    %v3329 = vpop.f32.mrf.mxu0
    %v3330 = vadd.f32 %v3131, %v3329
    %v3331 = vpop.f32.mrf.mxu0
    %v3332 = vadd.f32 %v3133, %v3331
    %3333 = vmatmul.bf16.gmra.mxu0 %v2286
    %v3334 = vpop.f32.mrf.mxu0
    %v3335 = vadd.f32 %v3136, %v3334
    %v3336 = vpop.f32.mrf.mxu0
    %v3337 = vadd.f32 %v3138, %v3336
    %3338 = vmatmul.bf16.gmra.mxu0 %v2287
    %v3339 = vpop.f32.mrf.mxu0
    %v3340 = vadd.f32 %v3141, %v3339
    %v3341 = vpop.f32.mrf.mxu0
    %v3342 = vadd.f32 %v3143, %v3341
    %3343 = vmatmul.bf16.gmra.mxu0 %v2288
    %v3344 = vpop.f32.mrf.mxu0
    %v3345 = vadd.f32 %v3146, %v3344
    %v3346 = vpop.f32.mrf.mxu0
    %v3347 = vadd.f32 %v3148, %v3346
    %3348 = vmatmul.bf16.gmra.mxu0 %v2289
    %v3349 = vpop.f32.mrf.mxu0
    %v3350 = vadd.f32 %v3151, %v3349
    %v3351 = vpop.f32.mrf.mxu0
    %v3352 = vadd.f32 %v3153, %v3351
    %3353 = vmatmul.bf16.gmra.mxu0 %v2106
    %v3354 = vpop.f32.mrf.mxu0
    %v3355 = vadd.f32 %v3156, %v3354
    %v3356 = vpop.f32.mrf.mxu0
    %v3357 = vadd.f32 %v3158, %v3356
    %3358 = vmatmul.bf16.gmra.mxu0 %v2107
    %v3359 = vpop.f32.mrf.mxu0
    %v3360 = vadd.f32 %v3161, %v3359
    %v3361 = vpop.f32.mrf.mxu0
    %v3362 = vadd.f32 %v3163, %v3361
    %3363 = vmatmul.bf16.gmra.mxu0 %v2254
    %v3364 = vpop.f32.mrf.mxu0
    %v3365 = vadd.f32 %v3166, %v3364
    %v3366 = vpop.f32.mrf.mxu0
    %v3367 = vadd.f32 %v3168, %v3366
    %3368 = vmatmul.bf16.gmra.mxu0 %v2255
    %v3369 = vpop.f32.mrf.mxu0
    %v3370 = vadd.f32 %v3171, %v3369
    %v3371 = vpop.f32.mrf.mxu0
    %v3372 = vadd.f32 %v3173, %v3371
    %3373 = vmatmul.bf16.gmra.mxu0 %v2256
    %v3374 = vpop.f32.mrf.mxu0
    %v3375 = vadd.f32 %v3176, %v3374
    %v3376 = vpop.f32.mrf.mxu0
    %v3377 = vadd.f32 %v3178, %v3376
    %3378 = vmatmul.bf16.gmra.mxu0 %v2257
    %v3379 = vpop.f32.mrf.mxu0
    %v3380 = vadd.f32 %v3181, %v3379
    %v3381 = vpop.f32.mrf.mxu0
    %v3382 = vadd.f32 %v3183, %v3381
    %3383 = vdwg.mxu0
    %v3384 = vmax.f32 %v3195, 0.0
    %v3385 = vmax.f32 %v3197, 0.0
    %v3386 = vmax.f32 %v3200, 0.0
    %v3387 = vmax.f32 %v3202, 0.0
    %v3388 = vmax.f32 %v3205, 0.0
    %v3389 = vmax.f32 %v3207, 0.0
    %v3390 = vmax.f32 %v3210, 0.0
    %v3391 = vmax.f32 %v3212, 0.0
    %v3392 = vmax.f32 %v3215, 0.0
    %v3393 = vmax.f32 %v3217, 0.0
    %v3394 = vmax.f32 %v3220, 0.0
    %v3395 = vmax.f32 %v3222, 0.0
    %v3396 = vmax.f32 %v3225, 0.0
    %v3397 = vmax.f32 %v3227, 0.0
    %v3398 = vmax.f32 %v3230, 0.0
    %v3399 = vmax.f32 %v3232, 0.0
    %v3400 = vmax.f32 %v3235, 0.0
    %v3401 = vmax.f32 %v3237, 0.0
    %v3402 = vmax.f32 %v3240, 0.0
    %v3403 = vmax.f32 %v3242, 0.0
    %v3404 = vmax.f32 %v3245, 0.0
    %v3405 = vmax.f32 %v3247, 0.0
    %v3406 = vmax.f32 %v3250, 0.0
    %v3407 = vmax.f32 %v3252, 0.0
    %v3408 = vmax.f32 %v3255, 0.0
    %v3409 = vmax.f32 %v3257, 0.0
    %v3410 = vmax.f32 %v3260, 0.0
    %v3411 = vmax.f32 %v3262, 0.0
    %v3412 = vmax.f32 %v3265, 0.0
    %v3413 = vmax.f32 %v3267, 0.0
    %v3414 = vmax.f32 %v3270, 0.0
    %v3415 = vmax.f32 %v3272, 0.0
    %v3416 = vmax.f32 %v3275, 0.0
    %v3417 = vmax.f32 %v3277, 0.0
    %v3418 = vmax.f32 %v3280, 0.0
    %v3419 = vmax.f32 %v3282, 0.0
    %v3420 = vmax.f32 %v3285, 0.0
    %v3421 = vmax.f32 %v3287, 0.0
    %v3422 = vmax.f32 %v3290, 0.0
    %v3423 = vmax.f32 %v3292, 0.0
    %v3424 = vmax.f32 %v3295, 0.0
    %v3425 = vmax.f32 %v3297, 0.0
    %v3426 = vmax.f32 %v3300, 0.0
    %v3427 = vmax.f32 %v3302, 0.0
    %v3428 = vmax.f32 %v3305, 0.0
    %v3429 = vmax.f32 %v3307, 0.0
    %v3430 = vmax.f32 %v3310, 0.0
    %v3431 = vmax.f32 %v3312, 0.0
    %v3432 = vmax.f32 %v3315, 0.0
    %v3433 = vmax.f32 %v3317, 0.0
    %v3434 = vmax.f32 %v3320, 0.0
    %v3435 = vmax.f32 %v3322, 0.0
    %v3436 = vmax.f32 %v3325, 0.0
    %v3437 = vmax.f32 %v3327, 0.0
    %v3438 = vmax.f32 %v3330, 0.0
    %v3439 = vmax.f32 %v3332, 0.0
    %v3440 = vmax.f32 %v3335, 0.0
    %v3441 = vmax.f32 %v3337, 0.0
    %v3442 = vmax.f32 %v3340, 0.0
    %v3443 = vmax.f32 %v3342, 0.0
    %v3444 = vmax.f32 %v3345, 0.0
    %v3445 = vmax.f32 %v3347, 0.0
    %v3446 = vmax.f32 %v3350, 0.0
    %v3447 = vmax.f32 %v3352, 0.0
    %v3448 = vmax.f32 %v3355, 0.0
    %v3449 = vmax.f32 %v3357, 0.0
    %v3450 = vmax.f32 %v3360, 0.0
    %v3451 = vmax.f32 %v3362, 0.0
    %v3452 = vmax.f32 %v3365, 0.0
    %v3453 = vmax.f32 %v3367, 0.0
    %v3454 = vmax.f32 %v3370, 0.0
    %v3455 = vmax.f32 %v3372, 0.0
    %v3456 = vmax.f32 %v3375, 0.0
    %v3457 = vmax.f32 %v3377, 0.0
    %v3458 = vmax.f32 %v3380, 0.0
    %v3459 = vmax.f32 %v3382, 0.0
    %v3460 = vsel %vm1870, %v3384, 0.0
    %v3461 = vsel %vm1871, %v3385, 0.0
    %v3462 = vsel %vm1872, %v3386, 0.0
    %v3463 = vsel %vm1873, %v3387, 0.0
    %v3464 = vsel %vm1874, %v3388, 0.0
    %v3465 = vsel %vm1875, %v3389, 0.0
    %v3466 = vsel %vm1876, %v3390, 0.0
    %v3467 = vsel %vm1877, %v3391, 0.0
    %v3468 = vsel %vm1878, %v3392, 0.0
    %v3469 = vsel %vm1879, %v3393, 0.0
    %v3470 = vsel %vm1880, %v3394, 0.0
    %v3471 = vsel %vm1881, %v3395, 0.0
    %v3472 = vsel %vm1882, %v3396, 0.0
    %v3473 = vsel %vm1883, %v3397, 0.0
    %v3474 = vsel %vm1884, %v3398, 0.0
    %v3475 = vsel %vm1885, %v3399, 0.0
    %v3476 = vsel %vm1886, %v3400, 0.0
    %v3477 = vsel %vm1887, %v3401, 0.0
    %v3478 = vsel %vm1888, %v3402, 0.0
    %v3479 = vsel %vm1889, %v3403, 0.0
    %v3480 = vsel %vm1890, %v3404, 0.0
    %v3481 = vsel %vm1891, %v3405, 0.0
    %v3482 = vsel %vm1892, %v3406, 0.0
    %v3483 = vsel %vm1893, %v3407, 0.0
    %v3484 = vsel %vm1894, %v3408, 0.0
    %v3485 = vsel %vm1895, %v3409, 0.0
    %v3486 = vsel %vm1896, %v3410, 0.0
    %v3487 = vsel %vm1897, %v3411, 0.0
    %v3488 = vsel %vm1898, %v3412, 0.0
    %v3489 = vsel %vm1899, %v3413, 0.0
    %v3490 = vsel %vm1900, %v3414, 0.0
    %v3491 = vsel %vm1901, %v3415, 0.0
    %v3492 = vsel %vm1902, %v3416, 0.0
    %v3493 = vsel %vm1903, %v3417, 0.0
    %v3494 = vsel %vm1904, %v3418, 0.0
    %v3495 = vsel %vm1905, %v3419, 0.0
    %v3496 = vsel %vm1906, %v3420, 0.0
    %v3497 = vsel %vm1907, %v3421, 0.0
    %v3498 = vsel %vm1908, %v3422, 0.0
    %v3499 = vsel %vm1909, %v3423, 0.0
    %v3500 = vsel %vm1910, %v3424, 0.0
    %v3501 = vsel %vm1911, %v3425, 0.0
    %v3502 = vsel %vm1912, %v3426, 0.0
    %v3503 = vsel %vm1913, %v3427, 0.0
    %v3504 = vsel %vm1914, %v3428, 0.0
    %v3505 = vsel %vm1915, %v3429, 0.0
    %v3506 = vsel %vm1916, %v3430, 0.0
    %v3507 = vsel %vm1917, %v3431, 0.0
    %v3508 = vsel %vm1918, %v3432, 0.0
    %v3509 = vsel %vm1919, %v3433, 0.0
    %v3510 = vsel %vm1920, %v3434, 0.0
    %v3511 = vsel %vm1921, %v3435, 0.0
    %v3512 = vsel %vm1922, %v3436, 0.0
    %v3513 = vsel %vm1923, %v3437, 0.0
    %v3514 = vsel %vm1924, %v3438, 0.0
    %v3515 = vsel %vm1925, %v3439, 0.0
    %v3516 = vsel %vm1926, %v3440, 0.0
    %v3517 = vsel %vm1927, %v3441, 0.0
    %v3518 = vsel %vm1928, %v3442, 0.0
    %v3519 = vsel %vm1929, %v3443, 0.0
    %v3520 = vsel %vm1930, %v3444, 0.0
    %v3521 = vsel %vm1931, %v3445, 0.0
    %v3522 = vsel %vm1932, %v3446, 0.0
    %v3523 = vsel %vm1933, %v3447, 0.0
    %v3524 = vsel %vm1934, %v3448, 0.0
    %v3525 = vsel %vm1935, %v3449, 0.0
    %v3526 = vsel %vm1936, %v3450, 0.0
    %v3527 = vsel %vm1937, %v3451, 0.0
    %v3528 = vsel %vm1938, %v3452, 0.0
    %v3529 = vsel %vm1939, %v3453, 0.0
    %v3530 = vsel %vm1940, %v3454, 0.0
    %v3531 = vsel %vm1941, %v3455, 0.0
    %v3532 = vsel %vm1942, %v3456, 0.0
    %v3533 = vsel %vm1943, %v3457, 0.0
    %v3534 = vsel %vm1944, %v3458, 0.0
    %v3535 = vsel %vm1945, %v3459, 0.0
    %v3536 = vpack.c.bf16 %v3460, %v3460
    %v3537 = vpack.c.bf16 %v3461, %v3461
    %v3538 = vpack.c.bf16 %v3462, %v3462
    %v3539 = vpack.c.bf16 %v3463, %v3463
    %v3540 = vpack.c.bf16 %v3464, %v3464
    %v3541 = vpack.c.bf16 %v3465, %v3465
    %v3542 = vpack.c.bf16 %v3466, %v3466
    %v3543 = vpack.c.bf16 %v3467, %v3467
    %v3544 = vpack.c.bf16 %v3468, %v3468
    %v3545 = vpack.c.bf16 %v3469, %v3469
    %v3546 = vpack.c.bf16 %v3470, %v3470
    %v3547 = vpack.c.bf16 %v3471, %v3471
    %v3548 = vpack.c.bf16 %v3472, %v3472
    %v3549 = vpack.c.bf16 %v3473, %v3473
    %v3550 = vpack.c.bf16 %v3474, %v3474
    %v3551 = vpack.c.bf16 %v3475, %v3475
    %v3552 = vpack.c.bf16 %v3476, %v3476
    %v3553 = vpack.c.bf16 %v3477, %v3477
    %v3554 = vpack.c.bf16 %v3478, %v3478
    %v3555 = vpack.c.bf16 %v3479, %v3479
    %v3556 = vpack.c.bf16 %v3480, %v3480
    %v3557 = vpack.c.bf16 %v3481, %v3481
    %v3558 = vpack.c.bf16 %v3482, %v3482
    %v3559 = vpack.c.bf16 %v3483, %v3483
    %v3560 = vpack.c.bf16 %v3484, %v3484
    %v3561 = vpack.c.bf16 %v3485, %v3485
    %v3562 = vpack.c.bf16 %v3486, %v3486
    %v3563 = vpack.c.bf16 %v3487, %v3487
    %v3564 = vpack.c.bf16 %v3488, %v3488
    %v3565 = vpack.c.bf16 %v3489, %v3489
    %v3566 = vpack.c.bf16 %v3490, %v3490
    %v3567 = vpack.c.bf16 %v3491, %v3491
    %v3568 = vpack.c.bf16 %v3492, %v3492
    %v3569 = vpack.c.bf16 %v3493, %v3493
    %v3570 = vpack.c.bf16 %v3494, %v3494
    %v3571 = vpack.c.bf16 %v3495, %v3495
    %v3572 = vpack.c.bf16 %v3496, %v3496
    %v3573 = vpack.c.bf16 %v3497, %v3497
    %v3574 = vpack.c.bf16 %v3498, %v3498
    %v3575 = vpack.c.bf16 %v3499, %v3499
    %v3576 = vpack.c.bf16 %v3500, %v3500
    %v3577 = vpack.c.bf16 %v3501, %v3501
    %v3578 = vpack.c.bf16 %v3502, %v3502
    %v3579 = vpack.c.bf16 %v3503, %v3503
    %v3580 = vpack.c.bf16 %v3504, %v3504
    %v3581 = vpack.c.bf16 %v3505, %v3505
    %v3582 = vpack.c.bf16 %v3506, %v3506
    %v3583 = vpack.c.bf16 %v3507, %v3507
    %v3584 = vpack.c.bf16 %v3508, %v3508
    %v3585 = vpack.c.bf16 %v3509, %v3509
    %v3586 = vpack.c.bf16 %v3510, %v3510
    %v3587 = vpack.c.bf16 %v3511, %v3511
    %v3588 = vpack.c.bf16 %v3512, %v3512
    %v3589 = vpack.c.bf16 %v3513, %v3513
    %v3590 = vpack.c.bf16 %v3514, %v3514
    %v3591 = vpack.c.bf16 %v3515, %v3515
    %v3592 = vpack.c.bf16 %v3516, %v3516
    %v3593 = vpack.c.bf16 %v3517, %v3517
    %v3594 = vpack.c.bf16 %v3518, %v3518
    %v3595 = vpack.c.bf16 %v3519, %v3519
    %v3596 = vpack.c.bf16 %v3520, %v3520
    %v3597 = vpack.c.bf16 %v3521, %v3521
    %v3598 = vpack.c.bf16 %v3522, %v3522
    %v3599 = vpack.c.bf16 %v3523, %v3523
    %v3600 = vpack.c.bf16 %v3524, %v3524
    %v3601 = vpack.c.bf16 %v3525, %v3525
    %v3602 = vpack.c.bf16 %v3526, %v3526
    %v3603 = vpack.c.bf16 %v3527, %v3527
    %v3604 = vpack.c.bf16 %v3528, %v3528
    %v3605 = vpack.c.bf16 %v3529, %v3529
    %v3606 = vpack.c.bf16 %v3530, %v3530
    %v3607 = vpack.c.bf16 %v3531, %v3531
    %v3608 = vpack.c.bf16 %v3532, %v3532
    %v3609 = vpack.c.bf16 %v3533, %v3533
    %v3610 = vpack.c.bf16 %v3534, %v3534
    %v3611 = vpack.c.bf16 %v3535, %v3535
    %v3616 = vunpack.c.l.b16 %v3608
    %v3617 = vunpack.c.l.b16 %v3609
    %v3618 = vunpack.c.l.b16 %v3610
    %v3619 = vunpack.c.l.b16 %v3611
    %v3620 = vpack.c.b16 %v3617, %v3616
    %v3621 = vpack.c.b16 %v3619, %v3618
    %v3696 = vunpack.c.l.b16 %v3536
    %v3697 = vunpack.c.l.b16 %v3537
    %v3698 = vunpack.c.l.b16 %v3538
    %v3699 = vunpack.c.l.b16 %v3539
    %v3700 = vunpack.c.l.b16 %v3540
    %v3701 = vunpack.c.l.b16 %v3541
    %v3702 = vunpack.c.l.b16 %v3542
    %v3703 = vunpack.c.l.b16 %v3543
    %v3704 = vunpack.c.l.b16 %v3544
    %v3705 = vunpack.c.l.b16 %v3545
    %v3706 = vunpack.c.l.b16 %v3546
    %v3707 = vunpack.c.l.b16 %v3547
    %v3708 = vunpack.c.l.b16 %v3548
    %v3709 = vunpack.c.l.b16 %v3549
    %v3710 = vunpack.c.l.b16 %v3550
    %v3711 = vunpack.c.l.b16 %v3551
    %v3712 = vunpack.c.l.b16 %v3552
    %v3713 = vunpack.c.l.b16 %v3553
    %v3714 = vunpack.c.l.b16 %v3554
    %v3715 = vunpack.c.l.b16 %v3555
    %v3716 = vunpack.c.l.b16 %v3556
    %v3717 = vunpack.c.l.b16 %v3557
    %v3718 = vunpack.c.l.b16 %v3558
    %v3719 = vunpack.c.l.b16 %v3559
    %v3720 = vunpack.c.l.b16 %v3560
    %v3721 = vunpack.c.l.b16 %v3561
    %v3722 = vunpack.c.l.b16 %v3562
    %v3723 = vunpack.c.l.b16 %v3563
    %v3724 = vunpack.c.l.b16 %v3564
    %v3725 = vunpack.c.l.b16 %v3565
    %v3726 = vunpack.c.l.b16 %v3566
    %v3727 = vunpack.c.l.b16 %v3567
    %v3728 = vunpack.c.l.b16 %v3568
    %v3729 = vunpack.c.l.b16 %v3569
    %v3730 = vunpack.c.l.b16 %v3570
    %v3731 = vunpack.c.l.b16 %v3571
    %v3732 = vunpack.c.l.b16 %v3572
    %v3733 = vunpack.c.l.b16 %v3573
    %v3734 = vunpack.c.l.b16 %v3574
    %v3735 = vunpack.c.l.b16 %v3575
    %v3736 = vunpack.c.l.b16 %v3576
    %v3737 = vunpack.c.l.b16 %v3577
    %v3738 = vunpack.c.l.b16 %v3578
    %v3739 = vunpack.c.l.b16 %v3579
    %v3740 = vunpack.c.l.b16 %v3580
    %v3741 = vunpack.c.l.b16 %v3581
    %v3742 = vunpack.c.l.b16 %v3582
    %v3743 = vunpack.c.l.b16 %v3583
    %v3744 = vunpack.c.l.b16 %v3584
    %v3745 = vunpack.c.l.b16 %v3585
    %v3746 = vunpack.c.l.b16 %v3586
    %v3747 = vunpack.c.l.b16 %v3587
    %v3748 = vunpack.c.l.b16 %v3588
    %v3749 = vunpack.c.l.b16 %v3589
    %v3750 = vunpack.c.l.b16 %v3590
    %v3751 = vunpack.c.l.b16 %v3591
    %v3752 = vunpack.c.l.b16 %v3592
    %v3753 = vunpack.c.l.b16 %v3593
    %v3754 = vunpack.c.l.b16 %v3594
    %v3755 = vunpack.c.l.b16 %v3595
    %v3756 = vunpack.c.l.b16 %v3596
    %v3757 = vunpack.c.l.b16 %v3597
    %v3758 = vunpack.c.l.b16 %v3598
    %v3759 = vunpack.c.l.b16 %v3599
    %v3760 = vunpack.c.l.b16 %v3600
    %v3761 = vunpack.c.l.b16 %v3601
    %v3762 = vunpack.c.l.b16 %v3602
    %v3763 = vunpack.c.l.b16 %v3603
    %v3764 = vunpack.c.l.b16 %v3604
    %v3765 = vunpack.c.l.b16 %v3605
    %v3766 = vunpack.c.l.b16 %v3606
    %v3767 = vunpack.c.l.b16 %v3607
    %v3768 = vpack.c.b16 %v3697, %v3696
    %v3769 = vpack.c.b16 %v3699, %v3698
    %v3770 = vpack.c.b16 %v3701, %v3700
    %v3771 = vpack.c.b16 %v3703, %v3702
    %v3772 = vpack.c.b16 %v3705, %v3704
    %v3773 = vpack.c.b16 %v3707, %v3706
    %v3774 = vpack.c.b16 %v3709, %v3708
    %v3775 = vpack.c.b16 %v3711, %v3710
    %v3776 = vpack.c.b16 %v3713, %v3712
    %v3777 = vpack.c.b16 %v3715, %v3714
    %v3778 = vpack.c.b16 %v3717, %v3716
    %v3779 = vpack.c.b16 %v3719, %v3718
    %v3780 = vpack.c.b16 %v3721, %v3720
    %v3781 = vpack.c.b16 %v3723, %v3722
    %v3782 = vpack.c.b16 %v3725, %v3724
    %v3783 = vpack.c.b16 %v3727, %v3726
    %v3784 = vpack.c.b16 %v3729, %v3728
    %v3785 = vpack.c.b16 %v3731, %v3730
    %v3786 = vpack.c.b16 %v3733, %v3732
    %v3787 = vpack.c.b16 %v3735, %v3734
    %v3788 = vpack.c.b16 %v3737, %v3736
    %v3789 = vpack.c.b16 %v3739, %v3738
    %v3790 = vpack.c.b16 %v3741, %v3740
    %v3791 = vpack.c.b16 %v3743, %v3742
    %v3792 = vpack.c.b16 %v3745, %v3744
    %v3793 = vpack.c.b16 %v3747, %v3746
    %v3794 = vpack.c.b16 %v3749, %v3748
    %v3795 = vpack.c.b16 %v3751, %v3750
    %v3796 = vpack.c.b16 %v3753, %v3752
    %v3797 = vpack.c.b16 %v3755, %v3754
    %v3798 = vpack.c.b16 %v3757, %v3756
    %v3799 = vpack.c.b16 %v3759, %v3758
    %v3800 = vpack.c.b16 %v3761, %v3760
    %v3801 = vpack.c.b16 %v3763, %v3762
    %v3802 = vpack.c.b16 %v3765, %v3764
    %v3803 = vpack.c.b16 %v3767, %v3766
    %s3840 = scalar_lea.vmem [#allocation2], 512
    %v3841 = vld [vmem:[%s3840] sm:$0xf]
    %v3842 = vld [vmem:[%s3840 + $0x4] sm:$0xf]
    %v3843 = vld [vmem:[%s3840 + $0x8] sm:$0xf]
    %v3844 = vld [vmem:[%s3840 + $0xc] sm:$0xf]
    %v3845 = vld [vmem:[%s3840 + $0x10] sm:$0xf]
    %v3846 = vld [vmem:[%s3840 + $0x14] sm:$0xf]
    %v3847 = vld [vmem:[%s3840 + $0x18] sm:$0xf]
    %v3848 = vld [vmem:[%s3840 + $0x1c] sm:$0xf]
    %v3849 = vld [vmem:[%s3840 + $0x20] sm:$0xf]
    %v3850 = vld [vmem:[%s3840 + $0x24] sm:$0xf]
    %v3851 = vld [vmem:[%s3840 + $0x28] sm:$0xf]
    %v3852 = vld [vmem:[%s3840 + $0x2c] sm:$0xf]
    %v3853 = vld [vmem:[%s3840 + $0x30] sm:$0xf]
    %v3854 = vld [vmem:[%s3840 + $0x34] sm:$0xf]
    %v3855 = vld [vmem:[%s3840 + $0x38] sm:$0xf]
    %v3856 = vld [vmem:[%s3840 + $0x3c] sm:$0xf]
    %v3857 = vld [vmem:[%s3840 + $0x40] sm:$0xf]
    %v3858 = vld [vmem:[%s3840 + $0x44] sm:$0xf]
    %v3859 = vld [vmem:[%s3840 + $0x48] sm:$0xf]
    %v3860 = vld [vmem:[%s3840 + $0x4c] sm:$0xf]
    %v3861 = vld [vmem:[%s3840 + $0x50] sm:$0xf]
    %v3862 = vld [vmem:[%s3840 + $0x54] sm:$0xf]
    %v3863 = vld [vmem:[%s3840 + $0x58] sm:$0xf]
    %v3864 = vld [vmem:[%s3840 + $0x5c] sm:$0xf]
    %v3865 = vld [vmem:[%s3840 + $0x60] sm:$0xf]
    %v3866 = vld [vmem:[%s3840 + $0x64] sm:$0xf]
    %v3867 = vld [vmem:[%s3840 + $0x68] sm:$0xf]
    %v3868 = vld [vmem:[%s3840 + $0x6c] sm:$0xf]
    %v3869 = vld [vmem:[%s3840 + $0x70] sm:$0xf]
    %v3870 = vld [vmem:[%s3840 + $0x74] sm:$0xf]
    %v3871 = vld [vmem:[%s3840 + $0x78] sm:$0xf]
    %v3872 = vld [vmem:[%s3840 + $0x7c] sm:$0xf]
    %v3873 = vld [vmem:[%s3840 + $0x80] sm:$0xf]
    %v3874 = vld [vmem:[%s3840 + $0x84] sm:$0xf]
    %v3875 = vld [vmem:[%s3840 + $0x88] sm:$0xf]
    %v3876 = vld [vmem:[%s3840 + $0x8c] sm:$0xf]
    %v3877 = vld [vmem:[%s3840 + $0x90] sm:$0xf]
    %v3878 = vld [vmem:[%s3840 + $0x94] sm:$0xf]
    %v3879 = vld [vmem:[%s3840 + $0x98] sm:$0xf]
    %v3880 = vld [vmem:[%s3840 + $0x9c] sm:$0xf]
    %v3881 = vld [vmem:[%s3840 + $0xa0] sm:$0xf]
    %v3882 = vld [vmem:[%s3840 + $0xa4] sm:$0xf]
    %v3883 = vld [vmem:[%s3840 + $0xa8] sm:$0xf]
    %v3884 = vld [vmem:[%s3840 + $0xac] sm:$0xf]
    %v3885 = vld [vmem:[%s3840 + $0xb0] sm:$0xf]
    %v3886 = vld [vmem:[%s3840 + $0xb4] sm:$0xf]
    %v3887 = vld [vmem:[%s3840 + $0xb8] sm:$0xf]
    %v3888 = vld [vmem:[%s3840 + $0xbc] sm:$0xf]
    %v3889 = vld [vmem:[%s3840 + $0xc0] sm:$0xf]
    %v3890 = vld [vmem:[%s3840 + $0xc4] sm:$0xf]
    %v3891 = vld [vmem:[%s3840 + $0xc8] sm:$0xf]
    %v3892 = vld [vmem:[%s3840 + $0xcc] sm:$0xf]
    %v3893 = vld [vmem:[%s3840 + $0xd0] sm:$0xf]
    %v3894 = vld [vmem:[%s3840 + $0xd4] sm:$0xf]
    %v3895 = vld [vmem:[%s3840 + $0xd8] sm:$0xf]
    %v3896 = vld [vmem:[%s3840 + $0xdc] sm:$0xf]
    %v3897 = vld [vmem:[%s3840 + $0xe0] sm:$0xf]
    %v3898 = vld [vmem:[%s3840 + $0xe4] sm:$0xf]
    %v3899 = vld [vmem:[%s3840 + $0xe8] sm:$0xf]
    %v3900 = vld [vmem:[%s3840 + $0xec] sm:$0xf]
    %v3901 = vld [vmem:[%s3840 + $0xf0] sm:$0xf]
    %v3902 = vld [vmem:[%s3840 + $0xf4] sm:$0xf]
    %v3903 = vld [vmem:[%s3840 + $0xf8] sm:$0xf]
    %v3904 = vld [vmem:[%s3840 + $0xfc] sm:$0xf]
    %s3905 = scalar_lea.vmem %s2, 2
    %v3906 = vld [vmem:[%s3905] sm:$0x1]
    %v3908 = vperm.slane %v3906, 0
    %v3974 = vunpack.c.l.b16 %v3841
    %v3975 = vunpack.c.l.b16 %v3842
    %v3976 = vunpack.c.l.b16 %v3843
    %v3977 = vunpack.c.l.b16 %v3844
    %v3978 = vunpack.c.l.b16 %v3845
    %v3979 = vunpack.c.l.b16 %v3846
    %v3980 = vunpack.c.l.b16 %v3847
    %v3981 = vunpack.c.l.b16 %v3848
    %v3982 = vunpack.c.l.b16 %v3849
    %v3983 = vunpack.c.l.b16 %v3850
    %v3984 = vunpack.c.l.b16 %v3851
    %v3985 = vunpack.c.l.b16 %v3852
    %v3986 = vunpack.c.l.b16 %v3853
    %v3987 = vunpack.c.l.b16 %v3854
    %v3988 = vunpack.c.l.b16 %v3855
    %v3989 = vunpack.c.l.b16 %v3856
    %v3990 = vunpack.c.l.b16 %v3857
    %v3991 = vunpack.c.l.b16 %v3858
    %v3992 = vunpack.c.l.b16 %v3859
    %v3993 = vunpack.c.l.b16 %v3860
    %v3994 = vunpack.c.l.b16 %v3861
    %v3995 = vunpack.c.l.b16 %v3862
    %v3996 = vunpack.c.l.b16 %v3863
    %v3997 = vunpack.c.l.b16 %v3864
    %v3998 = vunpack.c.l.b16 %v3865
    %v3999 = vunpack.c.l.b16 %v3866
    %v4000 = vunpack.c.l.b16 %v3867
    %v4001 = vunpack.c.l.b16 %v3868
    %v4002 = vunpack.c.l.b16 %v3869
    %v4003 = vunpack.c.l.b16 %v3870
    %v4004 = vunpack.c.l.b16 %v3871
    %v4005 = vunpack.c.l.b16 %v3872
    %v4006 = vunpack.c.l.b16 %v3873
    %v4007 = vunpack.c.l.b16 %v3874
    %v4008 = vunpack.c.l.b16 %v3875
    %v4009 = vunpack.c.l.b16 %v3876
    %v4010 = vunpack.c.l.b16 %v3877
    %v4011 = vunpack.c.l.b16 %v3878
    %v4012 = vunpack.c.l.b16 %v3879
    %v4013 = vunpack.c.l.b16 %v3880
    %v4014 = vunpack.c.l.b16 %v3881
    %v4015 = vunpack.c.l.b16 %v3882
    %v4016 = vunpack.c.l.b16 %v3883
    %v4017 = vunpack.c.l.b16 %v3884
    %v4018 = vunpack.c.l.b16 %v3885
    %v4019 = vunpack.c.l.b16 %v3886
    %v4020 = vunpack.c.l.b16 %v3887
    %v4021 = vunpack.c.l.b16 %v3888
    %v4022 = vunpack.c.l.b16 %v3889
    %v4023 = vunpack.c.l.b16 %v3890
    %v4024 = vunpack.c.l.b16 %v3891
    %v4025 = vunpack.c.l.b16 %v3892
    %v4026 = vunpack.c.l.b16 %v3893
    %v4027 = vunpack.c.l.b16 %v3894
    %v4028 = vunpack.c.l.b16 %v3895
    %v4029 = vunpack.c.l.b16 %v3896
    %v4030 = vunpack.c.l.b16 %v3897
    %v4031 = vunpack.c.l.b16 %v3898
    %v4032 = vunpack.c.l.b16 %v3899
    %v4033 = vunpack.c.l.b16 %v3900
    %v4034 = vunpack.c.l.b16 %v3901
    %v4035 = vunpack.c.l.b16 %v3902
    %v4036 = vunpack.c.l.b16 %v3903
    %v4037 = vunpack.c.l.b16 %v3904
    %v4038 = vpack.c.b16 %v3975, %v3974
    %v4039 = vpack.c.b16 %v3977, %v3976
    %v4040 = vpack.c.b16 %v3979, %v3978
    %v4041 = vpack.c.b16 %v3981, %v3980
    %v4042 = vpack.c.b16 %v3983, %v3982
    %v4043 = vpack.c.b16 %v3985, %v3984
    %v4044 = vpack.c.b16 %v3987, %v3986
    %v4045 = vpack.c.b16 %v3989, %v3988
    %v4046 = vpack.c.b16 %v3991, %v3990
    %v4047 = vpack.c.b16 %v3993, %v3992
    %v4048 = vpack.c.b16 %v3995, %v3994
    %v4049 = vpack.c.b16 %v3997, %v3996
    %v4050 = vpack.c.b16 %v3999, %v3998
    %v4051 = vpack.c.b16 %v4001, %v4000
    %v4052 = vpack.c.b16 %v4003, %v4002
    %v4053 = vpack.c.b16 %v4005, %v4004
    %v4054 = vpack.c.b16 %v4007, %v4006
    %v4055 = vpack.c.b16 %v4009, %v4008
    %v4056 = vpack.c.b16 %v4011, %v4010
    %v4057 = vpack.c.b16 %v4013, %v4012
    %v4058 = vpack.c.b16 %v4015, %v4014
    %v4059 = vpack.c.b16 %v4017, %v4016
    %v4060 = vpack.c.b16 %v4019, %v4018
    %v4061 = vpack.c.b16 %v4021, %v4020
    %v4062 = vpack.c.b16 %v4023, %v4022
    %v4063 = vpack.c.b16 %v4025, %v4024
    %v4064 = vpack.c.b16 %v4027, %v4026
    %v4065 = vpack.c.b16 %v4029, %v4028
    %v4066 = vpack.c.b16 %v4031, %v4030
    %v4067 = vpack.c.b16 %v4033, %v4032
    %v4068 = vpack.c.b16 %v4035, %v4034
    %v4069 = vpack.c.b16 %v4037, %v4036
    %4102 = vmatpush.bf16.msra.mxu0 %v4045
    %4103 = vmatpush.bf16.msra.mxu0 %v4044
    %4104 = vmatpush.bf16.msra.mxu0 %v4043
    %4105 = vmatpush.bf16.msra.mxu0 %v4042
    %4106 = vmatpush.bf16.msra.mxu0 %v4041
    %4107 = vmatpush.bf16.msra.mxu0 %v4040
    %4108 = vmatpush.bf16.msra.mxu0 %v4039
    %4109 = vmatpush.bf16.msra.mxu0 %v4038
    %4110 = vmatmul.bf16.gmra.mxu0 %v3620
    %v4111 = vpop.f32.mrf.mxu0
    %v4112 = vadd.f32 %v3908, %v4111
    %v4113 = vpop.f32.mrf.mxu0
    %v4114 = vadd.f32 %v3908, %v4113
    %4115 = vmatmul.bf16.gmra.mxu0 %v3621
    %v4116 = vpop.f32.mrf.mxu0
    %v4117 = vadd.f32 %v3908, %v4116
    %v4118 = vpop.f32.mrf.mxu0
    %v4119 = vadd.f32 %v3908, %v4118
    %4120 = vmatmul.bf16.gmra.mxu0 %v3768
    %v4121 = vpop.f32.mrf.mxu0
    %v4122 = vadd.f32 %v3908, %v4121
    %v4123 = vpop.f32.mrf.mxu0
    %v4124 = vadd.f32 %v3908, %v4123
    %4125 = vmatmul.bf16.gmra.mxu0 %v3769
    %v4126 = vpop.f32.mrf.mxu0
    %v4127 = vadd.f32 %v3908, %v4126
    %v4128 = vpop.f32.mrf.mxu0
    %v4129 = vadd.f32 %v3908, %v4128
    %4130 = vmatmul.bf16.gmra.mxu0 %v3770
    %v4131 = vpop.f32.mrf.mxu0
    %v4132 = vadd.f32 %v3908, %v4131
    %v4133 = vpop.f32.mrf.mxu0
    %v4134 = vadd.f32 %v3908, %v4133
    %4135 = vmatmul.bf16.gmra.mxu0 %v3771
    %v4136 = vpop.f32.mrf.mxu0
    %v4137 = vadd.f32 %v3908, %v4136
    %v4138 = vpop.f32.mrf.mxu0
    %v4139 = vadd.f32 %v3908, %v4138
    %4140 = vmatmul.bf16.gmra.mxu0 %v3772
    %v4141 = vpop.f32.mrf.mxu0
    %v4142 = vadd.f32 %v3908, %v4141
    %v4143 = vpop.f32.mrf.mxu0
    %v4144 = vadd.f32 %v3908, %v4143
    %4145 = vmatmul.bf16.gmra.mxu0 %v3773
    %v4146 = vpop.f32.mrf.mxu0
    %v4147 = vadd.f32 %v3908, %v4146
    %v4148 = vpop.f32.mrf.mxu0
    %v4149 = vadd.f32 %v3908, %v4148
    %4150 = vmatmul.bf16.gmra.mxu0 %v3774
    %v4151 = vpop.f32.mrf.mxu0
    %v4152 = vadd.f32 %v3908, %v4151
    %v4153 = vpop.f32.mrf.mxu0
    %v4154 = vadd.f32 %v3908, %v4153
    %4155 = vmatmul.bf16.gmra.mxu0 %v3775
    %v4156 = vpop.f32.mrf.mxu0
    %v4157 = vadd.f32 %v3908, %v4156
    %v4158 = vpop.f32.mrf.mxu0
    %v4159 = vadd.f32 %v3908, %v4158
    %4160 = vmatmul.bf16.gmra.mxu0 %v3776
    %v4161 = vpop.f32.mrf.mxu0
    %v4162 = vadd.f32 %v3908, %v4161
    %v4163 = vpop.f32.mrf.mxu0
    %v4164 = vadd.f32 %v3908, %v4163
    %4165 = vmatmul.bf16.gmra.mxu0 %v3777
    %v4166 = vpop.f32.mrf.mxu0
    %v4167 = vadd.f32 %v3908, %v4166
    %v4168 = vpop.f32.mrf.mxu0
    %v4169 = vadd.f32 %v3908, %v4168
    %4170 = vmatmul.bf16.gmra.mxu0 %v3778
    %v4171 = vpop.f32.mrf.mxu0
    %v4172 = vadd.f32 %v3908, %v4171
    %v4173 = vpop.f32.mrf.mxu0
    %v4174 = vadd.f32 %v3908, %v4173
    %4175 = vmatmul.bf16.gmra.mxu0 %v3779
    %v4176 = vpop.f32.mrf.mxu0
    %v4177 = vadd.f32 %v3908, %v4176
    %v4178 = vpop.f32.mrf.mxu0
    %v4179 = vadd.f32 %v3908, %v4178
    %4180 = vmatmul.bf16.gmra.mxu0 %v3780
    %v4181 = vpop.f32.mrf.mxu0
    %v4182 = vadd.f32 %v3908, %v4181
    %v4183 = vpop.f32.mrf.mxu0
    %v4184 = vadd.f32 %v3908, %v4183
    %4185 = vmatmul.bf16.gmra.mxu0 %v3781
    %v4186 = vpop.f32.mrf.mxu0
    %v4187 = vadd.f32 %v3908, %v4186
    %v4188 = vpop.f32.mrf.mxu0
    %v4189 = vadd.f32 %v3908, %v4188
    %4190 = vmatmul.bf16.gmra.mxu0 %v3782
    %v4191 = vpop.f32.mrf.mxu0
    %v4192 = vadd.f32 %v3908, %v4191
    %v4193 = vpop.f32.mrf.mxu0
    %v4194 = vadd.f32 %v3908, %v4193
    %4195 = vmatmul.bf16.gmra.mxu0 %v3783
    %v4196 = vpop.f32.mrf.mxu0
    %v4197 = vadd.f32 %v3908, %v4196
    %v4198 = vpop.f32.mrf.mxu0
    %v4199 = vadd.f32 %v3908, %v4198
    %4200 = vmatmul.bf16.gmra.mxu0 %v3784
    %v4201 = vpop.f32.mrf.mxu0
    %v4202 = vadd.f32 %v3908, %v4201
    %v4203 = vpop.f32.mrf.mxu0
    %v4204 = vadd.f32 %v3908, %v4203
    %4205 = vmatmul.bf16.gmra.mxu0 %v3785
    %v4206 = vpop.f32.mrf.mxu0
    %v4207 = vadd.f32 %v3908, %v4206
    %v4208 = vpop.f32.mrf.mxu0
    %v4209 = vadd.f32 %v3908, %v4208
    %4210 = vmatmul.bf16.gmra.mxu0 %v3786
    %v4211 = vpop.f32.mrf.mxu0
    %v4212 = vadd.f32 %v3908, %v4211
    %v4213 = vpop.f32.mrf.mxu0
    %v4214 = vadd.f32 %v3908, %v4213
    %4215 = vmatmul.bf16.gmra.mxu0 %v3787
    %v4216 = vpop.f32.mrf.mxu0
    %v4217 = vadd.f32 %v3908, %v4216
    %v4218 = vpop.f32.mrf.mxu0
    %v4219 = vadd.f32 %v3908, %v4218
    %4220 = vmatmul.bf16.gmra.mxu0 %v3788
    %v4221 = vpop.f32.mrf.mxu0
    %v4222 = vadd.f32 %v3908, %v4221
    %v4223 = vpop.f32.mrf.mxu0
    %v4224 = vadd.f32 %v3908, %v4223
    %4225 = vmatmul.bf16.gmra.mxu0 %v3789
    %v4226 = vpop.f32.mrf.mxu0
    %v4227 = vadd.f32 %v3908, %v4226
    %v4228 = vpop.f32.mrf.mxu0
    %v4229 = vadd.f32 %v3908, %v4228
    %4230 = vmatmul.bf16.gmra.mxu0 %v3790
    %v4231 = vpop.f32.mrf.mxu0
    %v4232 = vadd.f32 %v3908, %v4231
    %v4233 = vpop.f32.mrf.mxu0
    %v4234 = vadd.f32 %v3908, %v4233
    %4235 = vmatmul.bf16.gmra.mxu0 %v3791
    %v4236 = vpop.f32.mrf.mxu0
    %v4237 = vadd.f32 %v3908, %v4236
    %v4238 = vpop.f32.mrf.mxu0
    %v4239 = vadd.f32 %v3908, %v4238
    %4240 = vmatmul.bf16.gmra.mxu0 %v3792
    %v4241 = vpop.f32.mrf.mxu0
    %v4242 = vadd.f32 %v3908, %v4241
    %v4243 = vpop.f32.mrf.mxu0
    %v4244 = vadd.f32 %v3908, %v4243
    %4245 = vmatmul.bf16.gmra.mxu0 %v3793
    %v4246 = vpop.f32.mrf.mxu0
    %v4247 = vadd.f32 %v3908, %v4246
    %v4248 = vpop.f32.mrf.mxu0
    %v4249 = vadd.f32 %v3908, %v4248
    %4250 = vmatmul.bf16.gmra.mxu0 %v3794
    %v4251 = vpop.f32.mrf.mxu0
    %v4252 = vadd.f32 %v3908, %v4251
    %v4253 = vpop.f32.mrf.mxu0
    %v4254 = vadd.f32 %v3908, %v4253
    %4255 = vmatmul.bf16.gmra.mxu0 %v3795
    %v4256 = vpop.f32.mrf.mxu0
    %v4257 = vadd.f32 %v3908, %v4256
    %v4258 = vpop.f32.mrf.mxu0
    %v4259 = vadd.f32 %v3908, %v4258
    %4260 = vmatmul.bf16.gmra.mxu0 %v3796
    %v4261 = vpop.f32.mrf.mxu0
    %v4262 = vadd.f32 %v3908, %v4261
    %v4263 = vpop.f32.mrf.mxu0
    %v4264 = vadd.f32 %v3908, %v4263
    %4265 = vmatmul.bf16.gmra.mxu0 %v3797
    %v4266 = vpop.f32.mrf.mxu0
    %v4267 = vadd.f32 %v3908, %v4266
    %v4268 = vpop.f32.mrf.mxu0
    %v4269 = vadd.f32 %v3908, %v4268
    %4270 = vmatmul.bf16.gmra.mxu0 %v3798
    %v4271 = vpop.f32.mrf.mxu0
    %v4272 = vadd.f32 %v3908, %v4271
    %v4273 = vpop.f32.mrf.mxu0
    %v4274 = vadd.f32 %v3908, %v4273
    %4275 = vmatmul.bf16.gmra.mxu0 %v3799
    %v4276 = vpop.f32.mrf.mxu0
    %v4277 = vadd.f32 %v3908, %v4276
    %v4278 = vpop.f32.mrf.mxu0
    %v4279 = vadd.f32 %v3908, %v4278
    %4280 = vmatmul.bf16.gmra.mxu0 %v3800
    %v4281 = vpop.f32.mrf.mxu0
    %v4282 = vadd.f32 %v3908, %v4281
    %v4283 = vpop.f32.mrf.mxu0
    %v4284 = vadd.f32 %v3908, %v4283
    %4285 = vmatmul.bf16.gmra.mxu0 %v3801
    %v4286 = vpop.f32.mrf.mxu0
    %v4287 = vadd.f32 %v3908, %v4286
    %v4288 = vpop.f32.mrf.mxu0
    %v4289 = vadd.f32 %v3908, %v4288
    %4290 = vmatmul.bf16.gmra.mxu0 %v3802
    %v4291 = vpop.f32.mrf.mxu0
    %v4292 = vadd.f32 %v3908, %v4291
    %v4293 = vpop.f32.mrf.mxu0
    %v4294 = vadd.f32 %v3908, %v4293
    %4295 = vmatmul.bf16.gmra.mxu0 %v3803
    %v4296 = vpop.f32.mrf.mxu0
    %v4297 = vadd.f32 %v3908, %v4296
    %v4298 = vpop.f32.mrf.mxu0
    %v4299 = vadd.f32 %v3908, %v4298
    %4300 = vdwg.mxu0
    %4301 = vmatpush.bf16.msra.mxu0 %v4053
    %4302 = vmatpush.bf16.msra.mxu0 %v4052
    %4303 = vmatpush.bf16.msra.mxu0 %v4051
    %4304 = vmatpush.bf16.msra.mxu0 %v4050
    %4305 = vmatpush.bf16.msra.mxu0 %v4049
    %4306 = vmatpush.bf16.msra.mxu0 %v4048
    %4307 = vmatpush.bf16.msra.mxu0 %v4047
    %4308 = vmatpush.bf16.msra.mxu0 %v4046
    %4309 = vmatmul.bf16.gmra.mxu0 %v3768
    %v4310 = vpop.f32.mrf.mxu0
    %v4311 = vadd.f32 %v4112, %v4310
    %v4312 = vpop.f32.mrf.mxu0
    %v4313 = vadd.f32 %v4114, %v4312
    %4314 = vmatmul.bf16.gmra.mxu0 %v3769
    %v4315 = vpop.f32.mrf.mxu0
    %v4316 = vadd.f32 %v4117, %v4315
    %v4317 = vpop.f32.mrf.mxu0
    %v4318 = vadd.f32 %v4119, %v4317
    %4319 = vmatmul.bf16.gmra.mxu0 %v3770
    %v4320 = vpop.f32.mrf.mxu0
    %v4321 = vadd.f32 %v4122, %v4320
    %v4322 = vpop.f32.mrf.mxu0
    %v4323 = vadd.f32 %v4124, %v4322
    %4324 = vmatmul.bf16.gmra.mxu0 %v3771
    %v4325 = vpop.f32.mrf.mxu0
    %v4326 = vadd.f32 %v4127, %v4325
    %v4327 = vpop.f32.mrf.mxu0
    %v4328 = vadd.f32 %v4129, %v4327
    %4329 = vmatmul.bf16.gmra.mxu0 %v3772
    %v4330 = vpop.f32.mrf.mxu0
    %v4331 = vadd.f32 %v4132, %v4330
    %v4332 = vpop.f32.mrf.mxu0
    %v4333 = vadd.f32 %v4134, %v4332
    %4334 = vmatmul.bf16.gmra.mxu0 %v3773
    %v4335 = vpop.f32.mrf.mxu0
    %v4336 = vadd.f32 %v4137, %v4335
    %v4337 = vpop.f32.mrf.mxu0
    %v4338 = vadd.f32 %v4139, %v4337
    %4339 = vmatmul.bf16.gmra.mxu0 %v3774
    %v4340 = vpop.f32.mrf.mxu0
    %v4341 = vadd.f32 %v4142, %v4340
    %v4342 = vpop.f32.mrf.mxu0
    %v4343 = vadd.f32 %v4144, %v4342
    %4344 = vmatmul.bf16.gmra.mxu0 %v3775
    %v4345 = vpop.f32.mrf.mxu0
    %v4346 = vadd.f32 %v4147, %v4345
    %v4347 = vpop.f32.mrf.mxu0
    %v4348 = vadd.f32 %v4149, %v4347
    %4349 = vmatmul.bf16.gmra.mxu0 %v3776
    %v4350 = vpop.f32.mrf.mxu0
    %v4351 = vadd.f32 %v4152, %v4350
    %v4352 = vpop.f32.mrf.mxu0
    %v4353 = vadd.f32 %v4154, %v4352
    %4354 = vmatmul.bf16.gmra.mxu0 %v3777
    %v4355 = vpop.f32.mrf.mxu0
    %v4356 = vadd.f32 %v4157, %v4355
    %v4357 = vpop.f32.mrf.mxu0
    %v4358 = vadd.f32 %v4159, %v4357
    %4359 = vmatmul.bf16.gmra.mxu0 %v3778
    %v4360 = vpop.f32.mrf.mxu0
    %v4361 = vadd.f32 %v4162, %v4360
    %v4362 = vpop.f32.mrf.mxu0
    %v4363 = vadd.f32 %v4164, %v4362
    %4364 = vmatmul.bf16.gmra.mxu0 %v3779
    %v4365 = vpop.f32.mrf.mxu0
    %v4366 = vadd.f32 %v4167, %v4365
    %v4367 = vpop.f32.mrf.mxu0
    %v4368 = vadd.f32 %v4169, %v4367
    %4369 = vmatmul.bf16.gmra.mxu0 %v3780
    %v4370 = vpop.f32.mrf.mxu0
    %v4371 = vadd.f32 %v4172, %v4370
    %v4372 = vpop.f32.mrf.mxu0
    %v4373 = vadd.f32 %v4174, %v4372
    %4374 = vmatmul.bf16.gmra.mxu0 %v3781
    %v4375 = vpop.f32.mrf.mxu0
    %v4376 = vadd.f32 %v4177, %v4375
    %v4377 = vpop.f32.mrf.mxu0
    %v4378 = vadd.f32 %v4179, %v4377
    %4379 = vmatmul.bf16.gmra.mxu0 %v3782
    %v4380 = vpop.f32.mrf.mxu0
    %v4381 = vadd.f32 %v4182, %v4380
    %v4382 = vpop.f32.mrf.mxu0
    %v4383 = vadd.f32 %v4184, %v4382
    %4384 = vmatmul.bf16.gmra.mxu0 %v3783
    %v4385 = vpop.f32.mrf.mxu0
    %v4386 = vadd.f32 %v4187, %v4385
    %v4387 = vpop.f32.mrf.mxu0
    %v4388 = vadd.f32 %v4189, %v4387
    %4389 = vmatmul.bf16.gmra.mxu0 %v3784
    %v4390 = vpop.f32.mrf.mxu0
    %v4391 = vadd.f32 %v4192, %v4390
    %v4392 = vpop.f32.mrf.mxu0
    %v4393 = vadd.f32 %v4194, %v4392
    %4394 = vmatmul.bf16.gmra.mxu0 %v3785
    %v4395 = vpop.f32.mrf.mxu0
    %v4396 = vadd.f32 %v4197, %v4395
    %v4397 = vpop.f32.mrf.mxu0
    %v4398 = vadd.f32 %v4199, %v4397
    %4399 = vmatmul.bf16.gmra.mxu0 %v3786
    %v4400 = vpop.f32.mrf.mxu0
    %v4401 = vadd.f32 %v4202, %v4400
    %v4402 = vpop.f32.mrf.mxu0
    %v4403 = vadd.f32 %v4204, %v4402
    %4404 = vmatmul.bf16.gmra.mxu0 %v3787
    %v4405 = vpop.f32.mrf.mxu0
    %v4406 = vadd.f32 %v4207, %v4405
    %v4407 = vpop.f32.mrf.mxu0
    %v4408 = vadd.f32 %v4209, %v4407
    %4409 = vmatmul.bf16.gmra.mxu0 %v3788
    %v4410 = vpop.f32.mrf.mxu0
    %v4411 = vadd.f32 %v4212, %v4410
    %v4412 = vpop.f32.mrf.mxu0
    %v4413 = vadd.f32 %v4214, %v4412
    %4414 = vmatmul.bf16.gmra.mxu0 %v3789
    %v4415 = vpop.f32.mrf.mxu0
    %v4416 = vadd.f32 %v4217, %v4415
    %v4417 = vpop.f32.mrf.mxu0
    %v4418 = vadd.f32 %v4219, %v4417
    %4419 = vmatmul.bf16.gmra.mxu0 %v3790
    %v4420 = vpop.f32.mrf.mxu0
    %v4421 = vadd.f32 %v4222, %v4420
    %v4422 = vpop.f32.mrf.mxu0
    %v4423 = vadd.f32 %v4224, %v4422
    %4424 = vmatmul.bf16.gmra.mxu0 %v3791
    %v4425 = vpop.f32.mrf.mxu0
    %v4426 = vadd.f32 %v4227, %v4425
    %v4427 = vpop.f32.mrf.mxu0
    %v4428 = vadd.f32 %v4229, %v4427
    %4429 = vmatmul.bf16.gmra.mxu0 %v3792
    %v4430 = vpop.f32.mrf.mxu0
    %v4431 = vadd.f32 %v4232, %v4430
    %v4432 = vpop.f32.mrf.mxu0
    %v4433 = vadd.f32 %v4234, %v4432
    %4434 = vmatmul.bf16.gmra.mxu0 %v3793
    %v4435 = vpop.f32.mrf.mxu0
    %v4436 = vadd.f32 %v4237, %v4435
    %v4437 = vpop.f32.mrf.mxu0
    %v4438 = vadd.f32 %v4239, %v4437
    %4439 = vmatmul.bf16.gmra.mxu0 %v3794
    %v4440 = vpop.f32.mrf.mxu0
    %v4441 = vadd.f32 %v4242, %v4440
    %v4442 = vpop.f32.mrf.mxu0
    %v4443 = vadd.f32 %v4244, %v4442
    %4444 = vmatmul.bf16.gmra.mxu0 %v3795
    %v4445 = vpop.f32.mrf.mxu0
    %v4446 = vadd.f32 %v4247, %v4445
    %v4447 = vpop.f32.mrf.mxu0
    %v4448 = vadd.f32 %v4249, %v4447
    %4449 = vmatmul.bf16.gmra.mxu0 %v3796
    %v4450 = vpop.f32.mrf.mxu0
    %v4451 = vadd.f32 %v4252, %v4450
    %v4452 = vpop.f32.mrf.mxu0
    %v4453 = vadd.f32 %v4254, %v4452
    %4454 = vmatmul.bf16.gmra.mxu0 %v3797
    %v4455 = vpop.f32.mrf.mxu0
    %v4456 = vadd.f32 %v4257, %v4455
    %v4457 = vpop.f32.mrf.mxu0
    %v4458 = vadd.f32 %v4259, %v4457
    %4459 = vmatmul.bf16.gmra.mxu0 %v3798
    %v4460 = vpop.f32.mrf.mxu0
    %v4461 = vadd.f32 %v4262, %v4460
    %v4462 = vpop.f32.mrf.mxu0
    %v4463 = vadd.f32 %v4264, %v4462
    %4464 = vmatmul.bf16.gmra.mxu0 %v3799
    %v4465 = vpop.f32.mrf.mxu0
    %v4466 = vadd.f32 %v4267, %v4465
    %v4467 = vpop.f32.mrf.mxu0
    %v4468 = vadd.f32 %v4269, %v4467
    %4469 = vmatmul.bf16.gmra.mxu0 %v3800
    %v4470 = vpop.f32.mrf.mxu0
    %v4471 = vadd.f32 %v4272, %v4470
    %v4472 = vpop.f32.mrf.mxu0
    %v4473 = vadd.f32 %v4274, %v4472
    %4474 = vmatmul.bf16.gmra.mxu0 %v3801
    %v4475 = vpop.f32.mrf.mxu0
    %v4476 = vadd.f32 %v4277, %v4475
    %v4477 = vpop.f32.mrf.mxu0
    %v4478 = vadd.f32 %v4279, %v4477
    %4479 = vmatmul.bf16.gmra.mxu0 %v3802
    %v4480 = vpop.f32.mrf.mxu0
    %v4481 = vadd.f32 %v4282, %v4480
    %v4482 = vpop.f32.mrf.mxu0
    %v4483 = vadd.f32 %v4284, %v4482
    %4484 = vmatmul.bf16.gmra.mxu0 %v3803
    %v4485 = vpop.f32.mrf.mxu0
    %v4486 = vadd.f32 %v4287, %v4485
    %v4487 = vpop.f32.mrf.mxu0
    %v4488 = vadd.f32 %v4289, %v4487
    %4489 = vmatmul.bf16.gmra.mxu0 %v3620
    %v4490 = vpop.f32.mrf.mxu0
    %v4491 = vadd.f32 %v4292, %v4490
    %v4492 = vpop.f32.mrf.mxu0
    %v4493 = vadd.f32 %v4294, %v4492
    %4494 = vmatmul.bf16.gmra.mxu0 %v3621
    %v4495 = vpop.f32.mrf.mxu0
    %v4496 = vadd.f32 %v4297, %v4495
    %v4497 = vpop.f32.mrf.mxu0
    %v4498 = vadd.f32 %v4299, %v4497
    %4499 = vdwg.mxu0
    %4500 = vmatpush.bf16.msra.mxu0 %v4061
    %4501 = vmatpush.bf16.msra.mxu0 %v4060
    %4502 = vmatpush.bf16.msra.mxu0 %v4059
    %4503 = vmatpush.bf16.msra.mxu0 %v4058
    %4504 = vmatpush.bf16.msra.mxu0 %v4057
    %4505 = vmatpush.bf16.msra.mxu0 %v4056
    %4506 = vmatpush.bf16.msra.mxu0 %v4055
    %4507 = vmatpush.bf16.msra.mxu0 %v4054
    %4508 = vmatmul.bf16.gmra.mxu0 %v3770
    %v4509 = vpop.f32.mrf.mxu0
    %v4510 = vadd.f32 %v4311, %v4509
    %v4511 = vpop.f32.mrf.mxu0
    %v4512 = vadd.f32 %v4313, %v4511
    %4513 = vmatmul.bf16.gmra.mxu0 %v3771
    %v4514 = vpop.f32.mrf.mxu0
    %v4515 = vadd.f32 %v4316, %v4514
    %v4516 = vpop.f32.mrf.mxu0
    %v4517 = vadd.f32 %v4318, %v4516
    %4518 = vmatmul.bf16.gmra.mxu0 %v3772
    %v4519 = vpop.f32.mrf.mxu0
    %v4520 = vadd.f32 %v4321, %v4519
    %v4521 = vpop.f32.mrf.mxu0
    %v4522 = vadd.f32 %v4323, %v4521
    %4523 = vmatmul.bf16.gmra.mxu0 %v3773
    %v4524 = vpop.f32.mrf.mxu0
    %v4525 = vadd.f32 %v4326, %v4524
    %v4526 = vpop.f32.mrf.mxu0
    %v4527 = vadd.f32 %v4328, %v4526
    %4528 = vmatmul.bf16.gmra.mxu0 %v3774
    %v4529 = vpop.f32.mrf.mxu0
    %v4530 = vadd.f32 %v4331, %v4529
    %v4531 = vpop.f32.mrf.mxu0
    %v4532 = vadd.f32 %v4333, %v4531
    %4533 = vmatmul.bf16.gmra.mxu0 %v3775
    %v4534 = vpop.f32.mrf.mxu0
    %v4535 = vadd.f32 %v4336, %v4534
    %v4536 = vpop.f32.mrf.mxu0
    %v4537 = vadd.f32 %v4338, %v4536
    %4538 = vmatmul.bf16.gmra.mxu0 %v3776
    %v4539 = vpop.f32.mrf.mxu0
    %v4540 = vadd.f32 %v4341, %v4539
    %v4541 = vpop.f32.mrf.mxu0
    %v4542 = vadd.f32 %v4343, %v4541
    %4543 = vmatmul.bf16.gmra.mxu0 %v3777
    %v4544 = vpop.f32.mrf.mxu0
    %v4545 = vadd.f32 %v4346, %v4544
    %v4546 = vpop.f32.mrf.mxu0
    %v4547 = vadd.f32 %v4348, %v4546
    %4548 = vmatmul.bf16.gmra.mxu0 %v3778
    %v4549 = vpop.f32.mrf.mxu0
    %v4550 = vadd.f32 %v4351, %v4549
    %v4551 = vpop.f32.mrf.mxu0
    %v4552 = vadd.f32 %v4353, %v4551
    %4553 = vmatmul.bf16.gmra.mxu0 %v3779
    %v4554 = vpop.f32.mrf.mxu0
    %v4555 = vadd.f32 %v4356, %v4554
    %v4556 = vpop.f32.mrf.mxu0
    %v4557 = vadd.f32 %v4358, %v4556
    %4558 = vmatmul.bf16.gmra.mxu0 %v3780
    %v4559 = vpop.f32.mrf.mxu0
    %v4560 = vadd.f32 %v4361, %v4559
    %v4561 = vpop.f32.mrf.mxu0
    %v4562 = vadd.f32 %v4363, %v4561
    %4563 = vmatmul.bf16.gmra.mxu0 %v3781
    %v4564 = vpop.f32.mrf.mxu0
    %v4565 = vadd.f32 %v4366, %v4564
    %v4566 = vpop.f32.mrf.mxu0
    %v4567 = vadd.f32 %v4368, %v4566
    %4568 = vmatmul.bf16.gmra.mxu0 %v3782
    %v4569 = vpop.f32.mrf.mxu0
    %v4570 = vadd.f32 %v4371, %v4569
    %v4571 = vpop.f32.mrf.mxu0
    %v4572 = vadd.f32 %v4373, %v4571
    %4573 = vmatmul.bf16.gmra.mxu0 %v3783
    %v4574 = vpop.f32.mrf.mxu0
    %v4575 = vadd.f32 %v4376, %v4574
    %v4576 = vpop.f32.mrf.mxu0
    %v4577 = vadd.f32 %v4378, %v4576
    %4578 = vmatmul.bf16.gmra.mxu0 %v3784
    %v4579 = vpop.f32.mrf.mxu0
    %v4580 = vadd.f32 %v4381, %v4579
    %v4581 = vpop.f32.mrf.mxu0
    %v4582 = vadd.f32 %v4383, %v4581
    %4583 = vmatmul.bf16.gmra.mxu0 %v3785
    %v4584 = vpop.f32.mrf.mxu0
    %v4585 = vadd.f32 %v4386, %v4584
    %v4586 = vpop.f32.mrf.mxu0
    %v4587 = vadd.f32 %v4388, %v4586
    %4588 = vmatmul.bf16.gmra.mxu0 %v3786
    %v4589 = vpop.f32.mrf.mxu0
    %v4590 = vadd.f32 %v4391, %v4589
    %v4591 = vpop.f32.mrf.mxu0
    %v4592 = vadd.f32 %v4393, %v4591
    %4593 = vmatmul.bf16.gmra.mxu0 %v3787
    %v4594 = vpop.f32.mrf.mxu0
    %v4595 = vadd.f32 %v4396, %v4594
    %v4596 = vpop.f32.mrf.mxu0
    %v4597 = vadd.f32 %v4398, %v4596
    %4598 = vmatmul.bf16.gmra.mxu0 %v3788
    %v4599 = vpop.f32.mrf.mxu0
    %v4600 = vadd.f32 %v4401, %v4599
    %v4601 = vpop.f32.mrf.mxu0
    %v4602 = vadd.f32 %v4403, %v4601
    %4603 = vmatmul.bf16.gmra.mxu0 %v3789
    %v4604 = vpop.f32.mrf.mxu0
    %v4605 = vadd.f32 %v4406, %v4604
    %v4606 = vpop.f32.mrf.mxu0
    %v4607 = vadd.f32 %v4408, %v4606
    %4608 = vmatmul.bf16.gmra.mxu0 %v3790
    %v4609 = vpop.f32.mrf.mxu0
    %v4610 = vadd.f32 %v4411, %v4609
    %v4611 = vpop.f32.mrf.mxu0
    %v4612 = vadd.f32 %v4413, %v4611
    %4613 = vmatmul.bf16.gmra.mxu0 %v3791
    %v4614 = vpop.f32.mrf.mxu0
    %v4615 = vadd.f32 %v4416, %v4614
    %v4616 = vpop.f32.mrf.mxu0
    %v4617 = vadd.f32 %v4418, %v4616
    %4618 = vmatmul.bf16.gmra.mxu0 %v3792
    %v4619 = vpop.f32.mrf.mxu0
    %v4620 = vadd.f32 %v4421, %v4619
    %v4621 = vpop.f32.mrf.mxu0
    %v4622 = vadd.f32 %v4423, %v4621
    %4623 = vmatmul.bf16.gmra.mxu0 %v3793
    %v4624 = vpop.f32.mrf.mxu0
    %v4625 = vadd.f32 %v4426, %v4624
    %v4626 = vpop.f32.mrf.mxu0
    %v4627 = vadd.f32 %v4428, %v4626
    %4628 = vmatmul.bf16.gmra.mxu0 %v3794
    %v4629 = vpop.f32.mrf.mxu0
    %v4630 = vadd.f32 %v4431, %v4629
    %v4631 = vpop.f32.mrf.mxu0
    %v4632 = vadd.f32 %v4433, %v4631
    %4633 = vmatmul.bf16.gmra.mxu0 %v3795
    %v4634 = vpop.f32.mrf.mxu0
    %v4635 = vadd.f32 %v4436, %v4634
    %v4636 = vpop.f32.mrf.mxu0
    %v4637 = vadd.f32 %v4438, %v4636
    %4638 = vmatmul.bf16.gmra.mxu0 %v3796
    %v4639 = vpop.f32.mrf.mxu0
    %v4640 = vadd.f32 %v4441, %v4639
    %v4641 = vpop.f32.mrf.mxu0
    %v4642 = vadd.f32 %v4443, %v4641
    %4643 = vmatmul.bf16.gmra.mxu0 %v3797
    %v4644 = vpop.f32.mrf.mxu0
    %v4645 = vadd.f32 %v4446, %v4644
    %v4646 = vpop.f32.mrf.mxu0
    %v4647 = vadd.f32 %v4448, %v4646
    %4648 = vmatmul.bf16.gmra.mxu0 %v3798
    %v4649 = vpop.f32.mrf.mxu0
    %v4650 = vadd.f32 %v4451, %v4649
    %v4651 = vpop.f32.mrf.mxu0
    %v4652 = vadd.f32 %v4453, %v4651
    %4653 = vmatmul.bf16.gmra.mxu0 %v3799
    %v4654 = vpop.f32.mrf.mxu0
    %v4655 = vadd.f32 %v4456, %v4654
    %v4656 = vpop.f32.mrf.mxu0
    %v4657 = vadd.f32 %v4458, %v4656
    %4658 = vmatmul.bf16.gmra.mxu0 %v3800
    %v4659 = vpop.f32.mrf.mxu0
    %v4660 = vadd.f32 %v4461, %v4659
    %v4661 = vpop.f32.mrf.mxu0
    %v4662 = vadd.f32 %v4463, %v4661
    %4663 = vmatmul.bf16.gmra.mxu0 %v3801
    %v4664 = vpop.f32.mrf.mxu0
    %v4665 = vadd.f32 %v4466, %v4664
    %v4666 = vpop.f32.mrf.mxu0
    %v4667 = vadd.f32 %v4468, %v4666
    %4668 = vmatmul.bf16.gmra.mxu0 %v3802
    %v4669 = vpop.f32.mrf.mxu0
    %v4670 = vadd.f32 %v4471, %v4669
    %v4671 = vpop.f32.mrf.mxu0
    %v4672 = vadd.f32 %v4473, %v4671
    %4673 = vmatmul.bf16.gmra.mxu0 %v3803
    %v4674 = vpop.f32.mrf.mxu0
    %v4675 = vadd.f32 %v4476, %v4674
    %v4676 = vpop.f32.mrf.mxu0
    %v4677 = vadd.f32 %v4478, %v4676
    %4678 = vmatmul.bf16.gmra.mxu0 %v3620
    %v4679 = vpop.f32.mrf.mxu0
    %v4680 = vadd.f32 %v4481, %v4679
    %v4681 = vpop.f32.mrf.mxu0
    %v4682 = vadd.f32 %v4483, %v4681
    %4683 = vmatmul.bf16.gmra.mxu0 %v3621
    %v4684 = vpop.f32.mrf.mxu0
    %v4685 = vadd.f32 %v4486, %v4684
    %v4686 = vpop.f32.mrf.mxu0
    %v4687 = vadd.f32 %v4488, %v4686
    %4688 = vmatmul.bf16.gmra.mxu0 %v3768
    %v4689 = vpop.f32.mrf.mxu0
    %v4690 = vadd.f32 %v4491, %v4689
    %v4691 = vpop.f32.mrf.mxu0
    %v4692 = vadd.f32 %v4493, %v4691
    %4693 = vmatmul.bf16.gmra.mxu0 %v3769
    %v4694 = vpop.f32.mrf.mxu0
    %v4695 = vadd.f32 %v4496, %v4694
    %v4696 = vpop.f32.mrf.mxu0
    %v4697 = vadd.f32 %v4498, %v4696
    %4698 = vdwg.mxu0
    %4699 = vmatpush.bf16.msra.mxu0 %v4069
    %4700 = vmatpush.bf16.msra.mxu0 %v4068
    %4701 = vmatpush.bf16.msra.mxu0 %v4067
    %4702 = vmatpush.bf16.msra.mxu0 %v4066
    %4703 = vmatpush.bf16.msra.mxu0 %v4065
    %4704 = vmatpush.bf16.msra.mxu0 %v4064
    %4705 = vmatpush.bf16.msra.mxu0 %v4063
    %4706 = vmatpush.bf16.msra.mxu0 %v4062
    %4707 = vmatmul.bf16.gmra.mxu0 %v3772
    %v4708 = vpop.f32.mrf.mxu0
    %v4709 = vadd.f32 %v4510, %v4708
    %v4710 = vpop.f32.mrf.mxu0
    %v4711 = vadd.f32 %v4512, %v4710
    %4712 = vmatmul.bf16.gmra.mxu0 %v3773
    %v4713 = vpop.f32.mrf.mxu0
    %v4714 = vadd.f32 %v4515, %v4713
    %v4715 = vpop.f32.mrf.mxu0
    %v4716 = vadd.f32 %v4517, %v4715
    %4717 = vmatmul.bf16.gmra.mxu0 %v3774
    %v4718 = vpop.f32.mrf.mxu0
    %v4719 = vadd.f32 %v4520, %v4718
    %v4720 = vpop.f32.mrf.mxu0
    %v4721 = vadd.f32 %v4522, %v4720
    %4722 = vmatmul.bf16.gmra.mxu0 %v3775
    %v4723 = vpop.f32.mrf.mxu0
    %v4724 = vadd.f32 %v4525, %v4723
    %v4725 = vpop.f32.mrf.mxu0
    %v4726 = vadd.f32 %v4527, %v4725
    %4727 = vmatmul.bf16.gmra.mxu0 %v3776
    %v4728 = vpop.f32.mrf.mxu0
    %v4729 = vadd.f32 %v4530, %v4728
    %v4730 = vpop.f32.mrf.mxu0
    %v4731 = vadd.f32 %v4532, %v4730
    %4732 = vmatmul.bf16.gmra.mxu0 %v3777
    %v4733 = vpop.f32.mrf.mxu0
    %v4734 = vadd.f32 %v4535, %v4733
    %v4735 = vpop.f32.mrf.mxu0
    %v4736 = vadd.f32 %v4537, %v4735
    %4737 = vmatmul.bf16.gmra.mxu0 %v3778
    %v4738 = vpop.f32.mrf.mxu0
    %v4739 = vadd.f32 %v4540, %v4738
    %v4740 = vpop.f32.mrf.mxu0
    %v4741 = vadd.f32 %v4542, %v4740
    %4742 = vmatmul.bf16.gmra.mxu0 %v3779
    %v4743 = vpop.f32.mrf.mxu0
    %v4744 = vadd.f32 %v4545, %v4743
    %v4745 = vpop.f32.mrf.mxu0
    %v4746 = vadd.f32 %v4547, %v4745
    %4747 = vmatmul.bf16.gmra.mxu0 %v3780
    %v4748 = vpop.f32.mrf.mxu0
    %v4749 = vadd.f32 %v4550, %v4748
    %v4750 = vpop.f32.mrf.mxu0
    %v4751 = vadd.f32 %v4552, %v4750
    %4752 = vmatmul.bf16.gmra.mxu0 %v3781
    %v4753 = vpop.f32.mrf.mxu0
    %v4754 = vadd.f32 %v4555, %v4753
    %v4755 = vpop.f32.mrf.mxu0
    %v4756 = vadd.f32 %v4557, %v4755
    %4757 = vmatmul.bf16.gmra.mxu0 %v3782
    %v4758 = vpop.f32.mrf.mxu0
    %v4759 = vadd.f32 %v4560, %v4758
    %v4760 = vpop.f32.mrf.mxu0
    %v4761 = vadd.f32 %v4562, %v4760
    %4762 = vmatmul.bf16.gmra.mxu0 %v3783
    %v4763 = vpop.f32.mrf.mxu0
    %v4764 = vadd.f32 %v4565, %v4763
    %v4765 = vpop.f32.mrf.mxu0
    %v4766 = vadd.f32 %v4567, %v4765
    %4767 = vmatmul.bf16.gmra.mxu0 %v3784
    %v4768 = vpop.f32.mrf.mxu0
    %v4769 = vadd.f32 %v4570, %v4768
    %v4770 = vpop.f32.mrf.mxu0
    %v4771 = vadd.f32 %v4572, %v4770
    %4772 = vmatmul.bf16.gmra.mxu0 %v3785
    %v4773 = vpop.f32.mrf.mxu0
    %v4774 = vadd.f32 %v4575, %v4773
    %v4775 = vpop.f32.mrf.mxu0
    %v4776 = vadd.f32 %v4577, %v4775
    %4777 = vmatmul.bf16.gmra.mxu0 %v3786
    %v4778 = vpop.f32.mrf.mxu0
    %v4779 = vadd.f32 %v4580, %v4778
    %v4780 = vpop.f32.mrf.mxu0
    %v4781 = vadd.f32 %v4582, %v4780
    %4782 = vmatmul.bf16.gmra.mxu0 %v3787
    %v4783 = vpop.f32.mrf.mxu0
    %v4784 = vadd.f32 %v4585, %v4783
    %v4785 = vpop.f32.mrf.mxu0
    %v4786 = vadd.f32 %v4587, %v4785
    %4787 = vmatmul.bf16.gmra.mxu0 %v3788
    %v4788 = vpop.f32.mrf.mxu0
    %v4789 = vadd.f32 %v4590, %v4788
    %v4790 = vpop.f32.mrf.mxu0
    %v4791 = vadd.f32 %v4592, %v4790
    %4792 = vmatmul.bf16.gmra.mxu0 %v3789
    %v4793 = vpop.f32.mrf.mxu0
    %v4794 = vadd.f32 %v4595, %v4793
    %v4795 = vpop.f32.mrf.mxu0
    %v4796 = vadd.f32 %v4597, %v4795
    %4797 = vmatmul.bf16.gmra.mxu0 %v3790
    %v4798 = vpop.f32.mrf.mxu0
    %v4799 = vadd.f32 %v4600, %v4798
    %v4800 = vpop.f32.mrf.mxu0
    %v4801 = vadd.f32 %v4602, %v4800
    %4802 = vmatmul.bf16.gmra.mxu0 %v3791
    %v4803 = vpop.f32.mrf.mxu0
    %v4804 = vadd.f32 %v4605, %v4803
    %v4805 = vpop.f32.mrf.mxu0
    %v4806 = vadd.f32 %v4607, %v4805
    %4807 = vmatmul.bf16.gmra.mxu0 %v3792
    %v4808 = vpop.f32.mrf.mxu0
    %v4809 = vadd.f32 %v4610, %v4808
    %v4810 = vpop.f32.mrf.mxu0
    %v4811 = vadd.f32 %v4612, %v4810
    %4812 = vmatmul.bf16.gmra.mxu0 %v3793
    %v4813 = vpop.f32.mrf.mxu0
    %v4814 = vadd.f32 %v4615, %v4813
    %v4815 = vpop.f32.mrf.mxu0
    %v4816 = vadd.f32 %v4617, %v4815
    %4817 = vmatmul.bf16.gmra.mxu0 %v3794
    %v4818 = vpop.f32.mrf.mxu0
    %v4819 = vadd.f32 %v4620, %v4818
    %v4820 = vpop.f32.mrf.mxu0
    %v4821 = vadd.f32 %v4622, %v4820
    %4822 = vmatmul.bf16.gmra.mxu0 %v3795
    %v4823 = vpop.f32.mrf.mxu0
    %v4824 = vadd.f32 %v4625, %v4823
    %v4825 = vpop.f32.mrf.mxu0
    %v4826 = vadd.f32 %v4627, %v4825
    %4827 = vmatmul.bf16.gmra.mxu0 %v3796
    %v4828 = vpop.f32.mrf.mxu0
    %v4829 = vadd.f32 %v4630, %v4828
    %v4830 = vpop.f32.mrf.mxu0
    %v4831 = vadd.f32 %v4632, %v4830
    %4832 = vmatmul.bf16.gmra.mxu0 %v3797
    %v4833 = vpop.f32.mrf.mxu0
    %v4834 = vadd.f32 %v4635, %v4833
    %v4835 = vpop.f32.mrf.mxu0
    %v4836 = vadd.f32 %v4637, %v4835
    %4837 = vmatmul.bf16.gmra.mxu0 %v3798
    %v4838 = vpop.f32.mrf.mxu0
    %v4839 = vadd.f32 %v4640, %v4838
    %v4840 = vpop.f32.mrf.mxu0
    %v4841 = vadd.f32 %v4642, %v4840
    %4842 = vmatmul.bf16.gmra.mxu0 %v3799
    %v4843 = vpop.f32.mrf.mxu0
    %v4844 = vadd.f32 %v4645, %v4843
    %v4845 = vpop.f32.mrf.mxu0
    %v4846 = vadd.f32 %v4647, %v4845
    %4847 = vmatmul.bf16.gmra.mxu0 %v3800
    %v4848 = vpop.f32.mrf.mxu0
    %v4849 = vadd.f32 %v4650, %v4848
    %v4850 = vpop.f32.mrf.mxu0
    %v4851 = vadd.f32 %v4652, %v4850
    %4852 = vmatmul.bf16.gmra.mxu0 %v3801
    %v4853 = vpop.f32.mrf.mxu0
    %v4854 = vadd.f32 %v4655, %v4853
    %v4855 = vpop.f32.mrf.mxu0
    %v4856 = vadd.f32 %v4657, %v4855
    %4857 = vmatmul.bf16.gmra.mxu0 %v3802
    %v4858 = vpop.f32.mrf.mxu0
    %v4859 = vadd.f32 %v4660, %v4858
    %v4860 = vpop.f32.mrf.mxu0
    %v4861 = vadd.f32 %v4662, %v4860
    %4862 = vmatmul.bf16.gmra.mxu0 %v3803
    %v4863 = vpop.f32.mrf.mxu0
    %v4864 = vadd.f32 %v4665, %v4863
    %v4865 = vpop.f32.mrf.mxu0
    %v4866 = vadd.f32 %v4667, %v4865
    %4867 = vmatmul.bf16.gmra.mxu0 %v3620
    %v4868 = vpop.f32.mrf.mxu0
    %v4869 = vadd.f32 %v4670, %v4868
    %v4870 = vpop.f32.mrf.mxu0
    %v4871 = vadd.f32 %v4672, %v4870
    %4872 = vmatmul.bf16.gmra.mxu0 %v3621
    %v4873 = vpop.f32.mrf.mxu0
    %v4874 = vadd.f32 %v4675, %v4873
    %v4875 = vpop.f32.mrf.mxu0
    %v4876 = vadd.f32 %v4677, %v4875
    %4877 = vmatmul.bf16.gmra.mxu0 %v3768
    %v4878 = vpop.f32.mrf.mxu0
    %v4879 = vadd.f32 %v4680, %v4878
    %v4880 = vpop.f32.mrf.mxu0
    %v4881 = vadd.f32 %v4682, %v4880
    %4882 = vmatmul.bf16.gmra.mxu0 %v3769
    %v4883 = vpop.f32.mrf.mxu0
    %v4884 = vadd.f32 %v4685, %v4883
    %v4885 = vpop.f32.mrf.mxu0
    %v4886 = vadd.f32 %v4687, %v4885
    %4887 = vmatmul.bf16.gmra.mxu0 %v3770
    %v4888 = vpop.f32.mrf.mxu0
    %v4889 = vadd.f32 %v4690, %v4888
    %v4890 = vpop.f32.mrf.mxu0
    %v4891 = vadd.f32 %v4692, %v4890
    %4892 = vmatmul.bf16.gmra.mxu0 %v3771
    %v4893 = vpop.f32.mrf.mxu0
    %v4894 = vadd.f32 %v4695, %v4893
    %v4895 = vpop.f32.mrf.mxu0
    %v4896 = vadd.f32 %v4697, %v4895
    %4897 = vdwg.mxu0
    %v4898 = vmax.f32 %v4709, 0.0
    %v4899 = vmax.f32 %v4711, 0.0
    %v4900 = vmax.f32 %v4714, 0.0
    %v4901 = vmax.f32 %v4716, 0.0
    %v4902 = vmax.f32 %v4719, 0.0
    %v4903 = vmax.f32 %v4721, 0.0
    %v4904 = vmax.f32 %v4724, 0.0
    %v4905 = vmax.f32 %v4726, 0.0
    %v4906 = vmax.f32 %v4729, 0.0
    %v4907 = vmax.f32 %v4731, 0.0
    %v4908 = vmax.f32 %v4734, 0.0
    %v4909 = vmax.f32 %v4736, 0.0
    %v4910 = vmax.f32 %v4739, 0.0
    %v4911 = vmax.f32 %v4741, 0.0
    %v4912 = vmax.f32 %v4744, 0.0
    %v4913 = vmax.f32 %v4746, 0.0
    %v4914 = vmax.f32 %v4749, 0.0
    %v4915 = vmax.f32 %v4751, 0.0
    %v4916 = vmax.f32 %v4754, 0.0
    %v4917 = vmax.f32 %v4756, 0.0
    %v4918 = vmax.f32 %v4759, 0.0
    %v4919 = vmax.f32 %v4761, 0.0
    %v4920 = vmax.f32 %v4764, 0.0
    %v4921 = vmax.f32 %v4766, 0.0
    %v4922 = vmax.f32 %v4769, 0.0
    %v4923 = vmax.f32 %v4771, 0.0
    %v4924 = vmax.f32 %v4774, 0.0
    %v4925 = vmax.f32 %v4776, 0.0
    %v4926 = vmax.f32 %v4779, 0.0
    %v4927 = vmax.f32 %v4781, 0.0
    %v4928 = vmax.f32 %v4784, 0.0
    %v4929 = vmax.f32 %v4786, 0.0
    %v4930 = vmax.f32 %v4789, 0.0
    %v4931 = vmax.f32 %v4791, 0.0
    %v4932 = vmax.f32 %v4794, 0.0
    %v4933 = vmax.f32 %v4796, 0.0
    %v4934 = vmax.f32 %v4799, 0.0
    %v4935 = vmax.f32 %v4801, 0.0
    %v4936 = vmax.f32 %v4804, 0.0
    %v4937 = vmax.f32 %v4806, 0.0
    %v4938 = vmax.f32 %v4809, 0.0
    %v4939 = vmax.f32 %v4811, 0.0
    %v4940 = vmax.f32 %v4814, 0.0
    %v4941 = vmax.f32 %v4816, 0.0
    %v4942 = vmax.f32 %v4819, 0.0
    %v4943 = vmax.f32 %v4821, 0.0
    %v4944 = vmax.f32 %v4824, 0.0
    %v4945 = vmax.f32 %v4826, 0.0
    %v4946 = vmax.f32 %v4829, 0.0
    %v4947 = vmax.f32 %v4831, 0.0
    %v4948 = vmax.f32 %v4834, 0.0
    %v4949 = vmax.f32 %v4836, 0.0
    %v4950 = vmax.f32 %v4839, 0.0
    %v4951 = vmax.f32 %v4841, 0.0
    %v4952 = vmax.f32 %v4844, 0.0
    %v4953 = vmax.f32 %v4846, 0.0
    %v4954 = vmax.f32 %v4849, 0.0
    %v4955 = vmax.f32 %v4851, 0.0
    %v4956 = vmax.f32 %v4854, 0.0
    %v4957 = vmax.f32 %v4856, 0.0
    %v4958 = vmax.f32 %v4859, 0.0
    %v4959 = vmax.f32 %v4861, 0.0
    %v4960 = vmax.f32 %v4864, 0.0
    %v4961 = vmax.f32 %v4866, 0.0
    %v4962 = vmax.f32 %v4869, 0.0
    %v4963 = vmax.f32 %v4871, 0.0
    %v4964 = vmax.f32 %v4874, 0.0
    %v4965 = vmax.f32 %v4876, 0.0
    %v4966 = vmax.f32 %v4879, 0.0
    %v4967 = vmax.f32 %v4881, 0.0
    %v4968 = vmax.f32 %v4884, 0.0
    %v4969 = vmax.f32 %v4886, 0.0
    %v4970 = vmax.f32 %v4889, 0.0
    %v4971 = vmax.f32 %v4891, 0.0
    %v4972 = vmax.f32 %v4894, 0.0
    %v4973 = vmax.f32 %v4896, 0.0
    %v4974 = vsel %vm1870, %v4898, 0.0
    %v4975 = vsel %vm1871, %v4899, 0.0
    %v4976 = vsel %vm1872, %v4900, 0.0
    %v4977 = vsel %vm1873, %v4901, 0.0
    %v4978 = vsel %vm1874, %v4902, 0.0
    %v4979 = vsel %vm1875, %v4903, 0.0
    %v4980 = vsel %vm1876, %v4904, 0.0
    %v4981 = vsel %vm1877, %v4905, 0.0
    %v4982 = vsel %vm1878, %v4906, 0.0
    %v4983 = vsel %vm1879, %v4907, 0.0
    %v4984 = vsel %vm1880, %v4908, 0.0
    %v4985 = vsel %vm1881, %v4909, 0.0
    %v4986 = vsel %vm1882, %v4910, 0.0
    %v4987 = vsel %vm1883, %v4911, 0.0
    %v4988 = vsel %vm1884, %v4912, 0.0
    %v4989 = vsel %vm1885, %v4913, 0.0
    %v4990 = vsel %vm1886, %v4914, 0.0
    %v4991 = vsel %vm1887, %v4915, 0.0
    %v4992 = vsel %vm1888, %v4916, 0.0
    %v4993 = vsel %vm1889, %v4917, 0.0
    %v4994 = vsel %vm1890, %v4918, 0.0
    %v4995 = vsel %vm1891, %v4919, 0.0
    %v4996 = vsel %vm1892, %v4920, 0.0
    %v4997 = vsel %vm1893, %v4921, 0.0
    %v4998 = vsel %vm1894, %v4922, 0.0
    %v4999 = vsel %vm1895, %v4923, 0.0
    %v5000 = vsel %vm1896, %v4924, 0.0
    %v5001 = vsel %vm1897, %v4925, 0.0
    %v5002 = vsel %vm1898, %v4926, 0.0
    %v5003 = vsel %vm1899, %v4927, 0.0
    %v5004 = vsel %vm1900, %v4928, 0.0
    %v5005 = vsel %vm1901, %v4929, 0.0
    %v5006 = vsel %vm1902, %v4930, 0.0
    %v5007 = vsel %vm1903, %v4931, 0.0
    %v5008 = vsel %vm1904, %v4932, 0.0
    %v5009 = vsel %vm1905, %v4933, 0.0
    %v5010 = vsel %vm1906, %v4934, 0.0
    %v5011 = vsel %vm1907, %v4935, 0.0
    %v5012 = vsel %vm1908, %v4936, 0.0
    %v5013 = vsel %vm1909, %v4937, 0.0
    %v5014 = vsel %vm1910, %v4938, 0.0
    %v5015 = vsel %vm1911, %v4939, 0.0
    %v5016 = vsel %vm1912, %v4940, 0.0
    %v5017 = vsel %vm1913, %v4941, 0.0
    %v5018 = vsel %vm1914, %v4942, 0.0
    %v5019 = vsel %vm1915, %v4943, 0.0
    %v5020 = vsel %vm1916, %v4944, 0.0
    %v5021 = vsel %vm1917, %v4945, 0.0
    %v5022 = vsel %vm1918, %v4946, 0.0
    %v5023 = vsel %vm1919, %v4947, 0.0
    %v5024 = vsel %vm1920, %v4948, 0.0
    %v5025 = vsel %vm1921, %v4949, 0.0
    %v5026 = vsel %vm1922, %v4950, 0.0
    %v5027 = vsel %vm1923, %v4951, 0.0
    %v5028 = vsel %vm1924, %v4952, 0.0
    %v5029 = vsel %vm1925, %v4953, 0.0
    %v5030 = vsel %vm1926, %v4954, 0.0
    %v5031 = vsel %vm1927, %v4955, 0.0
    %v5032 = vsel %vm1928, %v4956, 0.0
    %v5033 = vsel %vm1929, %v4957, 0.0
    %v5034 = vsel %vm1930, %v4958, 0.0
    %v5035 = vsel %vm1931, %v4959, 0.0
    %v5036 = vsel %vm1932, %v4960, 0.0
    %v5037 = vsel %vm1933, %v4961, 0.0
    %v5038 = vsel %vm1934, %v4962, 0.0
    %v5039 = vsel %vm1935, %v4963, 0.0
    %v5040 = vsel %vm1936, %v4964, 0.0
    %v5041 = vsel %vm1937, %v4965, 0.0
    %v5042 = vsel %vm1938, %v4966, 0.0
    %v5043 = vsel %vm1939, %v4967, 0.0
    %v5044 = vsel %vm1940, %v4968, 0.0
    %v5045 = vsel %vm1941, %v4969, 0.0
    %v5046 = vsel %vm1942, %v4970, 0.0
    %v5047 = vsel %vm1943, %v4971, 0.0
    %v5048 = vsel %vm1944, %v4972, 0.0
    %v5049 = vsel %vm1945, %v4973, 0.0
    %v5050 = vpack.c.bf16 %v4974, %v4974
    %v5051 = vpack.c.bf16 %v4975, %v4975
    %v5052 = vpack.c.bf16 %v4976, %v4976
    %v5053 = vpack.c.bf16 %v4977, %v4977
    %v5054 = vpack.c.bf16 %v4978, %v4978
    %v5055 = vpack.c.bf16 %v4979, %v4979
    %v5056 = vpack.c.bf16 %v4980, %v4980
    %v5057 = vpack.c.bf16 %v4981, %v4981
    %v5058 = vpack.c.bf16 %v4982, %v4982
    %v5059 = vpack.c.bf16 %v4983, %v4983
    %v5060 = vpack.c.bf16 %v4984, %v4984
    %v5061 = vpack.c.bf16 %v4985, %v4985
    %v5062 = vpack.c.bf16 %v4986, %v4986
    %v5063 = vpack.c.bf16 %v4987, %v4987
    %v5064 = vpack.c.bf16 %v4988, %v4988
    %v5065 = vpack.c.bf16 %v4989, %v4989
    %v5066 = vpack.c.bf16 %v4990, %v4990
    %v5067 = vpack.c.bf16 %v4991, %v4991
    %v5068 = vpack.c.bf16 %v4992, %v4992
    %v5069 = vpack.c.bf16 %v4993, %v4993
    %v5070 = vpack.c.bf16 %v4994, %v4994
    %v5071 = vpack.c.bf16 %v4995, %v4995
    %v5072 = vpack.c.bf16 %v4996, %v4996
    %v5073 = vpack.c.bf16 %v4997, %v4997
    %v5074 = vpack.c.bf16 %v4998, %v4998
    %v5075 = vpack.c.bf16 %v4999, %v4999
    %v5076 = vpack.c.bf16 %v5000, %v5000
    %v5077 = vpack.c.bf16 %v5001, %v5001
    %v5078 = vpack.c.bf16 %v5002, %v5002
    %v5079 = vpack.c.bf16 %v5003, %v5003
    %v5080 = vpack.c.bf16 %v5004, %v5004
    %v5081 = vpack.c.bf16 %v5005, %v5005
    %v5082 = vpack.c.bf16 %v5006, %v5006
    %v5083 = vpack.c.bf16 %v5007, %v5007
    %v5084 = vpack.c.bf16 %v5008, %v5008
    %v5085 = vpack.c.bf16 %v5009, %v5009
    %v5086 = vpack.c.bf16 %v5010, %v5010
    %v5087 = vpack.c.bf16 %v5011, %v5011
    %v5088 = vpack.c.bf16 %v5012, %v5012
    %v5089 = vpack.c.bf16 %v5013, %v5013
    %v5090 = vpack.c.bf16 %v5014, %v5014
    %v5091 = vpack.c.bf16 %v5015, %v5015
    %v5092 = vpack.c.bf16 %v5016, %v5016
    %v5093 = vpack.c.bf16 %v5017, %v5017
    %v5094 = vpack.c.bf16 %v5018, %v5018
    %v5095 = vpack.c.bf16 %v5019, %v5019
    %v5096 = vpack.c.bf16 %v5020, %v5020
    %v5097 = vpack.c.bf16 %v5021, %v5021
    %v5098 = vpack.c.bf16 %v5022, %v5022
    %v5099 = vpack.c.bf16 %v5023, %v5023
    %v5100 = vpack.c.bf16 %v5024, %v5024
    %v5101 = vpack.c.bf16 %v5025, %v5025
    %v5102 = vpack.c.bf16 %v5026, %v5026
    %v5103 = vpack.c.bf16 %v5027, %v5027
    %v5104 = vpack.c.bf16 %v5028, %v5028
    %v5105 = vpack.c.bf16 %v5029, %v5029
    %v5106 = vpack.c.bf16 %v5030, %v5030
    %v5107 = vpack.c.bf16 %v5031, %v5031
    %v5108 = vpack.c.bf16 %v5032, %v5032
    %v5109 = vpack.c.bf16 %v5033, %v5033
    %v5110 = vpack.c.bf16 %v5034, %v5034
    %v5111 = vpack.c.bf16 %v5035, %v5035
    %v5112 = vpack.c.bf16 %v5036, %v5036
    %v5113 = vpack.c.bf16 %v5037, %v5037
    %v5114 = vpack.c.bf16 %v5038, %v5038
    %v5115 = vpack.c.bf16 %v5039, %v5039
    %v5116 = vpack.c.bf16 %v5040, %v5040
    %v5117 = vpack.c.bf16 %v5041, %v5041
    %v5118 = vpack.c.bf16 %v5042, %v5042
    %v5119 = vpack.c.bf16 %v5043, %v5043
    %v5120 = vpack.c.bf16 %v5044, %v5044
    %v5121 = vpack.c.bf16 %v5045, %v5045
    %v5122 = vpack.c.bf16 %v5046, %v5046
    %v5123 = vpack.c.bf16 %v5047, %v5047
    %v5124 = vpack.c.bf16 %v5048, %v5048
    %v5125 = vpack.c.bf16 %v5049, %v5049
    %v5130 = vunpack.c.l.b16 %v5122
    %v5131 = vunpack.c.l.b16 %v5123
    %v5132 = vunpack.c.l.b16 %v5124
    %v5133 = vunpack.c.l.b16 %v5125
    %v5134 = vpack.c.b16 %v5131, %v5130
    %v5135 = vpack.c.b16 %v5133, %v5132
    %v5210 = vunpack.c.l.b16 %v5050
    %v5211 = vunpack.c.l.b16 %v5051
    %v5212 = vunpack.c.l.b16 %v5052
    %v5213 = vunpack.c.l.b16 %v5053
    %v5214 = vunpack.c.l.b16 %v5054
    %v5215 = vunpack.c.l.b16 %v5055
    %v5216 = vunpack.c.l.b16 %v5056
    %v5217 = vunpack.c.l.b16 %v5057
    %v5218 = vunpack.c.l.b16 %v5058
    %v5219 = vunpack.c.l.b16 %v5059
    %v5220 = vunpack.c.l.b16 %v5060
    %v5221 = vunpack.c.l.b16 %v5061
    %v5222 = vunpack.c.l.b16 %v5062
    %v5223 = vunpack.c.l.b16 %v5063
    %v5224 = vunpack.c.l.b16 %v5064
    %v5225 = vunpack.c.l.b16 %v5065
    %v5226 = vunpack.c.l.b16 %v5066
    %v5227 = vunpack.c.l.b16 %v5067
    %v5228 = vunpack.c.l.b16 %v5068
    %v5229 = vunpack.c.l.b16 %v5069
    %v5230 = vunpack.c.l.b16 %v5070
    %v5231 = vunpack.c.l.b16 %v5071
    %v5232 = vunpack.c.l.b16 %v5072
    %v5233 = vunpack.c.l.b16 %v5073
    %v5234 = vunpack.c.l.b16 %v5074
    %v5235 = vunpack.c.l.b16 %v5075
    %v5236 = vunpack.c.l.b16 %v5076
    %v5237 = vunpack.c.l.b16 %v5077
    %v5238 = vunpack.c.l.b16 %v5078
    %v5239 = vunpack.c.l.b16 %v5079
    %v5240 = vunpack.c.l.b16 %v5080
    %v5241 = vunpack.c.l.b16 %v5081
    %v5242 = vunpack.c.l.b16 %v5082
    %v5243 = vunpack.c.l.b16 %v5083
    %v5244 = vunpack.c.l.b16 %v5084
    %v5245 = vunpack.c.l.b16 %v5085
    %v5246 = vunpack.c.l.b16 %v5086
    %v5247 = vunpack.c.l.b16 %v5087
    %v5248 = vunpack.c.l.b16 %v5088
    %v5249 = vunpack.c.l.b16 %v5089
    %v5250 = vunpack.c.l.b16 %v5090
    %v5251 = vunpack.c.l.b16 %v5091
    %v5252 = vunpack.c.l.b16 %v5092
    %v5253 = vunpack.c.l.b16 %v5093
    %v5254 = vunpack.c.l.b16 %v5094
    %v5255 = vunpack.c.l.b16 %v5095
    %v5256 = vunpack.c.l.b16 %v5096
    %v5257 = vunpack.c.l.b16 %v5097
    %v5258 = vunpack.c.l.b16 %v5098
    %v5259 = vunpack.c.l.b16 %v5099
    %v5260 = vunpack.c.l.b16 %v5100
    %v5261 = vunpack.c.l.b16 %v5101
    %v5262 = vunpack.c.l.b16 %v5102
    %v5263 = vunpack.c.l.b16 %v5103
    %v5264 = vunpack.c.l.b16 %v5104
    %v5265 = vunpack.c.l.b16 %v5105
    %v5266 = vunpack.c.l.b16 %v5106
    %v5267 = vunpack.c.l.b16 %v5107
    %v5268 = vunpack.c.l.b16 %v5108
    %v5269 = vunpack.c.l.b16 %v5109
    %v5270 = vunpack.c.l.b16 %v5110
    %v5271 = vunpack.c.l.b16 %v5111
    %v5272 = vunpack.c.l.b16 %v5112
    %v5273 = vunpack.c.l.b16 %v5113
    %v5274 = vunpack.c.l.b16 %v5114
    %v5275 = vunpack.c.l.b16 %v5115
    %v5276 = vunpack.c.l.b16 %v5116
    %v5277 = vunpack.c.l.b16 %v5117
    %v5278 = vunpack.c.l.b16 %v5118
    %v5279 = vunpack.c.l.b16 %v5119
    %v5280 = vunpack.c.l.b16 %v5120
    %v5281 = vunpack.c.l.b16 %v5121
    %v5282 = vpack.c.b16 %v5211, %v5210
    %v5283 = vpack.c.b16 %v5213, %v5212
    %v5284 = vpack.c.b16 %v5215, %v5214
    %v5285 = vpack.c.b16 %v5217, %v5216
    %v5286 = vpack.c.b16 %v5219, %v5218
    %v5287 = vpack.c.b16 %v5221, %v5220
    %v5288 = vpack.c.b16 %v5223, %v5222
    %v5289 = vpack.c.b16 %v5225, %v5224
    %v5290 = vpack.c.b16 %v5227, %v5226
    %v5291 = vpack.c.b16 %v5229, %v5228
    %v5292 = vpack.c.b16 %v5231, %v5230
    %v5293 = vpack.c.b16 %v5233, %v5232
    %v5294 = vpack.c.b16 %v5235, %v5234
    %v5295 = vpack.c.b16 %v5237, %v5236
    %v5296 = vpack.c.b16 %v5239, %v5238
    %v5297 = vpack.c.b16 %v5241, %v5240
    %v5298 = vpack.c.b16 %v5243, %v5242
    %v5299 = vpack.c.b16 %v5245, %v5244
    %v5300 = vpack.c.b16 %v5247, %v5246
    %v5301 = vpack.c.b16 %v5249, %v5248
    %v5302 = vpack.c.b16 %v5251, %v5250
    %v5303 = vpack.c.b16 %v5253, %v5252
    %v5304 = vpack.c.b16 %v5255, %v5254
    %v5305 = vpack.c.b16 %v5257, %v5256
    %v5306 = vpack.c.b16 %v5259, %v5258
    %v5307 = vpack.c.b16 %v5261, %v5260
    %v5308 = vpack.c.b16 %v5263, %v5262
    %v5309 = vpack.c.b16 %v5265, %v5264
    %v5310 = vpack.c.b16 %v5267, %v5266
    %v5311 = vpack.c.b16 %v5269, %v5268
    %v5312 = vpack.c.b16 %v5271, %v5270
    %v5313 = vpack.c.b16 %v5273, %v5272
    %v5314 = vpack.c.b16 %v5275, %v5274
    %v5315 = vpack.c.b16 %v5277, %v5276
    %v5316 = vpack.c.b16 %v5279, %v5278
    %v5317 = vpack.c.b16 %v5281, %v5280
    %s5354 = scalar_lea.vmem [#allocation2], 768
    %v5355 = vld [vmem:[%s5354] sm:$0xf]
    %v5356 = vld [vmem:[%s5354 + $0x4] sm:$0xf]
    %v5357 = vld [vmem:[%s5354 + $0x8] sm:$0xf]
    %v5358 = vld [vmem:[%s5354 + $0xc] sm:$0xf]
    %v5359 = vld [vmem:[%s5354 + $0x10] sm:$0xf]
    %v5360 = vld [vmem:[%s5354 + $0x14] sm:$0xf]
    %v5361 = vld [vmem:[%s5354 + $0x18] sm:$0xf]
    %v5362 = vld [vmem:[%s5354 + $0x1c] sm:$0xf]
    %v5363 = vld [vmem:[%s5354 + $0x20] sm:$0xf]
    %v5364 = vld [vmem:[%s5354 + $0x24] sm:$0xf]
    %v5365 = vld [vmem:[%s5354 + $0x28] sm:$0xf]
    %v5366 = vld [vmem:[%s5354 + $0x2c] sm:$0xf]
    %v5367 = vld [vmem:[%s5354 + $0x30] sm:$0xf]
    %v5368 = vld [vmem:[%s5354 + $0x34] sm:$0xf]
    %v5369 = vld [vmem:[%s5354 + $0x38] sm:$0xf]
    %v5370 = vld [vmem:[%s5354 + $0x3c] sm:$0xf]
    %v5371 = vld [vmem:[%s5354 + $0x40] sm:$0xf]
    %v5372 = vld [vmem:[%s5354 + $0x44] sm:$0xf]
    %v5373 = vld [vmem:[%s5354 + $0x48] sm:$0xf]
    %v5374 = vld [vmem:[%s5354 + $0x4c] sm:$0xf]
    %v5375 = vld [vmem:[%s5354 + $0x50] sm:$0xf]
    %v5376 = vld [vmem:[%s5354 + $0x54] sm:$0xf]
    %v5377 = vld [vmem:[%s5354 + $0x58] sm:$0xf]
    %v5378 = vld [vmem:[%s5354 + $0x5c] sm:$0xf]
    %v5379 = vld [vmem:[%s5354 + $0x60] sm:$0xf]
    %v5380 = vld [vmem:[%s5354 + $0x64] sm:$0xf]
    %v5381 = vld [vmem:[%s5354 + $0x68] sm:$0xf]
    %v5382 = vld [vmem:[%s5354 + $0x6c] sm:$0xf]
    %v5383 = vld [vmem:[%s5354 + $0x70] sm:$0xf]
    %v5384 = vld [vmem:[%s5354 + $0x74] sm:$0xf]
    %v5385 = vld [vmem:[%s5354 + $0x78] sm:$0xf]
    %v5386 = vld [vmem:[%s5354 + $0x7c] sm:$0xf]
    %v5387 = vld [vmem:[%s5354 + $0x80] sm:$0xf]
    %v5388 = vld [vmem:[%s5354 + $0x84] sm:$0xf]
    %v5389 = vld [vmem:[%s5354 + $0x88] sm:$0xf]
    %v5390 = vld [vmem:[%s5354 + $0x8c] sm:$0xf]
    %v5391 = vld [vmem:[%s5354 + $0x90] sm:$0xf]
    %v5392 = vld [vmem:[%s5354 + $0x94] sm:$0xf]
    %v5393 = vld [vmem:[%s5354 + $0x98] sm:$0xf]
    %v5394 = vld [vmem:[%s5354 + $0x9c] sm:$0xf]
    %v5395 = vld [vmem:[%s5354 + $0xa0] sm:$0xf]
    %v5396 = vld [vmem:[%s5354 + $0xa4] sm:$0xf]
    %v5397 = vld [vmem:[%s5354 + $0xa8] sm:$0xf]
    %v5398 = vld [vmem:[%s5354 + $0xac] sm:$0xf]
    %v5399 = vld [vmem:[%s5354 + $0xb0] sm:$0xf]
    %v5400 = vld [vmem:[%s5354 + $0xb4] sm:$0xf]
    %v5401 = vld [vmem:[%s5354 + $0xb8] sm:$0xf]
    %v5402 = vld [vmem:[%s5354 + $0xbc] sm:$0xf]
    %v5403 = vld [vmem:[%s5354 + $0xc0] sm:$0xf]
    %v5404 = vld [vmem:[%s5354 + $0xc4] sm:$0xf]
    %v5405 = vld [vmem:[%s5354 + $0xc8] sm:$0xf]
    %v5406 = vld [vmem:[%s5354 + $0xcc] sm:$0xf]
    %v5407 = vld [vmem:[%s5354 + $0xd0] sm:$0xf]
    %v5408 = vld [vmem:[%s5354 + $0xd4] sm:$0xf]
    %v5409 = vld [vmem:[%s5354 + $0xd8] sm:$0xf]
    %v5410 = vld [vmem:[%s5354 + $0xdc] sm:$0xf]
    %v5411 = vld [vmem:[%s5354 + $0xe0] sm:$0xf]
    %v5412 = vld [vmem:[%s5354 + $0xe4] sm:$0xf]
    %v5413 = vld [vmem:[%s5354 + $0xe8] sm:$0xf]
    %v5414 = vld [vmem:[%s5354 + $0xec] sm:$0xf]
    %v5415 = vld [vmem:[%s5354 + $0xf0] sm:$0xf]
    %v5416 = vld [vmem:[%s5354 + $0xf4] sm:$0xf]
    %v5417 = vld [vmem:[%s5354 + $0xf8] sm:$0xf]
    %v5418 = vld [vmem:[%s5354 + $0xfc] sm:$0xf]
    %s5419 = scalar_lea.vmem %s2, 3
    %v5420 = vld [vmem:[%s5419] sm:$0x1]
    %v5422 = vperm.slane %v5420, 0
    %v5488 = vunpack.c.l.b16 %v5355
    %v5489 = vunpack.c.l.b16 %v5356
    %v5490 = vunpack.c.l.b16 %v5357
    %v5491 = vunpack.c.l.b16 %v5358
    %v5492 = vunpack.c.l.b16 %v5359
    %v5493 = vunpack.c.l.b16 %v5360
    %v5494 = vunpack.c.l.b16 %v5361
    %v5495 = vunpack.c.l.b16 %v5362
    %v5496 = vunpack.c.l.b16 %v5363
    %v5497 = vunpack.c.l.b16 %v5364
    %v5498 = vunpack.c.l.b16 %v5365
    %v5499 = vunpack.c.l.b16 %v5366
    %v5500 = vunpack.c.l.b16 %v5367
    %v5501 = vunpack.c.l.b16 %v5368
    %v5502 = vunpack.c.l.b16 %v5369
    %v5503 = vunpack.c.l.b16 %v5370
    %v5504 = vunpack.c.l.b16 %v5371
    %v5505 = vunpack.c.l.b16 %v5372
    %v5506 = vunpack.c.l.b16 %v5373
    %v5507 = vunpack.c.l.b16 %v5374
    %v5508 = vunpack.c.l.b16 %v5375
    %v5509 = vunpack.c.l.b16 %v5376
    %v5510 = vunpack.c.l.b16 %v5377
    %v5511 = vunpack.c.l.b16 %v5378
    %v5512 = vunpack.c.l.b16 %v5379
    %v5513 = vunpack.c.l.b16 %v5380
    %v5514 = vunpack.c.l.b16 %v5381
    %v5515 = vunpack.c.l.b16 %v5382
    %v5516 = vunpack.c.l.b16 %v5383
    %v5517 = vunpack.c.l.b16 %v5384
    %v5518 = vunpack.c.l.b16 %v5385
    %v5519 = vunpack.c.l.b16 %v5386
    %v5520 = vunpack.c.l.b16 %v5387
    %v5521 = vunpack.c.l.b16 %v5388
    %v5522 = vunpack.c.l.b16 %v5389
    %v5523 = vunpack.c.l.b16 %v5390
    %v5524 = vunpack.c.l.b16 %v5391
    %v5525 = vunpack.c.l.b16 %v5392
    %v5526 = vunpack.c.l.b16 %v5393
    %v5527 = vunpack.c.l.b16 %v5394
    %v5528 = vunpack.c.l.b16 %v5395
    %v5529 = vunpack.c.l.b16 %v5396
    %v5530 = vunpack.c.l.b16 %v5397
    %v5531 = vunpack.c.l.b16 %v5398
    %v5532 = vunpack.c.l.b16 %v5399
    %v5533 = vunpack.c.l.b16 %v5400
    %v5534 = vunpack.c.l.b16 %v5401
    %v5535 = vunpack.c.l.b16 %v5402
    %v5536 = vunpack.c.l.b16 %v5403
    %v5537 = vunpack.c.l.b16 %v5404
    %v5538 = vunpack.c.l.b16 %v5405
    %v5539 = vunpack.c.l.b16 %v5406
    %v5540 = vunpack.c.l.b16 %v5407
    %v5541 = vunpack.c.l.b16 %v5408
    %v5542 = vunpack.c.l.b16 %v5409
    %v5543 = vunpack.c.l.b16 %v5410
    %v5544 = vunpack.c.l.b16 %v5411
    %v5545 = vunpack.c.l.b16 %v5412
    %v5546 = vunpack.c.l.b16 %v5413
    %v5547 = vunpack.c.l.b16 %v5414
    %v5548 = vunpack.c.l.b16 %v5415
    %v5549 = vunpack.c.l.b16 %v5416
    %v5550 = vunpack.c.l.b16 %v5417
    %v5551 = vunpack.c.l.b16 %v5418
    %v5552 = vpack.c.b16 %v5489, %v5488
    %v5553 = vpack.c.b16 %v5491, %v5490
    %v5554 = vpack.c.b16 %v5493, %v5492
    %v5555 = vpack.c.b16 %v5495, %v5494
    %v5556 = vpack.c.b16 %v5497, %v5496
    %v5557 = vpack.c.b16 %v5499, %v5498
    %v5558 = vpack.c.b16 %v5501, %v5500
    %v5559 = vpack.c.b16 %v5503, %v5502
    %v5560 = vpack.c.b16 %v5505, %v5504
    %v5561 = vpack.c.b16 %v5507, %v5506
    %v5562 = vpack.c.b16 %v5509, %v5508
    %v5563 = vpack.c.b16 %v5511, %v5510
    %v5564 = vpack.c.b16 %v5513, %v5512
    %v5565 = vpack.c.b16 %v5515, %v5514
    %v5566 = vpack.c.b16 %v5517, %v5516
    %v5567 = vpack.c.b16 %v5519, %v5518
    %v5568 = vpack.c.b16 %v5521, %v5520
    %v5569 = vpack.c.b16 %v5523, %v5522
    %v5570 = vpack.c.b16 %v5525, %v5524
    %v5571 = vpack.c.b16 %v5527, %v5526
    %v5572 = vpack.c.b16 %v5529, %v5528
    %v5573 = vpack.c.b16 %v5531, %v5530
    %v5574 = vpack.c.b16 %v5533, %v5532
    %v5575 = vpack.c.b16 %v5535, %v5534
    %v5576 = vpack.c.b16 %v5537, %v5536
    %v5577 = vpack.c.b16 %v5539, %v5538
    %v5578 = vpack.c.b16 %v5541, %v5540
    %v5579 = vpack.c.b16 %v5543, %v5542
    %v5580 = vpack.c.b16 %v5545, %v5544
    %v5581 = vpack.c.b16 %v5547, %v5546
    %v5582 = vpack.c.b16 %v5549, %v5548
    %v5583 = vpack.c.b16 %v5551, %v5550
    %5616 = vmatpush.bf16.msra.mxu0 %v5559
    %5617 = vmatpush.bf16.msra.mxu0 %v5558
    %5618 = vmatpush.bf16.msra.mxu0 %v5557
    %5619 = vmatpush.bf16.msra.mxu0 %v5556
    %5620 = vmatpush.bf16.msra.mxu0 %v5555
    %5621 = vmatpush.bf16.msra.mxu0 %v5554
    %5622 = vmatpush.bf16.msra.mxu0 %v5553
    %5623 = vmatpush.bf16.msra.mxu0 %v5552
    %5624 = vmatmul.bf16.gmra.mxu0 %v5134
    %v5625 = vpop.f32.mrf.mxu0
    %v5626 = vadd.f32 %v5422, %v5625
    %v5627 = vpop.f32.mrf.mxu0
    %v5628 = vadd.f32 %v5422, %v5627
    %5629 = vmatmul.bf16.gmra.mxu0 %v5135
    %v5630 = vpop.f32.mrf.mxu0
    %v5631 = vadd.f32 %v5422, %v5630
    %v5632 = vpop.f32.mrf.mxu0
    %v5633 = vadd.f32 %v5422, %v5632
    %5634 = vmatmul.bf16.gmra.mxu0 %v5282
    %v5635 = vpop.f32.mrf.mxu0
    %v5636 = vadd.f32 %v5422, %v5635
    %v5637 = vpop.f32.mrf.mxu0
    %v5638 = vadd.f32 %v5422, %v5637
    %5639 = vmatmul.bf16.gmra.mxu0 %v5283
    %v5640 = vpop.f32.mrf.mxu0
    %v5641 = vadd.f32 %v5422, %v5640
    %v5642 = vpop.f32.mrf.mxu0
    %v5643 = vadd.f32 %v5422, %v5642
    %5644 = vmatmul.bf16.gmra.mxu0 %v5284
    %v5645 = vpop.f32.mrf.mxu0
    %v5646 = vadd.f32 %v5422, %v5645
    %v5647 = vpop.f32.mrf.mxu0
    %v5648 = vadd.f32 %v5422, %v5647
    %5649 = vmatmul.bf16.gmra.mxu0 %v5285
    %v5650 = vpop.f32.mrf.mxu0
    %v5651 = vadd.f32 %v5422, %v5650
    %v5652 = vpop.f32.mrf.mxu0
    %v5653 = vadd.f32 %v5422, %v5652
    %5654 = vmatmul.bf16.gmra.mxu0 %v5286
    %v5655 = vpop.f32.mrf.mxu0
    %v5656 = vadd.f32 %v5422, %v5655
    %v5657 = vpop.f32.mrf.mxu0
    %v5658 = vadd.f32 %v5422, %v5657
    %5659 = vmatmul.bf16.gmra.mxu0 %v5287
    %v5660 = vpop.f32.mrf.mxu0
    %v5661 = vadd.f32 %v5422, %v5660
    %v5662 = vpop.f32.mrf.mxu0
    %v5663 = vadd.f32 %v5422, %v5662
    %5664 = vmatmul.bf16.gmra.mxu0 %v5288
    %v5665 = vpop.f32.mrf.mxu0
    %v5666 = vadd.f32 %v5422, %v5665
    %v5667 = vpop.f32.mrf.mxu0
    %v5668 = vadd.f32 %v5422, %v5667
    %5669 = vmatmul.bf16.gmra.mxu0 %v5289
    %v5670 = vpop.f32.mrf.mxu0
    %v5671 = vadd.f32 %v5422, %v5670
    %v5672 = vpop.f32.mrf.mxu0
    %v5673 = vadd.f32 %v5422, %v5672
    %5674 = vmatmul.bf16.gmra.mxu0 %v5290
    %v5675 = vpop.f32.mrf.mxu0
    %v5676 = vadd.f32 %v5422, %v5675
    %v5677 = vpop.f32.mrf.mxu0
    %v5678 = vadd.f32 %v5422, %v5677
    %5679 = vmatmul.bf16.gmra.mxu0 %v5291
    %v5680 = vpop.f32.mrf.mxu0
    %v5681 = vadd.f32 %v5422, %v5680
    %v5682 = vpop.f32.mrf.mxu0
    %v5683 = vadd.f32 %v5422, %v5682
    %5684 = vmatmul.bf16.gmra.mxu0 %v5292
    %v5685 = vpop.f32.mrf.mxu0
    %v5686 = vadd.f32 %v5422, %v5685
    %v5687 = vpop.f32.mrf.mxu0
    %v5688 = vadd.f32 %v5422, %v5687
    %5689 = vmatmul.bf16.gmra.mxu0 %v5293
    %v5690 = vpop.f32.mrf.mxu0
    %v5691 = vadd.f32 %v5422, %v5690
    %v5692 = vpop.f32.mrf.mxu0
    %v5693 = vadd.f32 %v5422, %v5692
    %5694 = vmatmul.bf16.gmra.mxu0 %v5294
    %v5695 = vpop.f32.mrf.mxu0
    %v5696 = vadd.f32 %v5422, %v5695
    %v5697 = vpop.f32.mrf.mxu0
    %v5698 = vadd.f32 %v5422, %v5697
    %5699 = vmatmul.bf16.gmra.mxu0 %v5295
    %v5700 = vpop.f32.mrf.mxu0
    %v5701 = vadd.f32 %v5422, %v5700
    %v5702 = vpop.f32.mrf.mxu0
    %v5703 = vadd.f32 %v5422, %v5702
    %5704 = vmatmul.bf16.gmra.mxu0 %v5296
    %v5705 = vpop.f32.mrf.mxu0
    %v5706 = vadd.f32 %v5422, %v5705
    %v5707 = vpop.f32.mrf.mxu0
    %v5708 = vadd.f32 %v5422, %v5707
    %5709 = vmatmul.bf16.gmra.mxu0 %v5297
    %v5710 = vpop.f32.mrf.mxu0
    %v5711 = vadd.f32 %v5422, %v5710
    %v5712 = vpop.f32.mrf.mxu0
    %v5713 = vadd.f32 %v5422, %v5712
    %5714 = vmatmul.bf16.gmra.mxu0 %v5298
    %v5715 = vpop.f32.mrf.mxu0
    %v5716 = vadd.f32 %v5422, %v5715
    %v5717 = vpop.f32.mrf.mxu0
    %v5718 = vadd.f32 %v5422, %v5717
    %5719 = vmatmul.bf16.gmra.mxu0 %v5299
    %v5720 = vpop.f32.mrf.mxu0
    %v5721 = vadd.f32 %v5422, %v5720
    %v5722 = vpop.f32.mrf.mxu0
    %v5723 = vadd.f32 %v5422, %v5722
    %5724 = vmatmul.bf16.gmra.mxu0 %v5300
    %v5725 = vpop.f32.mrf.mxu0
    %v5726 = vadd.f32 %v5422, %v5725
    %v5727 = vpop.f32.mrf.mxu0
    %v5728 = vadd.f32 %v5422, %v5727
    %5729 = vmatmul.bf16.gmra.mxu0 %v5301
    %v5730 = vpop.f32.mrf.mxu0
    %v5731 = vadd.f32 %v5422, %v5730
    %v5732 = vpop.f32.mrf.mxu0
    %v5733 = vadd.f32 %v5422, %v5732
    %5734 = vmatmul.bf16.gmra.mxu0 %v5302
    %v5735 = vpop.f32.mrf.mxu0
    %v5736 = vadd.f32 %v5422, %v5735
    %v5737 = vpop.f32.mrf.mxu0
    %v5738 = vadd.f32 %v5422, %v5737
    %5739 = vmatmul.bf16.gmra.mxu0 %v5303
    %v5740 = vpop.f32.mrf.mxu0
    %v5741 = vadd.f32 %v5422, %v5740
    %v5742 = vpop.f32.mrf.mxu0
    %v5743 = vadd.f32 %v5422, %v5742
    %5744 = vmatmul.bf16.gmra.mxu0 %v5304
    %v5745 = vpop.f32.mrf.mxu0
    %v5746 = vadd.f32 %v5422, %v5745
    %v5747 = vpop.f32.mrf.mxu0
    %v5748 = vadd.f32 %v5422, %v5747
    %5749 = vmatmul.bf16.gmra.mxu0 %v5305
    %v5750 = vpop.f32.mrf.mxu0
    %v5751 = vadd.f32 %v5422, %v5750
    %v5752 = vpop.f32.mrf.mxu0
    %v5753 = vadd.f32 %v5422, %v5752
    %5754 = vmatmul.bf16.gmra.mxu0 %v5306
    %v5755 = vpop.f32.mrf.mxu0
    %v5756 = vadd.f32 %v5422, %v5755
    %v5757 = vpop.f32.mrf.mxu0
    %v5758 = vadd.f32 %v5422, %v5757
    %5759 = vmatmul.bf16.gmra.mxu0 %v5307
    %v5760 = vpop.f32.mrf.mxu0
    %v5761 = vadd.f32 %v5422, %v5760
    %v5762 = vpop.f32.mrf.mxu0
    %v5763 = vadd.f32 %v5422, %v5762
    %5764 = vmatmul.bf16.gmra.mxu0 %v5308
    %v5765 = vpop.f32.mrf.mxu0
    %v5766 = vadd.f32 %v5422, %v5765
    %v5767 = vpop.f32.mrf.mxu0
    %v5768 = vadd.f32 %v5422, %v5767
    %5769 = vmatmul.bf16.gmra.mxu0 %v5309
    %v5770 = vpop.f32.mrf.mxu0
    %v5771 = vadd.f32 %v5422, %v5770
    %v5772 = vpop.f32.mrf.mxu0
    %v5773 = vadd.f32 %v5422, %v5772
    %5774 = vmatmul.bf16.gmra.mxu0 %v5310
    %v5775 = vpop.f32.mrf.mxu0
    %v5776 = vadd.f32 %v5422, %v5775
    %v5777 = vpop.f32.mrf.mxu0
    %v5778 = vadd.f32 %v5422, %v5777
    %5779 = vmatmul.bf16.gmra.mxu0 %v5311
    %v5780 = vpop.f32.mrf.mxu0
    %v5781 = vadd.f32 %v5422, %v5780
    %v5782 = vpop.f32.mrf.mxu0
    %v5783 = vadd.f32 %v5422, %v5782
    %5784 = vmatmul.bf16.gmra.mxu0 %v5312
    %v5785 = vpop.f32.mrf.mxu0
    %v5786 = vadd.f32 %v5422, %v5785
    %v5787 = vpop.f32.mrf.mxu0
    %v5788 = vadd.f32 %v5422, %v5787
    %5789 = vmatmul.bf16.gmra.mxu0 %v5313
    %v5790 = vpop.f32.mrf.mxu0
    %v5791 = vadd.f32 %v5422, %v5790
    %v5792 = vpop.f32.mrf.mxu0
    %v5793 = vadd.f32 %v5422, %v5792
    %5794 = vmatmul.bf16.gmra.mxu0 %v5314
    %v5795 = vpop.f32.mrf.mxu0
    %v5796 = vadd.f32 %v5422, %v5795
    %v5797 = vpop.f32.mrf.mxu0
    %v5798 = vadd.f32 %v5422, %v5797
    %5799 = vmatmul.bf16.gmra.mxu0 %v5315
    %v5800 = vpop.f32.mrf.mxu0
    %v5801 = vadd.f32 %v5422, %v5800
    %v5802 = vpop.f32.mrf.mxu0
    %v5803 = vadd.f32 %v5422, %v5802
    %5804 = vmatmul.bf16.gmra.mxu0 %v5316
    %v5805 = vpop.f32.mrf.mxu0
    %v5806 = vadd.f32 %v5422, %v5805
    %v5807 = vpop.f32.mrf.mxu0
    %v5808 = vadd.f32 %v5422, %v5807
    %5809 = vmatmul.bf16.gmra.mxu0 %v5317
    %v5810 = vpop.f32.mrf.mxu0
    %v5811 = vadd.f32 %v5422, %v5810
    %v5812 = vpop.f32.mrf.mxu0
    %v5813 = vadd.f32 %v5422, %v5812
    %5814 = vdwg.mxu0
    %5815 = vmatpush.bf16.msra.mxu0 %v5567
    %5816 = vmatpush.bf16.msra.mxu0 %v5566
    %5817 = vmatpush.bf16.msra.mxu0 %v5565
    %5818 = vmatpush.bf16.msra.mxu0 %v5564
    %5819 = vmatpush.bf16.msra.mxu0 %v5563
    %5820 = vmatpush.bf16.msra.mxu0 %v5562
    %5821 = vmatpush.bf16.msra.mxu0 %v5561
    %5822 = vmatpush.bf16.msra.mxu0 %v5560
    %5823 = vmatmul.bf16.gmra.mxu0 %v5282
    %v5824 = vpop.f32.mrf.mxu0
    %v5825 = vadd.f32 %v5626, %v5824
    %v5826 = vpop.f32.mrf.mxu0
    %v5827 = vadd.f32 %v5628, %v5826
    %5828 = vmatmul.bf16.gmra.mxu0 %v5283
    %v5829 = vpop.f32.mrf.mxu0
    %v5830 = vadd.f32 %v5631, %v5829
    %v5831 = vpop.f32.mrf.mxu0
    %v5832 = vadd.f32 %v5633, %v5831
    %5833 = vmatmul.bf16.gmra.mxu0 %v5284
    %v5834 = vpop.f32.mrf.mxu0
    %v5835 = vadd.f32 %v5636, %v5834
    %v5836 = vpop.f32.mrf.mxu0
    %v5837 = vadd.f32 %v5638, %v5836
    %5838 = vmatmul.bf16.gmra.mxu0 %v5285
    %v5839 = vpop.f32.mrf.mxu0
    %v5840 = vadd.f32 %v5641, %v5839
    %v5841 = vpop.f32.mrf.mxu0
    %v5842 = vadd.f32 %v5643, %v5841
    %5843 = vmatmul.bf16.gmra.mxu0 %v5286
    %v5844 = vpop.f32.mrf.mxu0
    %v5845 = vadd.f32 %v5646, %v5844
    %v5846 = vpop.f32.mrf.mxu0
    %v5847 = vadd.f32 %v5648, %v5846
    %5848 = vmatmul.bf16.gmra.mxu0 %v5287
    %v5849 = vpop.f32.mrf.mxu0
    %v5850 = vadd.f32 %v5651, %v5849
    %v5851 = vpop.f32.mrf.mxu0
    %v5852 = vadd.f32 %v5653, %v5851
    %5853 = vmatmul.bf16.gmra.mxu0 %v5288
    %v5854 = vpop.f32.mrf.mxu0
    %v5855 = vadd.f32 %v5656, %v5854
    %v5856 = vpop.f32.mrf.mxu0
    %v5857 = vadd.f32 %v5658, %v5856
    %5858 = vmatmul.bf16.gmra.mxu0 %v5289
    %v5859 = vpop.f32.mrf.mxu0
    %v5860 = vadd.f32 %v5661, %v5859
    %v5861 = vpop.f32.mrf.mxu0
    %v5862 = vadd.f32 %v5663, %v5861
    %5863 = vmatmul.bf16.gmra.mxu0 %v5290
    %v5864 = vpop.f32.mrf.mxu0
    %v5865 = vadd.f32 %v5666, %v5864
    %v5866 = vpop.f32.mrf.mxu0
    %v5867 = vadd.f32 %v5668, %v5866
    %5868 = vmatmul.bf16.gmra.mxu0 %v5291
    %v5869 = vpop.f32.mrf.mxu0
    %v5870 = vadd.f32 %v5671, %v5869
    %v5871 = vpop.f32.mrf.mxu0
    %v5872 = vadd.f32 %v5673, %v5871
    %5873 = vmatmul.bf16.gmra.mxu0 %v5292
    %v5874 = vpop.f32.mrf.mxu0
    %v5875 = vadd.f32 %v5676, %v5874
    %v5876 = vpop.f32.mrf.mxu0
    %v5877 = vadd.f32 %v5678, %v5876
    %5878 = vmatmul.bf16.gmra.mxu0 %v5293
    %v5879 = vpop.f32.mrf.mxu0
    %v5880 = vadd.f32 %v5681, %v5879
    %v5881 = vpop.f32.mrf.mxu0
    %v5882 = vadd.f32 %v5683, %v5881
    %5883 = vmatmul.bf16.gmra.mxu0 %v5294
    %v5884 = vpop.f32.mrf.mxu0
    %v5885 = vadd.f32 %v5686, %v5884
    %v5886 = vpop.f32.mrf.mxu0
    %v5887 = vadd.f32 %v5688, %v5886
    %5888 = vmatmul.bf16.gmra.mxu0 %v5295
    %v5889 = vpop.f32.mrf.mxu0
    %v5890 = vadd.f32 %v5691, %v5889
    %v5891 = vpop.f32.mrf.mxu0
    %v5892 = vadd.f32 %v5693, %v5891
    %5893 = vmatmul.bf16.gmra.mxu0 %v5296
    %v5894 = vpop.f32.mrf.mxu0
    %v5895 = vadd.f32 %v5696, %v5894
    %v5896 = vpop.f32.mrf.mxu0
    %v5897 = vadd.f32 %v5698, %v5896
    %5898 = vmatmul.bf16.gmra.mxu0 %v5297
    %v5899 = vpop.f32.mrf.mxu0
    %v5900 = vadd.f32 %v5701, %v5899
    %v5901 = vpop.f32.mrf.mxu0
    %v5902 = vadd.f32 %v5703, %v5901
    %5903 = vmatmul.bf16.gmra.mxu0 %v5298
    %v5904 = vpop.f32.mrf.mxu0
    %v5905 = vadd.f32 %v5706, %v5904
    %v5906 = vpop.f32.mrf.mxu0
    %v5907 = vadd.f32 %v5708, %v5906
    %5908 = vmatmul.bf16.gmra.mxu0 %v5299
    %v5909 = vpop.f32.mrf.mxu0
    %v5910 = vadd.f32 %v5711, %v5909
    %v5911 = vpop.f32.mrf.mxu0
    %v5912 = vadd.f32 %v5713, %v5911
    %5913 = vmatmul.bf16.gmra.mxu0 %v5300
    %v5914 = vpop.f32.mrf.mxu0
    %v5915 = vadd.f32 %v5716, %v5914
    %v5916 = vpop.f32.mrf.mxu0
    %v5917 = vadd.f32 %v5718, %v5916
    %5918 = vmatmul.bf16.gmra.mxu0 %v5301
    %v5919 = vpop.f32.mrf.mxu0
    %v5920 = vadd.f32 %v5721, %v5919
    %v5921 = vpop.f32.mrf.mxu0
    %v5922 = vadd.f32 %v5723, %v5921
    %5923 = vmatmul.bf16.gmra.mxu0 %v5302
    %v5924 = vpop.f32.mrf.mxu0
    %v5925 = vadd.f32 %v5726, %v5924
    %v5926 = vpop.f32.mrf.mxu0
    %v5927 = vadd.f32 %v5728, %v5926
    %5928 = vmatmul.bf16.gmra.mxu0 %v5303
    %v5929 = vpop.f32.mrf.mxu0
    %v5930 = vadd.f32 %v5731, %v5929
    %v5931 = vpop.f32.mrf.mxu0
    %v5932 = vadd.f32 %v5733, %v5931
    %5933 = vmatmul.bf16.gmra.mxu0 %v5304
    %v5934 = vpop.f32.mrf.mxu0
    %v5935 = vadd.f32 %v5736, %v5934
    %v5936 = vpop.f32.mrf.mxu0
    %v5937 = vadd.f32 %v5738, %v5936
    %5938 = vmatmul.bf16.gmra.mxu0 %v5305
    %v5939 = vpop.f32.mrf.mxu0
    %v5940 = vadd.f32 %v5741, %v5939
    %v5941 = vpop.f32.mrf.mxu0
    %v5942 = vadd.f32 %v5743, %v5941
    %5943 = vmatmul.bf16.gmra.mxu0 %v5306
    %v5944 = vpop.f32.mrf.mxu0
    %v5945 = vadd.f32 %v5746, %v5944
    %v5946 = vpop.f32.mrf.mxu0
    %v5947 = vadd.f32 %v5748, %v5946
    %5948 = vmatmul.bf16.gmra.mxu0 %v5307
    %v5949 = vpop.f32.mrf.mxu0
    %v5950 = vadd.f32 %v5751, %v5949
    %v5951 = vpop.f32.mrf.mxu0
    %v5952 = vadd.f32 %v5753, %v5951
    %5953 = vmatmul.bf16.gmra.mxu0 %v5308
    %v5954 = vpop.f32.mrf.mxu0
    %v5955 = vadd.f32 %v5756, %v5954
    %v5956 = vpop.f32.mrf.mxu0
    %v5957 = vadd.f32 %v5758, %v5956
    %5958 = vmatmul.bf16.gmra.mxu0 %v5309
    %v5959 = vpop.f32.mrf.mxu0
    %v5960 = vadd.f32 %v5761, %v5959
    %v5961 = vpop.f32.mrf.mxu0
    %v5962 = vadd.f32 %v5763, %v5961
    %5963 = vmatmul.bf16.gmra.mxu0 %v5310
    %v5964 = vpop.f32.mrf.mxu0
    %v5965 = vadd.f32 %v5766, %v5964
    %v5966 = vpop.f32.mrf.mxu0
    %v5967 = vadd.f32 %v5768, %v5966
    %5968 = vmatmul.bf16.gmra.mxu0 %v5311
    %v5969 = vpop.f32.mrf.mxu0
    %v5970 = vadd.f32 %v5771, %v5969
    %v5971 = vpop.f32.mrf.mxu0
    %v5972 = vadd.f32 %v5773, %v5971
    %5973 = vmatmul.bf16.gmra.mxu0 %v5312
    %v5974 = vpop.f32.mrf.mxu0
    %v5975 = vadd.f32 %v5776, %v5974
    %v5976 = vpop.f32.mrf.mxu0
    %v5977 = vadd.f32 %v5778, %v5976
    %5978 = vmatmul.bf16.gmra.mxu0 %v5313
    %v5979 = vpop.f32.mrf.mxu0
    %v5980 = vadd.f32 %v5781, %v5979
    %v5981 = vpop.f32.mrf.mxu0
    %v5982 = vadd.f32 %v5783, %v5981
    %5983 = vmatmul.bf16.gmra.mxu0 %v5314
    %v5984 = vpop.f32.mrf.mxu0
    %v5985 = vadd.f32 %v5786, %v5984
    %v5986 = vpop.f32.mrf.mxu0
    %v5987 = vadd.f32 %v5788, %v5986
    %5988 = vmatmul.bf16.gmra.mxu0 %v5315
    %v5989 = vpop.f32.mrf.mxu0
    %v5990 = vadd.f32 %v5791, %v5989
    %v5991 = vpop.f32.mrf.mxu0
    %v5992 = vadd.f32 %v5793, %v5991
    %5993 = vmatmul.bf16.gmra.mxu0 %v5316
    %v5994 = vpop.f32.mrf.mxu0
    %v5995 = vadd.f32 %v5796, %v5994
    %v5996 = vpop.f32.mrf.mxu0
    %v5997 = vadd.f32 %v5798, %v5996
    %5998 = vmatmul.bf16.gmra.mxu0 %v5317
    %v5999 = vpop.f32.mrf.mxu0
    %v6000 = vadd.f32 %v5801, %v5999
    %v6001 = vpop.f32.mrf.mxu0
    %v6002 = vadd.f32 %v5803, %v6001
    %6003 = vmatmul.bf16.gmra.mxu0 %v5134
    %v6004 = vpop.f32.mrf.mxu0
    %v6005 = vadd.f32 %v5806, %v6004
    %v6006 = vpop.f32.mrf.mxu0
    %v6007 = vadd.f32 %v5808, %v6006
    %6008 = vmatmul.bf16.gmra.mxu0 %v5135
    %v6009 = vpop.f32.mrf.mxu0
    %v6010 = vadd.f32 %v5811, %v6009
    %v6011 = vpop.f32.mrf.mxu0
    %v6012 = vadd.f32 %v5813, %v6011
    %6013 = vdwg.mxu0
    %6014 = vmatpush.bf16.msra.mxu0 %v5575
    %6015 = vmatpush.bf16.msra.mxu0 %v5574
    %6016 = vmatpush.bf16.msra.mxu0 %v5573
    %6017 = vmatpush.bf16.msra.mxu0 %v5572
    %6018 = vmatpush.bf16.msra.mxu0 %v5571
    %6019 = vmatpush.bf16.msra.mxu0 %v5570
    %6020 = vmatpush.bf16.msra.mxu0 %v5569
    %6021 = vmatpush.bf16.msra.mxu0 %v5568
    %6022 = vmatmul.bf16.gmra.mxu0 %v5284
    %v6023 = vpop.f32.mrf.mxu0
    %v6024 = vadd.f32 %v5825, %v6023
    %v6025 = vpop.f32.mrf.mxu0
    %v6026 = vadd.f32 %v5827, %v6025
    %6027 = vmatmul.bf16.gmra.mxu0 %v5285
    %v6028 = vpop.f32.mrf.mxu0
    %v6029 = vadd.f32 %v5830, %v6028
    %v6030 = vpop.f32.mrf.mxu0
    %v6031 = vadd.f32 %v5832, %v6030
    %6032 = vmatmul.bf16.gmra.mxu0 %v5286
    %v6033 = vpop.f32.mrf.mxu0
    %v6034 = vadd.f32 %v5835, %v6033
    %v6035 = vpop.f32.mrf.mxu0
    %v6036 = vadd.f32 %v5837, %v6035
    %6037 = vmatmul.bf16.gmra.mxu0 %v5287
    %v6038 = vpop.f32.mrf.mxu0
    %v6039 = vadd.f32 %v5840, %v6038
    %v6040 = vpop.f32.mrf.mxu0
    %v6041 = vadd.f32 %v5842, %v6040
    %6042 = vmatmul.bf16.gmra.mxu0 %v5288
    %v6043 = vpop.f32.mrf.mxu0
    %v6044 = vadd.f32 %v5845, %v6043
    %v6045 = vpop.f32.mrf.mxu0
    %v6046 = vadd.f32 %v5847, %v6045
    %6047 = vmatmul.bf16.gmra.mxu0 %v5289
    %v6048 = vpop.f32.mrf.mxu0
    %v6049 = vadd.f32 %v5850, %v6048
    %v6050 = vpop.f32.mrf.mxu0
    %v6051 = vadd.f32 %v5852, %v6050
    %6052 = vmatmul.bf16.gmra.mxu0 %v5290
    %v6053 = vpop.f32.mrf.mxu0
    %v6054 = vadd.f32 %v5855, %v6053
    %v6055 = vpop.f32.mrf.mxu0
    %v6056 = vadd.f32 %v5857, %v6055
    %6057 = vmatmul.bf16.gmra.mxu0 %v5291
    %v6058 = vpop.f32.mrf.mxu0
    %v6059 = vadd.f32 %v5860, %v6058
    %v6060 = vpop.f32.mrf.mxu0
    %v6061 = vadd.f32 %v5862, %v6060
    %6062 = vmatmul.bf16.gmra.mxu0 %v5292
    %v6063 = vpop.f32.mrf.mxu0
    %v6064 = vadd.f32 %v5865, %v6063
    %v6065 = vpop.f32.mrf.mxu0
    %v6066 = vadd.f32 %v5867, %v6065
    %6067 = vmatmul.bf16.gmra.mxu0 %v5293
    %v6068 = vpop.f32.mrf.mxu0
    %v6069 = vadd.f32 %v5870, %v6068
    %v6070 = vpop.f32.mrf.mxu0
    %v6071 = vadd.f32 %v5872, %v6070
    %6072 = vmatmul.bf16.gmra.mxu0 %v5294
    %v6073 = vpop.f32.mrf.mxu0
    %v6074 = vadd.f32 %v5875, %v6073
    %v6075 = vpop.f32.mrf.mxu0
    %v6076 = vadd.f32 %v5877, %v6075
    %6077 = vmatmul.bf16.gmra.mxu0 %v5295
    %v6078 = vpop.f32.mrf.mxu0
    %v6079 = vadd.f32 %v5880, %v6078
    %v6080 = vpop.f32.mrf.mxu0
    %v6081 = vadd.f32 %v5882, %v6080
    %6082 = vmatmul.bf16.gmra.mxu0 %v5296
    %v6083 = vpop.f32.mrf.mxu0
    %v6084 = vadd.f32 %v5885, %v6083
    %v6085 = vpop.f32.mrf.mxu0
    %v6086 = vadd.f32 %v5887, %v6085
    %6087 = vmatmul.bf16.gmra.mxu0 %v5297
    %v6088 = vpop.f32.mrf.mxu0
    %v6089 = vadd.f32 %v5890, %v6088
    %v6090 = vpop.f32.mrf.mxu0
    %v6091 = vadd.f32 %v5892, %v6090
    %6092 = vmatmul.bf16.gmra.mxu0 %v5298
    %v6093 = vpop.f32.mrf.mxu0
    %v6094 = vadd.f32 %v5895, %v6093
    %v6095 = vpop.f32.mrf.mxu0
    %v6096 = vadd.f32 %v5897, %v6095
    %6097 = vmatmul.bf16.gmra.mxu0 %v5299
    %v6098 = vpop.f32.mrf.mxu0
    %v6099 = vadd.f32 %v5900, %v6098
    %v6100 = vpop.f32.mrf.mxu0
    %v6101 = vadd.f32 %v5902, %v6100
    %6102 = vmatmul.bf16.gmra.mxu0 %v5300
    %v6103 = vpop.f32.mrf.mxu0
    %v6104 = vadd.f32 %v5905, %v6103
    %v6105 = vpop.f32.mrf.mxu0
    %v6106 = vadd.f32 %v5907, %v6105
    %6107 = vmatmul.bf16.gmra.mxu0 %v5301
    %v6108 = vpop.f32.mrf.mxu0
    %v6109 = vadd.f32 %v5910, %v6108
    %v6110 = vpop.f32.mrf.mxu0
    %v6111 = vadd.f32 %v5912, %v6110
    %6112 = vmatmul.bf16.gmra.mxu0 %v5302
    %v6113 = vpop.f32.mrf.mxu0
    %v6114 = vadd.f32 %v5915, %v6113
    %v6115 = vpop.f32.mrf.mxu0
    %v6116 = vadd.f32 %v5917, %v6115
    %6117 = vmatmul.bf16.gmra.mxu0 %v5303
    %v6118 = vpop.f32.mrf.mxu0
    %v6119 = vadd.f32 %v5920, %v6118
    %v6120 = vpop.f32.mrf.mxu0
    %v6121 = vadd.f32 %v5922, %v6120
    %6122 = vmatmul.bf16.gmra.mxu0 %v5304
    %v6123 = vpop.f32.mrf.mxu0
    %v6124 = vadd.f32 %v5925, %v6123
    %v6125 = vpop.f32.mrf.mxu0
    %v6126 = vadd.f32 %v5927, %v6125
    %6127 = vmatmul.bf16.gmra.mxu0 %v5305
    %v6128 = vpop.f32.mrf.mxu0
    %v6129 = vadd.f32 %v5930, %v6128
    %v6130 = vpop.f32.mrf.mxu0
    %v6131 = vadd.f32 %v5932, %v6130
    %6132 = vmatmul.bf16.gmra.mxu0 %v5306
    %v6133 = vpop.f32.mrf.mxu0
    %v6134 = vadd.f32 %v5935, %v6133
    %v6135 = vpop.f32.mrf.mxu0
    %v6136 = vadd.f32 %v5937, %v6135
    %6137 = vmatmul.bf16.gmra.mxu0 %v5307
    %v6138 = vpop.f32.mrf.mxu0
    %v6139 = vadd.f32 %v5940, %v6138
    %v6140 = vpop.f32.mrf.mxu0
    %v6141 = vadd.f32 %v5942, %v6140
    %6142 = vmatmul.bf16.gmra.mxu0 %v5308
    %v6143 = vpop.f32.mrf.mxu0
    %v6144 = vadd.f32 %v5945, %v6143
    %v6145 = vpop.f32.mrf.mxu0
    %v6146 = vadd.f32 %v5947, %v6145
    %6147 = vmatmul.bf16.gmra.mxu0 %v5309
    %v6148 = vpop.f32.mrf.mxu0
    %v6149 = vadd.f32 %v5950, %v6148
    %v6150 = vpop.f32.mrf.mxu0
    %v6151 = vadd.f32 %v5952, %v6150
    %6152 = vmatmul.bf16.gmra.mxu0 %v5310
    %v6153 = vpop.f32.mrf.mxu0
    %v6154 = vadd.f32 %v5955, %v6153
    %v6155 = vpop.f32.mrf.mxu0
    %v6156 = vadd.f32 %v5957, %v6155
    %6157 = vmatmul.bf16.gmra.mxu0 %v5311
    %v6158 = vpop.f32.mrf.mxu0
    %v6159 = vadd.f32 %v5960, %v6158
    %v6160 = vpop.f32.mrf.mxu0
    %v6161 = vadd.f32 %v5962, %v6160
    %6162 = vmatmul.bf16.gmra.mxu0 %v5312
    %v6163 = vpop.f32.mrf.mxu0
    %v6164 = vadd.f32 %v5965, %v6163
    %v6165 = vpop.f32.mrf.mxu0
    %v6166 = vadd.f32 %v5967, %v6165
    %6167 = vmatmul.bf16.gmra.mxu0 %v5313
    %v6168 = vpop.f32.mrf.mxu0
    %v6169 = vadd.f32 %v5970, %v6168
    %v6170 = vpop.f32.mrf.mxu0
    %v6171 = vadd.f32 %v5972, %v6170
    %6172 = vmatmul.bf16.gmra.mxu0 %v5314
    %v6173 = vpop.f32.mrf.mxu0
    %v6174 = vadd.f32 %v5975, %v6173
    %v6175 = vpop.f32.mrf.mxu0
    %v6176 = vadd.f32 %v5977, %v6175
    %6177 = vmatmul.bf16.gmra.mxu0 %v5315
    %v6178 = vpop.f32.mrf.mxu0
    %v6179 = vadd.f32 %v5980, %v6178
    %v6180 = vpop.f32.mrf.mxu0
    %v6181 = vadd.f32 %v5982, %v6180
    %6182 = vmatmul.bf16.gmra.mxu0 %v5316
    %v6183 = vpop.f32.mrf.mxu0
    %v6184 = vadd.f32 %v5985, %v6183
    %v6185 = vpop.f32.mrf.mxu0
    %v6186 = vadd.f32 %v5987, %v6185
    %6187 = vmatmul.bf16.gmra.mxu0 %v5317
    %v6188 = vpop.f32.mrf.mxu0
    %v6189 = vadd.f32 %v5990, %v6188
    %v6190 = vpop.f32.mrf.mxu0
    %v6191 = vadd.f32 %v5992, %v6190
    %6192 = vmatmul.bf16.gmra.mxu0 %v5134
    %v6193 = vpop.f32.mrf.mxu0
    %v6194 = vadd.f32 %v5995, %v6193
    %v6195 = vpop.f32.mrf.mxu0
    %v6196 = vadd.f32 %v5997, %v6195
    %6197 = vmatmul.bf16.gmra.mxu0 %v5135
    %v6198 = vpop.f32.mrf.mxu0
    %v6199 = vadd.f32 %v6000, %v6198
    %v6200 = vpop.f32.mrf.mxu0
    %v6201 = vadd.f32 %v6002, %v6200
    %6202 = vmatmul.bf16.gmra.mxu0 %v5282
    %v6203 = vpop.f32.mrf.mxu0
    %v6204 = vadd.f32 %v6005, %v6203
    %v6205 = vpop.f32.mrf.mxu0
    %v6206 = vadd.f32 %v6007, %v6205
    %6207 = vmatmul.bf16.gmra.mxu0 %v5283
    %v6208 = vpop.f32.mrf.mxu0
    %v6209 = vadd.f32 %v6010, %v6208
    %v6210 = vpop.f32.mrf.mxu0
    %v6211 = vadd.f32 %v6012, %v6210
    %6212 = vdwg.mxu0
    %6213 = vmatpush.bf16.msra.mxu0 %v5583
    %6214 = vmatpush.bf16.msra.mxu0 %v5582
    %6215 = vmatpush.bf16.msra.mxu0 %v5581
    %6216 = vmatpush.bf16.msra.mxu0 %v5580
    %6217 = vmatpush.bf16.msra.mxu0 %v5579
    %6218 = vmatpush.bf16.msra.mxu0 %v5578
    %6219 = vmatpush.bf16.msra.mxu0 %v5577
    %6220 = vmatpush.bf16.msra.mxu0 %v5576
    %6221 = vmatmul.bf16.gmra.mxu0 %v5286
    %v6222 = vpop.f32.mrf.mxu0
    %v6223 = vadd.f32 %v6024, %v6222
    %v6224 = vpop.f32.mrf.mxu0
    %v6225 = vadd.f32 %v6026, %v6224
    %6226 = vmatmul.bf16.gmra.mxu0 %v5287
    %v6227 = vpop.f32.mrf.mxu0
    %v6228 = vadd.f32 %v6029, %v6227
    %v6229 = vpop.f32.mrf.mxu0
    %v6230 = vadd.f32 %v6031, %v6229
    %6231 = vmatmul.bf16.gmra.mxu0 %v5288
    %v6232 = vpop.f32.mrf.mxu0
    %v6233 = vadd.f32 %v6034, %v6232
    %v6234 = vpop.f32.mrf.mxu0
    %v6235 = vadd.f32 %v6036, %v6234
    %6236 = vmatmul.bf16.gmra.mxu0 %v5289
    %v6237 = vpop.f32.mrf.mxu0
    %v6238 = vadd.f32 %v6039, %v6237
    %v6239 = vpop.f32.mrf.mxu0
    %v6240 = vadd.f32 %v6041, %v6239
    %6241 = vmatmul.bf16.gmra.mxu0 %v5290
    %v6242 = vpop.f32.mrf.mxu0
    %v6243 = vadd.f32 %v6044, %v6242
    %v6244 = vpop.f32.mrf.mxu0
    %v6245 = vadd.f32 %v6046, %v6244
    %6246 = vmatmul.bf16.gmra.mxu0 %v5291
    %v6247 = vpop.f32.mrf.mxu0
    %v6248 = vadd.f32 %v6049, %v6247
    %v6249 = vpop.f32.mrf.mxu0
    %v6250 = vadd.f32 %v6051, %v6249
    %6251 = vmatmul.bf16.gmra.mxu0 %v5292
    %v6252 = vpop.f32.mrf.mxu0
    %v6253 = vadd.f32 %v6054, %v6252
    %v6254 = vpop.f32.mrf.mxu0
    %v6255 = vadd.f32 %v6056, %v6254
    %6256 = vmatmul.bf16.gmra.mxu0 %v5293
    %v6257 = vpop.f32.mrf.mxu0
    %v6258 = vadd.f32 %v6059, %v6257
    %v6259 = vpop.f32.mrf.mxu0
    %v6260 = vadd.f32 %v6061, %v6259
    %6261 = vmatmul.bf16.gmra.mxu0 %v5294
    %v6262 = vpop.f32.mrf.mxu0
    %v6263 = vadd.f32 %v6064, %v6262
    %v6264 = vpop.f32.mrf.mxu0
    %v6265 = vadd.f32 %v6066, %v6264
    %6266 = vmatmul.bf16.gmra.mxu0 %v5295
    %v6267 = vpop.f32.mrf.mxu0
    %v6268 = vadd.f32 %v6069, %v6267
    %v6269 = vpop.f32.mrf.mxu0
    %v6270 = vadd.f32 %v6071, %v6269
    %6271 = vmatmul.bf16.gmra.mxu0 %v5296
    %v6272 = vpop.f32.mrf.mxu0
    %v6273 = vadd.f32 %v6074, %v6272
    %v6274 = vpop.f32.mrf.mxu0
    %v6275 = vadd.f32 %v6076, %v6274
    %6276 = vmatmul.bf16.gmra.mxu0 %v5297
    %v6277 = vpop.f32.mrf.mxu0
    %v6278 = vadd.f32 %v6079, %v6277
    %v6279 = vpop.f32.mrf.mxu0
    %v6280 = vadd.f32 %v6081, %v6279
    %6281 = vmatmul.bf16.gmra.mxu0 %v5298
    %v6282 = vpop.f32.mrf.mxu0
    %v6283 = vadd.f32 %v6084, %v6282
    %v6284 = vpop.f32.mrf.mxu0
    %v6285 = vadd.f32 %v6086, %v6284
    %6286 = vmatmul.bf16.gmra.mxu0 %v5299
    %v6287 = vpop.f32.mrf.mxu0
    %v6288 = vadd.f32 %v6089, %v6287
    %v6289 = vpop.f32.mrf.mxu0
    %v6290 = vadd.f32 %v6091, %v6289
    %6291 = vmatmul.bf16.gmra.mxu0 %v5300
    %v6292 = vpop.f32.mrf.mxu0
    %v6293 = vadd.f32 %v6094, %v6292
    %v6294 = vpop.f32.mrf.mxu0
    %v6295 = vadd.f32 %v6096, %v6294
    %6296 = vmatmul.bf16.gmra.mxu0 %v5301
    %v6297 = vpop.f32.mrf.mxu0
    %v6298 = vadd.f32 %v6099, %v6297
    %v6299 = vpop.f32.mrf.mxu0
    %v6300 = vadd.f32 %v6101, %v6299
    %6301 = vmatmul.bf16.gmra.mxu0 %v5302
    %v6302 = vpop.f32.mrf.mxu0
    %v6303 = vadd.f32 %v6104, %v6302
    %v6304 = vpop.f32.mrf.mxu0
    %v6305 = vadd.f32 %v6106, %v6304
    %6306 = vmatmul.bf16.gmra.mxu0 %v5303
    %v6307 = vpop.f32.mrf.mxu0
    %v6308 = vadd.f32 %v6109, %v6307
    %v6309 = vpop.f32.mrf.mxu0
    %v6310 = vadd.f32 %v6111, %v6309
    %6311 = vmatmul.bf16.gmra.mxu0 %v5304
    %v6312 = vpop.f32.mrf.mxu0
    %v6313 = vadd.f32 %v6114, %v6312
    %v6314 = vpop.f32.mrf.mxu0
    %v6315 = vadd.f32 %v6116, %v6314
    %6316 = vmatmul.bf16.gmra.mxu0 %v5305
    %v6317 = vpop.f32.mrf.mxu0
    %v6318 = vadd.f32 %v6119, %v6317
    %v6319 = vpop.f32.mrf.mxu0
    %v6320 = vadd.f32 %v6121, %v6319
    %6321 = vmatmul.bf16.gmra.mxu0 %v5306
    %v6322 = vpop.f32.mrf.mxu0
    %v6323 = vadd.f32 %v6124, %v6322
    %v6324 = vpop.f32.mrf.mxu0
    %v6325 = vadd.f32 %v6126, %v6324
    %6326 = vmatmul.bf16.gmra.mxu0 %v5307
    %v6327 = vpop.f32.mrf.mxu0
    %v6328 = vadd.f32 %v6129, %v6327
    %v6329 = vpop.f32.mrf.mxu0
    %v6330 = vadd.f32 %v6131, %v6329
    %6331 = vmatmul.bf16.gmra.mxu0 %v5308
    %v6332 = vpop.f32.mrf.mxu0
    %v6333 = vadd.f32 %v6134, %v6332
    %v6334 = vpop.f32.mrf.mxu0
    %v6335 = vadd.f32 %v6136, %v6334
    %6336 = vmatmul.bf16.gmra.mxu0 %v5309
    %v6337 = vpop.f32.mrf.mxu0
    %v6338 = vadd.f32 %v6139, %v6337
    %v6339 = vpop.f32.mrf.mxu0
    %v6340 = vadd.f32 %v6141, %v6339
    %6341 = vmatmul.bf16.gmra.mxu0 %v5310
    %v6342 = vpop.f32.mrf.mxu0
    %v6343 = vadd.f32 %v6144, %v6342
    %v6344 = vpop.f32.mrf.mxu0
    %v6345 = vadd.f32 %v6146, %v6344
    %6346 = vmatmul.bf16.gmra.mxu0 %v5311
    %v6347 = vpop.f32.mrf.mxu0
    %v6348 = vadd.f32 %v6149, %v6347
    %v6349 = vpop.f32.mrf.mxu0
    %v6350 = vadd.f32 %v6151, %v6349
    %6351 = vmatmul.bf16.gmra.mxu0 %v5312
    %v6352 = vpop.f32.mrf.mxu0
    %v6353 = vadd.f32 %v6154, %v6352
    %v6354 = vpop.f32.mrf.mxu0
    %v6355 = vadd.f32 %v6156, %v6354
    %6356 = vmatmul.bf16.gmra.mxu0 %v5313
    %v6357 = vpop.f32.mrf.mxu0
    %v6358 = vadd.f32 %v6159, %v6357
    %v6359 = vpop.f32.mrf.mxu0
    %v6360 = vadd.f32 %v6161, %v6359
    %6361 = vmatmul.bf16.gmra.mxu0 %v5314
    %v6362 = vpop.f32.mrf.mxu0
    %v6363 = vadd.f32 %v6164, %v6362
    %v6364 = vpop.f32.mrf.mxu0
    %v6365 = vadd.f32 %v6166, %v6364
    %6366 = vmatmul.bf16.gmra.mxu0 %v5315
    %v6367 = vpop.f32.mrf.mxu0
    %v6368 = vadd.f32 %v6169, %v6367
    %v6369 = vpop.f32.mrf.mxu0
    %v6370 = vadd.f32 %v6171, %v6369
    %6371 = vmatmul.bf16.gmra.mxu0 %v5316
    %v6372 = vpop.f32.mrf.mxu0
    %v6373 = vadd.f32 %v6174, %v6372
    %v6374 = vpop.f32.mrf.mxu0
    %v6375 = vadd.f32 %v6176, %v6374
    %6376 = vmatmul.bf16.gmra.mxu0 %v5317
    %v6377 = vpop.f32.mrf.mxu0
    %v6378 = vadd.f32 %v6179, %v6377
    %v6379 = vpop.f32.mrf.mxu0
    %v6380 = vadd.f32 %v6181, %v6379
    %6381 = vmatmul.bf16.gmra.mxu0 %v5134
    %v6382 = vpop.f32.mrf.mxu0
    %v6383 = vadd.f32 %v6184, %v6382
    %v6384 = vpop.f32.mrf.mxu0
    %v6385 = vadd.f32 %v6186, %v6384
    %6386 = vmatmul.bf16.gmra.mxu0 %v5135
    %v6387 = vpop.f32.mrf.mxu0
    %v6388 = vadd.f32 %v6189, %v6387
    %v6389 = vpop.f32.mrf.mxu0
    %v6390 = vadd.f32 %v6191, %v6389
    %6391 = vmatmul.bf16.gmra.mxu0 %v5282
    %v6392 = vpop.f32.mrf.mxu0
    %v6393 = vadd.f32 %v6194, %v6392
    %v6394 = vpop.f32.mrf.mxu0
    %v6395 = vadd.f32 %v6196, %v6394
    %6396 = vmatmul.bf16.gmra.mxu0 %v5283
    %v6397 = vpop.f32.mrf.mxu0
    %v6398 = vadd.f32 %v6199, %v6397
    %v6399 = vpop.f32.mrf.mxu0
    %v6400 = vadd.f32 %v6201, %v6399
    %6401 = vmatmul.bf16.gmra.mxu0 %v5284
    %v6402 = vpop.f32.mrf.mxu0
    %v6403 = vadd.f32 %v6204, %v6402
    %v6404 = vpop.f32.mrf.mxu0
    %v6405 = vadd.f32 %v6206, %v6404
    %6406 = vmatmul.bf16.gmra.mxu0 %v5285
    %v6407 = vpop.f32.mrf.mxu0
    %v6408 = vadd.f32 %v6209, %v6407
    %v6409 = vpop.f32.mrf.mxu0
    %v6410 = vadd.f32 %v6211, %v6409
    %6411 = vdwg.mxu0
    %v6412 = vmax.f32 %v6223, 0.0
    %v6413 = vmax.f32 %v6225, 0.0
    %v6414 = vmax.f32 %v6228, 0.0
    %v6415 = vmax.f32 %v6230, 0.0
    %v6416 = vmax.f32 %v6233, 0.0
    %v6417 = vmax.f32 %v6235, 0.0
    %v6418 = vmax.f32 %v6238, 0.0
    %v6419 = vmax.f32 %v6240, 0.0
    %v6420 = vmax.f32 %v6243, 0.0
    %v6421 = vmax.f32 %v6245, 0.0
    %v6422 = vmax.f32 %v6248, 0.0
    %v6423 = vmax.f32 %v6250, 0.0
    %v6424 = vmax.f32 %v6253, 0.0
    %v6425 = vmax.f32 %v6255, 0.0
    %v6426 = vmax.f32 %v6258, 0.0
    %v6427 = vmax.f32 %v6260, 0.0
    %v6428 = vmax.f32 %v6263, 0.0
    %v6429 = vmax.f32 %v6265, 0.0
    %v6430 = vmax.f32 %v6268, 0.0
    %v6431 = vmax.f32 %v6270, 0.0
    %v6432 = vmax.f32 %v6273, 0.0
    %v6433 = vmax.f32 %v6275, 0.0
    %v6434 = vmax.f32 %v6278, 0.0
    %v6435 = vmax.f32 %v6280, 0.0
    %v6436 = vmax.f32 %v6283, 0.0
    %v6437 = vmax.f32 %v6285, 0.0
    %v6438 = vmax.f32 %v6288, 0.0
    %v6439 = vmax.f32 %v6290, 0.0
    %v6440 = vmax.f32 %v6293, 0.0
    %v6441 = vmax.f32 %v6295, 0.0
    %v6442 = vmax.f32 %v6298, 0.0
    %v6443 = vmax.f32 %v6300, 0.0
    %v6444 = vmax.f32 %v6303, 0.0
    %v6445 = vmax.f32 %v6305, 0.0
    %v6446 = vmax.f32 %v6308, 0.0
    %v6447 = vmax.f32 %v6310, 0.0
    %v6448 = vmax.f32 %v6313, 0.0
    %v6449 = vmax.f32 %v6315, 0.0
    %v6450 = vmax.f32 %v6318, 0.0
    %v6451 = vmax.f32 %v6320, 0.0
    %v6452 = vmax.f32 %v6323, 0.0
    %v6453 = vmax.f32 %v6325, 0.0
    %v6454 = vmax.f32 %v6328, 0.0
    %v6455 = vmax.f32 %v6330, 0.0
    %v6456 = vmax.f32 %v6333, 0.0
    %v6457 = vmax.f32 %v6335, 0.0
    %v6458 = vmax.f32 %v6338, 0.0
    %v6459 = vmax.f32 %v6340, 0.0
    %v6460 = vmax.f32 %v6343, 0.0
    %v6461 = vmax.f32 %v6345, 0.0
    %v6462 = vmax.f32 %v6348, 0.0
    %v6463 = vmax.f32 %v6350, 0.0
    %v6464 = vmax.f32 %v6353, 0.0
    %v6465 = vmax.f32 %v6355, 0.0
    %v6466 = vmax.f32 %v6358, 0.0
    %v6467 = vmax.f32 %v6360, 0.0
    %v6468 = vmax.f32 %v6363, 0.0
    %v6469 = vmax.f32 %v6365, 0.0
    %v6470 = vmax.f32 %v6368, 0.0
    %v6471 = vmax.f32 %v6370, 0.0
    %v6472 = vmax.f32 %v6373, 0.0
    %v6473 = vmax.f32 %v6375, 0.0
    %v6474 = vmax.f32 %v6378, 0.0
    %v6475 = vmax.f32 %v6380, 0.0
    %v6476 = vmax.f32 %v6383, 0.0
    %v6477 = vmax.f32 %v6385, 0.0
    %v6478 = vmax.f32 %v6388, 0.0
    %v6479 = vmax.f32 %v6390, 0.0
    %v6480 = vmax.f32 %v6393, 0.0
    %v6481 = vmax.f32 %v6395, 0.0
    %v6482 = vmax.f32 %v6398, 0.0
    %v6483 = vmax.f32 %v6400, 0.0
    %v6484 = vmax.f32 %v6403, 0.0
    %v6485 = vmax.f32 %v6405, 0.0
    %v6486 = vmax.f32 %v6408, 0.0
    %v6487 = vmax.f32 %v6410, 0.0
    %v6488 = vsel %vm1870, %v6412, 0.0
    %v6489 = vsel %vm1871, %v6413, 0.0
    %v6490 = vsel %vm1872, %v6414, 0.0
    %v6491 = vsel %vm1873, %v6415, 0.0
    %v6492 = vsel %vm1874, %v6416, 0.0
    %v6493 = vsel %vm1875, %v6417, 0.0
    %v6494 = vsel %vm1876, %v6418, 0.0
    %v6495 = vsel %vm1877, %v6419, 0.0
    %v6496 = vsel %vm1878, %v6420, 0.0
    %v6497 = vsel %vm1879, %v6421, 0.0
    %v6498 = vsel %vm1880, %v6422, 0.0
    %v6499 = vsel %vm1881, %v6423, 0.0
    %v6500 = vsel %vm1882, %v6424, 0.0
    %v6501 = vsel %vm1883, %v6425, 0.0
    %v6502 = vsel %vm1884, %v6426, 0.0
    %v6503 = vsel %vm1885, %v6427, 0.0
    %v6504 = vsel %vm1886, %v6428, 0.0
    %v6505 = vsel %vm1887, %v6429, 0.0
    %v6506 = vsel %vm1888, %v6430, 0.0
    %v6507 = vsel %vm1889, %v6431, 0.0
    %v6508 = vsel %vm1890, %v6432, 0.0
    %v6509 = vsel %vm1891, %v6433, 0.0
    %v6510 = vsel %vm1892, %v6434, 0.0
    %v6511 = vsel %vm1893, %v6435, 0.0
    %v6512 = vsel %vm1894, %v6436, 0.0
    %v6513 = vsel %vm1895, %v6437, 0.0
    %v6514 = vsel %vm1896, %v6438, 0.0
    %v6515 = vsel %vm1897, %v6439, 0.0
    %v6516 = vsel %vm1898, %v6440, 0.0
    %v6517 = vsel %vm1899, %v6441, 0.0
    %v6518 = vsel %vm1900, %v6442, 0.0
    %v6519 = vsel %vm1901, %v6443, 0.0
    %v6520 = vsel %vm1902, %v6444, 0.0
    %v6521 = vsel %vm1903, %v6445, 0.0
    %v6522 = vsel %vm1904, %v6446, 0.0
    %v6523 = vsel %vm1905, %v6447, 0.0
    %v6524 = vsel %vm1906, %v6448, 0.0
    %v6525 = vsel %vm1907, %v6449, 0.0
    %v6526 = vsel %vm1908, %v6450, 0.0
    %v6527 = vsel %vm1909, %v6451, 0.0
    %v6528 = vsel %vm1910, %v6452, 0.0
    %v6529 = vsel %vm1911, %v6453, 0.0
    %v6530 = vsel %vm1912, %v6454, 0.0
    %v6531 = vsel %vm1913, %v6455, 0.0
    %v6532 = vsel %vm1914, %v6456, 0.0
    %v6533 = vsel %vm1915, %v6457, 0.0
    %v6534 = vsel %vm1916, %v6458, 0.0
    %v6535 = vsel %vm1917, %v6459, 0.0
    %v6536 = vsel %vm1918, %v6460, 0.0
    %v6537 = vsel %vm1919, %v6461, 0.0
    %v6538 = vsel %vm1920, %v6462, 0.0
    %v6539 = vsel %vm1921, %v6463, 0.0
    %v6540 = vsel %vm1922, %v6464, 0.0
    %v6541 = vsel %vm1923, %v6465, 0.0
    %v6542 = vsel %vm1924, %v6466, 0.0
    %v6543 = vsel %vm1925, %v6467, 0.0
    %v6544 = vsel %vm1926, %v6468, 0.0
    %v6545 = vsel %vm1927, %v6469, 0.0
    %v6546 = vsel %vm1928, %v6470, 0.0
    %v6547 = vsel %vm1929, %v6471, 0.0
    %v6548 = vsel %vm1930, %v6472, 0.0
    %v6549 = vsel %vm1931, %v6473, 0.0
    %v6550 = vsel %vm1932, %v6474, 0.0
    %v6551 = vsel %vm1933, %v6475, 0.0
    %v6552 = vsel %vm1934, %v6476, 0.0
    %v6553 = vsel %vm1935, %v6477, 0.0
    %v6554 = vsel %vm1936, %v6478, 0.0
    %v6555 = vsel %vm1937, %v6479, 0.0
    %v6556 = vsel %vm1938, %v6480, 0.0
    %v6557 = vsel %vm1939, %v6481, 0.0
    %v6558 = vsel %vm1940, %v6482, 0.0
    %v6559 = vsel %vm1941, %v6483, 0.0
    %v6560 = vsel %vm1942, %v6484, 0.0
    %v6561 = vsel %vm1943, %v6485, 0.0
    %v6562 = vsel %vm1944, %v6486, 0.0
    %v6563 = vsel %vm1945, %v6487, 0.0
    %v6564 = vpack.c.bf16 %v6488, %v6488
    %v6565 = vpack.c.bf16 %v6489, %v6489
    %v6566 = vpack.c.bf16 %v6490, %v6490
    %v6567 = vpack.c.bf16 %v6491, %v6491
    %v6568 = vpack.c.bf16 %v6492, %v6492
    %v6569 = vpack.c.bf16 %v6493, %v6493
    %v6570 = vpack.c.bf16 %v6494, %v6494
    %v6571 = vpack.c.bf16 %v6495, %v6495
    %v6572 = vpack.c.bf16 %v6496, %v6496
    %v6573 = vpack.c.bf16 %v6497, %v6497
    %v6574 = vpack.c.bf16 %v6498, %v6498
    %v6575 = vpack.c.bf16 %v6499, %v6499
    %v6576 = vpack.c.bf16 %v6500, %v6500
    %v6577 = vpack.c.bf16 %v6501, %v6501
    %v6578 = vpack.c.bf16 %v6502, %v6502
    %v6579 = vpack.c.bf16 %v6503, %v6503
    %v6580 = vpack.c.bf16 %v6504, %v6504
    %v6581 = vpack.c.bf16 %v6505, %v6505
    %v6582 = vpack.c.bf16 %v6506, %v6506
    %v6583 = vpack.c.bf16 %v6507, %v6507
    %v6584 = vpack.c.bf16 %v6508, %v6508
    %v6585 = vpack.c.bf16 %v6509, %v6509
    %v6586 = vpack.c.bf16 %v6510, %v6510
    %v6587 = vpack.c.bf16 %v6511, %v6511
    %v6588 = vpack.c.bf16 %v6512, %v6512
    %v6589 = vpack.c.bf16 %v6513, %v6513
    %v6590 = vpack.c.bf16 %v6514, %v6514
    %v6591 = vpack.c.bf16 %v6515, %v6515
    %v6592 = vpack.c.bf16 %v6516, %v6516
    %v6593 = vpack.c.bf16 %v6517, %v6517
    %v6594 = vpack.c.bf16 %v6518, %v6518
    %v6595 = vpack.c.bf16 %v6519, %v6519
    %v6596 = vpack.c.bf16 %v6520, %v6520
    %v6597 = vpack.c.bf16 %v6521, %v6521
    %v6598 = vpack.c.bf16 %v6522, %v6522
    %v6599 = vpack.c.bf16 %v6523, %v6523
    %v6600 = vpack.c.bf16 %v6524, %v6524
    %v6601 = vpack.c.bf16 %v6525, %v6525
    %v6602 = vpack.c.bf16 %v6526, %v6526
    %v6603 = vpack.c.bf16 %v6527, %v6527
    %v6604 = vpack.c.bf16 %v6528, %v6528
    %v6605 = vpack.c.bf16 %v6529, %v6529
    %v6606 = vpack.c.bf16 %v6530, %v6530
    %v6607 = vpack.c.bf16 %v6531, %v6531
    %v6608 = vpack.c.bf16 %v6532, %v6532
    %v6609 = vpack.c.bf16 %v6533, %v6533
    %v6610 = vpack.c.bf16 %v6534, %v6534
    %v6611 = vpack.c.bf16 %v6535, %v6535
    %v6612 = vpack.c.bf16 %v6536, %v6536
    %v6613 = vpack.c.bf16 %v6537, %v6537
    %v6614 = vpack.c.bf16 %v6538, %v6538
    %v6615 = vpack.c.bf16 %v6539, %v6539
    %v6616 = vpack.c.bf16 %v6540, %v6540
    %v6617 = vpack.c.bf16 %v6541, %v6541
    %v6618 = vpack.c.bf16 %v6542, %v6542
    %v6619 = vpack.c.bf16 %v6543, %v6543
    %v6620 = vpack.c.bf16 %v6544, %v6544
    %v6621 = vpack.c.bf16 %v6545, %v6545
    %v6622 = vpack.c.bf16 %v6546, %v6546
    %v6623 = vpack.c.bf16 %v6547, %v6547
    %v6624 = vpack.c.bf16 %v6548, %v6548
    %v6625 = vpack.c.bf16 %v6549, %v6549
    %v6626 = vpack.c.bf16 %v6550, %v6550
    %v6627 = vpack.c.bf16 %v6551, %v6551
    %v6628 = vpack.c.bf16 %v6552, %v6552
    %v6629 = vpack.c.bf16 %v6553, %v6553
    %v6630 = vpack.c.bf16 %v6554, %v6554
    %v6631 = vpack.c.bf16 %v6555, %v6555
    %v6632 = vpack.c.bf16 %v6556, %v6556
    %v6633 = vpack.c.bf16 %v6557, %v6557
    %v6634 = vpack.c.bf16 %v6558, %v6558
    %v6635 = vpack.c.bf16 %v6559, %v6559
    %v6636 = vpack.c.bf16 %v6560, %v6560
    %v6637 = vpack.c.bf16 %v6561, %v6561
    %v6638 = vpack.c.bf16 %v6562, %v6562
    %v6639 = vpack.c.bf16 %v6563, %v6563
    %v6644 = vunpack.c.l.b16 %v6636
    %v6645 = vunpack.c.l.b16 %v6637
    %v6646 = vunpack.c.l.b16 %v6638
    %v6647 = vunpack.c.l.b16 %v6639
    %v6648 = vpack.c.b16 %v6645, %v6644
    %v6649 = vpack.c.b16 %v6647, %v6646
    %v6724 = vunpack.c.l.b16 %v6564
    %v6725 = vunpack.c.l.b16 %v6565
    %v6726 = vunpack.c.l.b16 %v6566
    %v6727 = vunpack.c.l.b16 %v6567
    %v6728 = vunpack.c.l.b16 %v6568
    %v6729 = vunpack.c.l.b16 %v6569
    %v6730 = vunpack.c.l.b16 %v6570
    %v6731 = vunpack.c.l.b16 %v6571
    %v6732 = vunpack.c.l.b16 %v6572
    %v6733 = vunpack.c.l.b16 %v6573
    %v6734 = vunpack.c.l.b16 %v6574
    %v6735 = vunpack.c.l.b16 %v6575
    %v6736 = vunpack.c.l.b16 %v6576
    %v6737 = vunpack.c.l.b16 %v6577
    %v6738 = vunpack.c.l.b16 %v6578
    %v6739 = vunpack.c.l.b16 %v6579
    %v6740 = vunpack.c.l.b16 %v6580
    %v6741 = vunpack.c.l.b16 %v6581
    %v6742 = vunpack.c.l.b16 %v6582
    %v6743 = vunpack.c.l.b16 %v6583
    %v6744 = vunpack.c.l.b16 %v6584
    %v6745 = vunpack.c.l.b16 %v6585
    %v6746 = vunpack.c.l.b16 %v6586
    %v6747 = vunpack.c.l.b16 %v6587
    %v6748 = vunpack.c.l.b16 %v6588
    %v6749 = vunpack.c.l.b16 %v6589
    %v6750 = vunpack.c.l.b16 %v6590
    %v6751 = vunpack.c.l.b16 %v6591
    %v6752 = vunpack.c.l.b16 %v6592
    %v6753 = vunpack.c.l.b16 %v6593
    %v6754 = vunpack.c.l.b16 %v6594
    %v6755 = vunpack.c.l.b16 %v6595
    %v6756 = vunpack.c.l.b16 %v6596
    %v6757 = vunpack.c.l.b16 %v6597
    %v6758 = vunpack.c.l.b16 %v6598
    %v6759 = vunpack.c.l.b16 %v6599
    %v6760 = vunpack.c.l.b16 %v6600
    %v6761 = vunpack.c.l.b16 %v6601
    %v6762 = vunpack.c.l.b16 %v6602
    %v6763 = vunpack.c.l.b16 %v6603
    %v6764 = vunpack.c.l.b16 %v6604
    %v6765 = vunpack.c.l.b16 %v6605
    %v6766 = vunpack.c.l.b16 %v6606
    %v6767 = vunpack.c.l.b16 %v6607
    %v6768 = vunpack.c.l.b16 %v6608
    %v6769 = vunpack.c.l.b16 %v6609
    %v6770 = vunpack.c.l.b16 %v6610
    %v6771 = vunpack.c.l.b16 %v6611
    %v6772 = vunpack.c.l.b16 %v6612
    %v6773 = vunpack.c.l.b16 %v6613
    %v6774 = vunpack.c.l.b16 %v6614
    %v6775 = vunpack.c.l.b16 %v6615
    %v6776 = vunpack.c.l.b16 %v6616
    %v6777 = vunpack.c.l.b16 %v6617
    %v6778 = vunpack.c.l.b16 %v6618
    %v6779 = vunpack.c.l.b16 %v6619
    %v6780 = vunpack.c.l.b16 %v6620
    %v6781 = vunpack.c.l.b16 %v6621
    %v6782 = vunpack.c.l.b16 %v6622
    %v6783 = vunpack.c.l.b16 %v6623
    %v6784 = vunpack.c.l.b16 %v6624
    %v6785 = vunpack.c.l.b16 %v6625
    %v6786 = vunpack.c.l.b16 %v6626
    %v6787 = vunpack.c.l.b16 %v6627
    %v6788 = vunpack.c.l.b16 %v6628
    %v6789 = vunpack.c.l.b16 %v6629
    %v6790 = vunpack.c.l.b16 %v6630
    %v6791 = vunpack.c.l.b16 %v6631
    %v6792 = vunpack.c.l.b16 %v6632
    %v6793 = vunpack.c.l.b16 %v6633
    %v6794 = vunpack.c.l.b16 %v6634
    %v6795 = vunpack.c.l.b16 %v6635
    %v6796 = vpack.c.b16 %v6725, %v6724
    %v6797 = vpack.c.b16 %v6727, %v6726
    %v6798 = vpack.c.b16 %v6729, %v6728
    %v6799 = vpack.c.b16 %v6731, %v6730
    %v6800 = vpack.c.b16 %v6733, %v6732
    %v6801 = vpack.c.b16 %v6735, %v6734
    %v6802 = vpack.c.b16 %v6737, %v6736
    %v6803 = vpack.c.b16 %v6739, %v6738
    %v6804 = vpack.c.b16 %v6741, %v6740
    %v6805 = vpack.c.b16 %v6743, %v6742
    %v6806 = vpack.c.b16 %v6745, %v6744
    %v6807 = vpack.c.b16 %v6747, %v6746
    %v6808 = vpack.c.b16 %v6749, %v6748
    %v6809 = vpack.c.b16 %v6751, %v6750
    %v6810 = vpack.c.b16 %v6753, %v6752
    %v6811 = vpack.c.b16 %v6755, %v6754
    %v6812 = vpack.c.b16 %v6757, %v6756
    %v6813 = vpack.c.b16 %v6759, %v6758
    %v6814 = vpack.c.b16 %v6761, %v6760
    %v6815 = vpack.c.b16 %v6763, %v6762
    %v6816 = vpack.c.b16 %v6765, %v6764
    %v6817 = vpack.c.b16 %v6767, %v6766
    %v6818 = vpack.c.b16 %v6769, %v6768
    %v6819 = vpack.c.b16 %v6771, %v6770
    %v6820 = vpack.c.b16 %v6773, %v6772
    %v6821 = vpack.c.b16 %v6775, %v6774
    %v6822 = vpack.c.b16 %v6777, %v6776
    %v6823 = vpack.c.b16 %v6779, %v6778
    %v6824 = vpack.c.b16 %v6781, %v6780
    %v6825 = vpack.c.b16 %v6783, %v6782
    %v6826 = vpack.c.b16 %v6785, %v6784
    %v6827 = vpack.c.b16 %v6787, %v6786
    %v6828 = vpack.c.b16 %v6789, %v6788
    %v6829 = vpack.c.b16 %v6791, %v6790
    %v6830 = vpack.c.b16 %v6793, %v6792
    %v6831 = vpack.c.b16 %v6795, %v6794
    %s6868 = scalar_lea.vmem [#allocation2], 1024
    %v6869 = vld [vmem:[%s6868] sm:$0xf]
    %v6870 = vld [vmem:[%s6868 + $0x4] sm:$0xf]
    %v6871 = vld [vmem:[%s6868 + $0x8] sm:$0xf]
    %v6872 = vld [vmem:[%s6868 + $0xc] sm:$0xf]
    %v6873 = vld [vmem:[%s6868 + $0x10] sm:$0xf]
    %v6874 = vld [vmem:[%s6868 + $0x14] sm:$0xf]
    %v6875 = vld [vmem:[%s6868 + $0x18] sm:$0xf]
    %v6876 = vld [vmem:[%s6868 + $0x1c] sm:$0xf]
    %v6877 = vld [vmem:[%s6868 + $0x20] sm:$0xf]
    %v6878 = vld [vmem:[%s6868 + $0x24] sm:$0xf]
    %v6879 = vld [vmem:[%s6868 + $0x28] sm:$0xf]
    %v6880 = vld [vmem:[%s6868 + $0x2c] sm:$0xf]
    %v6881 = vld [vmem:[%s6868 + $0x30] sm:$0xf]
    %v6882 = vld [vmem:[%s6868 + $0x34] sm:$0xf]
    %v6883 = vld [vmem:[%s6868 + $0x38] sm:$0xf]
    %v6884 = vld [vmem:[%s6868 + $0x3c] sm:$0xf]
    %v6885 = vld [vmem:[%s6868 + $0x40] sm:$0xf]
    %v6886 = vld [vmem:[%s6868 + $0x44] sm:$0xf]
    %v6887 = vld [vmem:[%s6868 + $0x48] sm:$0xf]
    %v6888 = vld [vmem:[%s6868 + $0x4c] sm:$0xf]
    %v6889 = vld [vmem:[%s6868 + $0x50] sm:$0xf]
    %v6890 = vld [vmem:[%s6868 + $0x54] sm:$0xf]
    %v6891 = vld [vmem:[%s6868 + $0x58] sm:$0xf]
    %v6892 = vld [vmem:[%s6868 + $0x5c] sm:$0xf]
    %v6893 = vld [vmem:[%s6868 + $0x60] sm:$0xf]
    %v6894 = vld [vmem:[%s6868 + $0x64] sm:$0xf]
    %v6895 = vld [vmem:[%s6868 + $0x68] sm:$0xf]
    %v6896 = vld [vmem:[%s6868 + $0x6c] sm:$0xf]
    %v6897 = vld [vmem:[%s6868 + $0x70] sm:$0xf]
    %v6898 = vld [vmem:[%s6868 + $0x74] sm:$0xf]
    %v6899 = vld [vmem:[%s6868 + $0x78] sm:$0xf]
    %v6900 = vld [vmem:[%s6868 + $0x7c] sm:$0xf]
    %v6901 = vld [vmem:[%s6868 + $0x80] sm:$0xf]
    %v6902 = vld [vmem:[%s6868 + $0x84] sm:$0xf]
    %v6903 = vld [vmem:[%s6868 + $0x88] sm:$0xf]
    %v6904 = vld [vmem:[%s6868 + $0x8c] sm:$0xf]
    %v6905 = vld [vmem:[%s6868 + $0x90] sm:$0xf]
    %v6906 = vld [vmem:[%s6868 + $0x94] sm:$0xf]
    %v6907 = vld [vmem:[%s6868 + $0x98] sm:$0xf]
    %v6908 = vld [vmem:[%s6868 + $0x9c] sm:$0xf]
    %v6909 = vld [vmem:[%s6868 + $0xa0] sm:$0xf]
    %v6910 = vld [vmem:[%s6868 + $0xa4] sm:$0xf]
    %v6911 = vld [vmem:[%s6868 + $0xa8] sm:$0xf]
    %v6912 = vld [vmem:[%s6868 + $0xac] sm:$0xf]
    %v6913 = vld [vmem:[%s6868 + $0xb0] sm:$0xf]
    %v6914 = vld [vmem:[%s6868 + $0xb4] sm:$0xf]
    %v6915 = vld [vmem:[%s6868 + $0xb8] sm:$0xf]
    %v6916 = vld [vmem:[%s6868 + $0xbc] sm:$0xf]
    %v6917 = vld [vmem:[%s6868 + $0xc0] sm:$0xf]
    %v6918 = vld [vmem:[%s6868 + $0xc4] sm:$0xf]
    %v6919 = vld [vmem:[%s6868 + $0xc8] sm:$0xf]
    %v6920 = vld [vmem:[%s6868 + $0xcc] sm:$0xf]
    %v6921 = vld [vmem:[%s6868 + $0xd0] sm:$0xf]
    %v6922 = vld [vmem:[%s6868 + $0xd4] sm:$0xf]
    %v6923 = vld [vmem:[%s6868 + $0xd8] sm:$0xf]
    %v6924 = vld [vmem:[%s6868 + $0xdc] sm:$0xf]
    %v6925 = vld [vmem:[%s6868 + $0xe0] sm:$0xf]
    %v6926 = vld [vmem:[%s6868 + $0xe4] sm:$0xf]
    %v6927 = vld [vmem:[%s6868 + $0xe8] sm:$0xf]
    %v6928 = vld [vmem:[%s6868 + $0xec] sm:$0xf]
    %v6929 = vld [vmem:[%s6868 + $0xf0] sm:$0xf]
    %v6930 = vld [vmem:[%s6868 + $0xf4] sm:$0xf]
    %v6931 = vld [vmem:[%s6868 + $0xf8] sm:$0xf]
    %v6932 = vld [vmem:[%s6868 + $0xfc] sm:$0xf]
    %s6933 = scalar_lea.vmem %s2, 4
    %v6934 = vld [vmem:[%s6933] sm:$0x1]
    %v6936 = vperm.slane %v6934, 0
    %v7002 = vunpack.c.l.b16 %v6869
    %v7003 = vunpack.c.l.b16 %v6870
    %v7004 = vunpack.c.l.b16 %v6871
    %v7005 = vunpack.c.l.b16 %v6872
    %v7006 = vunpack.c.l.b16 %v6873
    %v7007 = vunpack.c.l.b16 %v6874
    %v7008 = vunpack.c.l.b16 %v6875
    %v7009 = vunpack.c.l.b16 %v6876
    %v7010 = vunpack.c.l.b16 %v6877
    %v7011 = vunpack.c.l.b16 %v6878
    %v7012 = vunpack.c.l.b16 %v6879
    %v7013 = vunpack.c.l.b16 %v6880
    %v7014 = vunpack.c.l.b16 %v6881
    %v7015 = vunpack.c.l.b16 %v6882
    %v7016 = vunpack.c.l.b16 %v6883
    %v7017 = vunpack.c.l.b16 %v6884
    %v7018 = vunpack.c.l.b16 %v6885
    %v7019 = vunpack.c.l.b16 %v6886
    %v7020 = vunpack.c.l.b16 %v6887
    %v7021 = vunpack.c.l.b16 %v6888
    %v7022 = vunpack.c.l.b16 %v6889
    %v7023 = vunpack.c.l.b16 %v6890
    %v7024 = vunpack.c.l.b16 %v6891
    %v7025 = vunpack.c.l.b16 %v6892
    %v7026 = vunpack.c.l.b16 %v6893
    %v7027 = vunpack.c.l.b16 %v6894
    %v7028 = vunpack.c.l.b16 %v6895
    %v7029 = vunpack.c.l.b16 %v6896
    %v7030 = vunpack.c.l.b16 %v6897
    %v7031 = vunpack.c.l.b16 %v6898
    %v7032 = vunpack.c.l.b16 %v6899
    %v7033 = vunpack.c.l.b16 %v6900
    %v7034 = vunpack.c.l.b16 %v6901
    %v7035 = vunpack.c.l.b16 %v6902
    %v7036 = vunpack.c.l.b16 %v6903
    %v7037 = vunpack.c.l.b16 %v6904
    %v7038 = vunpack.c.l.b16 %v6905
    %v7039 = vunpack.c.l.b16 %v6906
    %v7040 = vunpack.c.l.b16 %v6907
    %v7041 = vunpack.c.l.b16 %v6908
    %v7042 = vunpack.c.l.b16 %v6909
    %v7043 = vunpack.c.l.b16 %v6910
    %v7044 = vunpack.c.l.b16 %v6911
    %v7045 = vunpack.c.l.b16 %v6912
    %v7046 = vunpack.c.l.b16 %v6913
    %v7047 = vunpack.c.l.b16 %v6914
    %v7048 = vunpack.c.l.b16 %v6915
    %v7049 = vunpack.c.l.b16 %v6916
    %v7050 = vunpack.c.l.b16 %v6917
    %v7051 = vunpack.c.l.b16 %v6918
    %v7052 = vunpack.c.l.b16 %v6919
    %v7053 = vunpack.c.l.b16 %v6920
    %v7054 = vunpack.c.l.b16 %v6921
    %v7055 = vunpack.c.l.b16 %v6922
    %v7056 = vunpack.c.l.b16 %v6923
    %v7057 = vunpack.c.l.b16 %v6924
    %v7058 = vunpack.c.l.b16 %v6925
    %v7059 = vunpack.c.l.b16 %v6926
    %v7060 = vunpack.c.l.b16 %v6927
    %v7061 = vunpack.c.l.b16 %v6928
    %v7062 = vunpack.c.l.b16 %v6929
    %v7063 = vunpack.c.l.b16 %v6930
    %v7064 = vunpack.c.l.b16 %v6931
    %v7065 = vunpack.c.l.b16 %v6932
    %v7066 = vpack.c.b16 %v7003, %v7002
    %v7067 = vpack.c.b16 %v7005, %v7004
    %v7068 = vpack.c.b16 %v7007, %v7006
    %v7069 = vpack.c.b16 %v7009, %v7008
    %v7070 = vpack.c.b16 %v7011, %v7010
    %v7071 = vpack.c.b16 %v7013, %v7012
    %v7072 = vpack.c.b16 %v7015, %v7014
    %v7073 = vpack.c.b16 %v7017, %v7016
    %v7074 = vpack.c.b16 %v7019, %v7018
    %v7075 = vpack.c.b16 %v7021, %v7020
    %v7076 = vpack.c.b16 %v7023, %v7022
    %v7077 = vpack.c.b16 %v7025, %v7024
    %v7078 = vpack.c.b16 %v7027, %v7026
    %v7079 = vpack.c.b16 %v7029, %v7028
    %v7080 = vpack.c.b16 %v7031, %v7030
    %v7081 = vpack.c.b16 %v7033, %v7032
    %v7082 = vpack.c.b16 %v7035, %v7034
    %v7083 = vpack.c.b16 %v7037, %v7036
    %v7084 = vpack.c.b16 %v7039, %v7038
    %v7085 = vpack.c.b16 %v7041, %v7040
    %v7086 = vpack.c.b16 %v7043, %v7042
    %v7087 = vpack.c.b16 %v7045, %v7044
    %v7088 = vpack.c.b16 %v7047, %v7046
    %v7089 = vpack.c.b16 %v7049, %v7048
    %v7090 = vpack.c.b16 %v7051, %v7050
    %v7091 = vpack.c.b16 %v7053, %v7052
    %v7092 = vpack.c.b16 %v7055, %v7054
    %v7093 = vpack.c.b16 %v7057, %v7056
    %v7094 = vpack.c.b16 %v7059, %v7058
    %v7095 = vpack.c.b16 %v7061, %v7060
    %v7096 = vpack.c.b16 %v7063, %v7062
    %v7097 = vpack.c.b16 %v7065, %v7064
    %7130 = vmatpush.bf16.msra.mxu0 %v7073
    %7131 = vmatpush.bf16.msra.mxu0 %v7072
    %7132 = vmatpush.bf16.msra.mxu0 %v7071
    %7133 = vmatpush.bf16.msra.mxu0 %v7070
    %7134 = vmatpush.bf16.msra.mxu0 %v7069
    %7135 = vmatpush.bf16.msra.mxu0 %v7068
    %7136 = vmatpush.bf16.msra.mxu0 %v7067
    %7137 = vmatpush.bf16.msra.mxu0 %v7066
    %7138 = vmatmul.bf16.gmra.mxu0 %v6648
    %v7139 = vpop.f32.mrf.mxu0
    %v7140 = vadd.f32 %v6936, %v7139
    %v7141 = vpop.f32.mrf.mxu0
    %v7142 = vadd.f32 %v6936, %v7141
    %7143 = vmatmul.bf16.gmra.mxu0 %v6649
    %v7144 = vpop.f32.mrf.mxu0
    %v7145 = vadd.f32 %v6936, %v7144
    %v7146 = vpop.f32.mrf.mxu0
    %v7147 = vadd.f32 %v6936, %v7146
    %7148 = vmatmul.bf16.gmra.mxu0 %v6796
    %v7149 = vpop.f32.mrf.mxu0
    %v7150 = vadd.f32 %v6936, %v7149
    %v7151 = vpop.f32.mrf.mxu0
    %v7152 = vadd.f32 %v6936, %v7151
    %7153 = vmatmul.bf16.gmra.mxu0 %v6797
    %v7154 = vpop.f32.mrf.mxu0
    %v7155 = vadd.f32 %v6936, %v7154
    %v7156 = vpop.f32.mrf.mxu0
    %v7157 = vadd.f32 %v6936, %v7156
    %7158 = vmatmul.bf16.gmra.mxu0 %v6798
    %v7159 = vpop.f32.mrf.mxu0
    %v7160 = vadd.f32 %v6936, %v7159
    %v7161 = vpop.f32.mrf.mxu0
    %v7162 = vadd.f32 %v6936, %v7161
    %7163 = vmatmul.bf16.gmra.mxu0 %v6799
    %v7164 = vpop.f32.mrf.mxu0
    %v7165 = vadd.f32 %v6936, %v7164
    %v7166 = vpop.f32.mrf.mxu0
    %v7167 = vadd.f32 %v6936, %v7166
    %7168 = vmatmul.bf16.gmra.mxu0 %v6800
    %v7169 = vpop.f32.mrf.mxu0
    %v7170 = vadd.f32 %v6936, %v7169
    %v7171 = vpop.f32.mrf.mxu0
    %v7172 = vadd.f32 %v6936, %v7171
    %7173 = vmatmul.bf16.gmra.mxu0 %v6801
    %v7174 = vpop.f32.mrf.mxu0
    %v7175 = vadd.f32 %v6936, %v7174
    %v7176 = vpop.f32.mrf.mxu0
    %v7177 = vadd.f32 %v6936, %v7176
    %7178 = vmatmul.bf16.gmra.mxu0 %v6802
    %v7179 = vpop.f32.mrf.mxu0
    %v7180 = vadd.f32 %v6936, %v7179
    %v7181 = vpop.f32.mrf.mxu0
    %v7182 = vadd.f32 %v6936, %v7181
    %7183 = vmatmul.bf16.gmra.mxu0 %v6803
    %v7184 = vpop.f32.mrf.mxu0
    %v7185 = vadd.f32 %v6936, %v7184
    %v7186 = vpop.f32.mrf.mxu0
    %v7187 = vadd.f32 %v6936, %v7186
    %7188 = vmatmul.bf16.gmra.mxu0 %v6804
    %v7189 = vpop.f32.mrf.mxu0
    %v7190 = vadd.f32 %v6936, %v7189
    %v7191 = vpop.f32.mrf.mxu0
    %v7192 = vadd.f32 %v6936, %v7191
    %7193 = vmatmul.bf16.gmra.mxu0 %v6805
    %v7194 = vpop.f32.mrf.mxu0
    %v7195 = vadd.f32 %v6936, %v7194
    %v7196 = vpop.f32.mrf.mxu0
    %v7197 = vadd.f32 %v6936, %v7196
    %7198 = vmatmul.bf16.gmra.mxu0 %v6806
    %v7199 = vpop.f32.mrf.mxu0
    %v7200 = vadd.f32 %v6936, %v7199
    %v7201 = vpop.f32.mrf.mxu0
    %v7202 = vadd.f32 %v6936, %v7201
    %7203 = vmatmul.bf16.gmra.mxu0 %v6807
    %v7204 = vpop.f32.mrf.mxu0
    %v7205 = vadd.f32 %v6936, %v7204
    %v7206 = vpop.f32.mrf.mxu0
    %v7207 = vadd.f32 %v6936, %v7206
    %7208 = vmatmul.bf16.gmra.mxu0 %v6808
    %v7209 = vpop.f32.mrf.mxu0
    %v7210 = vadd.f32 %v6936, %v7209
    %v7211 = vpop.f32.mrf.mxu0
    %v7212 = vadd.f32 %v6936, %v7211
    %7213 = vmatmul.bf16.gmra.mxu0 %v6809
    %v7214 = vpop.f32.mrf.mxu0
    %v7215 = vadd.f32 %v6936, %v7214
    %v7216 = vpop.f32.mrf.mxu0
    %v7217 = vadd.f32 %v6936, %v7216
    %7218 = vmatmul.bf16.gmra.mxu0 %v6810
    %v7219 = vpop.f32.mrf.mxu0
    %v7220 = vadd.f32 %v6936, %v7219
    %v7221 = vpop.f32.mrf.mxu0
    %v7222 = vadd.f32 %v6936, %v7221
    %7223 = vmatmul.bf16.gmra.mxu0 %v6811
    %v7224 = vpop.f32.mrf.mxu0
    %v7225 = vadd.f32 %v6936, %v7224
    %v7226 = vpop.f32.mrf.mxu0
    %v7227 = vadd.f32 %v6936, %v7226
    %7228 = vmatmul.bf16.gmra.mxu0 %v6812
    %v7229 = vpop.f32.mrf.mxu0
    %v7230 = vadd.f32 %v6936, %v7229
    %v7231 = vpop.f32.mrf.mxu0
    %v7232 = vadd.f32 %v6936, %v7231
    %7233 = vmatmul.bf16.gmra.mxu0 %v6813
    %v7234 = vpop.f32.mrf.mxu0
    %v7235 = vadd.f32 %v6936, %v7234
    %v7236 = vpop.f32.mrf.mxu0
    %v7237 = vadd.f32 %v6936, %v7236
    %7238 = vmatmul.bf16.gmra.mxu0 %v6814
    %v7239 = vpop.f32.mrf.mxu0
    %v7240 = vadd.f32 %v6936, %v7239
    %v7241 = vpop.f32.mrf.mxu0
    %v7242 = vadd.f32 %v6936, %v7241
    %7243 = vmatmul.bf16.gmra.mxu0 %v6815
    %v7244 = vpop.f32.mrf.mxu0
    %v7245 = vadd.f32 %v6936, %v7244
    %v7246 = vpop.f32.mrf.mxu0
    %v7247 = vadd.f32 %v6936, %v7246
    %7248 = vmatmul.bf16.gmra.mxu0 %v6816
    %v7249 = vpop.f32.mrf.mxu0
    %v7250 = vadd.f32 %v6936, %v7249
    %v7251 = vpop.f32.mrf.mxu0
    %v7252 = vadd.f32 %v6936, %v7251
    %7253 = vmatmul.bf16.gmra.mxu0 %v6817
    %v7254 = vpop.f32.mrf.mxu0
    %v7255 = vadd.f32 %v6936, %v7254
    %v7256 = vpop.f32.mrf.mxu0
    %v7257 = vadd.f32 %v6936, %v7256
    %7258 = vmatmul.bf16.gmra.mxu0 %v6818
    %v7259 = vpop.f32.mrf.mxu0
    %v7260 = vadd.f32 %v6936, %v7259
    %v7261 = vpop.f32.mrf.mxu0
    %v7262 = vadd.f32 %v6936, %v7261
    %7263 = vmatmul.bf16.gmra.mxu0 %v6819
    %v7264 = vpop.f32.mrf.mxu0
    %v7265 = vadd.f32 %v6936, %v7264
    %v7266 = vpop.f32.mrf.mxu0
    %v7267 = vadd.f32 %v6936, %v7266
    %7268 = vmatmul.bf16.gmra.mxu0 %v6820
    %v7269 = vpop.f32.mrf.mxu0
    %v7270 = vadd.f32 %v6936, %v7269
    %v7271 = vpop.f32.mrf.mxu0
    %v7272 = vadd.f32 %v6936, %v7271
    %7273 = vmatmul.bf16.gmra.mxu0 %v6821
    %v7274 = vpop.f32.mrf.mxu0
    %v7275 = vadd.f32 %v6936, %v7274
    %v7276 = vpop.f32.mrf.mxu0
    %v7277 = vadd.f32 %v6936, %v7276
    %7278 = vmatmul.bf16.gmra.mxu0 %v6822
    %v7279 = vpop.f32.mrf.mxu0
    %v7280 = vadd.f32 %v6936, %v7279
    %v7281 = vpop.f32.mrf.mxu0
    %v7282 = vadd.f32 %v6936, %v7281
    %7283 = vmatmul.bf16.gmra.mxu0 %v6823
    %v7284 = vpop.f32.mrf.mxu0
    %v7285 = vadd.f32 %v6936, %v7284
    %v7286 = vpop.f32.mrf.mxu0
    %v7287 = vadd.f32 %v6936, %v7286
    %7288 = vmatmul.bf16.gmra.mxu0 %v6824
    %v7289 = vpop.f32.mrf.mxu0
    %v7290 = vadd.f32 %v6936, %v7289
    %v7291 = vpop.f32.mrf.mxu0
    %v7292 = vadd.f32 %v6936, %v7291
    %7293 = vmatmul.bf16.gmra.mxu0 %v6825
    %v7294 = vpop.f32.mrf.mxu0
    %v7295 = vadd.f32 %v6936, %v7294
    %v7296 = vpop.f32.mrf.mxu0
    %v7297 = vadd.f32 %v6936, %v7296
    %7298 = vmatmul.bf16.gmra.mxu0 %v6826
    %v7299 = vpop.f32.mrf.mxu0
    %v7300 = vadd.f32 %v6936, %v7299
    %v7301 = vpop.f32.mrf.mxu0
    %v7302 = vadd.f32 %v6936, %v7301
    %7303 = vmatmul.bf16.gmra.mxu0 %v6827
    %v7304 = vpop.f32.mrf.mxu0
    %v7305 = vadd.f32 %v6936, %v7304
    %v7306 = vpop.f32.mrf.mxu0
    %v7307 = vadd.f32 %v6936, %v7306
    %7308 = vmatmul.bf16.gmra.mxu0 %v6828
    %v7309 = vpop.f32.mrf.mxu0
    %v7310 = vadd.f32 %v6936, %v7309
    %v7311 = vpop.f32.mrf.mxu0
    %v7312 = vadd.f32 %v6936, %v7311
    %7313 = vmatmul.bf16.gmra.mxu0 %v6829
    %v7314 = vpop.f32.mrf.mxu0
    %v7315 = vadd.f32 %v6936, %v7314
    %v7316 = vpop.f32.mrf.mxu0
    %v7317 = vadd.f32 %v6936, %v7316
    %7318 = vmatmul.bf16.gmra.mxu0 %v6830
    %v7319 = vpop.f32.mrf.mxu0
    %v7320 = vadd.f32 %v6936, %v7319
    %v7321 = vpop.f32.mrf.mxu0
    %v7322 = vadd.f32 %v6936, %v7321
    %7323 = vmatmul.bf16.gmra.mxu0 %v6831
    %v7324 = vpop.f32.mrf.mxu0
    %v7325 = vadd.f32 %v6936, %v7324
    %v7326 = vpop.f32.mrf.mxu0
    %v7327 = vadd.f32 %v6936, %v7326
    %7328 = vdwg.mxu0
    %7329 = vmatpush.bf16.msra.mxu0 %v7081
    %7330 = vmatpush.bf16.msra.mxu0 %v7080
    %7331 = vmatpush.bf16.msra.mxu0 %v7079
    %7332 = vmatpush.bf16.msra.mxu0 %v7078
    %7333 = vmatpush.bf16.msra.mxu0 %v7077
    %7334 = vmatpush.bf16.msra.mxu0 %v7076
    %7335 = vmatpush.bf16.msra.mxu0 %v7075
    %7336 = vmatpush.bf16.msra.mxu0 %v7074
    %7337 = vmatmul.bf16.gmra.mxu0 %v6796
    %v7338 = vpop.f32.mrf.mxu0
    %v7339 = vadd.f32 %v7140, %v7338
    %v7340 = vpop.f32.mrf.mxu0
    %v7341 = vadd.f32 %v7142, %v7340
    %7342 = vmatmul.bf16.gmra.mxu0 %v6797
    %v7343 = vpop.f32.mrf.mxu0
    %v7344 = vadd.f32 %v7145, %v7343
    %v7345 = vpop.f32.mrf.mxu0
    %v7346 = vadd.f32 %v7147, %v7345
    %7347 = vmatmul.bf16.gmra.mxu0 %v6798
    %v7348 = vpop.f32.mrf.mxu0
    %v7349 = vadd.f32 %v7150, %v7348
    %v7350 = vpop.f32.mrf.mxu0
    %v7351 = vadd.f32 %v7152, %v7350
    %7352 = vmatmul.bf16.gmra.mxu0 %v6799
    %v7353 = vpop.f32.mrf.mxu0
    %v7354 = vadd.f32 %v7155, %v7353
    %v7355 = vpop.f32.mrf.mxu0
    %v7356 = vadd.f32 %v7157, %v7355
    %7357 = vmatmul.bf16.gmra.mxu0 %v6800
    %v7358 = vpop.f32.mrf.mxu0
    %v7359 = vadd.f32 %v7160, %v7358
    %v7360 = vpop.f32.mrf.mxu0
    %v7361 = vadd.f32 %v7162, %v7360
    %7362 = vmatmul.bf16.gmra.mxu0 %v6801
    %v7363 = vpop.f32.mrf.mxu0
    %v7364 = vadd.f32 %v7165, %v7363
    %v7365 = vpop.f32.mrf.mxu0
    %v7366 = vadd.f32 %v7167, %v7365
    %7367 = vmatmul.bf16.gmra.mxu0 %v6802
    %v7368 = vpop.f32.mrf.mxu0
    %v7369 = vadd.f32 %v7170, %v7368
    %v7370 = vpop.f32.mrf.mxu0
    %v7371 = vadd.f32 %v7172, %v7370
    %7372 = vmatmul.bf16.gmra.mxu0 %v6803
    %v7373 = vpop.f32.mrf.mxu0
    %v7374 = vadd.f32 %v7175, %v7373
    %v7375 = vpop.f32.mrf.mxu0
    %v7376 = vadd.f32 %v7177, %v7375
    %7377 = vmatmul.bf16.gmra.mxu0 %v6804
    %v7378 = vpop.f32.mrf.mxu0
    %v7379 = vadd.f32 %v7180, %v7378
    %v7380 = vpop.f32.mrf.mxu0
    %v7381 = vadd.f32 %v7182, %v7380
    %7382 = vmatmul.bf16.gmra.mxu0 %v6805
    %v7383 = vpop.f32.mrf.mxu0
    %v7384 = vadd.f32 %v7185, %v7383
    %v7385 = vpop.f32.mrf.mxu0
    %v7386 = vadd.f32 %v7187, %v7385
    %7387 = vmatmul.bf16.gmra.mxu0 %v6806
    %v7388 = vpop.f32.mrf.mxu0
    %v7389 = vadd.f32 %v7190, %v7388
    %v7390 = vpop.f32.mrf.mxu0
    %v7391 = vadd.f32 %v7192, %v7390
    %7392 = vmatmul.bf16.gmra.mxu0 %v6807
    %v7393 = vpop.f32.mrf.mxu0
    %v7394 = vadd.f32 %v7195, %v7393
    %v7395 = vpop.f32.mrf.mxu0
    %v7396 = vadd.f32 %v7197, %v7395
    %7397 = vmatmul.bf16.gmra.mxu0 %v6808
    %v7398 = vpop.f32.mrf.mxu0
    %v7399 = vadd.f32 %v7200, %v7398
    %v7400 = vpop.f32.mrf.mxu0
    %v7401 = vadd.f32 %v7202, %v7400
    %7402 = vmatmul.bf16.gmra.mxu0 %v6809
    %v7403 = vpop.f32.mrf.mxu0
    %v7404 = vadd.f32 %v7205, %v7403
    %v7405 = vpop.f32.mrf.mxu0
    %v7406 = vadd.f32 %v7207, %v7405
    %7407 = vmatmul.bf16.gmra.mxu0 %v6810
    %v7408 = vpop.f32.mrf.mxu0
    %v7409 = vadd.f32 %v7210, %v7408
    %v7410 = vpop.f32.mrf.mxu0
    %v7411 = vadd.f32 %v7212, %v7410
    %7412 = vmatmul.bf16.gmra.mxu0 %v6811
    %v7413 = vpop.f32.mrf.mxu0
    %v7414 = vadd.f32 %v7215, %v7413
    %v7415 = vpop.f32.mrf.mxu0
    %v7416 = vadd.f32 %v7217, %v7415
    %7417 = vmatmul.bf16.gmra.mxu0 %v6812
    %v7418 = vpop.f32.mrf.mxu0
    %v7419 = vadd.f32 %v7220, %v7418
    %v7420 = vpop.f32.mrf.mxu0
    %v7421 = vadd.f32 %v7222, %v7420
    %7422 = vmatmul.bf16.gmra.mxu0 %v6813
    %v7423 = vpop.f32.mrf.mxu0
    %v7424 = vadd.f32 %v7225, %v7423
    %v7425 = vpop.f32.mrf.mxu0
    %v7426 = vadd.f32 %v7227, %v7425
    %7427 = vmatmul.bf16.gmra.mxu0 %v6814
    %v7428 = vpop.f32.mrf.mxu0
    %v7429 = vadd.f32 %v7230, %v7428
    %v7430 = vpop.f32.mrf.mxu0
    %v7431 = vadd.f32 %v7232, %v7430
    %7432 = vmatmul.bf16.gmra.mxu0 %v6815
    %v7433 = vpop.f32.mrf.mxu0
    %v7434 = vadd.f32 %v7235, %v7433
    %v7435 = vpop.f32.mrf.mxu0
    %v7436 = vadd.f32 %v7237, %v7435
    %7437 = vmatmul.bf16.gmra.mxu0 %v6816
    %v7438 = vpop.f32.mrf.mxu0
    %v7439 = vadd.f32 %v7240, %v7438
    %v7440 = vpop.f32.mrf.mxu0
    %v7441 = vadd.f32 %v7242, %v7440
    %7442 = vmatmul.bf16.gmra.mxu0 %v6817
    %v7443 = vpop.f32.mrf.mxu0
    %v7444 = vadd.f32 %v7245, %v7443
    %v7445 = vpop.f32.mrf.mxu0
    %v7446 = vadd.f32 %v7247, %v7445
    %7447 = vmatmul.bf16.gmra.mxu0 %v6818
    %v7448 = vpop.f32.mrf.mxu0
    %v7449 = vadd.f32 %v7250, %v7448
    %v7450 = vpop.f32.mrf.mxu0
    %v7451 = vadd.f32 %v7252, %v7450
    %7452 = vmatmul.bf16.gmra.mxu0 %v6819
    %v7453 = vpop.f32.mrf.mxu0
    %v7454 = vadd.f32 %v7255, %v7453
    %v7455 = vpop.f32.mrf.mxu0
    %v7456 = vadd.f32 %v7257, %v7455
    %7457 = vmatmul.bf16.gmra.mxu0 %v6820
    %v7458 = vpop.f32.mrf.mxu0
    %v7459 = vadd.f32 %v7260, %v7458
    %v7460 = vpop.f32.mrf.mxu0
    %v7461 = vadd.f32 %v7262, %v7460
    %7462 = vmatmul.bf16.gmra.mxu0 %v6821
    %v7463 = vpop.f32.mrf.mxu0
    %v7464 = vadd.f32 %v7265, %v7463
    %v7465 = vpop.f32.mrf.mxu0
    %v7466 = vadd.f32 %v7267, %v7465
    %7467 = vmatmul.bf16.gmra.mxu0 %v6822
    %v7468 = vpop.f32.mrf.mxu0
    %v7469 = vadd.f32 %v7270, %v7468
    %v7470 = vpop.f32.mrf.mxu0
    %v7471 = vadd.f32 %v7272, %v7470
    %7472 = vmatmul.bf16.gmra.mxu0 %v6823
    %v7473 = vpop.f32.mrf.mxu0
    %v7474 = vadd.f32 %v7275, %v7473
    %v7475 = vpop.f32.mrf.mxu0
    %v7476 = vadd.f32 %v7277, %v7475
    %7477 = vmatmul.bf16.gmra.mxu0 %v6824
    %v7478 = vpop.f32.mrf.mxu0
    %v7479 = vadd.f32 %v7280, %v7478
    %v7480 = vpop.f32.mrf.mxu0
    %v7481 = vadd.f32 %v7282, %v7480
    %7482 = vmatmul.bf16.gmra.mxu0 %v6825
    %v7483 = vpop.f32.mrf.mxu0
    %v7484 = vadd.f32 %v7285, %v7483
    %v7485 = vpop.f32.mrf.mxu0
    %v7486 = vadd.f32 %v7287, %v7485
    %7487 = vmatmul.bf16.gmra.mxu0 %v6826
    %v7488 = vpop.f32.mrf.mxu0
    %v7489 = vadd.f32 %v7290, %v7488
    %v7490 = vpop.f32.mrf.mxu0
    %v7491 = vadd.f32 %v7292, %v7490
    %7492 = vmatmul.bf16.gmra.mxu0 %v6827
    %v7493 = vpop.f32.mrf.mxu0
    %v7494 = vadd.f32 %v7295, %v7493
    %v7495 = vpop.f32.mrf.mxu0
    %v7496 = vadd.f32 %v7297, %v7495
    %7497 = vmatmul.bf16.gmra.mxu0 %v6828
    %v7498 = vpop.f32.mrf.mxu0
    %v7499 = vadd.f32 %v7300, %v7498
    %v7500 = vpop.f32.mrf.mxu0
    %v7501 = vadd.f32 %v7302, %v7500
    %7502 = vmatmul.bf16.gmra.mxu0 %v6829
    %v7503 = vpop.f32.mrf.mxu0
    %v7504 = vadd.f32 %v7305, %v7503
    %v7505 = vpop.f32.mrf.mxu0
    %v7506 = vadd.f32 %v7307, %v7505
    %7507 = vmatmul.bf16.gmra.mxu0 %v6830
    %v7508 = vpop.f32.mrf.mxu0
    %v7509 = vadd.f32 %v7310, %v7508
    %v7510 = vpop.f32.mrf.mxu0
    %v7511 = vadd.f32 %v7312, %v7510
    %7512 = vmatmul.bf16.gmra.mxu0 %v6831
    %v7513 = vpop.f32.mrf.mxu0
    %v7514 = vadd.f32 %v7315, %v7513
    %v7515 = vpop.f32.mrf.mxu0
    %v7516 = vadd.f32 %v7317, %v7515
    %7517 = vmatmul.bf16.gmra.mxu0 %v6648
    %v7518 = vpop.f32.mrf.mxu0
    %v7519 = vadd.f32 %v7320, %v7518
    %v7520 = vpop.f32.mrf.mxu0
    %v7521 = vadd.f32 %v7322, %v7520
    %7522 = vmatmul.bf16.gmra.mxu0 %v6649
    %v7523 = vpop.f32.mrf.mxu0
    %v7524 = vadd.f32 %v7325, %v7523
    %v7525 = vpop.f32.mrf.mxu0
    %v7526 = vadd.f32 %v7327, %v7525
    %7527 = vdwg.mxu0
    %7528 = vmatpush.bf16.msra.mxu0 %v7089
    %7529 = vmatpush.bf16.msra.mxu0 %v7088
    %7530 = vmatpush.bf16.msra.mxu0 %v7087
    %7531 = vmatpush.bf16.msra.mxu0 %v7086
    %7532 = vmatpush.bf16.msra.mxu0 %v7085
    %7533 = vmatpush.bf16.msra.mxu0 %v7084
    %7534 = vmatpush.bf16.msra.mxu0 %v7083
    %7535 = vmatpush.bf16.msra.mxu0 %v7082
    %7536 = vmatmul.bf16.gmra.mxu0 %v6798
    %v7537 = vpop.f32.mrf.mxu0
    %v7538 = vadd.f32 %v7339, %v7537
    %v7539 = vpop.f32.mrf.mxu0
    %v7540 = vadd.f32 %v7341, %v7539
    %7541 = vmatmul.bf16.gmra.mxu0 %v6799
    %v7542 = vpop.f32.mrf.mxu0
    %v7543 = vadd.f32 %v7344, %v7542
    %v7544 = vpop.f32.mrf.mxu0
    %v7545 = vadd.f32 %v7346, %v7544
    %7546 = vmatmul.bf16.gmra.mxu0 %v6800
    %v7547 = vpop.f32.mrf.mxu0
    %v7548 = vadd.f32 %v7349, %v7547
    %v7549 = vpop.f32.mrf.mxu0
    %v7550 = vadd.f32 %v7351, %v7549
    %7551 = vmatmul.bf16.gmra.mxu0 %v6801
    %v7552 = vpop.f32.mrf.mxu0
    %v7553 = vadd.f32 %v7354, %v7552
    %v7554 = vpop.f32.mrf.mxu0
    %v7555 = vadd.f32 %v7356, %v7554
    %7556 = vmatmul.bf16.gmra.mxu0 %v6802
    %v7557 = vpop.f32.mrf.mxu0
    %v7558 = vadd.f32 %v7359, %v7557
    %v7559 = vpop.f32.mrf.mxu0
    %v7560 = vadd.f32 %v7361, %v7559
    %7561 = vmatmul.bf16.gmra.mxu0 %v6803
    %v7562 = vpop.f32.mrf.mxu0
    %v7563 = vadd.f32 %v7364, %v7562
    %v7564 = vpop.f32.mrf.mxu0
    %v7565 = vadd.f32 %v7366, %v7564
    %7566 = vmatmul.bf16.gmra.mxu0 %v6804
    %v7567 = vpop.f32.mrf.mxu0
    %v7568 = vadd.f32 %v7369, %v7567
    %v7569 = vpop.f32.mrf.mxu0
    %v7570 = vadd.f32 %v7371, %v7569
    %7571 = vmatmul.bf16.gmra.mxu0 %v6805
    %v7572 = vpop.f32.mrf.mxu0
    %v7573 = vadd.f32 %v7374, %v7572
    %v7574 = vpop.f32.mrf.mxu0
    %v7575 = vadd.f32 %v7376, %v7574
    %7576 = vmatmul.bf16.gmra.mxu0 %v6806
    %v7577 = vpop.f32.mrf.mxu0
    %v7578 = vadd.f32 %v7379, %v7577
    %v7579 = vpop.f32.mrf.mxu0
    %v7580 = vadd.f32 %v7381, %v7579
    %7581 = vmatmul.bf16.gmra.mxu0 %v6807
    %v7582 = vpop.f32.mrf.mxu0
    %v7583 = vadd.f32 %v7384, %v7582
    %v7584 = vpop.f32.mrf.mxu0
    %v7585 = vadd.f32 %v7386, %v7584
    %7586 = vmatmul.bf16.gmra.mxu0 %v6808
    %v7587 = vpop.f32.mrf.mxu0
    %v7588 = vadd.f32 %v7389, %v7587
    %v7589 = vpop.f32.mrf.mxu0
    %v7590 = vadd.f32 %v7391, %v7589
    %7591 = vmatmul.bf16.gmra.mxu0 %v6809
    %v7592 = vpop.f32.mrf.mxu0
    %v7593 = vadd.f32 %v7394, %v7592
    %v7594 = vpop.f32.mrf.mxu0
    %v7595 = vadd.f32 %v7396, %v7594
    %7596 = vmatmul.bf16.gmra.mxu0 %v6810
    %v7597 = vpop.f32.mrf.mxu0
    %v7598 = vadd.f32 %v7399, %v7597
    %v7599 = vpop.f32.mrf.mxu0
    %v7600 = vadd.f32 %v7401, %v7599
    %7601 = vmatmul.bf16.gmra.mxu0 %v6811
    %v7602 = vpop.f32.mrf.mxu0
    %v7603 = vadd.f32 %v7404, %v7602
    %v7604 = vpop.f32.mrf.mxu0
    %v7605 = vadd.f32 %v7406, %v7604
    %7606 = vmatmul.bf16.gmra.mxu0 %v6812
    %v7607 = vpop.f32.mrf.mxu0
    %v7608 = vadd.f32 %v7409, %v7607
    %v7609 = vpop.f32.mrf.mxu0
    %v7610 = vadd.f32 %v7411, %v7609
    %7611 = vmatmul.bf16.gmra.mxu0 %v6813
    %v7612 = vpop.f32.mrf.mxu0
    %v7613 = vadd.f32 %v7414, %v7612
    %v7614 = vpop.f32.mrf.mxu0
    %v7615 = vadd.f32 %v7416, %v7614
    %7616 = vmatmul.bf16.gmra.mxu0 %v6814
    %v7617 = vpop.f32.mrf.mxu0
    %v7618 = vadd.f32 %v7419, %v7617
    %v7619 = vpop.f32.mrf.mxu0
    %v7620 = vadd.f32 %v7421, %v7619
    %7621 = vmatmul.bf16.gmra.mxu0 %v6815
    %v7622 = vpop.f32.mrf.mxu0
    %v7623 = vadd.f32 %v7424, %v7622
    %v7624 = vpop.f32.mrf.mxu0
    %v7625 = vadd.f32 %v7426, %v7624
    %7626 = vmatmul.bf16.gmra.mxu0 %v6816
    %v7627 = vpop.f32.mrf.mxu0
    %v7628 = vadd.f32 %v7429, %v7627
    %v7629 = vpop.f32.mrf.mxu0
    %v7630 = vadd.f32 %v7431, %v7629
    %7631 = vmatmul.bf16.gmra.mxu0 %v6817
    %v7632 = vpop.f32.mrf.mxu0
    %v7633 = vadd.f32 %v7434, %v7632
    %v7634 = vpop.f32.mrf.mxu0
    %v7635 = vadd.f32 %v7436, %v7634
    %7636 = vmatmul.bf16.gmra.mxu0 %v6818
    %v7637 = vpop.f32.mrf.mxu0
    %v7638 = vadd.f32 %v7439, %v7637
    %v7639 = vpop.f32.mrf.mxu0
    %v7640 = vadd.f32 %v7441, %v7639
    %7641 = vmatmul.bf16.gmra.mxu0 %v6819
    %v7642 = vpop.f32.mrf.mxu0
    %v7643 = vadd.f32 %v7444, %v7642
    %v7644 = vpop.f32.mrf.mxu0
    %v7645 = vadd.f32 %v7446, %v7644
    %7646 = vmatmul.bf16.gmra.mxu0 %v6820
    %v7647 = vpop.f32.mrf.mxu0
    %v7648 = vadd.f32 %v7449, %v7647
    %v7649 = vpop.f32.mrf.mxu0
    %v7650 = vadd.f32 %v7451, %v7649
    %7651 = vmatmul.bf16.gmra.mxu0 %v6821
    %v7652 = vpop.f32.mrf.mxu0
    %v7653 = vadd.f32 %v7454, %v7652
    %v7654 = vpop.f32.mrf.mxu0
    %v7655 = vadd.f32 %v7456, %v7654
    %7656 = vmatmul.bf16.gmra.mxu0 %v6822
    %v7657 = vpop.f32.mrf.mxu0
    %v7658 = vadd.f32 %v7459, %v7657
    %v7659 = vpop.f32.mrf.mxu0
    %v7660 = vadd.f32 %v7461, %v7659
    %7661 = vmatmul.bf16.gmra.mxu0 %v6823
    %v7662 = vpop.f32.mrf.mxu0
    %v7663 = vadd.f32 %v7464, %v7662
    %v7664 = vpop.f32.mrf.mxu0
    %v7665 = vadd.f32 %v7466, %v7664
    %7666 = vmatmul.bf16.gmra.mxu0 %v6824
    %v7667 = vpop.f32.mrf.mxu0
    %v7668 = vadd.f32 %v7469, %v7667
    %v7669 = vpop.f32.mrf.mxu0
    %v7670 = vadd.f32 %v7471, %v7669
    %7671 = vmatmul.bf16.gmra.mxu0 %v6825
    %v7672 = vpop.f32.mrf.mxu0
    %v7673 = vadd.f32 %v7474, %v7672
    %v7674 = vpop.f32.mrf.mxu0
    %v7675 = vadd.f32 %v7476, %v7674
    %7676 = vmatmul.bf16.gmra.mxu0 %v6826
    %v7677 = vpop.f32.mrf.mxu0
    %v7678 = vadd.f32 %v7479, %v7677
    %v7679 = vpop.f32.mrf.mxu0
    %v7680 = vadd.f32 %v7481, %v7679
    %7681 = vmatmul.bf16.gmra.mxu0 %v6827
    %v7682 = vpop.f32.mrf.mxu0
    %v7683 = vadd.f32 %v7484, %v7682
    %v7684 = vpop.f32.mrf.mxu0
    %v7685 = vadd.f32 %v7486, %v7684
    %7686 = vmatmul.bf16.gmra.mxu0 %v6828
    %v7687 = vpop.f32.mrf.mxu0
    %v7688 = vadd.f32 %v7489, %v7687
    %v7689 = vpop.f32.mrf.mxu0
    %v7690 = vadd.f32 %v7491, %v7689
    %7691 = vmatmul.bf16.gmra.mxu0 %v6829
    %v7692 = vpop.f32.mrf.mxu0
    %v7693 = vadd.f32 %v7494, %v7692
    %v7694 = vpop.f32.mrf.mxu0
    %v7695 = vadd.f32 %v7496, %v7694
    %7696 = vmatmul.bf16.gmra.mxu0 %v6830
    %v7697 = vpop.f32.mrf.mxu0
    %v7698 = vadd.f32 %v7499, %v7697
    %v7699 = vpop.f32.mrf.mxu0
    %v7700 = vadd.f32 %v7501, %v7699
    %7701 = vmatmul.bf16.gmra.mxu0 %v6831
    %v7702 = vpop.f32.mrf.mxu0
    %v7703 = vadd.f32 %v7504, %v7702
    %v7704 = vpop.f32.mrf.mxu0
    %v7705 = vadd.f32 %v7506, %v7704
    %7706 = vmatmul.bf16.gmra.mxu0 %v6648
    %v7707 = vpop.f32.mrf.mxu0
    %v7708 = vadd.f32 %v7509, %v7707
    %v7709 = vpop.f32.mrf.mxu0
    %v7710 = vadd.f32 %v7511, %v7709
    %7711 = vmatmul.bf16.gmra.mxu0 %v6649
    %v7712 = vpop.f32.mrf.mxu0
    %v7713 = vadd.f32 %v7514, %v7712
    %v7714 = vpop.f32.mrf.mxu0
    %v7715 = vadd.f32 %v7516, %v7714
    %7716 = vmatmul.bf16.gmra.mxu0 %v6796
    %v7717 = vpop.f32.mrf.mxu0
    %v7718 = vadd.f32 %v7519, %v7717
    %v7719 = vpop.f32.mrf.mxu0
    %v7720 = vadd.f32 %v7521, %v7719
    %7721 = vmatmul.bf16.gmra.mxu0 %v6797
    %v7722 = vpop.f32.mrf.mxu0
    %v7723 = vadd.f32 %v7524, %v7722
    %v7724 = vpop.f32.mrf.mxu0
    %v7725 = vadd.f32 %v7526, %v7724
    %7726 = vdwg.mxu0
    %7727 = vmatpush.bf16.msra.mxu0 %v7097
    %7728 = vmatpush.bf16.msra.mxu0 %v7096
    %7729 = vmatpush.bf16.msra.mxu0 %v7095
    %7730 = vmatpush.bf16.msra.mxu0 %v7094
    %7731 = vmatpush.bf16.msra.mxu0 %v7093
    %7732 = vmatpush.bf16.msra.mxu0 %v7092
    %7733 = vmatpush.bf16.msra.mxu0 %v7091
    %7734 = vmatpush.bf16.msra.mxu0 %v7090
    %7735 = vmatmul.bf16.gmra.mxu0 %v6800
    %v7736 = vpop.f32.mrf.mxu0
    %v7737 = vadd.f32 %v7538, %v7736
    %v7738 = vpop.f32.mrf.mxu0
    %v7739 = vadd.f32 %v7540, %v7738
    %7740 = vmatmul.bf16.gmra.mxu0 %v6801
    %v7741 = vpop.f32.mrf.mxu0
    %v7742 = vadd.f32 %v7543, %v7741
    %v7743 = vpop.f32.mrf.mxu0
    %v7744 = vadd.f32 %v7545, %v7743
    %7745 = vmatmul.bf16.gmra.mxu0 %v6802
    %v7746 = vpop.f32.mrf.mxu0
    %v7747 = vadd.f32 %v7548, %v7746
    %v7748 = vpop.f32.mrf.mxu0
    %v7749 = vadd.f32 %v7550, %v7748
    %7750 = vmatmul.bf16.gmra.mxu0 %v6803
    %v7751 = vpop.f32.mrf.mxu0
    %v7752 = vadd.f32 %v7553, %v7751
    %v7753 = vpop.f32.mrf.mxu0
    %v7754 = vadd.f32 %v7555, %v7753
    %7755 = vmatmul.bf16.gmra.mxu0 %v6804
    %v7756 = vpop.f32.mrf.mxu0
    %v7757 = vadd.f32 %v7558, %v7756
    %v7758 = vpop.f32.mrf.mxu0
    %v7759 = vadd.f32 %v7560, %v7758
    %7760 = vmatmul.bf16.gmra.mxu0 %v6805
    %v7761 = vpop.f32.mrf.mxu0
    %v7762 = vadd.f32 %v7563, %v7761
    %v7763 = vpop.f32.mrf.mxu0
    %v7764 = vadd.f32 %v7565, %v7763
    %7765 = vmatmul.bf16.gmra.mxu0 %v6806
    %v7766 = vpop.f32.mrf.mxu0
    %v7767 = vadd.f32 %v7568, %v7766
    %v7768 = vpop.f32.mrf.mxu0
    %v7769 = vadd.f32 %v7570, %v7768
    %7770 = vmatmul.bf16.gmra.mxu0 %v6807
    %v7771 = vpop.f32.mrf.mxu0
    %v7772 = vadd.f32 %v7573, %v7771
    %v7773 = vpop.f32.mrf.mxu0
    %v7774 = vadd.f32 %v7575, %v7773
    %7775 = vmatmul.bf16.gmra.mxu0 %v6808
    %v7776 = vpop.f32.mrf.mxu0
    %v7777 = vadd.f32 %v7578, %v7776
    %v7778 = vpop.f32.mrf.mxu0
    %v7779 = vadd.f32 %v7580, %v7778
    %7780 = vmatmul.bf16.gmra.mxu0 %v6809
    %v7781 = vpop.f32.mrf.mxu0
    %v7782 = vadd.f32 %v7583, %v7781
    %v7783 = vpop.f32.mrf.mxu0
    %v7784 = vadd.f32 %v7585, %v7783
    %7785 = vmatmul.bf16.gmra.mxu0 %v6810
    %v7786 = vpop.f32.mrf.mxu0
    %v7787 = vadd.f32 %v7588, %v7786
    %v7788 = vpop.f32.mrf.mxu0
    %v7789 = vadd.f32 %v7590, %v7788
    %7790 = vmatmul.bf16.gmra.mxu0 %v6811
    %v7791 = vpop.f32.mrf.mxu0
    %v7792 = vadd.f32 %v7593, %v7791
    %v7793 = vpop.f32.mrf.mxu0
    %v7794 = vadd.f32 %v7595, %v7793
    %7795 = vmatmul.bf16.gmra.mxu0 %v6812
    %v7796 = vpop.f32.mrf.mxu0
    %v7797 = vadd.f32 %v7598, %v7796
    %v7798 = vpop.f32.mrf.mxu0
    %v7799 = vadd.f32 %v7600, %v7798
    %7800 = vmatmul.bf16.gmra.mxu0 %v6813
    %v7801 = vpop.f32.mrf.mxu0
    %v7802 = vadd.f32 %v7603, %v7801
    %v7803 = vpop.f32.mrf.mxu0
    %v7804 = vadd.f32 %v7605, %v7803
    %7805 = vmatmul.bf16.gmra.mxu0 %v6814
    %v7806 = vpop.f32.mrf.mxu0
    %v7807 = vadd.f32 %v7608, %v7806
    %v7808 = vpop.f32.mrf.mxu0
    %v7809 = vadd.f32 %v7610, %v7808
    %7810 = vmatmul.bf16.gmra.mxu0 %v6815
    %v7811 = vpop.f32.mrf.mxu0
    %v7812 = vadd.f32 %v7613, %v7811
    %v7813 = vpop.f32.mrf.mxu0
    %v7814 = vadd.f32 %v7615, %v7813
    %7815 = vmatmul.bf16.gmra.mxu0 %v6816
    %v7816 = vpop.f32.mrf.mxu0
    %v7817 = vadd.f32 %v7618, %v7816
    %v7818 = vpop.f32.mrf.mxu0
    %v7819 = vadd.f32 %v7620, %v7818
    %7820 = vmatmul.bf16.gmra.mxu0 %v6817
    %v7821 = vpop.f32.mrf.mxu0
    %v7822 = vadd.f32 %v7623, %v7821
    %v7823 = vpop.f32.mrf.mxu0
    %v7824 = vadd.f32 %v7625, %v7823
    %7825 = vmatmul.bf16.gmra.mxu0 %v6818
    %v7826 = vpop.f32.mrf.mxu0
    %v7827 = vadd.f32 %v7628, %v7826
    %v7828 = vpop.f32.mrf.mxu0
    %v7829 = vadd.f32 %v7630, %v7828
    %7830 = vmatmul.bf16.gmra.mxu0 %v6819
    %v7831 = vpop.f32.mrf.mxu0
    %v7832 = vadd.f32 %v7633, %v7831
    %v7833 = vpop.f32.mrf.mxu0
    %v7834 = vadd.f32 %v7635, %v7833
    %7835 = vmatmul.bf16.gmra.mxu0 %v6820
    %v7836 = vpop.f32.mrf.mxu0
    %v7837 = vadd.f32 %v7638, %v7836
    %v7838 = vpop.f32.mrf.mxu0
    %v7839 = vadd.f32 %v7640, %v7838
    %7840 = vmatmul.bf16.gmra.mxu0 %v6821
    %v7841 = vpop.f32.mrf.mxu0
    %v7842 = vadd.f32 %v7643, %v7841
    %v7843 = vpop.f32.mrf.mxu0
    %v7844 = vadd.f32 %v7645, %v7843
    %7845 = vmatmul.bf16.gmra.mxu0 %v6822
    %v7846 = vpop.f32.mrf.mxu0
    %v7847 = vadd.f32 %v7648, %v7846
    %v7848 = vpop.f32.mrf.mxu0
    %v7849 = vadd.f32 %v7650, %v7848
    %7850 = vmatmul.bf16.gmra.mxu0 %v6823
    %v7851 = vpop.f32.mrf.mxu0
    %v7852 = vadd.f32 %v7653, %v7851
    %v7853 = vpop.f32.mrf.mxu0
    %v7854 = vadd.f32 %v7655, %v7853
    %7855 = vmatmul.bf16.gmra.mxu0 %v6824
    %v7856 = vpop.f32.mrf.mxu0
    %v7857 = vadd.f32 %v7658, %v7856
    %v7858 = vpop.f32.mrf.mxu0
    %v7859 = vadd.f32 %v7660, %v7858
    %7860 = vmatmul.bf16.gmra.mxu0 %v6825
    %v7861 = vpop.f32.mrf.mxu0
    %v7862 = vadd.f32 %v7663, %v7861
    %v7863 = vpop.f32.mrf.mxu0
    %v7864 = vadd.f32 %v7665, %v7863
    %7865 = vmatmul.bf16.gmra.mxu0 %v6826
    %v7866 = vpop.f32.mrf.mxu0
    %v7867 = vadd.f32 %v7668, %v7866
    %v7868 = vpop.f32.mrf.mxu0
    %v7869 = vadd.f32 %v7670, %v7868
    %7870 = vmatmul.bf16.gmra.mxu0 %v6827
    %v7871 = vpop.f32.mrf.mxu0
    %v7872 = vadd.f32 %v7673, %v7871
    %v7873 = vpop.f32.mrf.mxu0
    %v7874 = vadd.f32 %v7675, %v7873
    %7875 = vmatmul.bf16.gmra.mxu0 %v6828
    %v7876 = vpop.f32.mrf.mxu0
    %v7877 = vadd.f32 %v7678, %v7876
    %v7878 = vpop.f32.mrf.mxu0
    %v7879 = vadd.f32 %v7680, %v7878
    %7880 = vmatmul.bf16.gmra.mxu0 %v6829
    %v7881 = vpop.f32.mrf.mxu0
    %v7882 = vadd.f32 %v7683, %v7881
    %v7883 = vpop.f32.mrf.mxu0
    %v7884 = vadd.f32 %v7685, %v7883
    %7885 = vmatmul.bf16.gmra.mxu0 %v6830
    %v7886 = vpop.f32.mrf.mxu0
    %v7887 = vadd.f32 %v7688, %v7886
    %v7888 = vpop.f32.mrf.mxu0
    %v7889 = vadd.f32 %v7690, %v7888
    %7890 = vmatmul.bf16.gmra.mxu0 %v6831
    %v7891 = vpop.f32.mrf.mxu0
    %v7892 = vadd.f32 %v7693, %v7891
    %v7893 = vpop.f32.mrf.mxu0
    %v7894 = vadd.f32 %v7695, %v7893
    %7895 = vmatmul.bf16.gmra.mxu0 %v6648
    %v7896 = vpop.f32.mrf.mxu0
    %v7897 = vadd.f32 %v7698, %v7896
    %v7898 = vpop.f32.mrf.mxu0
    %v7899 = vadd.f32 %v7700, %v7898
    %7900 = vmatmul.bf16.gmra.mxu0 %v6649
    %v7901 = vpop.f32.mrf.mxu0
    %v7902 = vadd.f32 %v7703, %v7901
    %v7903 = vpop.f32.mrf.mxu0
    %v7904 = vadd.f32 %v7705, %v7903
    %7905 = vmatmul.bf16.gmra.mxu0 %v6796
    %v7906 = vpop.f32.mrf.mxu0
    %v7907 = vadd.f32 %v7708, %v7906
    %v7908 = vpop.f32.mrf.mxu0
    %v7909 = vadd.f32 %v7710, %v7908
    %7910 = vmatmul.bf16.gmra.mxu0 %v6797
    %v7911 = vpop.f32.mrf.mxu0
    %v7912 = vadd.f32 %v7713, %v7911
    %v7913 = vpop.f32.mrf.mxu0
    %v7914 = vadd.f32 %v7715, %v7913
    %7915 = vmatmul.bf16.gmra.mxu0 %v6798
    %v7916 = vpop.f32.mrf.mxu0
    %v7917 = vadd.f32 %v7718, %v7916
    %v7918 = vpop.f32.mrf.mxu0
    %v7919 = vadd.f32 %v7720, %v7918
    %7920 = vmatmul.bf16.gmra.mxu0 %v6799
    %v7921 = vpop.f32.mrf.mxu0
    %v7922 = vadd.f32 %v7723, %v7921
    %v7923 = vpop.f32.mrf.mxu0
    %v7924 = vadd.f32 %v7725, %v7923
    %7925 = vdwg.mxu0
    %v7926 = vmax.f32 %v7737, 0.0
    %v7927 = vmax.f32 %v7739, 0.0
    %v7928 = vmax.f32 %v7742, 0.0
    %v7929 = vmax.f32 %v7744, 0.0
    %v7930 = vmax.f32 %v7747, 0.0
    %v7931 = vmax.f32 %v7749, 0.0
    %v7932 = vmax.f32 %v7752, 0.0
    %v7933 = vmax.f32 %v7754, 0.0
    %v7934 = vmax.f32 %v7757, 0.0
    %v7935 = vmax.f32 %v7759, 0.0
    %v7936 = vmax.f32 %v7762, 0.0
    %v7937 = vmax.f32 %v7764, 0.0
    %v7938 = vmax.f32 %v7767, 0.0
    %v7939 = vmax.f32 %v7769, 0.0
    %v7940 = vmax.f32 %v7772, 0.0
    %v7941 = vmax.f32 %v7774, 0.0
    %v7942 = vmax.f32 %v7777, 0.0
    %v7943 = vmax.f32 %v7779, 0.0
    %v7944 = vmax.f32 %v7782, 0.0
    %v7945 = vmax.f32 %v7784, 0.0
    %v7946 = vmax.f32 %v7787, 0.0
    %v7947 = vmax.f32 %v7789, 0.0
    %v7948 = vmax.f32 %v7792, 0.0
    %v7949 = vmax.f32 %v7794, 0.0
    %v7950 = vmax.f32 %v7797, 0.0
    %v7951 = vmax.f32 %v7799, 0.0
    %v7952 = vmax.f32 %v7802, 0.0
    %v7953 = vmax.f32 %v7804, 0.0
    %v7954 = vmax.f32 %v7807, 0.0
    %v7955 = vmax.f32 %v7809, 0.0
    %v7956 = vmax.f32 %v7812, 0.0
    %v7957 = vmax.f32 %v7814, 0.0
    %v7958 = vmax.f32 %v7817, 0.0
    %v7959 = vmax.f32 %v7819, 0.0
    %v7960 = vmax.f32 %v7822, 0.0
    %v7961 = vmax.f32 %v7824, 0.0
    %v7962 = vmax.f32 %v7827, 0.0
    %v7963 = vmax.f32 %v7829, 0.0
    %v7964 = vmax.f32 %v7832, 0.0
    %v7965 = vmax.f32 %v7834, 0.0
    %v7966 = vmax.f32 %v7837, 0.0
    %v7967 = vmax.f32 %v7839, 0.0
    %v7968 = vmax.f32 %v7842, 0.0
    %v7969 = vmax.f32 %v7844, 0.0
    %v7970 = vmax.f32 %v7847, 0.0
    %v7971 = vmax.f32 %v7849, 0.0
    %v7972 = vmax.f32 %v7852, 0.0
    %v7973 = vmax.f32 %v7854, 0.0
    %v7974 = vmax.f32 %v7857, 0.0
    %v7975 = vmax.f32 %v7859, 0.0
    %v7976 = vmax.f32 %v7862, 0.0
    %v7977 = vmax.f32 %v7864, 0.0
    %v7978 = vmax.f32 %v7867, 0.0
    %v7979 = vmax.f32 %v7869, 0.0
    %v7980 = vmax.f32 %v7872, 0.0
    %v7981 = vmax.f32 %v7874, 0.0
    %v7982 = vmax.f32 %v7877, 0.0
    %v7983 = vmax.f32 %v7879, 0.0
    %v7984 = vmax.f32 %v7882, 0.0
    %v7985 = vmax.f32 %v7884, 0.0
    %v7986 = vmax.f32 %v7887, 0.0
    %v7987 = vmax.f32 %v7889, 0.0
    %v7988 = vmax.f32 %v7892, 0.0
    %v7989 = vmax.f32 %v7894, 0.0
    %v7990 = vmax.f32 %v7897, 0.0
    %v7991 = vmax.f32 %v7899, 0.0
    %v7992 = vmax.f32 %v7902, 0.0
    %v7993 = vmax.f32 %v7904, 0.0
    %v7994 = vmax.f32 %v7907, 0.0
    %v7995 = vmax.f32 %v7909, 0.0
    %v7996 = vmax.f32 %v7912, 0.0
    %v7997 = vmax.f32 %v7914, 0.0
    %v7998 = vmax.f32 %v7917, 0.0
    %v7999 = vmax.f32 %v7919, 0.0
    %v8000 = vmax.f32 %v7922, 0.0
    %v8001 = vmax.f32 %v7924, 0.0
    %v8002 = vsel %vm1870, %v7926, 0.0
    %v8003 = vsel %vm1871, %v7927, 0.0
    %v8004 = vsel %vm1872, %v7928, 0.0
    %v8005 = vsel %vm1873, %v7929, 0.0
    %v8006 = vsel %vm1874, %v7930, 0.0
    %v8007 = vsel %vm1875, %v7931, 0.0
    %v8008 = vsel %vm1876, %v7932, 0.0
    %v8009 = vsel %vm1877, %v7933, 0.0
    %v8010 = vsel %vm1878, %v7934, 0.0
    %v8011 = vsel %vm1879, %v7935, 0.0
    %v8012 = vsel %vm1880, %v7936, 0.0
    %v8013 = vsel %vm1881, %v7937, 0.0
    %v8014 = vsel %vm1882, %v7938, 0.0
    %v8015 = vsel %vm1883, %v7939, 0.0
    %v8016 = vsel %vm1884, %v7940, 0.0
    %v8017 = vsel %vm1885, %v7941, 0.0
    %v8018 = vsel %vm1886, %v7942, 0.0
    %v8019 = vsel %vm1887, %v7943, 0.0
    %v8020 = vsel %vm1888, %v7944, 0.0
    %v8021 = vsel %vm1889, %v7945, 0.0
    %v8022 = vsel %vm1890, %v7946, 0.0
    %v8023 = vsel %vm1891, %v7947, 0.0
    %v8024 = vsel %vm1892, %v7948, 0.0
    %v8025 = vsel %vm1893, %v7949, 0.0
    %v8026 = vsel %vm1894, %v7950, 0.0
    %v8027 = vsel %vm1895, %v7951, 0.0
    %v8028 = vsel %vm1896, %v7952, 0.0
    %v8029 = vsel %vm1897, %v7953, 0.0
    %v8030 = vsel %vm1898, %v7954, 0.0
    %v8031 = vsel %vm1899, %v7955, 0.0
    %v8032 = vsel %vm1900, %v7956, 0.0
    %v8033 = vsel %vm1901, %v7957, 0.0
    %v8034 = vsel %vm1902, %v7958, 0.0
    %v8035 = vsel %vm1903, %v7959, 0.0
    %v8036 = vsel %vm1904, %v7960, 0.0
    %v8037 = vsel %vm1905, %v7961, 0.0
    %v8038 = vsel %vm1906, %v7962, 0.0
    %v8039 = vsel %vm1907, %v7963, 0.0
    %v8040 = vsel %vm1908, %v7964, 0.0
    %v8041 = vsel %vm1909, %v7965, 0.0
    %v8042 = vsel %vm1910, %v7966, 0.0
    %v8043 = vsel %vm1911, %v7967, 0.0
    %v8044 = vsel %vm1912, %v7968, 0.0
    %v8045 = vsel %vm1913, %v7969, 0.0
    %v8046 = vsel %vm1914, %v7970, 0.0
    %v8047 = vsel %vm1915, %v7971, 0.0
    %v8048 = vsel %vm1916, %v7972, 0.0
    %v8049 = vsel %vm1917, %v7973, 0.0
    %v8050 = vsel %vm1918, %v7974, 0.0
    %v8051 = vsel %vm1919, %v7975, 0.0
    %v8052 = vsel %vm1920, %v7976, 0.0
    %v8053 = vsel %vm1921, %v7977, 0.0
    %v8054 = vsel %vm1922, %v7978, 0.0
    %v8055 = vsel %vm1923, %v7979, 0.0
    %v8056 = vsel %vm1924, %v7980, 0.0
    %v8057 = vsel %vm1925, %v7981, 0.0
    %v8058 = vsel %vm1926, %v7982, 0.0
    %v8059 = vsel %vm1927, %v7983, 0.0
    %v8060 = vsel %vm1928, %v7984, 0.0
    %v8061 = vsel %vm1929, %v7985, 0.0
    %v8062 = vsel %vm1930, %v7986, 0.0
    %v8063 = vsel %vm1931, %v7987, 0.0
    %v8064 = vsel %vm1932, %v7988, 0.0
    %v8065 = vsel %vm1933, %v7989, 0.0
    %v8066 = vsel %vm1934, %v7990, 0.0
    %v8067 = vsel %vm1935, %v7991, 0.0
    %v8068 = vsel %vm1936, %v7992, 0.0
    %v8069 = vsel %vm1937, %v7993, 0.0
    %v8070 = vsel %vm1938, %v7994, 0.0
    %v8071 = vsel %vm1939, %v7995, 0.0
    %v8072 = vsel %vm1940, %v7996, 0.0
    %v8073 = vsel %vm1941, %v7997, 0.0
    %v8074 = vsel %vm1942, %v7998, 0.0
    %v8075 = vsel %vm1943, %v7999, 0.0
    %v8076 = vsel %vm1944, %v8000, 0.0
    %v8077 = vsel %vm1945, %v8001, 0.0
    %v8078 = vpack.c.bf16 %v8002, %v8002
    %v8079 = vpack.c.bf16 %v8003, %v8003
    %v8080 = vpack.c.bf16 %v8004, %v8004
    %v8081 = vpack.c.bf16 %v8005, %v8005
    %v8082 = vpack.c.bf16 %v8006, %v8006
    %v8083 = vpack.c.bf16 %v8007, %v8007
    %v8084 = vpack.c.bf16 %v8008, %v8008
    %v8085 = vpack.c.bf16 %v8009, %v8009
    %v8086 = vpack.c.bf16 %v8010, %v8010
    %v8087 = vpack.c.bf16 %v8011, %v8011
    %v8088 = vpack.c.bf16 %v8012, %v8012
    %v8089 = vpack.c.bf16 %v8013, %v8013
    %v8090 = vpack.c.bf16 %v8014, %v8014
    %v8091 = vpack.c.bf16 %v8015, %v8015
    %v8092 = vpack.c.bf16 %v8016, %v8016
    %v8093 = vpack.c.bf16 %v8017, %v8017
    %v8094 = vpack.c.bf16 %v8018, %v8018
    %v8095 = vpack.c.bf16 %v8019, %v8019
    %v8096 = vpack.c.bf16 %v8020, %v8020
    %v8097 = vpack.c.bf16 %v8021, %v8021
    %v8098 = vpack.c.bf16 %v8022, %v8022
    %v8099 = vpack.c.bf16 %v8023, %v8023
    %v8100 = vpack.c.bf16 %v8024, %v8024
    %v8101 = vpack.c.bf16 %v8025, %v8025
    %v8102 = vpack.c.bf16 %v8026, %v8026
    %v8103 = vpack.c.bf16 %v8027, %v8027
    %v8104 = vpack.c.bf16 %v8028, %v8028
    %v8105 = vpack.c.bf16 %v8029, %v8029
    %v8106 = vpack.c.bf16 %v8030, %v8030
    %v8107 = vpack.c.bf16 %v8031, %v8031
    %v8108 = vpack.c.bf16 %v8032, %v8032
    %v8109 = vpack.c.bf16 %v8033, %v8033
    %v8110 = vpack.c.bf16 %v8034, %v8034
    %v8111 = vpack.c.bf16 %v8035, %v8035
    %v8112 = vpack.c.bf16 %v8036, %v8036
    %v8113 = vpack.c.bf16 %v8037, %v8037
    %v8114 = vpack.c.bf16 %v8038, %v8038
    %v8115 = vpack.c.bf16 %v8039, %v8039
    %v8116 = vpack.c.bf16 %v8040, %v8040
    %v8117 = vpack.c.bf16 %v8041, %v8041
    %v8118 = vpack.c.bf16 %v8042, %v8042
    %v8119 = vpack.c.bf16 %v8043, %v8043
    %v8120 = vpack.c.bf16 %v8044, %v8044
    %v8121 = vpack.c.bf16 %v8045, %v8045
    %v8122 = vpack.c.bf16 %v8046, %v8046
    %v8123 = vpack.c.bf16 %v8047, %v8047
    %v8124 = vpack.c.bf16 %v8048, %v8048
    %v8125 = vpack.c.bf16 %v8049, %v8049
    %v8126 = vpack.c.bf16 %v8050, %v8050
    %v8127 = vpack.c.bf16 %v8051, %v8051
    %v8128 = vpack.c.bf16 %v8052, %v8052
    %v8129 = vpack.c.bf16 %v8053, %v8053
    %v8130 = vpack.c.bf16 %v8054, %v8054
    %v8131 = vpack.c.bf16 %v8055, %v8055
    %v8132 = vpack.c.bf16 %v8056, %v8056
    %v8133 = vpack.c.bf16 %v8057, %v8057
    %v8134 = vpack.c.bf16 %v8058, %v8058
    %v8135 = vpack.c.bf16 %v8059, %v8059
    %v8136 = vpack.c.bf16 %v8060, %v8060
    %v8137 = vpack.c.bf16 %v8061, %v8061
    %v8138 = vpack.c.bf16 %v8062, %v8062
    %v8139 = vpack.c.bf16 %v8063, %v8063
    %v8140 = vpack.c.bf16 %v8064, %v8064
    %v8141 = vpack.c.bf16 %v8065, %v8065
    %v8142 = vpack.c.bf16 %v8066, %v8066
    %v8143 = vpack.c.bf16 %v8067, %v8067
    %v8144 = vpack.c.bf16 %v8068, %v8068
    %v8145 = vpack.c.bf16 %v8069, %v8069
    %v8146 = vpack.c.bf16 %v8070, %v8070
    %v8147 = vpack.c.bf16 %v8071, %v8071
    %v8148 = vpack.c.bf16 %v8072, %v8072
    %v8149 = vpack.c.bf16 %v8073, %v8073
    %v8150 = vpack.c.bf16 %v8074, %v8074
    %v8151 = vpack.c.bf16 %v8075, %v8075
    %v8152 = vpack.c.bf16 %v8076, %v8076
    %v8153 = vpack.c.bf16 %v8077, %v8077
    %v8158 = vunpack.c.l.b16 %v8150
    %v8159 = vunpack.c.l.b16 %v8151
    %v8160 = vunpack.c.l.b16 %v8152
    %v8161 = vunpack.c.l.b16 %v8153
    %v8162 = vpack.c.b16 %v8159, %v8158
    %v8163 = vpack.c.b16 %v8161, %v8160
    %v8238 = vunpack.c.l.b16 %v8078
    %v8239 = vunpack.c.l.b16 %v8079
    %v8240 = vunpack.c.l.b16 %v8080
    %v8241 = vunpack.c.l.b16 %v8081
    %v8242 = vunpack.c.l.b16 %v8082
    %v8243 = vunpack.c.l.b16 %v8083
    %v8244 = vunpack.c.l.b16 %v8084
    %v8245 = vunpack.c.l.b16 %v8085
    %v8246 = vunpack.c.l.b16 %v8086
    %v8247 = vunpack.c.l.b16 %v8087
    %v8248 = vunpack.c.l.b16 %v8088
    %v8249 = vunpack.c.l.b16 %v8089
    %v8250 = vunpack.c.l.b16 %v8090
    %v8251 = vunpack.c.l.b16 %v8091
    %v8252 = vunpack.c.l.b16 %v8092
    %v8253 = vunpack.c.l.b16 %v8093
    %v8254 = vunpack.c.l.b16 %v8094
    %v8255 = vunpack.c.l.b16 %v8095
    %v8256 = vunpack.c.l.b16 %v8096
    %v8257 = vunpack.c.l.b16 %v8097
    %v8258 = vunpack.c.l.b16 %v8098
    %v8259 = vunpack.c.l.b16 %v8099
    %v8260 = vunpack.c.l.b16 %v8100
    %v8261 = vunpack.c.l.b16 %v8101
    %v8262 = vunpack.c.l.b16 %v8102
    %v8263 = vunpack.c.l.b16 %v8103
    %v8264 = vunpack.c.l.b16 %v8104
    %v8265 = vunpack.c.l.b16 %v8105
    %v8266 = vunpack.c.l.b16 %v8106
    %v8267 = vunpack.c.l.b16 %v8107
    %v8268 = vunpack.c.l.b16 %v8108
    %v8269 = vunpack.c.l.b16 %v8109
    %v8270 = vunpack.c.l.b16 %v8110
    %v8271 = vunpack.c.l.b16 %v8111
    %v8272 = vunpack.c.l.b16 %v8112
    %v8273 = vunpack.c.l.b16 %v8113
    %v8274 = vunpack.c.l.b16 %v8114
    %v8275 = vunpack.c.l.b16 %v8115
    %v8276 = vunpack.c.l.b16 %v8116
    %v8277 = vunpack.c.l.b16 %v8117
    %v8278 = vunpack.c.l.b16 %v8118
    %v8279 = vunpack.c.l.b16 %v8119
    %v8280 = vunpack.c.l.b16 %v8120
    %v8281 = vunpack.c.l.b16 %v8121
    %v8282 = vunpack.c.l.b16 %v8122
    %v8283 = vunpack.c.l.b16 %v8123
    %v8284 = vunpack.c.l.b16 %v8124
    %v8285 = vunpack.c.l.b16 %v8125
    %v8286 = vunpack.c.l.b16 %v8126
    %v8287 = vunpack.c.l.b16 %v8127
    %v8288 = vunpack.c.l.b16 %v8128
    %v8289 = vunpack.c.l.b16 %v8129
    %v8290 = vunpack.c.l.b16 %v8130
    %v8291 = vunpack.c.l.b16 %v8131
    %v8292 = vunpack.c.l.b16 %v8132
    %v8293 = vunpack.c.l.b16 %v8133
    %v8294 = vunpack.c.l.b16 %v8134
    %v8295 = vunpack.c.l.b16 %v8135
    %v8296 = vunpack.c.l.b16 %v8136
    %v8297 = vunpack.c.l.b16 %v8137
    %v8298 = vunpack.c.l.b16 %v8138
    %v8299 = vunpack.c.l.b16 %v8139
    %v8300 = vunpack.c.l.b16 %v8140
    %v8301 = vunpack.c.l.b16 %v8141
    %v8302 = vunpack.c.l.b16 %v8142
    %v8303 = vunpack.c.l.b16 %v8143
    %v8304 = vunpack.c.l.b16 %v8144
    %v8305 = vunpack.c.l.b16 %v8145
    %v8306 = vunpack.c.l.b16 %v8146
    %v8307 = vunpack.c.l.b16 %v8147
    %v8308 = vunpack.c.l.b16 %v8148
    %v8309 = vunpack.c.l.b16 %v8149
    %v8310 = vpack.c.b16 %v8239, %v8238
    %v8311 = vpack.c.b16 %v8241, %v8240
    %v8312 = vpack.c.b16 %v8243, %v8242
    %v8313 = vpack.c.b16 %v8245, %v8244
    %v8314 = vpack.c.b16 %v8247, %v8246
    %v8315 = vpack.c.b16 %v8249, %v8248
    %v8316 = vpack.c.b16 %v8251, %v8250
    %v8317 = vpack.c.b16 %v8253, %v8252
    %v8318 = vpack.c.b16 %v8255, %v8254
    %v8319 = vpack.c.b16 %v8257, %v8256
    %v8320 = vpack.c.b16 %v8259, %v8258
    %v8321 = vpack.c.b16 %v8261, %v8260
    %v8322 = vpack.c.b16 %v8263, %v8262
    %v8323 = vpack.c.b16 %v8265, %v8264
    %v8324 = vpack.c.b16 %v8267, %v8266
    %v8325 = vpack.c.b16 %v8269, %v8268
    %v8326 = vpack.c.b16 %v8271, %v8270
    %v8327 = vpack.c.b16 %v8273, %v8272
    %v8328 = vpack.c.b16 %v8275, %v8274
    %v8329 = vpack.c.b16 %v8277, %v8276
    %v8330 = vpack.c.b16 %v8279, %v8278
    %v8331 = vpack.c.b16 %v8281, %v8280
    %v8332 = vpack.c.b16 %v8283, %v8282
    %v8333 = vpack.c.b16 %v8285, %v8284
    %v8334 = vpack.c.b16 %v8287, %v8286
    %v8335 = vpack.c.b16 %v8289, %v8288
    %v8336 = vpack.c.b16 %v8291, %v8290
    %v8337 = vpack.c.b16 %v8293, %v8292
    %v8338 = vpack.c.b16 %v8295, %v8294
    %v8339 = vpack.c.b16 %v8297, %v8296
    %v8340 = vpack.c.b16 %v8299, %v8298
    %v8341 = vpack.c.b16 %v8301, %v8300
    %v8342 = vpack.c.b16 %v8303, %v8302
    %v8343 = vpack.c.b16 %v8305, %v8304
    %v8344 = vpack.c.b16 %v8307, %v8306
    %v8345 = vpack.c.b16 %v8309, %v8308
    %s8382 = scalar_lea.vmem [#allocation2], 1280
    %v8383 = vld [vmem:[%s8382] sm:$0xf]
    %v8384 = vld [vmem:[%s8382 + $0x4] sm:$0xf]
    %v8385 = vld [vmem:[%s8382 + $0x8] sm:$0xf]
    %v8386 = vld [vmem:[%s8382 + $0xc] sm:$0xf]
    %v8387 = vld [vmem:[%s8382 + $0x10] sm:$0xf]
    %v8388 = vld [vmem:[%s8382 + $0x14] sm:$0xf]
    %v8389 = vld [vmem:[%s8382 + $0x18] sm:$0xf]
    %v8390 = vld [vmem:[%s8382 + $0x1c] sm:$0xf]
    %v8391 = vld [vmem:[%s8382 + $0x20] sm:$0xf]
    %v8392 = vld [vmem:[%s8382 + $0x24] sm:$0xf]
    %v8393 = vld [vmem:[%s8382 + $0x28] sm:$0xf]
    %v8394 = vld [vmem:[%s8382 + $0x2c] sm:$0xf]
    %v8395 = vld [vmem:[%s8382 + $0x30] sm:$0xf]
    %v8396 = vld [vmem:[%s8382 + $0x34] sm:$0xf]
    %v8397 = vld [vmem:[%s8382 + $0x38] sm:$0xf]
    %v8398 = vld [vmem:[%s8382 + $0x3c] sm:$0xf]
    %v8399 = vld [vmem:[%s8382 + $0x40] sm:$0xf]
    %v8400 = vld [vmem:[%s8382 + $0x44] sm:$0xf]
    %v8401 = vld [vmem:[%s8382 + $0x48] sm:$0xf]
    %v8402 = vld [vmem:[%s8382 + $0x4c] sm:$0xf]
    %v8403 = vld [vmem:[%s8382 + $0x50] sm:$0xf]
    %v8404 = vld [vmem:[%s8382 + $0x54] sm:$0xf]
    %v8405 = vld [vmem:[%s8382 + $0x58] sm:$0xf]
    %v8406 = vld [vmem:[%s8382 + $0x5c] sm:$0xf]
    %v8407 = vld [vmem:[%s8382 + $0x60] sm:$0xf]
    %v8408 = vld [vmem:[%s8382 + $0x64] sm:$0xf]
    %v8409 = vld [vmem:[%s8382 + $0x68] sm:$0xf]
    %v8410 = vld [vmem:[%s8382 + $0x6c] sm:$0xf]
    %v8411 = vld [vmem:[%s8382 + $0x70] sm:$0xf]
    %v8412 = vld [vmem:[%s8382 + $0x74] sm:$0xf]
    %v8413 = vld [vmem:[%s8382 + $0x78] sm:$0xf]
    %v8414 = vld [vmem:[%s8382 + $0x7c] sm:$0xf]
    %v8415 = vld [vmem:[%s8382 + $0x80] sm:$0xf]
    %v8416 = vld [vmem:[%s8382 + $0x84] sm:$0xf]
    %v8417 = vld [vmem:[%s8382 + $0x88] sm:$0xf]
    %v8418 = vld [vmem:[%s8382 + $0x8c] sm:$0xf]
    %v8419 = vld [vmem:[%s8382 + $0x90] sm:$0xf]
    %v8420 = vld [vmem:[%s8382 + $0x94] sm:$0xf]
    %v8421 = vld [vmem:[%s8382 + $0x98] sm:$0xf]
    %v8422 = vld [vmem:[%s8382 + $0x9c] sm:$0xf]
    %v8423 = vld [vmem:[%s8382 + $0xa0] sm:$0xf]
    %v8424 = vld [vmem:[%s8382 + $0xa4] sm:$0xf]
    %v8425 = vld [vmem:[%s8382 + $0xa8] sm:$0xf]
    %v8426 = vld [vmem:[%s8382 + $0xac] sm:$0xf]
    %v8427 = vld [vmem:[%s8382 + $0xb0] sm:$0xf]
    %v8428 = vld [vmem:[%s8382 + $0xb4] sm:$0xf]
    %v8429 = vld [vmem:[%s8382 + $0xb8] sm:$0xf]
    %v8430 = vld [vmem:[%s8382 + $0xbc] sm:$0xf]
    %v8431 = vld [vmem:[%s8382 + $0xc0] sm:$0xf]
    %v8432 = vld [vmem:[%s8382 + $0xc4] sm:$0xf]
    %v8433 = vld [vmem:[%s8382 + $0xc8] sm:$0xf]
    %v8434 = vld [vmem:[%s8382 + $0xcc] sm:$0xf]
    %v8435 = vld [vmem:[%s8382 + $0xd0] sm:$0xf]
    %v8436 = vld [vmem:[%s8382 + $0xd4] sm:$0xf]
    %v8437 = vld [vmem:[%s8382 + $0xd8] sm:$0xf]
    %v8438 = vld [vmem:[%s8382 + $0xdc] sm:$0xf]
    %v8439 = vld [vmem:[%s8382 + $0xe0] sm:$0xf]
    %v8440 = vld [vmem:[%s8382 + $0xe4] sm:$0xf]
    %v8441 = vld [vmem:[%s8382 + $0xe8] sm:$0xf]
    %v8442 = vld [vmem:[%s8382 + $0xec] sm:$0xf]
    %v8443 = vld [vmem:[%s8382 + $0xf0] sm:$0xf]
    %v8444 = vld [vmem:[%s8382 + $0xf4] sm:$0xf]
    %v8445 = vld [vmem:[%s8382 + $0xf8] sm:$0xf]
    %v8446 = vld [vmem:[%s8382 + $0xfc] sm:$0xf]
    %s8447 = scalar_lea.vmem %s2, 5
    %v8448 = vld [vmem:[%s8447] sm:$0x1]
    %v8450 = vperm.slane %v8448, 0
    %v8516 = vunpack.c.l.b16 %v8383
    %v8517 = vunpack.c.l.b16 %v8384
    %v8518 = vunpack.c.l.b16 %v8385
    %v8519 = vunpack.c.l.b16 %v8386
    %v8520 = vunpack.c.l.b16 %v8387
    %v8521 = vunpack.c.l.b16 %v8388
    %v8522 = vunpack.c.l.b16 %v8389
    %v8523 = vunpack.c.l.b16 %v8390
    %v8524 = vunpack.c.l.b16 %v8391
    %v8525 = vunpack.c.l.b16 %v8392
    %v8526 = vunpack.c.l.b16 %v8393
    %v8527 = vunpack.c.l.b16 %v8394
    %v8528 = vunpack.c.l.b16 %v8395
    %v8529 = vunpack.c.l.b16 %v8396
    %v8530 = vunpack.c.l.b16 %v8397
    %v8531 = vunpack.c.l.b16 %v8398
    %v8532 = vunpack.c.l.b16 %v8399
    %v8533 = vunpack.c.l.b16 %v8400
    %v8534 = vunpack.c.l.b16 %v8401
    %v8535 = vunpack.c.l.b16 %v8402
    %v8536 = vunpack.c.l.b16 %v8403
    %v8537 = vunpack.c.l.b16 %v8404
    %v8538 = vunpack.c.l.b16 %v8405
    %v8539 = vunpack.c.l.b16 %v8406
    %v8540 = vunpack.c.l.b16 %v8407
    %v8541 = vunpack.c.l.b16 %v8408
    %v8542 = vunpack.c.l.b16 %v8409
    %v8543 = vunpack.c.l.b16 %v8410
    %v8544 = vunpack.c.l.b16 %v8411
    %v8545 = vunpack.c.l.b16 %v8412
    %v8546 = vunpack.c.l.b16 %v8413
    %v8547 = vunpack.c.l.b16 %v8414
    %v8548 = vunpack.c.l.b16 %v8415
    %v8549 = vunpack.c.l.b16 %v8416
    %v8550 = vunpack.c.l.b16 %v8417
    %v8551 = vunpack.c.l.b16 %v8418
    %v8552 = vunpack.c.l.b16 %v8419
    %v8553 = vunpack.c.l.b16 %v8420
    %v8554 = vunpack.c.l.b16 %v8421
    %v8555 = vunpack.c.l.b16 %v8422
    %v8556 = vunpack.c.l.b16 %v8423
    %v8557 = vunpack.c.l.b16 %v8424
    %v8558 = vunpack.c.l.b16 %v8425
    %v8559 = vunpack.c.l.b16 %v8426
    %v8560 = vunpack.c.l.b16 %v8427
    %v8561 = vunpack.c.l.b16 %v8428
    %v8562 = vunpack.c.l.b16 %v8429
    %v8563 = vunpack.c.l.b16 %v8430
    %v8564 = vunpack.c.l.b16 %v8431
    %v8565 = vunpack.c.l.b16 %v8432
    %v8566 = vunpack.c.l.b16 %v8433
    %v8567 = vunpack.c.l.b16 %v8434
    %v8568 = vunpack.c.l.b16 %v8435
    %v8569 = vunpack.c.l.b16 %v8436
    %v8570 = vunpack.c.l.b16 %v8437
    %v8571 = vunpack.c.l.b16 %v8438
    %v8572 = vunpack.c.l.b16 %v8439
    %v8573 = vunpack.c.l.b16 %v8440
    %v8574 = vunpack.c.l.b16 %v8441
    %v8575 = vunpack.c.l.b16 %v8442
    %v8576 = vunpack.c.l.b16 %v8443
    %v8577 = vunpack.c.l.b16 %v8444
    %v8578 = vunpack.c.l.b16 %v8445
    %v8579 = vunpack.c.l.b16 %v8446
    %v8580 = vpack.c.b16 %v8517, %v8516
    %v8581 = vpack.c.b16 %v8519, %v8518
    %v8582 = vpack.c.b16 %v8521, %v8520
    %v8583 = vpack.c.b16 %v8523, %v8522
    %v8584 = vpack.c.b16 %v8525, %v8524
    %v8585 = vpack.c.b16 %v8527, %v8526
    %v8586 = vpack.c.b16 %v8529, %v8528
    %v8587 = vpack.c.b16 %v8531, %v8530
    %v8588 = vpack.c.b16 %v8533, %v8532
    %v8589 = vpack.c.b16 %v8535, %v8534
    %v8590 = vpack.c.b16 %v8537, %v8536
    %v8591 = vpack.c.b16 %v8539, %v8538
    %v8592 = vpack.c.b16 %v8541, %v8540
    %v8593 = vpack.c.b16 %v8543, %v8542
    %v8594 = vpack.c.b16 %v8545, %v8544
    %v8595 = vpack.c.b16 %v8547, %v8546
    %v8596 = vpack.c.b16 %v8549, %v8548
    %v8597 = vpack.c.b16 %v8551, %v8550
    %v8598 = vpack.c.b16 %v8553, %v8552
    %v8599 = vpack.c.b16 %v8555, %v8554
    %v8600 = vpack.c.b16 %v8557, %v8556
    %v8601 = vpack.c.b16 %v8559, %v8558
    %v8602 = vpack.c.b16 %v8561, %v8560
    %v8603 = vpack.c.b16 %v8563, %v8562
    %v8604 = vpack.c.b16 %v8565, %v8564
    %v8605 = vpack.c.b16 %v8567, %v8566
    %v8606 = vpack.c.b16 %v8569, %v8568
    %v8607 = vpack.c.b16 %v8571, %v8570
    %v8608 = vpack.c.b16 %v8573, %v8572
    %v8609 = vpack.c.b16 %v8575, %v8574
    %v8610 = vpack.c.b16 %v8577, %v8576
    %v8611 = vpack.c.b16 %v8579, %v8578
    %8644 = vmatpush.bf16.msra.mxu0 %v8587
    %8645 = vmatpush.bf16.msra.mxu0 %v8586
    %8646 = vmatpush.bf16.msra.mxu0 %v8585
    %8647 = vmatpush.bf16.msra.mxu0 %v8584
    %8648 = vmatpush.bf16.msra.mxu0 %v8583
    %8649 = vmatpush.bf16.msra.mxu0 %v8582
    %8650 = vmatpush.bf16.msra.mxu0 %v8581
    %8651 = vmatpush.bf16.msra.mxu0 %v8580
    %8652 = vmatmul.bf16.gmra.mxu0 %v8162
    %v8653 = vpop.f32.mrf.mxu0
    %v8654 = vpop.f32.mrf.mxu0
    %8655 = vmatmul.bf16.gmra.mxu0 %v8163
    %v8656 = vpop.f32.mrf.mxu0
    %v8657 = vpop.f32.mrf.mxu0
    %8658 = vmatmul.bf16.gmra.mxu0 %v8310
    %v8659 = vpop.f32.mrf.mxu0
    %v8660 = vadd.f32 %v8450, %v8659
    %v8661 = vpop.f32.mrf.mxu0
    %v8662 = vadd.f32 %v8450, %v8661
    %8663 = vmatmul.bf16.gmra.mxu0 %v8311
    %v8664 = vpop.f32.mrf.mxu0
    %v8665 = vadd.f32 %v8450, %v8664
    %v8666 = vpop.f32.mrf.mxu0
    %v8667 = vadd.f32 %v8450, %v8666
    %8668 = vmatmul.bf16.gmra.mxu0 %v8312
    %v8669 = vpop.f32.mrf.mxu0
    %v8670 = vadd.f32 %v8450, %v8669
    %v8671 = vpop.f32.mrf.mxu0
    %v8672 = vadd.f32 %v8450, %v8671
    %8673 = vmatmul.bf16.gmra.mxu0 %v8313
    %v8674 = vpop.f32.mrf.mxu0
    %v8675 = vadd.f32 %v8450, %v8674
    %v8676 = vpop.f32.mrf.mxu0
    %v8677 = vadd.f32 %v8450, %v8676
    %8678 = vmatmul.bf16.gmra.mxu0 %v8314
    %v8679 = vpop.f32.mrf.mxu0
    %v8680 = vadd.f32 %v8450, %v8679
    %v8681 = vpop.f32.mrf.mxu0
    %v8682 = vadd.f32 %v8450, %v8681
    %8683 = vmatmul.bf16.gmra.mxu0 %v8315
    %v8684 = vpop.f32.mrf.mxu0
    %v8685 = vadd.f32 %v8450, %v8684
    %v8686 = vpop.f32.mrf.mxu0
    %v8687 = vadd.f32 %v8450, %v8686
    %8688 = vmatmul.bf16.gmra.mxu0 %v8316
    %v8689 = vpop.f32.mrf.mxu0
    %v8690 = vadd.f32 %v8450, %v8689
    %v8691 = vpop.f32.mrf.mxu0
    %v8692 = vadd.f32 %v8450, %v8691
    %8693 = vmatmul.bf16.gmra.mxu0 %v8317
    %v8694 = vpop.f32.mrf.mxu0
    %v8695 = vadd.f32 %v8450, %v8694
    %v8696 = vpop.f32.mrf.mxu0
    %v8697 = vadd.f32 %v8450, %v8696
    %8698 = vmatmul.bf16.gmra.mxu0 %v8318
    %v8699 = vpop.f32.mrf.mxu0
    %v8700 = vadd.f32 %v8450, %v8699
    %v8701 = vpop.f32.mrf.mxu0
    %v8702 = vadd.f32 %v8450, %v8701
    %8703 = vmatmul.bf16.gmra.mxu0 %v8319
    %v8704 = vpop.f32.mrf.mxu0
    %v8705 = vadd.f32 %v8450, %v8704
    %v8706 = vpop.f32.mrf.mxu0
    %v8707 = vadd.f32 %v8450, %v8706
    %8708 = vmatmul.bf16.gmra.mxu0 %v8320
    %v8709 = vpop.f32.mrf.mxu0
    %v8710 = vadd.f32 %v8450, %v8709
    %v8711 = vpop.f32.mrf.mxu0
    %v8712 = vadd.f32 %v8450, %v8711
    %8713 = vmatmul.bf16.gmra.mxu0 %v8321
    %v8714 = vpop.f32.mrf.mxu0
    %v8715 = vadd.f32 %v8450, %v8714
    %v8716 = vpop.f32.mrf.mxu0
    %v8717 = vadd.f32 %v8450, %v8716
    %8718 = vmatmul.bf16.gmra.mxu0 %v8322
    %v8719 = vpop.f32.mrf.mxu0
    %v8720 = vadd.f32 %v8450, %v8719
    %v8721 = vpop.f32.mrf.mxu0
    %v8722 = vadd.f32 %v8450, %v8721
    %8723 = vmatmul.bf16.gmra.mxu0 %v8323
    %v8724 = vpop.f32.mrf.mxu0
    %v8725 = vadd.f32 %v8450, %v8724
    %v8726 = vpop.f32.mrf.mxu0
    %v8727 = vadd.f32 %v8450, %v8726
    %8728 = vmatmul.bf16.gmra.mxu0 %v8324
    %v8729 = vpop.f32.mrf.mxu0
    %v8730 = vadd.f32 %v8450, %v8729
    %v8731 = vpop.f32.mrf.mxu0
    %v8732 = vadd.f32 %v8450, %v8731
    %8733 = vmatmul.bf16.gmra.mxu0 %v8325
    %v8734 = vpop.f32.mrf.mxu0
    %v8735 = vadd.f32 %v8450, %v8734
    %v8736 = vpop.f32.mrf.mxu0
    %v8737 = vadd.f32 %v8450, %v8736
    %8738 = vmatmul.bf16.gmra.mxu0 %v8326
    %v8739 = vpop.f32.mrf.mxu0
    %v8740 = vadd.f32 %v8450, %v8739
    %v8741 = vpop.f32.mrf.mxu0
    %v8742 = vadd.f32 %v8450, %v8741
    %8743 = vmatmul.bf16.gmra.mxu0 %v8327
    %v8744 = vpop.f32.mrf.mxu0
    %v8745 = vadd.f32 %v8450, %v8744
    %v8746 = vpop.f32.mrf.mxu0
    %v8747 = vadd.f32 %v8450, %v8746
    %8748 = vmatmul.bf16.gmra.mxu0 %v8328
    %v8749 = vpop.f32.mrf.mxu0
    %v8750 = vadd.f32 %v8450, %v8749
    %v8751 = vpop.f32.mrf.mxu0
    %v8752 = vadd.f32 %v8450, %v8751
    %8753 = vmatmul.bf16.gmra.mxu0 %v8329
    %v8754 = vpop.f32.mrf.mxu0
    %v8755 = vadd.f32 %v8450, %v8754
    %v8756 = vpop.f32.mrf.mxu0
    %v8757 = vadd.f32 %v8450, %v8756
    %8758 = vmatmul.bf16.gmra.mxu0 %v8330
    %v8759 = vpop.f32.mrf.mxu0
    %v8760 = vadd.f32 %v8450, %v8759
    %v8761 = vpop.f32.mrf.mxu0
    %v8762 = vadd.f32 %v8450, %v8761
    %8763 = vmatmul.bf16.gmra.mxu0 %v8331
    %v8764 = vpop.f32.mrf.mxu0
    %v8765 = vadd.f32 %v8450, %v8764
    %v8766 = vpop.f32.mrf.mxu0
    %v8767 = vadd.f32 %v8450, %v8766
    %8768 = vmatmul.bf16.gmra.mxu0 %v8332
    %v8769 = vpop.f32.mrf.mxu0
    %v8770 = vadd.f32 %v8450, %v8769
    %v8771 = vpop.f32.mrf.mxu0
    %v8772 = vadd.f32 %v8450, %v8771
    %8773 = vmatmul.bf16.gmra.mxu0 %v8333
    %v8774 = vpop.f32.mrf.mxu0
    %v8775 = vadd.f32 %v8450, %v8774
    %v8776 = vpop.f32.mrf.mxu0
    %v8777 = vadd.f32 %v8450, %v8776
    %8778 = vmatmul.bf16.gmra.mxu0 %v8334
    %v8779 = vpop.f32.mrf.mxu0
    %v8780 = vadd.f32 %v8450, %v8779
    %v8781 = vpop.f32.mrf.mxu0
    %v8782 = vadd.f32 %v8450, %v8781
    %8783 = vmatmul.bf16.gmra.mxu0 %v8335
    %v8784 = vpop.f32.mrf.mxu0
    %v8785 = vadd.f32 %v8450, %v8784
    %v8786 = vpop.f32.mrf.mxu0
    %v8787 = vadd.f32 %v8450, %v8786
    %8788 = vmatmul.bf16.gmra.mxu0 %v8336
    %v8789 = vpop.f32.mrf.mxu0
    %v8790 = vadd.f32 %v8450, %v8789
    %v8791 = vpop.f32.mrf.mxu0
    %v8792 = vadd.f32 %v8450, %v8791
    %8793 = vmatmul.bf16.gmra.mxu0 %v8337
    %v8794 = vpop.f32.mrf.mxu0
    %v8795 = vadd.f32 %v8450, %v8794
    %v8796 = vpop.f32.mrf.mxu0
    %v8797 = vadd.f32 %v8450, %v8796
    %8798 = vmatmul.bf16.gmra.mxu0 %v8338
    %v8799 = vpop.f32.mrf.mxu0
    %v8800 = vadd.f32 %v8450, %v8799
    %v8801 = vpop.f32.mrf.mxu0
    %v8802 = vadd.f32 %v8450, %v8801
    %8803 = vmatmul.bf16.gmra.mxu0 %v8339
    %v8804 = vpop.f32.mrf.mxu0
    %v8805 = vadd.f32 %v8450, %v8804
    %v8806 = vpop.f32.mrf.mxu0
    %v8807 = vadd.f32 %v8450, %v8806
    %8808 = vmatmul.bf16.gmra.mxu0 %v8340
    %v8809 = vpop.f32.mrf.mxu0
    %v8810 = vadd.f32 %v8450, %v8809
    %v8811 = vpop.f32.mrf.mxu0
    %v8812 = vadd.f32 %v8450, %v8811
    %8813 = vmatmul.bf16.gmra.mxu0 %v8341
    %v8814 = vpop.f32.mrf.mxu0
    %v8815 = vadd.f32 %v8450, %v8814
    %v8816 = vpop.f32.mrf.mxu0
    %v8817 = vadd.f32 %v8450, %v8816
    %8818 = vmatmul.bf16.gmra.mxu0 %v8342
    %v8819 = vpop.f32.mrf.mxu0
    %v8820 = vpop.f32.mrf.mxu0
    %8821 = vmatmul.bf16.gmra.mxu0 %v8343
    %v8822 = vpop.f32.mrf.mxu0
    %v8823 = vpop.f32.mrf.mxu0
    %8824 = vmatmul.bf16.gmra.mxu0 %v8344
    %v8825 = vpop.f32.mrf.mxu0
    %v8826 = vpop.f32.mrf.mxu0
    %8827 = vmatmul.bf16.gmra.mxu0 %v8345
    %v8828 = vpop.f32.mrf.mxu0
    %v8829 = vpop.f32.mrf.mxu0
    %8830 = vdwg.mxu0
    %8831 = vmatpush.bf16.msra.mxu0 %v8595
    %8832 = vmatpush.bf16.msra.mxu0 %v8594
    %8833 = vmatpush.bf16.msra.mxu0 %v8593
    %8834 = vmatpush.bf16.msra.mxu0 %v8592
    %8835 = vmatpush.bf16.msra.mxu0 %v8591
    %8836 = vmatpush.bf16.msra.mxu0 %v8590
    %8837 = vmatpush.bf16.msra.mxu0 %v8589
    %8838 = vmatpush.bf16.msra.mxu0 %v8588
    %8839 = vmatmul.bf16.gmra.mxu0 %v8310
    %v8840 = vpop.f32.mrf.mxu0
    %v8841 = vpop.f32.mrf.mxu0
    %8842 = vmatmul.bf16.gmra.mxu0 %v8311
    %v8843 = vpop.f32.mrf.mxu0
    %v8844 = vpop.f32.mrf.mxu0
    %8845 = vmatmul.bf16.gmra.mxu0 %v8312
    %v8846 = vpop.f32.mrf.mxu0
    %v8847 = vadd.f32 %v8660, %v8846
    %v8848 = vpop.f32.mrf.mxu0
    %v8849 = vadd.f32 %v8662, %v8848
    %8850 = vmatmul.bf16.gmra.mxu0 %v8313
    %v8851 = vpop.f32.mrf.mxu0
    %v8852 = vadd.f32 %v8665, %v8851
    %v8853 = vpop.f32.mrf.mxu0
    %v8854 = vadd.f32 %v8667, %v8853
    %8855 = vmatmul.bf16.gmra.mxu0 %v8314
    %v8856 = vpop.f32.mrf.mxu0
    %v8857 = vadd.f32 %v8670, %v8856
    %v8858 = vpop.f32.mrf.mxu0
    %v8859 = vadd.f32 %v8672, %v8858
    %8860 = vmatmul.bf16.gmra.mxu0 %v8315
    %v8861 = vpop.f32.mrf.mxu0
    %v8862 = vadd.f32 %v8675, %v8861
    %v8863 = vpop.f32.mrf.mxu0
    %v8864 = vadd.f32 %v8677, %v8863
    %8865 = vmatmul.bf16.gmra.mxu0 %v8316
    %v8866 = vpop.f32.mrf.mxu0
    %v8867 = vadd.f32 %v8680, %v8866
    %v8868 = vpop.f32.mrf.mxu0
    %v8869 = vadd.f32 %v8682, %v8868
    %8870 = vmatmul.bf16.gmra.mxu0 %v8317
    %v8871 = vpop.f32.mrf.mxu0
    %v8872 = vadd.f32 %v8685, %v8871
    %v8873 = vpop.f32.mrf.mxu0
    %v8874 = vadd.f32 %v8687, %v8873
    %8875 = vmatmul.bf16.gmra.mxu0 %v8318
    %v8876 = vpop.f32.mrf.mxu0
    %v8877 = vadd.f32 %v8690, %v8876
    %v8878 = vpop.f32.mrf.mxu0
    %v8879 = vadd.f32 %v8692, %v8878
    %8880 = vmatmul.bf16.gmra.mxu0 %v8319
    %v8881 = vpop.f32.mrf.mxu0
    %v8882 = vadd.f32 %v8695, %v8881
    %v8883 = vpop.f32.mrf.mxu0
    %v8884 = vadd.f32 %v8697, %v8883
    %8885 = vmatmul.bf16.gmra.mxu0 %v8320
    %v8886 = vpop.f32.mrf.mxu0
    %v8887 = vadd.f32 %v8700, %v8886
    %v8888 = vpop.f32.mrf.mxu0
    %v8889 = vadd.f32 %v8702, %v8888
    %8890 = vmatmul.bf16.gmra.mxu0 %v8321
    %v8891 = vpop.f32.mrf.mxu0
    %v8892 = vadd.f32 %v8705, %v8891
    %v8893 = vpop.f32.mrf.mxu0
    %v8894 = vadd.f32 %v8707, %v8893
    %8895 = vmatmul.bf16.gmra.mxu0 %v8322
    %v8896 = vpop.f32.mrf.mxu0
    %v8897 = vadd.f32 %v8710, %v8896
    %v8898 = vpop.f32.mrf.mxu0
    %v8899 = vadd.f32 %v8712, %v8898
    %8900 = vmatmul.bf16.gmra.mxu0 %v8323
    %v8901 = vpop.f32.mrf.mxu0
    %v8902 = vadd.f32 %v8715, %v8901
    %v8903 = vpop.f32.mrf.mxu0
    %v8904 = vadd.f32 %v8717, %v8903
    %8905 = vmatmul.bf16.gmra.mxu0 %v8324
    %v8906 = vpop.f32.mrf.mxu0
    %v8907 = vadd.f32 %v8720, %v8906
    %v8908 = vpop.f32.mrf.mxu0
    %v8909 = vadd.f32 %v8722, %v8908
    %8910 = vmatmul.bf16.gmra.mxu0 %v8325
    %v8911 = vpop.f32.mrf.mxu0
    %v8912 = vadd.f32 %v8725, %v8911
    %v8913 = vpop.f32.mrf.mxu0
    %v8914 = vadd.f32 %v8727, %v8913
    %8915 = vmatmul.bf16.gmra.mxu0 %v8326
    %v8916 = vpop.f32.mrf.mxu0
    %v8917 = vadd.f32 %v8730, %v8916
    %v8918 = vpop.f32.mrf.mxu0
    %v8919 = vadd.f32 %v8732, %v8918
    %8920 = vmatmul.bf16.gmra.mxu0 %v8327
    %v8921 = vpop.f32.mrf.mxu0
    %v8922 = vadd.f32 %v8735, %v8921
    %v8923 = vpop.f32.mrf.mxu0
    %v8924 = vadd.f32 %v8737, %v8923
    %8925 = vmatmul.bf16.gmra.mxu0 %v8328
    %v8926 = vpop.f32.mrf.mxu0
    %v8927 = vadd.f32 %v8740, %v8926
    %v8928 = vpop.f32.mrf.mxu0
    %v8929 = vadd.f32 %v8742, %v8928
    %8930 = vmatmul.bf16.gmra.mxu0 %v8329
    %v8931 = vpop.f32.mrf.mxu0
    %v8932 = vadd.f32 %v8745, %v8931
    %v8933 = vpop.f32.mrf.mxu0
    %v8934 = vadd.f32 %v8747, %v8933
    %8935 = vmatmul.bf16.gmra.mxu0 %v8330
    %v8936 = vpop.f32.mrf.mxu0
    %v8937 = vadd.f32 %v8750, %v8936
    %v8938 = vpop.f32.mrf.mxu0
    %v8939 = vadd.f32 %v8752, %v8938
    %8940 = vmatmul.bf16.gmra.mxu0 %v8331
    %v8941 = vpop.f32.mrf.mxu0
    %v8942 = vadd.f32 %v8755, %v8941
    %v8943 = vpop.f32.mrf.mxu0
    %v8944 = vadd.f32 %v8757, %v8943
    %8945 = vmatmul.bf16.gmra.mxu0 %v8332
    %v8946 = vpop.f32.mrf.mxu0
    %v8947 = vadd.f32 %v8760, %v8946
    %v8948 = vpop.f32.mrf.mxu0
    %v8949 = vadd.f32 %v8762, %v8948
    %8950 = vmatmul.bf16.gmra.mxu0 %v8333
    %v8951 = vpop.f32.mrf.mxu0
    %v8952 = vadd.f32 %v8765, %v8951
    %v8953 = vpop.f32.mrf.mxu0
    %v8954 = vadd.f32 %v8767, %v8953
    %8955 = vmatmul.bf16.gmra.mxu0 %v8334
    %v8956 = vpop.f32.mrf.mxu0
    %v8957 = vadd.f32 %v8770, %v8956
    %v8958 = vpop.f32.mrf.mxu0
    %v8959 = vadd.f32 %v8772, %v8958
    %8960 = vmatmul.bf16.gmra.mxu0 %v8335
    %v8961 = vpop.f32.mrf.mxu0
    %v8962 = vadd.f32 %v8775, %v8961
    %v8963 = vpop.f32.mrf.mxu0
    %v8964 = vadd.f32 %v8777, %v8963
    %8965 = vmatmul.bf16.gmra.mxu0 %v8336
    %v8966 = vpop.f32.mrf.mxu0
    %v8967 = vadd.f32 %v8780, %v8966
    %v8968 = vpop.f32.mrf.mxu0
    %v8969 = vadd.f32 %v8782, %v8968
    %8970 = vmatmul.bf16.gmra.mxu0 %v8337
    %v8971 = vpop.f32.mrf.mxu0
    %v8972 = vadd.f32 %v8785, %v8971
    %v8973 = vpop.f32.mrf.mxu0
    %v8974 = vadd.f32 %v8787, %v8973
    %8975 = vmatmul.bf16.gmra.mxu0 %v8338
    %v8976 = vpop.f32.mrf.mxu0
    %v8977 = vadd.f32 %v8790, %v8976
    %v8978 = vpop.f32.mrf.mxu0
    %v8979 = vadd.f32 %v8792, %v8978
    %8980 = vmatmul.bf16.gmra.mxu0 %v8339
    %v8981 = vpop.f32.mrf.mxu0
    %v8982 = vadd.f32 %v8795, %v8981
    %v8983 = vpop.f32.mrf.mxu0
    %v8984 = vadd.f32 %v8797, %v8983
    %8985 = vmatmul.bf16.gmra.mxu0 %v8340
    %v8986 = vpop.f32.mrf.mxu0
    %v8987 = vadd.f32 %v8800, %v8986
    %v8988 = vpop.f32.mrf.mxu0
    %v8989 = vadd.f32 %v8802, %v8988
    %8990 = vmatmul.bf16.gmra.mxu0 %v8341
    %v8991 = vpop.f32.mrf.mxu0
    %v8992 = vadd.f32 %v8805, %v8991
    %v8993 = vpop.f32.mrf.mxu0
    %v8994 = vadd.f32 %v8807, %v8993
    %8995 = vmatmul.bf16.gmra.mxu0 %v8342
    %v8996 = vpop.f32.mrf.mxu0
    %v8997 = vadd.f32 %v8810, %v8996
    %v8998 = vpop.f32.mrf.mxu0
    %v8999 = vadd.f32 %v8812, %v8998
    %9000 = vmatmul.bf16.gmra.mxu0 %v8343
    %v9001 = vpop.f32.mrf.mxu0
    %v9002 = vadd.f32 %v8815, %v9001
    %v9003 = vpop.f32.mrf.mxu0
    %v9004 = vadd.f32 %v8817, %v9003
    %9005 = vmatmul.bf16.gmra.mxu0 %v8344
    %v9006 = vpop.f32.mrf.mxu0
    %v9007 = vpop.f32.mrf.mxu0
    %9008 = vmatmul.bf16.gmra.mxu0 %v8345
    %v9009 = vpop.f32.mrf.mxu0
    %v9010 = vpop.f32.mrf.mxu0
    %9011 = vmatmul.bf16.gmra.mxu0 %v8162
    %v9012 = vpop.f32.mrf.mxu0
    %v9013 = vpop.f32.mrf.mxu0
    %9014 = vmatmul.bf16.gmra.mxu0 %v8163
    %v9015 = vpop.f32.mrf.mxu0
    %v9016 = vpop.f32.mrf.mxu0
    %9017 = vdwg.mxu0
    %9018 = vmatpush.bf16.msra.mxu0 %v8603
    %9019 = vmatpush.bf16.msra.mxu0 %v8602
    %9020 = vmatpush.bf16.msra.mxu0 %v8601
    %9021 = vmatpush.bf16.msra.mxu0 %v8600
    %9022 = vmatpush.bf16.msra.mxu0 %v8599
    %9023 = vmatpush.bf16.msra.mxu0 %v8598
    %9024 = vmatpush.bf16.msra.mxu0 %v8597
    %9025 = vmatpush.bf16.msra.mxu0 %v8596
    %9026 = vmatmul.bf16.gmra.mxu0 %v8312
    %v9027 = vpop.f32.mrf.mxu0
    %v9028 = vpop.f32.mrf.mxu0
    %9029 = vmatmul.bf16.gmra.mxu0 %v8313
    %v9030 = vpop.f32.mrf.mxu0
    %v9031 = vpop.f32.mrf.mxu0
    %9032 = vmatmul.bf16.gmra.mxu0 %v8314
    %v9033 = vpop.f32.mrf.mxu0
    %v9034 = vadd.f32 %v8847, %v9033
    %v9035 = vpop.f32.mrf.mxu0
    %v9036 = vadd.f32 %v8849, %v9035
    %9037 = vmatmul.bf16.gmra.mxu0 %v8315
    %v9038 = vpop.f32.mrf.mxu0
    %v9039 = vadd.f32 %v8852, %v9038
    %v9040 = vpop.f32.mrf.mxu0
    %v9041 = vadd.f32 %v8854, %v9040
    %9042 = vmatmul.bf16.gmra.mxu0 %v8316
    %v9043 = vpop.f32.mrf.mxu0
    %v9044 = vadd.f32 %v8857, %v9043
    %v9045 = vpop.f32.mrf.mxu0
    %v9046 = vadd.f32 %v8859, %v9045
    %9047 = vmatmul.bf16.gmra.mxu0 %v8317
    %v9048 = vpop.f32.mrf.mxu0
    %v9049 = vadd.f32 %v8862, %v9048
    %v9050 = vpop.f32.mrf.mxu0
    %v9051 = vadd.f32 %v8864, %v9050
    %9052 = vmatmul.bf16.gmra.mxu0 %v8318
    %v9053 = vpop.f32.mrf.mxu0
    %v9054 = vadd.f32 %v8867, %v9053
    %v9055 = vpop.f32.mrf.mxu0
    %v9056 = vadd.f32 %v8869, %v9055
    %9057 = vmatmul.bf16.gmra.mxu0 %v8319
    %v9058 = vpop.f32.mrf.mxu0
    %v9059 = vadd.f32 %v8872, %v9058
    %v9060 = vpop.f32.mrf.mxu0
    %v9061 = vadd.f32 %v8874, %v9060
    %9062 = vmatmul.bf16.gmra.mxu0 %v8320
    %v9063 = vpop.f32.mrf.mxu0
    %v9064 = vadd.f32 %v8877, %v9063
    %v9065 = vpop.f32.mrf.mxu0
    %v9066 = vadd.f32 %v8879, %v9065
    %9067 = vmatmul.bf16.gmra.mxu0 %v8321
    %v9068 = vpop.f32.mrf.mxu0
    %v9069 = vadd.f32 %v8882, %v9068
    %v9070 = vpop.f32.mrf.mxu0
    %v9071 = vadd.f32 %v8884, %v9070
    %9072 = vmatmul.bf16.gmra.mxu0 %v8322
    %v9073 = vpop.f32.mrf.mxu0
    %v9074 = vadd.f32 %v8887, %v9073
    %v9075 = vpop.f32.mrf.mxu0
    %v9076 = vadd.f32 %v8889, %v9075
    %9077 = vmatmul.bf16.gmra.mxu0 %v8323
    %v9078 = vpop.f32.mrf.mxu0
    %v9079 = vadd.f32 %v8892, %v9078
    %v9080 = vpop.f32.mrf.mxu0
    %v9081 = vadd.f32 %v8894, %v9080
    %9082 = vmatmul.bf16.gmra.mxu0 %v8324
    %v9083 = vpop.f32.mrf.mxu0
    %v9084 = vadd.f32 %v8897, %v9083
    %v9085 = vpop.f32.mrf.mxu0
    %v9086 = vadd.f32 %v8899, %v9085
    %9087 = vmatmul.bf16.gmra.mxu0 %v8325
    %v9088 = vpop.f32.mrf.mxu0
    %v9089 = vadd.f32 %v8902, %v9088
    %v9090 = vpop.f32.mrf.mxu0
    %v9091 = vadd.f32 %v8904, %v9090
    %9092 = vmatmul.bf16.gmra.mxu0 %v8326
    %v9093 = vpop.f32.mrf.mxu0
    %v9094 = vadd.f32 %v8907, %v9093
    %v9095 = vpop.f32.mrf.mxu0
    %v9096 = vadd.f32 %v8909, %v9095
    %9097 = vmatmul.bf16.gmra.mxu0 %v8327
    %v9098 = vpop.f32.mrf.mxu0
    %v9099 = vadd.f32 %v8912, %v9098
    %v9100 = vpop.f32.mrf.mxu0
    %v9101 = vadd.f32 %v8914, %v9100
    %9102 = vmatmul.bf16.gmra.mxu0 %v8328
    %v9103 = vpop.f32.mrf.mxu0
    %v9104 = vadd.f32 %v8917, %v9103
    %v9105 = vpop.f32.mrf.mxu0
    %v9106 = vadd.f32 %v8919, %v9105
    %9107 = vmatmul.bf16.gmra.mxu0 %v8329
    %v9108 = vpop.f32.mrf.mxu0
    %v9109 = vadd.f32 %v8922, %v9108
    %v9110 = vpop.f32.mrf.mxu0
    %v9111 = vadd.f32 %v8924, %v9110
    %9112 = vmatmul.bf16.gmra.mxu0 %v8330
    %v9113 = vpop.f32.mrf.mxu0
    %v9114 = vadd.f32 %v8927, %v9113
    %v9115 = vpop.f32.mrf.mxu0
    %v9116 = vadd.f32 %v8929, %v9115
    %9117 = vmatmul.bf16.gmra.mxu0 %v8331
    %v9118 = vpop.f32.mrf.mxu0
    %v9119 = vadd.f32 %v8932, %v9118
    %v9120 = vpop.f32.mrf.mxu0
    %v9121 = vadd.f32 %v8934, %v9120
    %9122 = vmatmul.bf16.gmra.mxu0 %v8332
    %v9123 = vpop.f32.mrf.mxu0
    %v9124 = vadd.f32 %v8937, %v9123
    %v9125 = vpop.f32.mrf.mxu0
    %v9126 = vadd.f32 %v8939, %v9125
    %9127 = vmatmul.bf16.gmra.mxu0 %v8333
    %v9128 = vpop.f32.mrf.mxu0
    %v9129 = vadd.f32 %v8942, %v9128
    %v9130 = vpop.f32.mrf.mxu0
    %v9131 = vadd.f32 %v8944, %v9130
    %9132 = vmatmul.bf16.gmra.mxu0 %v8334
    %v9133 = vpop.f32.mrf.mxu0
    %v9134 = vadd.f32 %v8947, %v9133
    %v9135 = vpop.f32.mrf.mxu0
    %v9136 = vadd.f32 %v8949, %v9135
    %9137 = vmatmul.bf16.gmra.mxu0 %v8335
    %v9138 = vpop.f32.mrf.mxu0
    %v9139 = vadd.f32 %v8952, %v9138
    %v9140 = vpop.f32.mrf.mxu0
    %v9141 = vadd.f32 %v8954, %v9140
    %9142 = vmatmul.bf16.gmra.mxu0 %v8336
    %v9143 = vpop.f32.mrf.mxu0
    %v9144 = vadd.f32 %v8957, %v9143
    %v9145 = vpop.f32.mrf.mxu0
    %v9146 = vadd.f32 %v8959, %v9145
    %9147 = vmatmul.bf16.gmra.mxu0 %v8337
    %v9148 = vpop.f32.mrf.mxu0
    %v9149 = vadd.f32 %v8962, %v9148
    %v9150 = vpop.f32.mrf.mxu0
    %v9151 = vadd.f32 %v8964, %v9150
    %9152 = vmatmul.bf16.gmra.mxu0 %v8338
    %v9153 = vpop.f32.mrf.mxu0
    %v9154 = vadd.f32 %v8967, %v9153
    %v9155 = vpop.f32.mrf.mxu0
    %v9156 = vadd.f32 %v8969, %v9155
    %9157 = vmatmul.bf16.gmra.mxu0 %v8339
    %v9158 = vpop.f32.mrf.mxu0
    %v9159 = vadd.f32 %v8972, %v9158
    %v9160 = vpop.f32.mrf.mxu0
    %v9161 = vadd.f32 %v8974, %v9160
    %9162 = vmatmul.bf16.gmra.mxu0 %v8340
    %v9163 = vpop.f32.mrf.mxu0
    %v9164 = vadd.f32 %v8977, %v9163
    %v9165 = vpop.f32.mrf.mxu0
    %v9166 = vadd.f32 %v8979, %v9165
    %9167 = vmatmul.bf16.gmra.mxu0 %v8341
    %v9168 = vpop.f32.mrf.mxu0
    %v9169 = vadd.f32 %v8982, %v9168
    %v9170 = vpop.f32.mrf.mxu0
    %v9171 = vadd.f32 %v8984, %v9170
    %9172 = vmatmul.bf16.gmra.mxu0 %v8342
    %v9173 = vpop.f32.mrf.mxu0
    %v9174 = vadd.f32 %v8987, %v9173
    %v9175 = vpop.f32.mrf.mxu0
    %v9176 = vadd.f32 %v8989, %v9175
    %9177 = vmatmul.bf16.gmra.mxu0 %v8343
    %v9178 = vpop.f32.mrf.mxu0
    %v9179 = vadd.f32 %v8992, %v9178
    %v9180 = vpop.f32.mrf.mxu0
    %v9181 = vadd.f32 %v8994, %v9180
    %9182 = vmatmul.bf16.gmra.mxu0 %v8344
    %v9183 = vpop.f32.mrf.mxu0
    %v9184 = vadd.f32 %v8997, %v9183
    %v9185 = vpop.f32.mrf.mxu0
    %v9186 = vadd.f32 %v8999, %v9185
    %9187 = vmatmul.bf16.gmra.mxu0 %v8345
    %v9188 = vpop.f32.mrf.mxu0
    %v9189 = vadd.f32 %v9002, %v9188
    %v9190 = vpop.f32.mrf.mxu0
    %v9191 = vadd.f32 %v9004, %v9190
    %9192 = vmatmul.bf16.gmra.mxu0 %v8162
    %v9193 = vpop.f32.mrf.mxu0
    %v9194 = vpop.f32.mrf.mxu0
    %9195 = vmatmul.bf16.gmra.mxu0 %v8163
    %v9196 = vpop.f32.mrf.mxu0
    %v9197 = vpop.f32.mrf.mxu0
    %9198 = vmatmul.bf16.gmra.mxu0 %v8310
    %v9199 = vpop.f32.mrf.mxu0
    %v9200 = vpop.f32.mrf.mxu0
    %9201 = vmatmul.bf16.gmra.mxu0 %v8311
    %v9202 = vpop.f32.mrf.mxu0
    %v9203 = vpop.f32.mrf.mxu0
    %9204 = vdwg.mxu0
    %9205 = vmatpush.bf16.msra.mxu0 %v8611
    %9206 = vmatpush.bf16.msra.mxu0 %v8610
    %9207 = vmatpush.bf16.msra.mxu0 %v8609
    %9208 = vmatpush.bf16.msra.mxu0 %v8608
    %9209 = vmatpush.bf16.msra.mxu0 %v8607
    %9210 = vmatpush.bf16.msra.mxu0 %v8606
    %9211 = vmatpush.bf16.msra.mxu0 %v8605
    %9212 = vmatpush.bf16.msra.mxu0 %v8604
    %9213 = vmatmul.bf16.gmra.mxu0 %v8314
    %v9214 = vpop.f32.mrf.mxu0
    %v9215 = vpop.f32.mrf.mxu0
    %9216 = vmatmul.bf16.gmra.mxu0 %v8315
    %v9217 = vpop.f32.mrf.mxu0
    %v9218 = vpop.f32.mrf.mxu0
    %9219 = vmatmul.bf16.gmra.mxu0 %v8316
    %v9220 = vpop.f32.mrf.mxu0
    %v9221 = vadd.f32 %v9034, %v9220
    %v9222 = vpop.f32.mrf.mxu0
    %v9223 = vadd.f32 %v9036, %v9222
    %9224 = vmatmul.bf16.gmra.mxu0 %v8317
    %v9225 = vpop.f32.mrf.mxu0
    %v9226 = vadd.f32 %v9039, %v9225
    %v9227 = vpop.f32.mrf.mxu0
    %v9228 = vadd.f32 %v9041, %v9227
    %9229 = vmatmul.bf16.gmra.mxu0 %v8318
    %v9230 = vpop.f32.mrf.mxu0
    %v9231 = vadd.f32 %v9044, %v9230
    %v9232 = vpop.f32.mrf.mxu0
    %v9233 = vadd.f32 %v9046, %v9232
    %9234 = vmatmul.bf16.gmra.mxu0 %v8319
    %v9235 = vpop.f32.mrf.mxu0
    %v9236 = vadd.f32 %v9049, %v9235
    %v9237 = vpop.f32.mrf.mxu0
    %v9238 = vadd.f32 %v9051, %v9237
    %9239 = vmatmul.bf16.gmra.mxu0 %v8320
    %v9240 = vpop.f32.mrf.mxu0
    %v9241 = vadd.f32 %v9054, %v9240
    %v9242 = vpop.f32.mrf.mxu0
    %v9243 = vadd.f32 %v9056, %v9242
    %9244 = vmatmul.bf16.gmra.mxu0 %v8321
    %v9245 = vpop.f32.mrf.mxu0
    %v9246 = vadd.f32 %v9059, %v9245
    %v9247 = vpop.f32.mrf.mxu0
    %v9248 = vadd.f32 %v9061, %v9247
    %9249 = vmatmul.bf16.gmra.mxu0 %v8322
    %v9250 = vpop.f32.mrf.mxu0
    %v9251 = vadd.f32 %v9064, %v9250
    %v9252 = vpop.f32.mrf.mxu0
    %v9253 = vadd.f32 %v9066, %v9252
    %9254 = vmatmul.bf16.gmra.mxu0 %v8323
    %v9255 = vpop.f32.mrf.mxu0
    %v9256 = vadd.f32 %v9069, %v9255
    %v9257 = vpop.f32.mrf.mxu0
    %v9258 = vadd.f32 %v9071, %v9257
    %9259 = vmatmul.bf16.gmra.mxu0 %v8324
    %v9260 = vpop.f32.mrf.mxu0
    %v9261 = vadd.f32 %v9074, %v9260
    %v9262 = vpop.f32.mrf.mxu0
    %v9263 = vadd.f32 %v9076, %v9262
    %9264 = vmatmul.bf16.gmra.mxu0 %v8325
    %v9265 = vpop.f32.mrf.mxu0
    %v9266 = vadd.f32 %v9079, %v9265
    %v9267 = vpop.f32.mrf.mxu0
    %v9268 = vadd.f32 %v9081, %v9267
    %9269 = vmatmul.bf16.gmra.mxu0 %v8326
    %v9270 = vpop.f32.mrf.mxu0
    %v9271 = vadd.f32 %v9084, %v9270
    %v9272 = vpop.f32.mrf.mxu0
    %v9273 = vadd.f32 %v9086, %v9272
    %9274 = vmatmul.bf16.gmra.mxu0 %v8327
    %v9275 = vpop.f32.mrf.mxu0
    %v9276 = vadd.f32 %v9089, %v9275
    %v9277 = vpop.f32.mrf.mxu0
    %v9278 = vadd.f32 %v9091, %v9277
    %9279 = vmatmul.bf16.gmra.mxu0 %v8328
    %v9280 = vpop.f32.mrf.mxu0
    %v9281 = vadd.f32 %v9094, %v9280
    %v9282 = vpop.f32.mrf.mxu0
    %v9283 = vadd.f32 %v9096, %v9282
    %9284 = vmatmul.bf16.gmra.mxu0 %v8329
    %v9285 = vpop.f32.mrf.mxu0
    %v9286 = vadd.f32 %v9099, %v9285
    %v9287 = vpop.f32.mrf.mxu0
    %v9288 = vadd.f32 %v9101, %v9287
    %9289 = vmatmul.bf16.gmra.mxu0 %v8330
    %v9290 = vpop.f32.mrf.mxu0
    %v9291 = vadd.f32 %v9104, %v9290
    %v9292 = vpop.f32.mrf.mxu0
    %v9293 = vadd.f32 %v9106, %v9292
    %9294 = vmatmul.bf16.gmra.mxu0 %v8331
    %v9295 = vpop.f32.mrf.mxu0
    %v9296 = vadd.f32 %v9109, %v9295
    %v9297 = vpop.f32.mrf.mxu0
    %v9298 = vadd.f32 %v9111, %v9297
    %9299 = vmatmul.bf16.gmra.mxu0 %v8332
    %v9300 = vpop.f32.mrf.mxu0
    %v9301 = vadd.f32 %v9114, %v9300
    %v9302 = vpop.f32.mrf.mxu0
    %v9303 = vadd.f32 %v9116, %v9302
    %9304 = vmatmul.bf16.gmra.mxu0 %v8333
    %v9305 = vpop.f32.mrf.mxu0
    %v9306 = vadd.f32 %v9119, %v9305
    %v9307 = vpop.f32.mrf.mxu0
    %v9308 = vadd.f32 %v9121, %v9307
    %9309 = vmatmul.bf16.gmra.mxu0 %v8334
    %v9310 = vpop.f32.mrf.mxu0
    %v9311 = vadd.f32 %v9124, %v9310
    %v9312 = vpop.f32.mrf.mxu0
    %v9313 = vadd.f32 %v9126, %v9312
    %9314 = vmatmul.bf16.gmra.mxu0 %v8335
    %v9315 = vpop.f32.mrf.mxu0
    %v9316 = vadd.f32 %v9129, %v9315
    %v9317 = vpop.f32.mrf.mxu0
    %v9318 = vadd.f32 %v9131, %v9317
    %9319 = vmatmul.bf16.gmra.mxu0 %v8336
    %v9320 = vpop.f32.mrf.mxu0
    %v9321 = vadd.f32 %v9134, %v9320
    %v9322 = vpop.f32.mrf.mxu0
    %v9323 = vadd.f32 %v9136, %v9322
    %9324 = vmatmul.bf16.gmra.mxu0 %v8337
    %v9325 = vpop.f32.mrf.mxu0
    %v9326 = vadd.f32 %v9139, %v9325
    %v9327 = vpop.f32.mrf.mxu0
    %v9328 = vadd.f32 %v9141, %v9327
    %9329 = vmatmul.bf16.gmra.mxu0 %v8338
    %v9330 = vpop.f32.mrf.mxu0
    %v9331 = vadd.f32 %v9144, %v9330
    %v9332 = vpop.f32.mrf.mxu0
    %v9333 = vadd.f32 %v9146, %v9332
    %9334 = vmatmul.bf16.gmra.mxu0 %v8339
    %v9335 = vpop.f32.mrf.mxu0
    %v9336 = vadd.f32 %v9149, %v9335
    %v9337 = vpop.f32.mrf.mxu0
    %v9338 = vadd.f32 %v9151, %v9337
    %9339 = vmatmul.bf16.gmra.mxu0 %v8340
    %v9340 = vpop.f32.mrf.mxu0
    %v9341 = vadd.f32 %v9154, %v9340
    %v9342 = vpop.f32.mrf.mxu0
    %v9343 = vadd.f32 %v9156, %v9342
    %9344 = vmatmul.bf16.gmra.mxu0 %v8341
    %v9345 = vpop.f32.mrf.mxu0
    %v9346 = vadd.f32 %v9159, %v9345
    %v9347 = vpop.f32.mrf.mxu0
    %v9348 = vadd.f32 %v9161, %v9347
    %9349 = vmatmul.bf16.gmra.mxu0 %v8342
    %v9350 = vpop.f32.mrf.mxu0
    %v9351 = vadd.f32 %v9164, %v9350
    %v9352 = vpop.f32.mrf.mxu0
    %v9353 = vadd.f32 %v9166, %v9352
    %9354 = vmatmul.bf16.gmra.mxu0 %v8343
    %v9355 = vpop.f32.mrf.mxu0
    %v9356 = vadd.f32 %v9169, %v9355
    %v9357 = vpop.f32.mrf.mxu0
    %v9358 = vadd.f32 %v9171, %v9357
    %9359 = vmatmul.bf16.gmra.mxu0 %v8344
    %v9360 = vpop.f32.mrf.mxu0
    %v9361 = vadd.f32 %v9174, %v9360
    %v9362 = vpop.f32.mrf.mxu0
    %v9363 = vadd.f32 %v9176, %v9362
    %9364 = vmatmul.bf16.gmra.mxu0 %v8345
    %v9365 = vpop.f32.mrf.mxu0
    %v9366 = vadd.f32 %v9179, %v9365
    %v9367 = vpop.f32.mrf.mxu0
    %v9368 = vadd.f32 %v9181, %v9367
    %9369 = vmatmul.bf16.gmra.mxu0 %v8162
    %v9370 = vpop.f32.mrf.mxu0
    %v9371 = vadd.f32 %v9184, %v9370
    %v9372 = vpop.f32.mrf.mxu0
    %v9373 = vadd.f32 %v9186, %v9372
    %9374 = vmatmul.bf16.gmra.mxu0 %v8163
    %v9375 = vpop.f32.mrf.mxu0
    %v9376 = vadd.f32 %v9189, %v9375
    %v9377 = vpop.f32.mrf.mxu0
    %v9378 = vadd.f32 %v9191, %v9377
    %9379 = vmatmul.bf16.gmra.mxu0 %v8310
    %v9380 = vpop.f32.mrf.mxu0
    %v9381 = vpop.f32.mrf.mxu0
    %9382 = vmatmul.bf16.gmra.mxu0 %v8311
    %v9383 = vpop.f32.mrf.mxu0
    %v9384 = vpop.f32.mrf.mxu0
    %9385 = vmatmul.bf16.gmra.mxu0 %v8312
    %v9386 = vpop.f32.mrf.mxu0
    %v9387 = vpop.f32.mrf.mxu0
    %9388 = vmatmul.bf16.gmra.mxu0 %v8313
    %v9389 = vpop.f32.mrf.mxu0
    %v9390 = vpop.f32.mrf.mxu0
    %9391 = vdwg.mxu0
    %v9392 = vmax.f32 %v9221, 0.0
    %v9393 = vmax.f32 %v9223, 0.0
    %v9394 = vmax.f32 %v9226, 0.0
    %v9395 = vmax.f32 %v9228, 0.0
    %v9396 = vmax.f32 %v9231, 0.0
    %v9397 = vmax.f32 %v9233, 0.0
    %v9398 = vmax.f32 %v9236, 0.0
    %v9399 = vmax.f32 %v9238, 0.0
    %v9400 = vmax.f32 %v9241, 0.0
    %v9401 = vmax.f32 %v9243, 0.0
    %v9402 = vmax.f32 %v9246, 0.0
    %v9403 = vmax.f32 %v9248, 0.0
    %v9404 = vmax.f32 %v9251, 0.0
    %v9405 = vmax.f32 %v9253, 0.0
    %v9406 = vmax.f32 %v9256, 0.0
    %v9407 = vmax.f32 %v9258, 0.0
    %v9408 = vmax.f32 %v9261, 0.0
    %v9409 = vmax.f32 %v9263, 0.0
    %v9410 = vmax.f32 %v9266, 0.0
    %v9411 = vmax.f32 %v9268, 0.0
    %v9412 = vmax.f32 %v9271, 0.0
    %v9413 = vmax.f32 %v9273, 0.0
    %v9414 = vmax.f32 %v9276, 0.0
    %v9415 = vmax.f32 %v9278, 0.0
    %v9416 = vmax.f32 %v9281, 0.0
    %v9417 = vmax.f32 %v9283, 0.0
    %v9418 = vmax.f32 %v9286, 0.0
    %v9419 = vmax.f32 %v9288, 0.0
    %v9420 = vmax.f32 %v9291, 0.0
    %v9421 = vmax.f32 %v9293, 0.0
    %v9422 = vmax.f32 %v9296, 0.0
    %v9423 = vmax.f32 %v9298, 0.0
    %v9424 = vmax.f32 %v9301, 0.0
    %v9425 = vmax.f32 %v9303, 0.0
    %v9426 = vmax.f32 %v9306, 0.0
    %v9427 = vmax.f32 %v9308, 0.0
    %v9428 = vmax.f32 %v9311, 0.0
    %v9429 = vmax.f32 %v9313, 0.0
    %v9430 = vmax.f32 %v9316, 0.0
    %v9431 = vmax.f32 %v9318, 0.0
    %v9432 = vmax.f32 %v9321, 0.0
    %v9433 = vmax.f32 %v9323, 0.0
    %v9434 = vmax.f32 %v9326, 0.0
    %v9435 = vmax.f32 %v9328, 0.0
    %v9436 = vmax.f32 %v9331, 0.0
    %v9437 = vmax.f32 %v9333, 0.0
    %v9438 = vmax.f32 %v9336, 0.0
    %v9439 = vmax.f32 %v9338, 0.0
    %v9440 = vmax.f32 %v9341, 0.0
    %v9441 = vmax.f32 %v9343, 0.0
    %v9442 = vmax.f32 %v9346, 0.0
    %v9443 = vmax.f32 %v9348, 0.0
    %v9444 = vmax.f32 %v9351, 0.0
    %v9445 = vmax.f32 %v9353, 0.0
    %v9446 = vmax.f32 %v9356, 0.0
    %v9447 = vmax.f32 %v9358, 0.0
    %v9448 = vmax.f32 %v9361, 0.0
    %v9449 = vmax.f32 %v9363, 0.0
    %v9450 = vmax.f32 %v9366, 0.0
    %v9451 = vmax.f32 %v9368, 0.0
    %v9452 = vmax.f32 %v9371, 0.0
    %v9453 = vmax.f32 %v9373, 0.0
    %v9454 = vmax.f32 %v9376, 0.0
    %v9455 = vmax.f32 %v9378, 0.0
    %v9456 = vpack.c.bf16 %v9392, %v9392
    %v9457 = vpack.c.bf16 %v9393, %v9393
    %v9458 = vpack.c.bf16 %v9394, %v9394
    %v9459 = vpack.c.bf16 %v9395, %v9395
    %v9460 = vpack.c.bf16 %v9396, %v9396
    %v9461 = vpack.c.bf16 %v9397, %v9397
    %v9462 = vpack.c.bf16 %v9398, %v9398
    %v9463 = vpack.c.bf16 %v9399, %v9399
    %v9464 = vpack.c.bf16 %v9400, %v9400
    %v9465 = vpack.c.bf16 %v9401, %v9401
    %v9466 = vpack.c.bf16 %v9402, %v9402
    %v9467 = vpack.c.bf16 %v9403, %v9403
    %v9468 = vpack.c.bf16 %v9404, %v9404
    %v9469 = vpack.c.bf16 %v9405, %v9405
    %v9470 = vpack.c.bf16 %v9406, %v9406
    %v9471 = vpack.c.bf16 %v9407, %v9407
    %v9472 = vpack.c.bf16 %v9408, %v9408
    %v9473 = vpack.c.bf16 %v9409, %v9409
    %v9474 = vpack.c.bf16 %v9410, %v9410
    %v9475 = vpack.c.bf16 %v9411, %v9411
    %v9476 = vpack.c.bf16 %v9412, %v9412
    %v9477 = vpack.c.bf16 %v9413, %v9413
    %v9478 = vpack.c.bf16 %v9414, %v9414
    %v9479 = vpack.c.bf16 %v9415, %v9415
    %v9480 = vpack.c.bf16 %v9416, %v9416
    %v9481 = vpack.c.bf16 %v9417, %v9417
    %v9482 = vpack.c.bf16 %v9418, %v9418
    %v9483 = vpack.c.bf16 %v9419, %v9419
    %v9484 = vpack.c.bf16 %v9420, %v9420
    %v9485 = vpack.c.bf16 %v9421, %v9421
    %v9486 = vpack.c.bf16 %v9422, %v9422
    %v9487 = vpack.c.bf16 %v9423, %v9423
    %v9488 = vpack.c.bf16 %v9424, %v9424
    %v9489 = vpack.c.bf16 %v9425, %v9425
    %v9490 = vpack.c.bf16 %v9426, %v9426
    %v9491 = vpack.c.bf16 %v9427, %v9427
    %v9492 = vpack.c.bf16 %v9428, %v9428
    %v9493 = vpack.c.bf16 %v9429, %v9429
    %v9494 = vpack.c.bf16 %v9430, %v9430
    %v9495 = vpack.c.bf16 %v9431, %v9431
    %v9496 = vpack.c.bf16 %v9432, %v9432
    %v9497 = vpack.c.bf16 %v9433, %v9433
    %v9498 = vpack.c.bf16 %v9434, %v9434
    %v9499 = vpack.c.bf16 %v9435, %v9435
    %v9500 = vpack.c.bf16 %v9436, %v9436
    %v9501 = vpack.c.bf16 %v9437, %v9437
    %v9502 = vpack.c.bf16 %v9438, %v9438
    %v9503 = vpack.c.bf16 %v9439, %v9439
    %v9504 = vpack.c.bf16 %v9440, %v9440
    %v9505 = vpack.c.bf16 %v9441, %v9441
    %v9506 = vpack.c.bf16 %v9442, %v9442
    %v9507 = vpack.c.bf16 %v9443, %v9443
    %v9508 = vpack.c.bf16 %v9444, %v9444
    %v9509 = vpack.c.bf16 %v9445, %v9445
    %v9510 = vpack.c.bf16 %v9446, %v9446
    %v9511 = vpack.c.bf16 %v9447, %v9447
    %v9512 = vpack.c.bf16 %v9448, %v9448
    %v9513 = vpack.c.bf16 %v9449, %v9449
    %v9514 = vpack.c.bf16 %v9450, %v9450
    %v9515 = vpack.c.bf16 %v9451, %v9451
    %v9516 = vpack.c.bf16 %v9452, %v9452
    %v9517 = vpack.c.bf16 %v9453, %v9453
    %v9518 = vpack.c.bf16 %v9454, %v9454
    %v9519 = vpack.c.bf16 %v9455, %v9455
    %v9520 = vld [vmem:[#allocation5] sm:$0xf]
    %v9521 = vld [vmem:[#allocation5 + $0x4] sm:$0xf]
    %v9522 = vld [vmem:[#allocation5 + $0x8] sm:$0xf]
    %v9523 = vld [vmem:[#allocation5 + $0xc] sm:$0xf]
    %v9524 = vld [vmem:[#allocation5 + $0x10] sm:$0xf]
    %v9525 = vld [vmem:[#allocation5 + $0x14] sm:$0xf]
    %v9526 = vld [vmem:[#allocation5 + $0x18] sm:$0xf]
    %v9527 = vld [vmem:[#allocation5 + $0x1c] sm:$0xf]
    %v9528 = vld [vmem:[#allocation5 + $0x20] sm:$0xf]
    %v9529 = vld [vmem:[#allocation5 + $0x24] sm:$0xf]
    %v9530 = vld [vmem:[#allocation5 + $0x28] sm:$0xf]
    %v9531 = vld [vmem:[#allocation5 + $0x2c] sm:$0xf]
    %v9532 = vld [vmem:[#allocation5 + $0x30] sm:$0xf]
    %v9533 = vld [vmem:[#allocation5 + $0x34] sm:$0xf]
    %v9534 = vld [vmem:[#allocation5 + $0x38] sm:$0xf]
    %v9535 = vld [vmem:[#allocation5 + $0x3c] sm:$0xf]
    %s9536 = scalar_lea.vmem [#allocation5], 64
    %v9537 = vld [vmem:[%s9536] sm:$0xf]
    %v9538 = vld [vmem:[%s9536 + $0x4] sm:$0xf]
    %v9539 = vld [vmem:[%s9536 + $0x8] sm:$0xf]
    %v9540 = vld [vmem:[%s9536 + $0xc] sm:$0xf]
    %v9541 = vld [vmem:[%s9536 + $0x10] sm:$0xf]
    %v9542 = vld [vmem:[%s9536 + $0x14] sm:$0xf]
    %v9543 = vld [vmem:[%s9536 + $0x18] sm:$0xf]
    %v9544 = vld [vmem:[%s9536 + $0x1c] sm:$0xf]
    %v9545 = vld [vmem:[%s9536 + $0x20] sm:$0xf]
    %v9546 = vld [vmem:[%s9536 + $0x24] sm:$0xf]
    %v9547 = vld [vmem:[%s9536 + $0x28] sm:$0xf]
    %v9548 = vld [vmem:[%s9536 + $0x2c] sm:$0xf]
    %v9549 = vld [vmem:[%s9536 + $0x30] sm:$0xf]
    %v9550 = vld [vmem:[%s9536 + $0x34] sm:$0xf]
    %v9551 = vld [vmem:[%s9536 + $0x38] sm:$0xf]
    %v9552 = vld [vmem:[%s9536 + $0x3c] sm:$0xf]
    %v9557 = vunpack.c.l.b16 %v9460
    %v9558 = vunpack.c.l.b16 %v9461
    %v9559 = vunpack.c.l.b16 %v9462
    %v9560 = vunpack.c.l.b16 %v9463
    %v9561 = vpack.c.b16 %v9558, %v9557
    %v9562 = vpack.c.b16 %v9560, %v9559
    %v9581 = vunpack.c.l.b16 %v9537
    %v9582 = vunpack.c.l.b16 %v9538
    %v9583 = vunpack.c.l.b16 %v9539
    %v9584 = vunpack.c.l.b16 %v9540
    %v9585 = vunpack.c.l.b16 %v9541
    %v9586 = vunpack.c.l.b16 %v9542
    %v9587 = vunpack.c.l.b16 %v9543
    %v9588 = vunpack.c.l.b16 %v9544
    %v9589 = vunpack.c.l.b16 %v9545
    %v9590 = vunpack.c.l.b16 %v9546
    %v9591 = vunpack.c.l.b16 %v9547
    %v9592 = vunpack.c.l.b16 %v9548
    %v9593 = vunpack.c.l.b16 %v9549
    %v9594 = vunpack.c.l.b16 %v9550
    %v9595 = vunpack.c.l.b16 %v9551
    %v9596 = vunpack.c.l.b16 %v9552
    %v9597 = vpack.c.b16 %v9582, %v9581
    %v9598 = vpack.c.b16 %v9584, %v9583
    %v9599 = vpack.c.b16 %v9586, %v9585
    %v9600 = vpack.c.b16 %v9588, %v9587
    %v9601 = vpack.c.b16 %v9590, %v9589
    %v9602 = vpack.c.b16 %v9592, %v9591
    %v9603 = vpack.c.b16 %v9594, %v9593
    %v9604 = vpack.c.b16 %v9596, %v9595
    %9613 = vmatpush.bf16.msra.mxu0 %v9604
    %9614 = vmatpush.bf16.msra.mxu0 %v9603
    %9615 = vmatpush.bf16.msra.mxu0 %v9602
    %9616 = vmatpush.bf16.msra.mxu0 %v9601
    %9617 = vmatpush.bf16.msra.mxu0 %v9600
    %9618 = vmatpush.bf16.msra.mxu0 %v9599
    %9619 = vmatpush.bf16.msra.mxu0 %v9598
    %9620 = vmatpush.bf16.msra.mxu0 %v9597
    %9621 = vmatmul.bf16.gmra.mxu0 %v9561
    %v9622 = vpop.f32.mrf.mxu0
    %v9623 = vadd.f32 0.0, %v9622
    %v9624 = vpop.f32.mrf.mxu0
    %v9625 = vadd.f32 0.0, %v9624
    %9626 = vmatmul.bf16.gmra.mxu0 %v9562
    %v9627 = vpop.f32.mrf.mxu0
    %v9628 = vadd.f32 0.0, %v9627
    %v9629 = vpop.f32.mrf.mxu0
    %v9630 = vadd.f32 0.0, %v9629
    %9631 = vdwg.mxu0
    %v9636 = vunpack.c.l.b16 %v9456
    %v9637 = vunpack.c.l.b16 %v9457
    %v9638 = vunpack.c.l.b16 %v9458
    %v9639 = vunpack.c.l.b16 %v9459
    %v9640 = vpack.c.b16 %v9637, %v9636
    %v9641 = vpack.c.b16 %v9639, %v9638
    %v9660 = vunpack.c.l.b16 %v9520
    %v9661 = vunpack.c.l.b16 %v9521
    %v9662 = vunpack.c.l.b16 %v9522
    %v9663 = vunpack.c.l.b16 %v9523
    %v9664 = vunpack.c.l.b16 %v9524
    %v9665 = vunpack.c.l.b16 %v9525
    %v9666 = vunpack.c.l.b16 %v9526
    %v9667 = vunpack.c.l.b16 %v9527
    %v9668 = vunpack.c.l.b16 %v9528
    %v9669 = vunpack.c.l.b16 %v9529
    %v9670 = vunpack.c.l.b16 %v9530
    %v9671 = vunpack.c.l.b16 %v9531
    %v9672 = vunpack.c.l.b16 %v9532
    %v9673 = vunpack.c.l.b16 %v9533
    %v9674 = vunpack.c.l.b16 %v9534
    %v9675 = vunpack.c.l.b16 %v9535
    %v9676 = vpack.c.b16 %v9661, %v9660
    %v9677 = vpack.c.b16 %v9663, %v9662
    %v9678 = vpack.c.b16 %v9665, %v9664
    %v9679 = vpack.c.b16 %v9667, %v9666
    %v9680 = vpack.c.b16 %v9669, %v9668
    %v9681 = vpack.c.b16 %v9671, %v9670
    %v9682 = vpack.c.b16 %v9673, %v9672
    %v9683 = vpack.c.b16 %v9675, %v9674
    %9692 = vmatpush.bf16.msra.mxu0 %v9683
    %9693 = vmatpush.bf16.msra.mxu0 %v9682
    %9694 = vmatpush.bf16.msra.mxu0 %v9681
    %9695 = vmatpush.bf16.msra.mxu0 %v9680
    %9696 = vmatpush.bf16.msra.mxu0 %v9679
    %9697 = vmatpush.bf16.msra.mxu0 %v9678
    %9698 = vmatpush.bf16.msra.mxu0 %v9677
    %9699 = vmatpush.bf16.msra.mxu0 %v9676
    %9700 = vmatmul.bf16.gmra.mxu0 %v9640
    %v9701 = vpop.f32.mrf.mxu0
    %v9702 = vadd.f32 %v9623, %v9701
    %v9703 = vpop.f32.mrf.mxu0
    %v9704 = vadd.f32 %v9625, %v9703
    %9705 = vmatmul.bf16.gmra.mxu0 %v9641
    %v9706 = vpop.f32.mrf.mxu0
    %v9707 = vadd.f32 %v9628, %v9706
    %v9708 = vpop.f32.mrf.mxu0
    %v9709 = vadd.f32 %v9630, %v9708
    %9710 = vdwg.mxu0
    %s9711 = scalar_lea.vmem [#allocation5], 128
    %v9712 = vld [vmem:[%s9711] sm:$0xf]
    %v9713 = vld [vmem:[%s9711 + $0x4] sm:$0xf]
    %v9714 = vld [vmem:[%s9711 + $0x8] sm:$0xf]
    %v9715 = vld [vmem:[%s9711 + $0xc] sm:$0xf]
    %v9716 = vld [vmem:[%s9711 + $0x10] sm:$0xf]
    %v9717 = vld [vmem:[%s9711 + $0x14] sm:$0xf]
    %v9718 = vld [vmem:[%s9711 + $0x18] sm:$0xf]
    %v9719 = vld [vmem:[%s9711 + $0x1c] sm:$0xf]
    %v9720 = vld [vmem:[%s9711 + $0x20] sm:$0xf]
    %v9721 = vld [vmem:[%s9711 + $0x24] sm:$0xf]
    %v9722 = vld [vmem:[%s9711 + $0x28] sm:$0xf]
    %v9723 = vld [vmem:[%s9711 + $0x2c] sm:$0xf]
    %v9724 = vld [vmem:[%s9711 + $0x30] sm:$0xf]
    %v9725 = vld [vmem:[%s9711 + $0x34] sm:$0xf]
    %v9726 = vld [vmem:[%s9711 + $0x38] sm:$0xf]
    %v9727 = vld [vmem:[%s9711 + $0x3c] sm:$0xf]
    %v9732 = vunpack.c.l.b16 %v9464
    %v9733 = vunpack.c.l.b16 %v9465
    %v9734 = vunpack.c.l.b16 %v9466
    %v9735 = vunpack.c.l.b16 %v9467
    %v9736 = vpack.c.b16 %v9733, %v9732
    %v9737 = vpack.c.b16 %v9735, %v9734
    %v9756 = vunpack.c.l.b16 %v9712
    %v9757 = vunpack.c.l.b16 %v9713
    %v9758 = vunpack.c.l.b16 %v9714
    %v9759 = vunpack.c.l.b16 %v9715
    %v9760 = vunpack.c.l.b16 %v9716
    %v9761 = vunpack.c.l.b16 %v9717
    %v9762 = vunpack.c.l.b16 %v9718
    %v9763 = vunpack.c.l.b16 %v9719
    %v9764 = vunpack.c.l.b16 %v9720
    %v9765 = vunpack.c.l.b16 %v9721
    %v9766 = vunpack.c.l.b16 %v9722
    %v9767 = vunpack.c.l.b16 %v9723
    %v9768 = vunpack.c.l.b16 %v9724
    %v9769 = vunpack.c.l.b16 %v9725
    %v9770 = vunpack.c.l.b16 %v9726
    %v9771 = vunpack.c.l.b16 %v9727
    %v9772 = vpack.c.b16 %v9757, %v9756
    %v9773 = vpack.c.b16 %v9759, %v9758
    %v9774 = vpack.c.b16 %v9761, %v9760
    %v9775 = vpack.c.b16 %v9763, %v9762
    %v9776 = vpack.c.b16 %v9765, %v9764
    %v9777 = vpack.c.b16 %v9767, %v9766
    %v9778 = vpack.c.b16 %v9769, %v9768
    %v9779 = vpack.c.b16 %v9771, %v9770
    %9788 = vmatpush.bf16.msra.mxu0 %v9779
    %9789 = vmatpush.bf16.msra.mxu0 %v9778
    %9790 = vmatpush.bf16.msra.mxu0 %v9777
    %9791 = vmatpush.bf16.msra.mxu0 %v9776
    %9792 = vmatpush.bf16.msra.mxu0 %v9775
    %9793 = vmatpush.bf16.msra.mxu0 %v9774
    %9794 = vmatpush.bf16.msra.mxu0 %v9773
    %9795 = vmatpush.bf16.msra.mxu0 %v9772
    %9796 = vmatmul.bf16.gmra.mxu0 %v9736
    %v9797 = vpop.f32.mrf.mxu0
    %v9798 = vadd.f32 0.0, %v9797
    %v9799 = vpop.f32.mrf.mxu0
    %v9800 = vadd.f32 0.0, %v9799
    %9801 = vmatmul.bf16.gmra.mxu0 %v9737
    %v9802 = vpop.f32.mrf.mxu0
    %v9803 = vadd.f32 0.0, %v9802
    %v9804 = vpop.f32.mrf.mxu0
    %v9805 = vadd.f32 0.0, %v9804
    %9806 = vdwg.mxu0
    %v9807 = vadd.f32 %v9702, %v9798
    %v9808 = vadd.f32 %v9704, %v9800
    %v9809 = vadd.f32 %v9707, %v9803
    %v9810 = vadd.f32 %v9709, %v9805
    %s9811 = scalar_lea.vmem [#allocation5], 192
    %v9812 = vld [vmem:[%s9811] sm:$0xf]
    %v9813 = vld [vmem:[%s9811 + $0x4] sm:$0xf]
    %v9814 = vld [vmem:[%s9811 + $0x8] sm:$0xf]
    %v9815 = vld [vmem:[%s9811 + $0xc] sm:$0xf]
    %v9816 = vld [vmem:[%s9811 + $0x10] sm:$0xf]
    %v9817 = vld [vmem:[%s9811 + $0x14] sm:$0xf]
    %v9818 = vld [vmem:[%s9811 + $0x18] sm:$0xf]
    %v9819 = vld [vmem:[%s9811 + $0x1c] sm:$0xf]
    %v9820 = vld [vmem:[%s9811 + $0x20] sm:$0xf]
    %v9821 = vld [vmem:[%s9811 + $0x24] sm:$0xf]
    %v9822 = vld [vmem:[%s9811 + $0x28] sm:$0xf]
    %v9823 = vld [vmem:[%s9811 + $0x2c] sm:$0xf]
    %v9824 = vld [vmem:[%s9811 + $0x30] sm:$0xf]
    %v9825 = vld [vmem:[%s9811 + $0x34] sm:$0xf]
    %v9826 = vld [vmem:[%s9811 + $0x38] sm:$0xf]
    %v9827 = vld [vmem:[%s9811 + $0x3c] sm:$0xf]
    %v9832 = vunpack.c.l.b16 %v9468
    %v9833 = vunpack.c.l.b16 %v9469
    %v9834 = vunpack.c.l.b16 %v9470
    %v9835 = vunpack.c.l.b16 %v9471
    %v9836 = vpack.c.b16 %v9833, %v9832
    %v9837 = vpack.c.b16 %v9835, %v9834
    %v9856 = vunpack.c.l.b16 %v9812
    %v9857 = vunpack.c.l.b16 %v9813
    %v9858 = vunpack.c.l.b16 %v9814
    %v9859 = vunpack.c.l.b16 %v9815
    %v9860 = vunpack.c.l.b16 %v9816
    %v9861 = vunpack.c.l.b16 %v9817
    %v9862 = vunpack.c.l.b16 %v9818
    %v9863 = vunpack.c.l.b16 %v9819
    %v9864 = vunpack.c.l.b16 %v9820
    %v9865 = vunpack.c.l.b16 %v9821
    %v9866 = vunpack.c.l.b16 %v9822
    %v9867 = vunpack.c.l.b16 %v9823
    %v9868 = vunpack.c.l.b16 %v9824
    %v9869 = vunpack.c.l.b16 %v9825
    %v9870 = vunpack.c.l.b16 %v9826
    %v9871 = vunpack.c.l.b16 %v9827
    %v9872 = vpack.c.b16 %v9857, %v9856
    %v9873 = vpack.c.b16 %v9859, %v9858
    %v9874 = vpack.c.b16 %v9861, %v9860
    %v9875 = vpack.c.b16 %v9863, %v9862
    %v9876 = vpack.c.b16 %v9865, %v9864
    %v9877 = vpack.c.b16 %v9867, %v9866
    %v9878 = vpack.c.b16 %v9869, %v9868
    %v9879 = vpack.c.b16 %v9871, %v9870
    %9888 = vmatpush.bf16.msra.mxu0 %v9879
    %9889 = vmatpush.bf16.msra.mxu0 %v9878
    %9890 = vmatpush.bf16.msra.mxu0 %v9877
    %9891 = vmatpush.bf16.msra.mxu0 %v9876
    %9892 = vmatpush.bf16.msra.mxu0 %v9875
    %9893 = vmatpush.bf16.msra.mxu0 %v9874
    %9894 = vmatpush.bf16.msra.mxu0 %v9873
    %9895 = vmatpush.bf16.msra.mxu0 %v9872
    %9896 = vmatmul.bf16.gmra.mxu0 %v9836
    %v9897 = vpop.f32.mrf.mxu0
    %v9898 = vadd.f32 0.0, %v9897
    %v9899 = vpop.f32.mrf.mxu0
    %v9900 = vadd.f32 0.0, %v9899
    %9901 = vmatmul.bf16.gmra.mxu0 %v9837
    %v9902 = vpop.f32.mrf.mxu0
    %v9903 = vadd.f32 0.0, %v9902
    %v9904 = vpop.f32.mrf.mxu0
    %v9905 = vadd.f32 0.0, %v9904
    %9906 = vdwg.mxu0
    %v9907 = vadd.f32 %v9807, %v9898
    %v9908 = vadd.f32 %v9808, %v9900
    %v9909 = vadd.f32 %v9809, %v9903
    %v9910 = vadd.f32 %v9810, %v9905
    %s9911 = scalar_lea.vmem [#allocation5], 256
    %v9912 = vld [vmem:[%s9911] sm:$0xf]
    %v9913 = vld [vmem:[%s9911 + $0x4] sm:$0xf]
    %v9914 = vld [vmem:[%s9911 + $0x8] sm:$0xf]
    %v9915 = vld [vmem:[%s9911 + $0xc] sm:$0xf]
    %v9916 = vld [vmem:[%s9911 + $0x10] sm:$0xf]
    %v9917 = vld [vmem:[%s9911 + $0x14] sm:$0xf]
    %v9918 = vld [vmem:[%s9911 + $0x18] sm:$0xf]
    %v9919 = vld [vmem:[%s9911 + $0x1c] sm:$0xf]
    %v9920 = vld [vmem:[%s9911 + $0x20] sm:$0xf]
    %v9921 = vld [vmem:[%s9911 + $0x24] sm:$0xf]
    %v9922 = vld [vmem:[%s9911 + $0x28] sm:$0xf]
    %v9923 = vld [vmem:[%s9911 + $0x2c] sm:$0xf]
    %v9924 = vld [vmem:[%s9911 + $0x30] sm:$0xf]
    %v9925 = vld [vmem:[%s9911 + $0x34] sm:$0xf]
    %v9926 = vld [vmem:[%s9911 + $0x38] sm:$0xf]
    %v9927 = vld [vmem:[%s9911 + $0x3c] sm:$0xf]
    %v9932 = vunpack.c.l.b16 %v9472
    %v9933 = vunpack.c.l.b16 %v9473
    %v9934 = vunpack.c.l.b16 %v9474
    %v9935 = vunpack.c.l.b16 %v9475
    %v9936 = vpack.c.b16 %v9933, %v9932
    %v9937 = vpack.c.b16 %v9935, %v9934
    %v9956 = vunpack.c.l.b16 %v9912
    %v9957 = vunpack.c.l.b16 %v9913
    %v9958 = vunpack.c.l.b16 %v9914
    %v9959 = vunpack.c.l.b16 %v9915
    %v9960 = vunpack.c.l.b16 %v9916
    %v9961 = vunpack.c.l.b16 %v9917
    %v9962 = vunpack.c.l.b16 %v9918
    %v9963 = vunpack.c.l.b16 %v9919
    %v9964 = vunpack.c.l.b16 %v9920
    %v9965 = vunpack.c.l.b16 %v9921
    %v9966 = vunpack.c.l.b16 %v9922
    %v9967 = vunpack.c.l.b16 %v9923
    %v9968 = vunpack.c.l.b16 %v9924
    %v9969 = vunpack.c.l.b16 %v9925
    %v9970 = vunpack.c.l.b16 %v9926
    %v9971 = vunpack.c.l.b16 %v9927
    %v9972 = vpack.c.b16 %v9957, %v9956
    %v9973 = vpack.c.b16 %v9959, %v9958
    %v9974 = vpack.c.b16 %v9961, %v9960
    %v9975 = vpack.c.b16 %v9963, %v9962
    %v9976 = vpack.c.b16 %v9965, %v9964
    %v9977 = vpack.c.b16 %v9967, %v9966
    %v9978 = vpack.c.b16 %v9969, %v9968
    %v9979 = vpack.c.b16 %v9971, %v9970
    %9988 = vmatpush.bf16.msra.mxu0 %v9979
    %9989 = vmatpush.bf16.msra.mxu0 %v9978
    %9990 = vmatpush.bf16.msra.mxu0 %v9977
    %9991 = vmatpush.bf16.msra.mxu0 %v9976
    %9992 = vmatpush.bf16.msra.mxu0 %v9975
    %9993 = vmatpush.bf16.msra.mxu0 %v9974
    %9994 = vmatpush.bf16.msra.mxu0 %v9973
    %9995 = vmatpush.bf16.msra.mxu0 %v9972
    %9996 = vmatmul.bf16.gmra.mxu0 %v9936
    %v9997 = vpop.f32.mrf.mxu0
    %v9998 = vadd.f32 0.0, %v9997
    %v9999 = vpop.f32.mrf.mxu0
    %v10000 = vadd.f32 0.0, %v9999
    %10001 = vmatmul.bf16.gmra.mxu0 %v9937
    %v10002 = vpop.f32.mrf.mxu0
    %v10003 = vadd.f32 0.0, %v10002
    %v10004 = vpop.f32.mrf.mxu0
    %v10005 = vadd.f32 0.0, %v10004
    %10006 = vdwg.mxu0
    %v10007 = vadd.f32 %v9907, %v9998
    %v10008 = vadd.f32 %v9908, %v10000
    %v10009 = vadd.f32 %v9909, %v10003
    %v10010 = vadd.f32 %v9910, %v10005
    %s10011 = scalar_lea.vmem [#allocation5], 320
    %v10012 = vld [vmem:[%s10011] sm:$0xf]
    %v10013 = vld [vmem:[%s10011 + $0x4] sm:$0xf]
    %v10014 = vld [vmem:[%s10011 + $0x8] sm:$0xf]
    %v10015 = vld [vmem:[%s10011 + $0xc] sm:$0xf]
    %v10016 = vld [vmem:[%s10011 + $0x10] sm:$0xf]
    %v10017 = vld [vmem:[%s10011 + $0x14] sm:$0xf]
    %v10018 = vld [vmem:[%s10011 + $0x18] sm:$0xf]
    %v10019 = vld [vmem:[%s10011 + $0x1c] sm:$0xf]
    %v10020 = vld [vmem:[%s10011 + $0x20] sm:$0xf]
    %v10021 = vld [vmem:[%s10011 + $0x24] sm:$0xf]
    %v10022 = vld [vmem:[%s10011 + $0x28] sm:$0xf]
    %v10023 = vld [vmem:[%s10011 + $0x2c] sm:$0xf]
    %v10024 = vld [vmem:[%s10011 + $0x30] sm:$0xf]
    %v10025 = vld [vmem:[%s10011 + $0x34] sm:$0xf]
    %v10026 = vld [vmem:[%s10011 + $0x38] sm:$0xf]
    %v10027 = vld [vmem:[%s10011 + $0x3c] sm:$0xf]
    %v10032 = vunpack.c.l.b16 %v9476
    %v10033 = vunpack.c.l.b16 %v9477
    %v10034 = vunpack.c.l.b16 %v9478
    %v10035 = vunpack.c.l.b16 %v9479
    %v10036 = vpack.c.b16 %v10033, %v10032
    %v10037 = vpack.c.b16 %v10035, %v10034
    %v10056 = vunpack.c.l.b16 %v10012
    %v10057 = vunpack.c.l.b16 %v10013
    %v10058 = vunpack.c.l.b16 %v10014
    %v10059 = vunpack.c.l.b16 %v10015
    %v10060 = vunpack.c.l.b16 %v10016
    %v10061 = vunpack.c.l.b16 %v10017
    %v10062 = vunpack.c.l.b16 %v10018
    %v10063 = vunpack.c.l.b16 %v10019
    %v10064 = vunpack.c.l.b16 %v10020
    %v10065 = vunpack.c.l.b16 %v10021
    %v10066 = vunpack.c.l.b16 %v10022
    %v10067 = vunpack.c.l.b16 %v10023
    %v10068 = vunpack.c.l.b16 %v10024
    %v10069 = vunpack.c.l.b16 %v10025
    %v10070 = vunpack.c.l.b16 %v10026
    %v10071 = vunpack.c.l.b16 %v10027
    %v10072 = vpack.c.b16 %v10057, %v10056
    %v10073 = vpack.c.b16 %v10059, %v10058
    %v10074 = vpack.c.b16 %v10061, %v10060
    %v10075 = vpack.c.b16 %v10063, %v10062
    %v10076 = vpack.c.b16 %v10065, %v10064
    %v10077 = vpack.c.b16 %v10067, %v10066
    %v10078 = vpack.c.b16 %v10069, %v10068
    %v10079 = vpack.c.b16 %v10071, %v10070
    %10088 = vmatpush.bf16.msra.mxu0 %v10079
    %10089 = vmatpush.bf16.msra.mxu0 %v10078
    %10090 = vmatpush.bf16.msra.mxu0 %v10077
    %10091 = vmatpush.bf16.msra.mxu0 %v10076
    %10092 = vmatpush.bf16.msra.mxu0 %v10075
    %10093 = vmatpush.bf16.msra.mxu0 %v10074
    %10094 = vmatpush.bf16.msra.mxu0 %v10073
    %10095 = vmatpush.bf16.msra.mxu0 %v10072
    %10096 = vmatmul.bf16.gmra.mxu0 %v10036
    %v10097 = vpop.f32.mrf.mxu0
    %v10098 = vadd.f32 0.0, %v10097
    %v10099 = vpop.f32.mrf.mxu0
    %v10100 = vadd.f32 0.0, %v10099
    %10101 = vmatmul.bf16.gmra.mxu0 %v10037
    %v10102 = vpop.f32.mrf.mxu0
    %v10103 = vadd.f32 0.0, %v10102
    %v10104 = vpop.f32.mrf.mxu0
    %v10105 = vadd.f32 0.0, %v10104
    %10106 = vdwg.mxu0
    %v10107 = vadd.f32 %v10007, %v10098
    %v10108 = vadd.f32 %v10008, %v10100
    %v10109 = vadd.f32 %v10009, %v10103
    %v10110 = vadd.f32 %v10010, %v10105
    %s10111 = scalar_lea.vmem [#allocation5], 384
    %v10112 = vld [vmem:[%s10111] sm:$0xf]
    %v10113 = vld [vmem:[%s10111 + $0x4] sm:$0xf]
    %v10114 = vld [vmem:[%s10111 + $0x8] sm:$0xf]
    %v10115 = vld [vmem:[%s10111 + $0xc] sm:$0xf]
    %v10116 = vld [vmem:[%s10111 + $0x10] sm:$0xf]
    %v10117 = vld [vmem:[%s10111 + $0x14] sm:$0xf]
    %v10118 = vld [vmem:[%s10111 + $0x18] sm:$0xf]
    %v10119 = vld [vmem:[%s10111 + $0x1c] sm:$0xf]
    %v10120 = vld [vmem:[%s10111 + $0x20] sm:$0xf]
    %v10121 = vld [vmem:[%s10111 + $0x24] sm:$0xf]
    %v10122 = vld [vmem:[%s10111 + $0x28] sm:$0xf]
    %v10123 = vld [vmem:[%s10111 + $0x2c] sm:$0xf]
    %v10124 = vld [vmem:[%s10111 + $0x30] sm:$0xf]
    %v10125 = vld [vmem:[%s10111 + $0x34] sm:$0xf]
    %v10126 = vld [vmem:[%s10111 + $0x38] sm:$0xf]
    %v10127 = vld [vmem:[%s10111 + $0x3c] sm:$0xf]
    %v10132 = vunpack.c.l.b16 %v9480
    %v10133 = vunpack.c.l.b16 %v9481
    %v10134 = vunpack.c.l.b16 %v9482
    %v10135 = vunpack.c.l.b16 %v9483
    %v10136 = vpack.c.b16 %v10133, %v10132
    %v10137 = vpack.c.b16 %v10135, %v10134
    %v10156 = vunpack.c.l.b16 %v10112
    %v10157 = vunpack.c.l.b16 %v10113
    %v10158 = vunpack.c.l.b16 %v10114
    %v10159 = vunpack.c.l.b16 %v10115
    %v10160 = vunpack.c.l.b16 %v10116
    %v10161 = vunpack.c.l.b16 %v10117
    %v10162 = vunpack.c.l.b16 %v10118
    %v10163 = vunpack.c.l.b16 %v10119
    %v10164 = vunpack.c.l.b16 %v10120
    %v10165 = vunpack.c.l.b16 %v10121
    %v10166 = vunpack.c.l.b16 %v10122
    %v10167 = vunpack.c.l.b16 %v10123
    %v10168 = vunpack.c.l.b16 %v10124
    %v10169 = vunpack.c.l.b16 %v10125
    %v10170 = vunpack.c.l.b16 %v10126
    %v10171 = vunpack.c.l.b16 %v10127
    %v10172 = vpack.c.b16 %v10157, %v10156
    %v10173 = vpack.c.b16 %v10159, %v10158
    %v10174 = vpack.c.b16 %v10161, %v10160
    %v10175 = vpack.c.b16 %v10163, %v10162
    %v10176 = vpack.c.b16 %v10165, %v10164
    %v10177 = vpack.c.b16 %v10167, %v10166
    %v10178 = vpack.c.b16 %v10169, %v10168
    %v10179 = vpack.c.b16 %v10171, %v10170
    %10188 = vmatpush.bf16.msra.mxu0 %v10179
    %10189 = vmatpush.bf16.msra.mxu0 %v10178
    %10190 = vmatpush.bf16.msra.mxu0 %v10177
    %10191 = vmatpush.bf16.msra.mxu0 %v10176
    %10192 = vmatpush.bf16.msra.mxu0 %v10175
    %10193 = vmatpush.bf16.msra.mxu0 %v10174
    %10194 = vmatpush.bf16.msra.mxu0 %v10173
    %10195 = vmatpush.bf16.msra.mxu0 %v10172
    %10196 = vmatmul.bf16.gmra.mxu0 %v10136
    %v10197 = vpop.f32.mrf.mxu0
    %v10198 = vadd.f32 0.0, %v10197
    %v10199 = vpop.f32.mrf.mxu0
    %v10200 = vadd.f32 0.0, %v10199
    %10201 = vmatmul.bf16.gmra.mxu0 %v10137
    %v10202 = vpop.f32.mrf.mxu0
    %v10203 = vadd.f32 0.0, %v10202
    %v10204 = vpop.f32.mrf.mxu0
    %v10205 = vadd.f32 0.0, %v10204
    %10206 = vdwg.mxu0
    %v10207 = vadd.f32 %v10107, %v10198
    %v10208 = vadd.f32 %v10108, %v10200
    %v10209 = vadd.f32 %v10109, %v10203
    %v10210 = vadd.f32 %v10110, %v10205
    %s10211 = scalar_lea.vmem [#allocation5], 448
    %v10212 = vld [vmem:[%s10211] sm:$0xf]
    %v10213 = vld [vmem:[%s10211 + $0x4] sm:$0xf]
    %v10214 = vld [vmem:[%s10211 + $0x8] sm:$0xf]
    %v10215 = vld [vmem:[%s10211 + $0xc] sm:$0xf]
    %v10216 = vld [vmem:[%s10211 + $0x10] sm:$0xf]
    %v10217 = vld [vmem:[%s10211 + $0x14] sm:$0xf]
    %v10218 = vld [vmem:[%s10211 + $0x18] sm:$0xf]
    %v10219 = vld [vmem:[%s10211 + $0x1c] sm:$0xf]
    %v10220 = vld [vmem:[%s10211 + $0x20] sm:$0xf]
    %v10221 = vld [vmem:[%s10211 + $0x24] sm:$0xf]
    %v10222 = vld [vmem:[%s10211 + $0x28] sm:$0xf]
    %v10223 = vld [vmem:[%s10211 + $0x2c] sm:$0xf]
    %v10224 = vld [vmem:[%s10211 + $0x30] sm:$0xf]
    %v10225 = vld [vmem:[%s10211 + $0x34] sm:$0xf]
    %v10226 = vld [vmem:[%s10211 + $0x38] sm:$0xf]
    %v10227 = vld [vmem:[%s10211 + $0x3c] sm:$0xf]
    %v10232 = vunpack.c.l.b16 %v9484
    %v10233 = vunpack.c.l.b16 %v9485
    %v10234 = vunpack.c.l.b16 %v9486
    %v10235 = vunpack.c.l.b16 %v9487
    %v10236 = vpack.c.b16 %v10233, %v10232
    %v10237 = vpack.c.b16 %v10235, %v10234
    %v10256 = vunpack.c.l.b16 %v10212
    %v10257 = vunpack.c.l.b16 %v10213
    %v10258 = vunpack.c.l.b16 %v10214
    %v10259 = vunpack.c.l.b16 %v10215
    %v10260 = vunpack.c.l.b16 %v10216
    %v10261 = vunpack.c.l.b16 %v10217
    %v10262 = vunpack.c.l.b16 %v10218
    %v10263 = vunpack.c.l.b16 %v10219
    %v10264 = vunpack.c.l.b16 %v10220
    %v10265 = vunpack.c.l.b16 %v10221
    %v10266 = vunpack.c.l.b16 %v10222
    %v10267 = vunpack.c.l.b16 %v10223
    %v10268 = vunpack.c.l.b16 %v10224
    %v10269 = vunpack.c.l.b16 %v10225
    %v10270 = vunpack.c.l.b16 %v10226
    %v10271 = vunpack.c.l.b16 %v10227
    %v10272 = vpack.c.b16 %v10257, %v10256
    %v10273 = vpack.c.b16 %v10259, %v10258
    %v10274 = vpack.c.b16 %v10261, %v10260
    %v10275 = vpack.c.b16 %v10263, %v10262
    %v10276 = vpack.c.b16 %v10265, %v10264
    %v10277 = vpack.c.b16 %v10267, %v10266
    %v10278 = vpack.c.b16 %v10269, %v10268
    %v10279 = vpack.c.b16 %v10271, %v10270
    %10288 = vmatpush.bf16.msra.mxu0 %v10279
    %10289 = vmatpush.bf16.msra.mxu0 %v10278
    %10290 = vmatpush.bf16.msra.mxu0 %v10277
    %10291 = vmatpush.bf16.msra.mxu0 %v10276
    %10292 = vmatpush.bf16.msra.mxu0 %v10275
    %10293 = vmatpush.bf16.msra.mxu0 %v10274
    %10294 = vmatpush.bf16.msra.mxu0 %v10273
    %10295 = vmatpush.bf16.msra.mxu0 %v10272
    %10296 = vmatmul.bf16.gmra.mxu0 %v10236
    %v10297 = vpop.f32.mrf.mxu0
    %v10298 = vadd.f32 0.0, %v10297
    %v10299 = vpop.f32.mrf.mxu0
    %v10300 = vadd.f32 0.0, %v10299
    %10301 = vmatmul.bf16.gmra.mxu0 %v10237
    %v10302 = vpop.f32.mrf.mxu0
    %v10303 = vadd.f32 0.0, %v10302
    %v10304 = vpop.f32.mrf.mxu0
    %v10305 = vadd.f32 0.0, %v10304
    %10306 = vdwg.mxu0
    %v10307 = vadd.f32 %v10207, %v10298
    %v10308 = vadd.f32 %v10208, %v10300
    %v10309 = vadd.f32 %v10209, %v10303
    %v10310 = vadd.f32 %v10210, %v10305
    %s10311 = scalar_lea.vmem [#allocation5], 512
    %v10312 = vld [vmem:[%s10311] sm:$0xf]
    %v10313 = vld [vmem:[%s10311 + $0x4] sm:$0xf]
    %v10314 = vld [vmem:[%s10311 + $0x8] sm:$0xf]
    %v10315 = vld [vmem:[%s10311 + $0xc] sm:$0xf]
    %v10316 = vld [vmem:[%s10311 + $0x10] sm:$0xf]
    %v10317 = vld [vmem:[%s10311 + $0x14] sm:$0xf]
    %v10318 = vld [vmem:[%s10311 + $0x18] sm:$0xf]
    %v10319 = vld [vmem:[%s10311 + $0x1c] sm:$0xf]
    %v10320 = vld [vmem:[%s10311 + $0x20] sm:$0xf]
    %v10321 = vld [vmem:[%s10311 + $0x24] sm:$0xf]
    %v10322 = vld [vmem:[%s10311 + $0x28] sm:$0xf]
    %v10323 = vld [vmem:[%s10311 + $0x2c] sm:$0xf]
    %v10324 = vld [vmem:[%s10311 + $0x30] sm:$0xf]
    %v10325 = vld [vmem:[%s10311 + $0x34] sm:$0xf]
    %v10326 = vld [vmem:[%s10311 + $0x38] sm:$0xf]
    %v10327 = vld [vmem:[%s10311 + $0x3c] sm:$0xf]
    %v10332 = vunpack.c.l.b16 %v9488
    %v10333 = vunpack.c.l.b16 %v9489
    %v10334 = vunpack.c.l.b16 %v9490
    %v10335 = vunpack.c.l.b16 %v9491
    %v10336 = vpack.c.b16 %v10333, %v10332
    %v10337 = vpack.c.b16 %v10335, %v10334
    %v10356 = vunpack.c.l.b16 %v10312
    %v10357 = vunpack.c.l.b16 %v10313
    %v10358 = vunpack.c.l.b16 %v10314
    %v10359 = vunpack.c.l.b16 %v10315
    %v10360 = vunpack.c.l.b16 %v10316
    %v10361 = vunpack.c.l.b16 %v10317
    %v10362 = vunpack.c.l.b16 %v10318
    %v10363 = vunpack.c.l.b16 %v10319
    %v10364 = vunpack.c.l.b16 %v10320
    %v10365 = vunpack.c.l.b16 %v10321
    %v10366 = vunpack.c.l.b16 %v10322
    %v10367 = vunpack.c.l.b16 %v10323
    %v10368 = vunpack.c.l.b16 %v10324
    %v10369 = vunpack.c.l.b16 %v10325
    %v10370 = vunpack.c.l.b16 %v10326
    %v10371 = vunpack.c.l.b16 %v10327
    %v10372 = vpack.c.b16 %v10357, %v10356
    %v10373 = vpack.c.b16 %v10359, %v10358
    %v10374 = vpack.c.b16 %v10361, %v10360
    %v10375 = vpack.c.b16 %v10363, %v10362
    %v10376 = vpack.c.b16 %v10365, %v10364
    %v10377 = vpack.c.b16 %v10367, %v10366
    %v10378 = vpack.c.b16 %v10369, %v10368
    %v10379 = vpack.c.b16 %v10371, %v10370
    %10388 = vmatpush.bf16.msra.mxu0 %v10379
    %10389 = vmatpush.bf16.msra.mxu0 %v10378
    %10390 = vmatpush.bf16.msra.mxu0 %v10377
    %10391 = vmatpush.bf16.msra.mxu0 %v10376
    %10392 = vmatpush.bf16.msra.mxu0 %v10375
    %10393 = vmatpush.bf16.msra.mxu0 %v10374
    %10394 = vmatpush.bf16.msra.mxu0 %v10373
    %10395 = vmatpush.bf16.msra.mxu0 %v10372
    %10396 = vmatmul.bf16.gmra.mxu0 %v10336
    %v10397 = vpop.f32.mrf.mxu0
    %v10398 = vadd.f32 0.0, %v10397
    %v10399 = vpop.f32.mrf.mxu0
    %v10400 = vadd.f32 0.0, %v10399
    %10401 = vmatmul.bf16.gmra.mxu0 %v10337
    %v10402 = vpop.f32.mrf.mxu0
    %v10403 = vadd.f32 0.0, %v10402
    %v10404 = vpop.f32.mrf.mxu0
    %v10405 = vadd.f32 0.0, %v10404
    %10406 = vdwg.mxu0
    %v10407 = vadd.f32 %v10307, %v10398
    %v10408 = vadd.f32 %v10308, %v10400
    %v10409 = vadd.f32 %v10309, %v10403
    %v10410 = vadd.f32 %v10310, %v10405
    %s10411 = scalar_lea.vmem [#allocation5], 576
    %v10412 = vld [vmem:[%s10411] sm:$0xf]
    %v10413 = vld [vmem:[%s10411 + $0x4] sm:$0xf]
    %v10414 = vld [vmem:[%s10411 + $0x8] sm:$0xf]
    %v10415 = vld [vmem:[%s10411 + $0xc] sm:$0xf]
    %v10416 = vld [vmem:[%s10411 + $0x10] sm:$0xf]
    %v10417 = vld [vmem:[%s10411 + $0x14] sm:$0xf]
    %v10418 = vld [vmem:[%s10411 + $0x18] sm:$0xf]
    %v10419 = vld [vmem:[%s10411 + $0x1c] sm:$0xf]
    %v10420 = vld [vmem:[%s10411 + $0x20] sm:$0xf]
    %v10421 = vld [vmem:[%s10411 + $0x24] sm:$0xf]
    %v10422 = vld [vmem:[%s10411 + $0x28] sm:$0xf]
    %v10423 = vld [vmem:[%s10411 + $0x2c] sm:$0xf]
    %v10424 = vld [vmem:[%s10411 + $0x30] sm:$0xf]
    %v10425 = vld [vmem:[%s10411 + $0x34] sm:$0xf]
    %v10426 = vld [vmem:[%s10411 + $0x38] sm:$0xf]
    %v10427 = vld [vmem:[%s10411 + $0x3c] sm:$0xf]
    %v10432 = vunpack.c.l.b16 %v9492
    %v10433 = vunpack.c.l.b16 %v9493
    %v10434 = vunpack.c.l.b16 %v9494
    %v10435 = vunpack.c.l.b16 %v9495
    %v10436 = vpack.c.b16 %v10433, %v10432
    %v10437 = vpack.c.b16 %v10435, %v10434
    %v10456 = vunpack.c.l.b16 %v10412
    %v10457 = vunpack.c.l.b16 %v10413
    %v10458 = vunpack.c.l.b16 %v10414
    %v10459 = vunpack.c.l.b16 %v10415
    %v10460 = vunpack.c.l.b16 %v10416
    %v10461 = vunpack.c.l.b16 %v10417
    %v10462 = vunpack.c.l.b16 %v10418
    %v10463 = vunpack.c.l.b16 %v10419
    %v10464 = vunpack.c.l.b16 %v10420
    %v10465 = vunpack.c.l.b16 %v10421
    %v10466 = vunpack.c.l.b16 %v10422
    %v10467 = vunpack.c.l.b16 %v10423
    %v10468 = vunpack.c.l.b16 %v10424
    %v10469 = vunpack.c.l.b16 %v10425
    %v10470 = vunpack.c.l.b16 %v10426
    %v10471 = vunpack.c.l.b16 %v10427
    %v10472 = vpack.c.b16 %v10457, %v10456
    %v10473 = vpack.c.b16 %v10459, %v10458
    %v10474 = vpack.c.b16 %v10461, %v10460
    %v10475 = vpack.c.b16 %v10463, %v10462
    %v10476 = vpack.c.b16 %v10465, %v10464
    %v10477 = vpack.c.b16 %v10467, %v10466
    %v10478 = vpack.c.b16 %v10469, %v10468
    %v10479 = vpack.c.b16 %v10471, %v10470
    %10488 = vmatpush.bf16.msra.mxu0 %v10479
    %10489 = vmatpush.bf16.msra.mxu0 %v10478
    %10490 = vmatpush.bf16.msra.mxu0 %v10477
    %10491 = vmatpush.bf16.msra.mxu0 %v10476
    %10492 = vmatpush.bf16.msra.mxu0 %v10475
    %10493 = vmatpush.bf16.msra.mxu0 %v10474
    %10494 = vmatpush.bf16.msra.mxu0 %v10473
    %10495 = vmatpush.bf16.msra.mxu0 %v10472
    %10496 = vmatmul.bf16.gmra.mxu0 %v10436
    %v10497 = vpop.f32.mrf.mxu0
    %v10498 = vadd.f32 0.0, %v10497
    %v10499 = vpop.f32.mrf.mxu0
    %v10500 = vadd.f32 0.0, %v10499
    %10501 = vmatmul.bf16.gmra.mxu0 %v10437
    %v10502 = vpop.f32.mrf.mxu0
    %v10503 = vadd.f32 0.0, %v10502
    %v10504 = vpop.f32.mrf.mxu0
    %v10505 = vadd.f32 0.0, %v10504
    %10506 = vdwg.mxu0
    %v10507 = vadd.f32 %v10407, %v10498
    %v10508 = vadd.f32 %v10408, %v10500
    %v10509 = vadd.f32 %v10409, %v10503
    %v10510 = vadd.f32 %v10410, %v10505
    %s10511 = scalar_lea.vmem [#allocation5], 640
    %v10512 = vld [vmem:[%s10511] sm:$0xf]
    %v10513 = vld [vmem:[%s10511 + $0x4] sm:$0xf]
    %v10514 = vld [vmem:[%s10511 + $0x8] sm:$0xf]
    %v10515 = vld [vmem:[%s10511 + $0xc] sm:$0xf]
    %v10516 = vld [vmem:[%s10511 + $0x10] sm:$0xf]
    %v10517 = vld [vmem:[%s10511 + $0x14] sm:$0xf]
    %v10518 = vld [vmem:[%s10511 + $0x18] sm:$0xf]
    %v10519 = vld [vmem:[%s10511 + $0x1c] sm:$0xf]
    %v10520 = vld [vmem:[%s10511 + $0x20] sm:$0xf]
    %v10521 = vld [vmem:[%s10511 + $0x24] sm:$0xf]
    %v10522 = vld [vmem:[%s10511 + $0x28] sm:$0xf]
    %v10523 = vld [vmem:[%s10511 + $0x2c] sm:$0xf]
    %v10524 = vld [vmem:[%s10511 + $0x30] sm:$0xf]
    %v10525 = vld [vmem:[%s10511 + $0x34] sm:$0xf]
    %v10526 = vld [vmem:[%s10511 + $0x38] sm:$0xf]
    %v10527 = vld [vmem:[%s10511 + $0x3c] sm:$0xf]
    %v10532 = vunpack.c.l.b16 %v9496
    %v10533 = vunpack.c.l.b16 %v9497
    %v10534 = vunpack.c.l.b16 %v9498
    %v10535 = vunpack.c.l.b16 %v9499
    %v10536 = vpack.c.b16 %v10533, %v10532
    %v10537 = vpack.c.b16 %v10535, %v10534
    %v10556 = vunpack.c.l.b16 %v10512
    %v10557 = vunpack.c.l.b16 %v10513
    %v10558 = vunpack.c.l.b16 %v10514
    %v10559 = vunpack.c.l.b16 %v10515
    %v10560 = vunpack.c.l.b16 %v10516
    %v10561 = vunpack.c.l.b16 %v10517
    %v10562 = vunpack.c.l.b16 %v10518
    %v10563 = vunpack.c.l.b16 %v10519
    %v10564 = vunpack.c.l.b16 %v10520
    %v10565 = vunpack.c.l.b16 %v10521
    %v10566 = vunpack.c.l.b16 %v10522
    %v10567 = vunpack.c.l.b16 %v10523
    %v10568 = vunpack.c.l.b16 %v10524
    %v10569 = vunpack.c.l.b16 %v10525
    %v10570 = vunpack.c.l.b16 %v10526
    %v10571 = vunpack.c.l.b16 %v10527
    %v10572 = vpack.c.b16 %v10557, %v10556
    %v10573 = vpack.c.b16 %v10559, %v10558
    %v10574 = vpack.c.b16 %v10561, %v10560
    %v10575 = vpack.c.b16 %v10563, %v10562
    %v10576 = vpack.c.b16 %v10565, %v10564
    %v10577 = vpack.c.b16 %v10567, %v10566
    %v10578 = vpack.c.b16 %v10569, %v10568
    %v10579 = vpack.c.b16 %v10571, %v10570
    %10588 = vmatpush.bf16.msra.mxu0 %v10579
    %10589 = vmatpush.bf16.msra.mxu0 %v10578
    %10590 = vmatpush.bf16.msra.mxu0 %v10577
    %10591 = vmatpush.bf16.msra.mxu0 %v10576
    %10592 = vmatpush.bf16.msra.mxu0 %v10575
    %10593 = vmatpush.bf16.msra.mxu0 %v10574
    %10594 = vmatpush.bf16.msra.mxu0 %v10573
    %10595 = vmatpush.bf16.msra.mxu0 %v10572
    %10596 = vmatmul.bf16.gmra.mxu0 %v10536
    %v10597 = vpop.f32.mrf.mxu0
    %v10598 = vadd.f32 0.0, %v10597
    %v10599 = vpop.f32.mrf.mxu0
    %v10600 = vadd.f32 0.0, %v10599
    %10601 = vmatmul.bf16.gmra.mxu0 %v10537
    %v10602 = vpop.f32.mrf.mxu0
    %v10603 = vadd.f32 0.0, %v10602
    %v10604 = vpop.f32.mrf.mxu0
    %v10605 = vadd.f32 0.0, %v10604
    %10606 = vdwg.mxu0
    %v10607 = vadd.f32 %v10507, %v10598
    %v10608 = vadd.f32 %v10508, %v10600
    %v10609 = vadd.f32 %v10509, %v10603
    %v10610 = vadd.f32 %v10510, %v10605
    %s10611 = scalar_lea.vmem [#allocation5], 704
    %v10612 = vld [vmem:[%s10611] sm:$0xf]
    %v10613 = vld [vmem:[%s10611 + $0x4] sm:$0xf]
    %v10614 = vld [vmem:[%s10611 + $0x8] sm:$0xf]
    %v10615 = vld [vmem:[%s10611 + $0xc] sm:$0xf]
    %v10616 = vld [vmem:[%s10611 + $0x10] sm:$0xf]
    %v10617 = vld [vmem:[%s10611 + $0x14] sm:$0xf]
    %v10618 = vld [vmem:[%s10611 + $0x18] sm:$0xf]
    %v10619 = vld [vmem:[%s10611 + $0x1c] sm:$0xf]
    %v10620 = vld [vmem:[%s10611 + $0x20] sm:$0xf]
    %v10621 = vld [vmem:[%s10611 + $0x24] sm:$0xf]
    %v10622 = vld [vmem:[%s10611 + $0x28] sm:$0xf]
    %v10623 = vld [vmem:[%s10611 + $0x2c] sm:$0xf]
    %v10624 = vld [vmem:[%s10611 + $0x30] sm:$0xf]
    %v10625 = vld [vmem:[%s10611 + $0x34] sm:$0xf]
    %v10626 = vld [vmem:[%s10611 + $0x38] sm:$0xf]
    %v10627 = vld [vmem:[%s10611 + $0x3c] sm:$0xf]
    %v10632 = vunpack.c.l.b16 %v9500
    %v10633 = vunpack.c.l.b16 %v9501
    %v10634 = vunpack.c.l.b16 %v9502
    %v10635 = vunpack.c.l.b16 %v9503
    %v10636 = vpack.c.b16 %v10633, %v10632
    %v10637 = vpack.c.b16 %v10635, %v10634
    %v10656 = vunpack.c.l.b16 %v10612
    %v10657 = vunpack.c.l.b16 %v10613
    %v10658 = vunpack.c.l.b16 %v10614
    %v10659 = vunpack.c.l.b16 %v10615
    %v10660 = vunpack.c.l.b16 %v10616
    %v10661 = vunpack.c.l.b16 %v10617
    %v10662 = vunpack.c.l.b16 %v10618
    %v10663 = vunpack.c.l.b16 %v10619
    %v10664 = vunpack.c.l.b16 %v10620
    %v10665 = vunpack.c.l.b16 %v10621
    %v10666 = vunpack.c.l.b16 %v10622
    %v10667 = vunpack.c.l.b16 %v10623
    %v10668 = vunpack.c.l.b16 %v10624
    %v10669 = vunpack.c.l.b16 %v10625
    %v10670 = vunpack.c.l.b16 %v10626
    %v10671 = vunpack.c.l.b16 %v10627
    %v10672 = vpack.c.b16 %v10657, %v10656
    %v10673 = vpack.c.b16 %v10659, %v10658
    %v10674 = vpack.c.b16 %v10661, %v10660
    %v10675 = vpack.c.b16 %v10663, %v10662
    %v10676 = vpack.c.b16 %v10665, %v10664
    %v10677 = vpack.c.b16 %v10667, %v10666
    %v10678 = vpack.c.b16 %v10669, %v10668
    %v10679 = vpack.c.b16 %v10671, %v10670
    %10688 = vmatpush.bf16.msra.mxu0 %v10679
    %10689 = vmatpush.bf16.msra.mxu0 %v10678
    %10690 = vmatpush.bf16.msra.mxu0 %v10677
    %10691 = vmatpush.bf16.msra.mxu0 %v10676
    %10692 = vmatpush.bf16.msra.mxu0 %v10675
    %10693 = vmatpush.bf16.msra.mxu0 %v10674
    %10694 = vmatpush.bf16.msra.mxu0 %v10673
    %10695 = vmatpush.bf16.msra.mxu0 %v10672
    %10696 = vmatmul.bf16.gmra.mxu0 %v10636
    %v10697 = vpop.f32.mrf.mxu0
    %v10698 = vadd.f32 0.0, %v10697
    %v10699 = vpop.f32.mrf.mxu0
    %v10700 = vadd.f32 0.0, %v10699
    %10701 = vmatmul.bf16.gmra.mxu0 %v10637
    %v10702 = vpop.f32.mrf.mxu0
    %v10703 = vadd.f32 0.0, %v10702
    %v10704 = vpop.f32.mrf.mxu0
    %v10705 = vadd.f32 0.0, %v10704
    %10706 = vdwg.mxu0
    %v10707 = vadd.f32 %v10607, %v10698
    %v10708 = vadd.f32 %v10608, %v10700
    %v10709 = vadd.f32 %v10609, %v10703
    %v10710 = vadd.f32 %v10610, %v10705
    %s10711 = scalar_lea.vmem [#allocation5], 768
    %v10712 = vld [vmem:[%s10711] sm:$0xf]
    %v10713 = vld [vmem:[%s10711 + $0x4] sm:$0xf]
    %v10714 = vld [vmem:[%s10711 + $0x8] sm:$0xf]
    %v10715 = vld [vmem:[%s10711 + $0xc] sm:$0xf]
    %v10716 = vld [vmem:[%s10711 + $0x10] sm:$0xf]
    %v10717 = vld [vmem:[%s10711 + $0x14] sm:$0xf]
    %v10718 = vld [vmem:[%s10711 + $0x18] sm:$0xf]
    %v10719 = vld [vmem:[%s10711 + $0x1c] sm:$0xf]
    %v10720 = vld [vmem:[%s10711 + $0x20] sm:$0xf]
    %v10721 = vld [vmem:[%s10711 + $0x24] sm:$0xf]
    %v10722 = vld [vmem:[%s10711 + $0x28] sm:$0xf]
    %v10723 = vld [vmem:[%s10711 + $0x2c] sm:$0xf]
    %v10724 = vld [vmem:[%s10711 + $0x30] sm:$0xf]
    %v10725 = vld [vmem:[%s10711 + $0x34] sm:$0xf]
    %v10726 = vld [vmem:[%s10711 + $0x38] sm:$0xf]
    %v10727 = vld [vmem:[%s10711 + $0x3c] sm:$0xf]
    %v10732 = vunpack.c.l.b16 %v9504
    %v10733 = vunpack.c.l.b16 %v9505
    %v10734 = vunpack.c.l.b16 %v9506
    %v10735 = vunpack.c.l.b16 %v9507
    %v10736 = vpack.c.b16 %v10733, %v10732
    %v10737 = vpack.c.b16 %v10735, %v10734
    %v10756 = vunpack.c.l.b16 %v10712
    %v10757 = vunpack.c.l.b16 %v10713
    %v10758 = vunpack.c.l.b16 %v10714
    %v10759 = vunpack.c.l.b16 %v10715
    %v10760 = vunpack.c.l.b16 %v10716
    %v10761 = vunpack.c.l.b16 %v10717
    %v10762 = vunpack.c.l.b16 %v10718
    %v10763 = vunpack.c.l.b16 %v10719
    %v10764 = vunpack.c.l.b16 %v10720
    %v10765 = vunpack.c.l.b16 %v10721
    %v10766 = vunpack.c.l.b16 %v10722
    %v10767 = vunpack.c.l.b16 %v10723
    %v10768 = vunpack.c.l.b16 %v10724
    %v10769 = vunpack.c.l.b16 %v10725
    %v10770 = vunpack.c.l.b16 %v10726
    %v10771 = vunpack.c.l.b16 %v10727
    %v10772 = vpack.c.b16 %v10757, %v10756
    %v10773 = vpack.c.b16 %v10759, %v10758
    %v10774 = vpack.c.b16 %v10761, %v10760
    %v10775 = vpack.c.b16 %v10763, %v10762
    %v10776 = vpack.c.b16 %v10765, %v10764
    %v10777 = vpack.c.b16 %v10767, %v10766
    %v10778 = vpack.c.b16 %v10769, %v10768
    %v10779 = vpack.c.b16 %v10771, %v10770
    %10788 = vmatpush.bf16.msra.mxu0 %v10779
    %10789 = vmatpush.bf16.msra.mxu0 %v10778
    %10790 = vmatpush.bf16.msra.mxu0 %v10777
    %10791 = vmatpush.bf16.msra.mxu0 %v10776
    %10792 = vmatpush.bf16.msra.mxu0 %v10775
    %10793 = vmatpush.bf16.msra.mxu0 %v10774
    %10794 = vmatpush.bf16.msra.mxu0 %v10773
    %10795 = vmatpush.bf16.msra.mxu0 %v10772
    %10796 = vmatmul.bf16.gmra.mxu0 %v10736
    %v10797 = vpop.f32.mrf.mxu0
    %v10798 = vadd.f32 0.0, %v10797
    %v10799 = vpop.f32.mrf.mxu0
    %v10800 = vadd.f32 0.0, %v10799
    %10801 = vmatmul.bf16.gmra.mxu0 %v10737
    %v10802 = vpop.f32.mrf.mxu0
    %v10803 = vadd.f32 0.0, %v10802
    %v10804 = vpop.f32.mrf.mxu0
    %v10805 = vadd.f32 0.0, %v10804
    %10806 = vdwg.mxu0
    %v10807 = vadd.f32 %v10707, %v10798
    %v10808 = vadd.f32 %v10708, %v10800
    %v10809 = vadd.f32 %v10709, %v10803
    %v10810 = vadd.f32 %v10710, %v10805
    %s10811 = scalar_lea.vmem [#allocation5], 832
    %v10812 = vld [vmem:[%s10811] sm:$0xf]
    %v10813 = vld [vmem:[%s10811 + $0x4] sm:$0xf]
    %v10814 = vld [vmem:[%s10811 + $0x8] sm:$0xf]
    %v10815 = vld [vmem:[%s10811 + $0xc] sm:$0xf]
    %v10816 = vld [vmem:[%s10811 + $0x10] sm:$0xf]
    %v10817 = vld [vmem:[%s10811 + $0x14] sm:$0xf]
    %v10818 = vld [vmem:[%s10811 + $0x18] sm:$0xf]
    %v10819 = vld [vmem:[%s10811 + $0x1c] sm:$0xf]
    %v10820 = vld [vmem:[%s10811 + $0x20] sm:$0xf]
    %v10821 = vld [vmem:[%s10811 + $0x24] sm:$0xf]
    %v10822 = vld [vmem:[%s10811 + $0x28] sm:$0xf]
    %v10823 = vld [vmem:[%s10811 + $0x2c] sm:$0xf]
    %v10824 = vld [vmem:[%s10811 + $0x30] sm:$0xf]
    %v10825 = vld [vmem:[%s10811 + $0x34] sm:$0xf]
    %v10826 = vld [vmem:[%s10811 + $0x38] sm:$0xf]
    %v10827 = vld [vmem:[%s10811 + $0x3c] sm:$0xf]
    %v10832 = vunpack.c.l.b16 %v9508
    %v10833 = vunpack.c.l.b16 %v9509
    %v10834 = vunpack.c.l.b16 %v9510
    %v10835 = vunpack.c.l.b16 %v9511
    %v10836 = vpack.c.b16 %v10833, %v10832
    %v10837 = vpack.c.b16 %v10835, %v10834
    %v10856 = vunpack.c.l.b16 %v10812
    %v10857 = vunpack.c.l.b16 %v10813
    %v10858 = vunpack.c.l.b16 %v10814
    %v10859 = vunpack.c.l.b16 %v10815
    %v10860 = vunpack.c.l.b16 %v10816
    %v10861 = vunpack.c.l.b16 %v10817
    %v10862 = vunpack.c.l.b16 %v10818
    %v10863 = vunpack.c.l.b16 %v10819
    %v10864 = vunpack.c.l.b16 %v10820
    %v10865 = vunpack.c.l.b16 %v10821
    %v10866 = vunpack.c.l.b16 %v10822
    %v10867 = vunpack.c.l.b16 %v10823
    %v10868 = vunpack.c.l.b16 %v10824
    %v10869 = vunpack.c.l.b16 %v10825
    %v10870 = vunpack.c.l.b16 %v10826
    %v10871 = vunpack.c.l.b16 %v10827
    %v10872 = vpack.c.b16 %v10857, %v10856
    %v10873 = vpack.c.b16 %v10859, %v10858
    %v10874 = vpack.c.b16 %v10861, %v10860
    %v10875 = vpack.c.b16 %v10863, %v10862
    %v10876 = vpack.c.b16 %v10865, %v10864
    %v10877 = vpack.c.b16 %v10867, %v10866
    %v10878 = vpack.c.b16 %v10869, %v10868
    %v10879 = vpack.c.b16 %v10871, %v10870
    %10888 = vmatpush.bf16.msra.mxu0 %v10879
    %10889 = vmatpush.bf16.msra.mxu0 %v10878
    %10890 = vmatpush.bf16.msra.mxu0 %v10877
    %10891 = vmatpush.bf16.msra.mxu0 %v10876
    %10892 = vmatpush.bf16.msra.mxu0 %v10875
    %10893 = vmatpush.bf16.msra.mxu0 %v10874
    %10894 = vmatpush.bf16.msra.mxu0 %v10873
    %10895 = vmatpush.bf16.msra.mxu0 %v10872
    %10896 = vmatmul.bf16.gmra.mxu0 %v10836
    %v10897 = vpop.f32.mrf.mxu0
    %v10898 = vadd.f32 0.0, %v10897
    %v10899 = vpop.f32.mrf.mxu0
    %v10900 = vadd.f32 0.0, %v10899
    %10901 = vmatmul.bf16.gmra.mxu0 %v10837
    %v10902 = vpop.f32.mrf.mxu0
    %v10903 = vadd.f32 0.0, %v10902
    %v10904 = vpop.f32.mrf.mxu0
    %v10905 = vadd.f32 0.0, %v10904
    %10906 = vdwg.mxu0
    %v10907 = vadd.f32 %v10807, %v10898
    %v10908 = vadd.f32 %v10808, %v10900
    %v10909 = vadd.f32 %v10809, %v10903
    %v10910 = vadd.f32 %v10810, %v10905
    %s10911 = scalar_lea.vmem [#allocation5], 896
    %v10912 = vld [vmem:[%s10911] sm:$0xf]
    %v10913 = vld [vmem:[%s10911 + $0x4] sm:$0xf]
    %v10914 = vld [vmem:[%s10911 + $0x8] sm:$0xf]
    %v10915 = vld [vmem:[%s10911 + $0xc] sm:$0xf]
    %v10916 = vld [vmem:[%s10911 + $0x10] sm:$0xf]
    %v10917 = vld [vmem:[%s10911 + $0x14] sm:$0xf]
    %v10918 = vld [vmem:[%s10911 + $0x18] sm:$0xf]
    %v10919 = vld [vmem:[%s10911 + $0x1c] sm:$0xf]
    %v10920 = vld [vmem:[%s10911 + $0x20] sm:$0xf]
    %v10921 = vld [vmem:[%s10911 + $0x24] sm:$0xf]
    %v10922 = vld [vmem:[%s10911 + $0x28] sm:$0xf]
    %v10923 = vld [vmem:[%s10911 + $0x2c] sm:$0xf]
    %v10924 = vld [vmem:[%s10911 + $0x30] sm:$0xf]
    %v10925 = vld [vmem:[%s10911 + $0x34] sm:$0xf]
    %v10926 = vld [vmem:[%s10911 + $0x38] sm:$0xf]
    %v10927 = vld [vmem:[%s10911 + $0x3c] sm:$0xf]
    %v10932 = vunpack.c.l.b16 %v9512
    %v10933 = vunpack.c.l.b16 %v9513
    %v10934 = vunpack.c.l.b16 %v9514
    %v10935 = vunpack.c.l.b16 %v9515
    %v10936 = vpack.c.b16 %v10933, %v10932
    %v10937 = vpack.c.b16 %v10935, %v10934
    %v10956 = vunpack.c.l.b16 %v10912
    %v10957 = vunpack.c.l.b16 %v10913
    %v10958 = vunpack.c.l.b16 %v10914
    %v10959 = vunpack.c.l.b16 %v10915
    %v10960 = vunpack.c.l.b16 %v10916
    %v10961 = vunpack.c.l.b16 %v10917
    %v10962 = vunpack.c.l.b16 %v10918
    %v10963 = vunpack.c.l.b16 %v10919
    %v10964 = vunpack.c.l.b16 %v10920
    %v10965 = vunpack.c.l.b16 %v10921
    %v10966 = vunpack.c.l.b16 %v10922
    %v10967 = vunpack.c.l.b16 %v10923
    %v10968 = vunpack.c.l.b16 %v10924
    %v10969 = vunpack.c.l.b16 %v10925
    %v10970 = vunpack.c.l.b16 %v10926
    %v10971 = vunpack.c.l.b16 %v10927
    %v10972 = vpack.c.b16 %v10957, %v10956
    %v10973 = vpack.c.b16 %v10959, %v10958
    %v10974 = vpack.c.b16 %v10961, %v10960
    %v10975 = vpack.c.b16 %v10963, %v10962
    %v10976 = vpack.c.b16 %v10965, %v10964
    %v10977 = vpack.c.b16 %v10967, %v10966
    %v10978 = vpack.c.b16 %v10969, %v10968
    %v10979 = vpack.c.b16 %v10971, %v10970
    %10988 = vmatpush.bf16.msra.mxu0 %v10979
    %10989 = vmatpush.bf16.msra.mxu0 %v10978
    %10990 = vmatpush.bf16.msra.mxu0 %v10977
    %10991 = vmatpush.bf16.msra.mxu0 %v10976
    %10992 = vmatpush.bf16.msra.mxu0 %v10975
    %10993 = vmatpush.bf16.msra.mxu0 %v10974
    %10994 = vmatpush.bf16.msra.mxu0 %v10973
    %10995 = vmatpush.bf16.msra.mxu0 %v10972
    %10996 = vmatmul.bf16.gmra.mxu0 %v10936
    %v10997 = vpop.f32.mrf.mxu0
    %v10998 = vadd.f32 0.0, %v10997
    %v10999 = vpop.f32.mrf.mxu0
    %v11000 = vadd.f32 0.0, %v10999
    %11001 = vmatmul.bf16.gmra.mxu0 %v10937
    %v11002 = vpop.f32.mrf.mxu0
    %v11003 = vadd.f32 0.0, %v11002
    %v11004 = vpop.f32.mrf.mxu0
    %v11005 = vadd.f32 0.0, %v11004
    %11006 = vdwg.mxu0
    %v11007 = vadd.f32 %v10907, %v10998
    %v11008 = vadd.f32 %v10908, %v11000
    %v11009 = vadd.f32 %v10909, %v11003
    %v11010 = vadd.f32 %v10910, %v11005
    %s11011 = scalar_lea.vmem [#allocation5], 960
    %v11012 = vld [vmem:[%s11011] sm:$0xf]
    %v11013 = vld [vmem:[%s11011 + $0x4] sm:$0xf]
    %v11014 = vld [vmem:[%s11011 + $0x8] sm:$0xf]
    %v11015 = vld [vmem:[%s11011 + $0xc] sm:$0xf]
    %v11016 = vld [vmem:[%s11011 + $0x10] sm:$0xf]
    %v11017 = vld [vmem:[%s11011 + $0x14] sm:$0xf]
    %v11018 = vld [vmem:[%s11011 + $0x18] sm:$0xf]
    %v11019 = vld [vmem:[%s11011 + $0x1c] sm:$0xf]
    %v11020 = vld [vmem:[%s11011 + $0x20] sm:$0xf]
    %v11021 = vld [vmem:[%s11011 + $0x24] sm:$0xf]
    %v11022 = vld [vmem:[%s11011 + $0x28] sm:$0xf]
    %v11023 = vld [vmem:[%s11011 + $0x2c] sm:$0xf]
    %v11024 = vld [vmem:[%s11011 + $0x30] sm:$0xf]
    %v11025 = vld [vmem:[%s11011 + $0x34] sm:$0xf]
    %v11026 = vld [vmem:[%s11011 + $0x38] sm:$0xf]
    %v11027 = vld [vmem:[%s11011 + $0x3c] sm:$0xf]
    %v11032 = vunpack.c.l.b16 %v9516
    %v11033 = vunpack.c.l.b16 %v9517
    %v11034 = vunpack.c.l.b16 %v9518
    %v11035 = vunpack.c.l.b16 %v9519
    %v11036 = vpack.c.b16 %v11033, %v11032
    %v11037 = vpack.c.b16 %v11035, %v11034
    %v11056 = vunpack.c.l.b16 %v11012
    %v11057 = vunpack.c.l.b16 %v11013
    %v11058 = vunpack.c.l.b16 %v11014
    %v11059 = vunpack.c.l.b16 %v11015
    %v11060 = vunpack.c.l.b16 %v11016
    %v11061 = vunpack.c.l.b16 %v11017
    %v11062 = vunpack.c.l.b16 %v11018
    %v11063 = vunpack.c.l.b16 %v11019
    %v11064 = vunpack.c.l.b16 %v11020
    %v11065 = vunpack.c.l.b16 %v11021
    %v11066 = vunpack.c.l.b16 %v11022
    %v11067 = vunpack.c.l.b16 %v11023
    %v11068 = vunpack.c.l.b16 %v11024
    %v11069 = vunpack.c.l.b16 %v11025
    %v11070 = vunpack.c.l.b16 %v11026
    %v11071 = vunpack.c.l.b16 %v11027
    %v11072 = vpack.c.b16 %v11057, %v11056
    %v11073 = vpack.c.b16 %v11059, %v11058
    %v11074 = vpack.c.b16 %v11061, %v11060
    %v11075 = vpack.c.b16 %v11063, %v11062
    %v11076 = vpack.c.b16 %v11065, %v11064
    %v11077 = vpack.c.b16 %v11067, %v11066
    %v11078 = vpack.c.b16 %v11069, %v11068
    %v11079 = vpack.c.b16 %v11071, %v11070
    %11088 = vmatpush.bf16.msra.mxu0 %v11079
    %11089 = vmatpush.bf16.msra.mxu0 %v11078
    %11090 = vmatpush.bf16.msra.mxu0 %v11077
    %11091 = vmatpush.bf16.msra.mxu0 %v11076
    %11092 = vmatpush.bf16.msra.mxu0 %v11075
    %11093 = vmatpush.bf16.msra.mxu0 %v11074
    %11094 = vmatpush.bf16.msra.mxu0 %v11073
    %11095 = vmatpush.bf16.msra.mxu0 %v11072
    %11096 = vmatmul.bf16.gmra.mxu0 %v11036
    %v11097 = vpop.f32.mrf.mxu0
    %v11098 = vadd.f32 0.0, %v11097
    %v11099 = vpop.f32.mrf.mxu0
    %v11100 = vadd.f32 0.0, %v11099
    %11101 = vmatmul.bf16.gmra.mxu0 %v11037
    %v11102 = vpop.f32.mrf.mxu0
    %v11103 = vadd.f32 0.0, %v11102
    %v11104 = vpop.f32.mrf.mxu0
    %v11105 = vadd.f32 0.0, %v11104
    %11106 = vdwg.mxu0
    %v11107 = vadd.f32 %v11007, %v11098
    %v11108 = vadd.f32 %v11008, %v11100
    %v11109 = vadd.f32 %v11009, %v11103
    %v11110 = vadd.f32 %v11010, %v11105
    %v11111 = vld [vmem:[%s4] sm:$0x1]
    %v11113 = vperm.slane %v11111, 0
    %v11115 = vadd.f32 %v11107, %v11113
    %v11116 = vadd.f32 %v11108, %v11113
    %v11117 = vadd.f32 %v11109, %v11113
    %v11118 = vadd.f32 %v11110, %v11113
    %11119 = vst [vmem:[#allocation7] sm:$0xff] %v11115
    %11120 = vst [vmem:[#allocation7 + $0x8] sm:$0xff] %v11116
    %11121 = vst [vmem:[#allocation7 + $0x10] sm:$0xff] %v11117
    %11122 = vst [vmem:[#allocation7 + $0x18] sm:$0xff] %v11118
    // Predicated region
    $region30: #{bayesian_conv_encoder_forward.1} parent=1 // pred_check
      _
    $region31: #{bayesian_conv_encoder_forward.1} parent=1 // pred_check_branch
      %11124 = sbr.rel (0) target = $region33
    $region32: #{bayesian_conv_encoder_forward.1} parent=1 // pred_region
      %11126 = vsyncadd [#allocation4], 0
      %s11127 = sshll.u32 [#allocation7], 4
      %s11128 = int_to_ptr.vmem [resolvable:$true] %s11127
      %s11129 = sshll.u32 %s5, 4
      %s11130 = int_to_ptr.hbm [resolvable:$true] %s11129
      %11135 = dma.vmem_to_hbm [thread:$0]  %s11128, 512, %s11130, [#allocation4], 128, 128, 8
    $region33: #{bayesian_conv_encoder_forward.1} parent=1 // pred_fallthru
      _
    // Predicated region
    $region34: #{bayesian_conv_encoder_forward.1} parent=1 // pred_check
      _
    $region35: #{bayesian_conv_encoder_forward.1} parent=1 // pred_check_branch
      %11137 = sbr.rel (0) target = $region37
    $region36: #{bayesian_conv_encoder_forward.1} parent=1 // pred_region
      %11139 = dma.done [#allocation4], 512
    $region37: #{bayesian_conv_encoder_forward.1} parent=1 // pred_fallthru
      _
    %11140 = vsyncpa [#allocation3], 1
    %11141 = vsyncpa [#allocation6], 1
    %11142 = vsyncpa [#allocation4], 1

</llo_original>
